<compile_context>
chip_gen: v7x
topology: tpu7x:2x2x1
jax: 0.10.0
libtpu: 0.0.40
codegen_flags: <defaults>
</compile_context>

<pallas_src>
import numpy as np

import jax
import jax.numpy as jnp
from jax import lax
from jax.experimental import pallas as pl
from jax.experimental.pallas import tpu as pltpu


# ----------------------------------------------------------------------------
# Fused kernel: conv1 + ReLU + conv2 + ReLU + NCHW-flatten + FC  (one launch)
# ----------------------------------------------------------------------------
def _fused_agent_kernel(x_ref, shift_ref, w1_ref, b1_ref, w2_ref, b2_ref,
                        wfc_ref, bfc_ref, bsel_ref, o_ref):
    """Whole forward pass for one batch tile; all intermediates stay on-chip."""
    x = x_ref[...]                                    # [tb*HW, C_in] f32

    def conv3x3_relu(inp, w_ref, b_ref):
        # 3x3 SAME conv as a sum over the 9 kernel offsets:
        #   out = relu(b + sum_k (S_k @ inp) @ W_k)
        # S_k: constant 0/1 spatial-shift matrix (zero rows encode the padding),
        # W_k = conv_weight[:, :, kh, kw] pre-transposed to [C_in, C_out].
        acc = jnp.zeros((inp.shape[0], w_ref.shape[-1]), jnp.float32)
        for k in range(shift_ref.shape[0]):           # 9 offsets, unrolled
            shifted = jnp.dot(shift_ref[k], inp,
                              preferred_element_type=jnp.float32)
            acc = acc + jnp.dot(shifted, w_ref[k],
                                preferred_element_type=jnp.float32)
        return jnp.maximum(acc + b_ref[...], 0.0)     # bias broadcast once/layer

    h1 = conv3x3_relu(x, w1_ref, b1_ref)              # [tb*HW, 64]  (VMEM only)
    h2 = conv3x3_relu(h1, w2_ref, b2_ref)             # [tb*HW, 128] (VMEM only)

    # FC over the torch-order (C, H, W) flatten, without any risky reshape:
    #   logits[b] = b_fc + sum_s (Bsel_s @ h2) @ Wfc[s]
    # Bsel_s picks activation row (b*HW + s);  Wfc[s, c, a] = fc_w[c*HW + s, a].
    acc = jnp.zeros(o_ref.shape, jnp.float32)
    for s in range(wfc_ref.shape[0]):                 # HW positions, unrolled
        rows = jnp.dot(bsel_ref[s], h2, preferred_element_type=jnp.float32)
        acc = acc + jnp.dot(rows, wfc_ref[s], preferred_element_type=jnp.float32)
    o_ref[...] = acc + bfc_ref[...]


# ----------------------------------------------------------------------------
# Constant operators (built once with numpy)
# ----------------------------------------------------------------------------
def build_shift_matrices(h, w, boards_per_tile):
    """S[k] @ X implements the spatial shift for 3x3 kernel offset k (pad=1)."""
    hw = h * w
    m = boards_per_tile * hw
    s = np.zeros((9, m, m), np.float32)
    for b in range(boards_per_tile):
        for hh in range(h):
            for ww in range(w):
                r = b * hw + hh * w + ww
                for kh in range(3):
                    for kw in range(3):
                        sh, sw = hh + kh - 1, ww + kw - 1
                        if 0 <= sh < h and 0 <= sw < w:
                            s[kh * 3 + kw, r, b * hw + sh * w + sw] = 1.0
    return jnp.asarray(s)


def build_batch_select(boards_per_tile, hw):
    """Bsel[s, b, :] picks activation row (b*hw + s)."""
    sel = np.zeros((hw, boards_per_tile, boards_per_tile * hw), np.float32)
    for s in range(hw):
        for b in range(boards_per_tile):
            sel[s, b, b * hw + s] = 1.0
    return jnp.asarray(sel)


# ----------------------------------------------------------------------------
# Parameters: synthetic torch-layout weights + one-time pack to kernel layout
# ----------------------------------------------------------------------------
def init_torch_params(key, c_in, h, w, c1=64, c2=128, n_actions=4):
    """Synthetic weights in PyTorch layouts (Conv2d: [OC,C,3,3]; FC as x @ W)."""
    k1, k2, k3 = jax.random.split(key, 3)
    hw = h * w
    return {
        "conv1_w": 0.05 * jax.random.normal(k1, (c1, c_in, 3, 3), jnp.float32),
        "conv1_b": jnp.zeros((c1,), jnp.float32),
        "conv2_w": 0.05 * jax.random.normal(k2, (c2, c1, 3, 3), jnp.float32),
        "conv2_b": jnp.zeros((c2,), jnp.float32),
        "fc_w":    0.05 * jax.random.normal(k3, (c2 * hw, n_actions), jnp.float32),
        "fc_b":    jnp.zeros((n_actions,), jnp.float32),
    }


def pack_params(raw, h, w):
    """Pre-transform weights into the matmul layouts the kernel consumes (once)."""
    hw = h * w
    c1, c_in = raw["conv1_w"].shape[:2]
    c2 = raw["conv2_w"].shape[0]
    n_actions = raw["fc_w"].shape[-1]
    return {
        # [9, C_in, C_out], k = kh*3 + kw;  W_k[c, oc] = conv_w[oc, c, kh, kw]
        "w1": raw["conv1_w"].transpose(2, 3, 1, 0).reshape(9, c_in, c1),
        "b1": raw["conv1_b"].reshape(1, c1),
        "w2": raw["conv2_w"].transpose(2, 3, 1, 0).reshape(9, c1, c2),
        "b2": raw["conv2_b"].reshape(1, c2),
        # [HW, C2, A]: Wfc[s, c, a] = fc_w[c*HW + s, a]  (matches NCHW flatten)
        "wfc": raw["fc_w"].reshape(c2, hw, n_actions).transpose(1, 0, 2),
        "bfc": raw["fc_b"].reshape(1, n_actions),
    }


# ----------------------------------------------------------------------------
# Forward pass: one fused pallas_call
# ----------------------------------------------------------------------------
def my_agent_forward(packed, shift, bsel, x_nchw):
    """Equivalent of MyAgent.forward(x): [B, C, H, W] -> [B, 4] logits."""
    B, C, H, W = x_nchw.shape
    hw = H * W
    n_actions = packed["bfc"].shape[-1]
    tb = bsel.shape[1]                     # boards per grid tile (== B here)
    assert B % tb == 0, (B, tb)
    m_tile = tb * hw

    # Single tiny layout op on the input: NCHW -> rows [(b,h,w), c].
    x_rows = x_nchw.transpose(0, 2, 3, 1).reshape(B * hw, C)

    return pl.pallas_call(
        _fused_agent_kernel,
        out_shape=jax.ShapeDtypeStruct((B, n_actions), jnp.float32),
        grid=(B // tb,),
        in_specs=[
            pl.BlockSpec((m_tile, C), lambda i: (i, 0)),
            pl.BlockSpec(shift.shape, lambda i: (0, 0, 0)),
            pl.BlockSpec(packed["w1"].shape, lambda i: (0, 0, 0)),
            pl.BlockSpec(packed["b1"].shape, lambda i: (0, 0)),
            pl.BlockSpec(packed["w2"].shape, lambda i: (0, 0, 0)),
            pl.BlockSpec(packed["b2"].shape, lambda i: (0, 0)),
            pl.BlockSpec(packed["wfc"].shape, lambda i: (0, 0, 0)),
            pl.BlockSpec(packed["bfc"].shape, lambda i: (0, 0)),
            pl.BlockSpec(bsel.shape, lambda i: (0, 0, 0)),
        ],
        out_specs=pl.BlockSpec((tb, n_actions), lambda i: (i, 0)),
        compiler_params=pltpu.CompilerParams(
            dimension_semantics=("parallel",)),   # batch tiles -> v7x megacore
    )(x_rows, shift, packed["w1"], packed["b1"], packed["w2"], packed["b2"],
      packed["wfc"], packed["bfc"], bsel)


# ----------------------------------------------------------------------------
# Plain-JAX reference (same net, torch-layout weights) for validation
# ----------------------------------------------------------------------------
def reference_forward(raw, x_nchw):
    def conv(x, w, b):
        y = lax.conv_general_dilated(
            x, w, window_strides=(1, 1), padding=((1, 1), (1, 1)),
            dimension_numbers=("NCHW", "OIHW", "NCHW"))
        return jnp.maximum(y + b[None, :, None, None], 0.0)

    h1 = conv(x_nchw, raw["conv1_w"], raw["conv1_b"])
    h2 = conv(h1, raw["conv2_w"], raw["conv2_b"])
    flat = h2.reshape(x_nchw.shape[0], -1)          # torch-style NCHW flatten
    return flat @ raw["fc_w"] + raw["fc_b"]


if __name__ == "__main__":
    # 2048 board: 4x4 spatial grid, 16 one-hot tile channels, small batch.
    B, C, H, W = 2, 16, 4, 4
    key = jax.random.PRNGKey(0)
    kx, kp = jax.random.split(key)
    x = jax.random.normal(kx, (B, C, H, W), jnp.float32)

    raw = init_torch_params(kp, C, H, W)
    packed = pack_params(raw, H, W)
    shift = build_shift_matrices(H, W, boards_per_tile=B)
    bsel = build_batch_select(B, H * W)

    fwd = jax.jit(my_agent_forward)
    logits = jax.block_until_ready(fwd(packed, shift, bsel, x))

    assert logits.shape == (B, 4), logits.shape
    assert bool(jnp.all(jnp.isfinite(logits)))

    # Cross-check the fused kernel against the plain-JAX reference.
    ref = jax.jit(reference_forward)(raw, x)
    tol = 5e-2 * max(1.0, float(jnp.max(jnp.abs(ref))))
    err = float(jnp.max(jnp.abs(logits - ref)))
    assert err < tol, f"max |err| = {err} (tol {tol})"

    print("KERNEL_OK")
</pallas_src>

<mosaic_0001>
module attributes {stable_mosaic.version = 11 : i64} {
  func.func @_fused_agent_kernel(%arg0: i32, %arg1: memref<32x16xf32, #tpu.memory_space<vmem>>, %arg2: memref<9x32x32xf32, #tpu.memory_space<vmem>>, %arg3: memref<9x16x64xf32, #tpu.memory_space<vmem>>, %arg4: memref<1x64xf32, #tpu.memory_space<vmem>>, %arg5: memref<9x64x128xf32, #tpu.memory_space<vmem>>, %arg6: memref<1x128xf32, #tpu.memory_space<vmem>>, %arg7: memref<16x128x4xf32, #tpu.memory_space<vmem>>, %arg8: memref<1x4xf32, #tpu.memory_space<vmem>>, %arg9: memref<16x2x32xf32, #tpu.memory_space<vmem>>, %arg10: memref<2x4xf32, #tpu.memory_space<vmem>>) attributes {dimension_semantics = [#tpu.dimension_semantics<parallel>], iteration_bounds = array<i64: 1>, scalar_prefetch = 0 : i64, scratch_operands = 0 : i64, tpu.core_type = #tpu.core_type<tc>, window_params = [{transform_indices = @transform_0, window_bounds = array<i64: 32, 16>}, {pipeline_mode = #tpu.pipeline_mode<synchronous>, transform_indices = @transform_1, window_bounds = array<i64: 9, 32, 32>}, {pipeline_mode = #tpu.pipeline_mode<synchronous>, transform_indices = @transform_2, window_bounds = array<i64: 9, 16, 64>}, {pipeline_mode = #tpu.pipeline_mode<synchronous>, transform_indices = @transform_3, window_bounds = array<i64: 1, 64>}, {pipeline_mode = #tpu.pipeline_mode<synchronous>, transform_indices = @transform_4, window_bounds = array<i64: 9, 64, 128>}, {pipeline_mode = #tpu.pipeline_mode<synchronous>, transform_indices = @transform_5, window_bounds = array<i64: 1, 128>}, {pipeline_mode = #tpu.pipeline_mode<synchronous>, transform_indices = @transform_6, window_bounds = array<i64: 16, 128, 4>}, {pipeline_mode = #tpu.pipeline_mode<synchronous>, transform_indices = @transform_7, window_bounds = array<i64: 1, 4>}, {pipeline_mode = #tpu.pipeline_mode<synchronous>, transform_indices = @transform_8, window_bounds = array<i64: 16, 2, 32>}, {transform_indices = @transform_9, window_bounds = array<i64: 2, 4>}]} {
    %c0 = arith.constant 0 : index
    %c0_0 = arith.constant 0 : index
    %0 = vector.load %arg1[%c0, %c0_0] : memref<32x16xf32, #tpu.memory_space<vmem>>, vector<32x16xf32>
    %cst = arith.constant 0.000000e+00 : f32
    %1 = vector.broadcast %cst : f32 to vector<32x64xf32>
    %c0_1 = arith.constant 0 : index
    %c0_2 = arith.constant 0 : index
    %c0_3 = arith.constant 0 : index
    %2 = vector.load %arg2[%c0_1, %c0_2, %c0_3] : memref<9x32x32xf32, #tpu.memory_space<vmem>>, vector<1x32x32xf32>
    %3 = vector.shape_cast %2 : vector<1x32x32xf32> to vector<32x32xf32>
    %cst_4 = arith.constant dense<0.000000e+00> : vector<32x16xf32>
    %4 = tpu.matmul %3, %0, %cst_4 {dimension_numbers = #tpu.dot_dimension_numbers<[1], [0], [0], [1], [0, 0, 1, 1], [], []>} : vector<32x32xf32>, vector<32x16xf32>, vector<32x16xf32> -> vector<32x16xf32>
    %c0_5 = arith.constant 0 : index
    %c0_6 = arith.constant 0 : index
    %c0_7 = arith.constant 0 : index
    %5 = vector.load %arg3[%c0_5, %c0_6, %c0_7] : memref<9x16x64xf32, #tpu.memory_space<vmem>>, vector<1x16x64xf32>
    %6 = vector.shape_cast %5 : vector<1x16x64xf32> to vector<16x64xf32>
    %cst_8 = arith.constant dense<0.000000e+00> : vector<32x64xf32>
    %7 = tpu.matmul %4, %6, %cst_8 {dimension_numbers = #tpu.dot_dimension_numbers<[1], [0], [0], [1], [0, 0, 1, 1], [], []>} : vector<32x16xf32>, vector<16x64xf32>, vector<32x64xf32> -> vector<32x64xf32>
    %8 = arith.addf %1, %7 : vector<32x64xf32>
    %c1 = arith.constant 1 : index
    %c0_9 = arith.constant 0 : index
    %c0_10 = arith.constant 0 : index
    %9 = vector.load %arg2[%c1, %c0_9, %c0_10] : memref<9x32x32xf32, #tpu.memory_space<vmem>>, vector<1x32x32xf32>
    %10 = vector.shape_cast %9 : vector<1x32x32xf32> to vector<32x32xf32>
    %cst_11 = arith.constant dense<0.000000e+00> : vector<32x16xf32>
    %11 = tpu.matmul %10, %0, %cst_11 {dimension_numbers = #tpu.dot_dimension_numbers<[1], [0], [0], [1], [0, 0, 1, 1], [], []>} : vector<32x32xf32>, vector<32x16xf32>, vector<32x16xf32> -> vector<32x16xf32>
    %c1_12 = arith.constant 1 : index
    %c0_13 = arith.constant 0 : index
    %c0_14 = arith.constant 0 : index
    %12 = vector.load %arg3[%c1_12, %c0_13, %c0_14] : memref<9x16x64xf32, #tpu.memory_space<vmem>>, vector<1x16x64xf32>
    %13 = vector.shape_cast %12 : vector<1x16x64xf32> to vector<16x64xf32>
    %cst_15 = arith.constant dense<0.000000e+00> : vector<32x64xf32>
    %14 = tpu.matmul %11, %13, %cst_15 {dimension_numbers = #tpu.dot_dimension_numbers<[1], [0], [0], [1], [0, 0, 1, 1], [], []>} : vector<32x16xf32>, vector<16x64xf32>, vector<32x64xf32> -> vector<32x64xf32>
    %15 = arith.addf %8, %14 : vector<32x64xf32>
    %c2 = arith.constant 2 : index
    %c0_16 = arith.constant 0 : index
    %c0_17 = arith.constant 0 : index
    %16 = vector.load %arg2[%c2, %c0_16, %c0_17] : memref<9x32x32xf32, #tpu.memory_space<vmem>>, vector<1x32x32xf32>
    %17 = vector.shape_cast %16 : vector<1x32x32xf32> to vector<32x32xf32>
    %cst_18 = arith.constant dense<0.000000e+00> : vector<32x16xf32>
    %18 = tpu.matmul %17, %0, %cst_18 {dimension_numbers = #tpu.dot_dimension_numbers<[1], [0], [0], [1], [0, 0, 1, 1], [], []>} : vector<32x32xf32>, vector<32x16xf32>, vector<32x16xf32> -> vector<32x16xf32>
    %c2_19 = arith.constant 2 : index
    %c0_20 = arith.constant 0 : index
    %c0_21 = arith.constant 0 : index
    %19 = vector.load %arg3[%c2_19, %c0_20, %c0_21] : memref<9x16x64xf32, #tpu.memory_space<vmem>>, vector<1x16x64xf32>
    %20 = vector.shape_cast %19 : vector<1x16x64xf32> to vector<16x64xf32>
    %cst_22 = arith.constant dense<0.000000e+00> : vector<32x64xf32>
    %21 = tpu.matmul %18, %20, %cst_22 {dimension_numbers = #tpu.dot_dimension_numbers<[1], [0], [0], [1], [0, 0, 1, 1], [], []>} : vector<32x16xf32>, vector<16x64xf32>, vector<32x64xf32> -> vector<32x64xf32>
    %22 = arith.addf %15, %21 : vector<32x64xf32>
    %c3 = arith.constant 3 : index
    %c0_23 = arith.constant 0 : index
    %c0_24 = arith.constant 0 : index
    %23 = vector.load %arg2[%c3, %c0_23, %c0_24] : memref<9x32x32xf32, #tpu.memory_space<vmem>>, vector<1x32x32xf32>
    %24 = vector.shape_cast %23 : vector<1x32x32xf32> to vector<32x32xf32>
    %cst_25 = arith.constant dense<0.000000e+00> : vector<32x16xf32>
    %25 = tpu.matmul %24, %0, %cst_25 {dimension_numbers = #tpu.dot_dimension_numbers<[1], [0], [0], [1], [0, 0, 1, 1], [], []>} : vector<32x32xf32>, vector<32x16xf32>, vector<32x16xf32> -> vector<32x16xf32>
    %c3_26 = arith.constant 3 : index
    %c0_27 = arith.constant 0 : index
    %c0_28 = arith.constant 0 : index
    %26 = vector.load %arg3[%c3_26, %c0_27, %c0_28] : memref<9x16x64xf32, #tpu.memory_space<vmem>>, vector<1x16x64xf32>
    %27 = vector.shape_cast %26 : vector<1x16x64xf32> to vector<16x64xf32>
    %cst_29 = arith.constant dense<0.000000e+00> : vector<32x64xf32>
    %28 = tpu.matmul %25, %27, %cst_29 {dimension_numbers = #tpu.dot_dimension_numbers<[1], [0], [0], [1], [0, 0, 1, 1], [], []>} : vector<32x16xf32>, vector<16x64xf32>, vector<32x64xf32> -> vector<32x64xf32>
    %29 = arith.addf %22, %28 : vector<32x64xf32>
    %c4 = arith.constant 4 : index
    %c0_30 = arith.constant 0 : index
    %c0_31 = arith.constant 0 : index
    %30 = vector.load %arg2[%c4, %c0_30, %c0_31] : memref<9x32x32xf32, #tpu.memory_space<vmem>>, vector<1x32x32xf32>
    %31 = vector.shape_cast %30 : vector<1x32x32xf32> to vector<32x32xf32>
    %cst_32 = arith.constant dense<0.000000e+00> : vector<32x16xf32>
    %32 = tpu.matmul %31, %0, %cst_32 {dimension_numbers = #tpu.dot_dimension_numbers<[1], [0], [0], [1], [0, 0, 1, 1], [], []>} : vector<32x32xf32>, vector<32x16xf32>, vector<32x16xf32> -> vector<32x16xf32>
    %c4_33 = arith.constant 4 : index
    %c0_34 = arith.constant 0 : index
    %c0_35 = arith.constant 0 : index
    %33 = vector.load %arg3[%c4_33, %c0_34, %c0_35] : memref<9x16x64xf32, #tpu.memory_space<vmem>>, vector<1x16x64xf32>
    %34 = vector.shape_cast %33 : vector<1x16x64xf32> to vector<16x64xf32>
    %cst_36 = arith.constant dense<0.000000e+00> : vector<32x64xf32>
    %35 = tpu.matmul %32, %34, %cst_36 {dimension_numbers = #tpu.dot_dimension_numbers<[1], [0], [0], [1], [0, 0, 1, 1], [], []>} : vector<32x16xf32>, vector<16x64xf32>, vector<32x64xf32> -> vector<32x64xf32>
    %36 = arith.addf %29, %35 : vector<32x64xf32>
    %c5 = arith.constant 5 : index
    %c0_37 = arith.constant 0 : index
    %c0_38 = arith.constant 0 : index
    %37 = vector.load %arg2[%c5, %c0_37, %c0_38] : memref<9x32x32xf32, #tpu.memory_space<vmem>>, vector<1x32x32xf32>
    %38 = vector.shape_cast %37 : vector<1x32x32xf32> to vector<32x32xf32>
    %cst_39 = arith.constant dense<0.000000e+00> : vector<32x16xf32>
    %39 = tpu.matmul %38, %0, %cst_39 {dimension_numbers = #tpu.dot_dimension_numbers<[1], [0], [0], [1], [0, 0, 1, 1], [], []>} : vector<32x32xf32>, vector<32x16xf32>, vector<32x16xf32> -> vector<32x16xf32>
    %c5_40 = arith.constant 5 : index
    %c0_41 = arith.constant 0 : index
    %c0_42 = arith.constant 0 : index
    %40 = vector.load %arg3[%c5_40, %c0_41, %c0_42] : memref<9x16x64xf32, #tpu.memory_space<vmem>>, vector<1x16x64xf32>
    %41 = vector.shape_cast %40 : vector<1x16x64xf32> to vector<16x64xf32>
    %cst_43 = arith.constant dense<0.000000e+00> : vector<32x64xf32>
    %42 = tpu.matmul %39, %41, %cst_43 {dimension_numbers = #tpu.dot_dimension_numbers<[1], [0], [0], [1], [0, 0, 1, 1], [], []>} : vector<32x16xf32>, vector<16x64xf32>, vector<32x64xf32> -> vector<32x64xf32>
    %43 = arith.addf %36, %42 : vector<32x64xf32>
    %c6 = arith.constant 6 : index
    %c0_44 = arith.constant 0 : index
    %c0_45 = arith.constant 0 : index
    %44 = vector.load %arg2[%c6, %c0_44, %c0_45] : memref<9x32x32xf32, #tpu.memory_space<vmem>>, vector<1x32x32xf32>
    %45 = vector.shape_cast %44 : vector<1x32x32xf32> to vector<32x32xf32>
    %cst_46 = arith.constant dense<0.000000e+00> : vector<32x16xf32>
    %46 = tpu.matmul %45, %0, %cst_46 {dimension_numbers = #tpu.dot_dimension_numbers<[1], [0], [0], [1], [0, 0, 1, 1], [], []>} : vector<32x32xf32>, vector<32x16xf32>, vector<32x16xf32> -> vector<32x16xf32>
    %c6_47 = arith.constant 6 : index
    %c0_48 = arith.constant 0 : index
    %c0_49 = arith.constant 0 : index
    %47 = vector.load %arg3[%c6_47, %c0_48, %c0_49] : memref<9x16x64xf32, #tpu.memory_space<vmem>>, vector<1x16x64xf32>
    %48 = vector.shape_cast %47 : vector<1x16x64xf32> to vector<16x64xf32>
    %cst_50 = arith.constant dense<0.000000e+00> : vector<32x64xf32>
    %49 = tpu.matmul %46, %48, %cst_50 {dimension_numbers = #tpu.dot_dimension_numbers<[1], [0], [0], [1], [0, 0, 1, 1], [], []>} : vector<32x16xf32>, vector<16x64xf32>, vector<32x64xf32> -> vector<32x64xf32>
    %50 = arith.addf %43, %49 : vector<32x64xf32>
    %c7 = arith.constant 7 : index
    %c0_51 = arith.constant 0 : index
    %c0_52 = arith.constant 0 : index
    %51 = vector.load %arg2[%c7, %c0_51, %c0_52] : memref<9x32x32xf32, #tpu.memory_space<vmem>>, vector<1x32x32xf32>
    %52 = vector.shape_cast %51 : vector<1x32x32xf32> to vector<32x32xf32>
    %cst_53 = arith.constant dense<0.000000e+00> : vector<32x16xf32>
    %53 = tpu.matmul %52, %0, %cst_53 {dimension_numbers = #tpu.dot_dimension_numbers<[1], [0], [0], [1], [0, 0, 1, 1], [], []>} : vector<32x32xf32>, vector<32x16xf32>, vector<32x16xf32> -> vector<32x16xf32>
    %c7_54 = arith.constant 7 : index
    %c0_55 = arith.constant 0 : index
    %c0_56 = arith.constant 0 : index
    %54 = vector.load %arg3[%c7_54, %c0_55, %c0_56] : memref<9x16x64xf32, #tpu.memory_space<vmem>>, vector<1x16x64xf32>
    %55 = vector.shape_cast %54 : vector<1x16x64xf32> to vector<16x64xf32>
    %cst_57 = arith.constant dense<0.000000e+00> : vector<32x64xf32>
    %56 = tpu.matmul %53, %55, %cst_57 {dimension_numbers = #tpu.dot_dimension_numbers<[1], [0], [0], [1], [0, 0, 1, 1], [], []>} : vector<32x16xf32>, vector<16x64xf32>, vector<32x64xf32> -> vector<32x64xf32>
    %57 = arith.addf %50, %56 : vector<32x64xf32>
    %c8 = arith.constant 8 : index
    %c0_58 = arith.constant 0 : index
    %c0_59 = arith.constant 0 : index
    %58 = vector.load %arg2[%c8, %c0_58, %c0_59] : memref<9x32x32xf32, #tpu.memory_space<vmem>>, vector<1x32x32xf32>
    %59 = vector.shape_cast %58 : vector<1x32x32xf32> to vector<32x32xf32>
    %cst_60 = arith.constant dense<0.000000e+00> : vector<32x16xf32>
    %60 = tpu.matmul %59, %0, %cst_60 {dimension_numbers = #tpu.dot_dimension_numbers<[1], [0], [0], [1], [0, 0, 1, 1], [], []>} : vector<32x32xf32>, vector<32x16xf32>, vector<32x16xf32> -> vector<32x16xf32>
    %c8_61 = arith.constant 8 : index
    %c0_62 = arith.constant 0 : index
    %c0_63 = arith.constant 0 : index
    %61 = vector.load %arg3[%c8_61, %c0_62, %c0_63] : memref<9x16x64xf32, #tpu.memory_space<vmem>>, vector<1x16x64xf32>
    %62 = vector.shape_cast %61 : vector<1x16x64xf32> to vector<16x64xf32>
    %cst_64 = arith.constant dense<0.000000e+00> : vector<32x64xf32>
    %63 = tpu.matmul %60, %62, %cst_64 {dimension_numbers = #tpu.dot_dimension_numbers<[1], [0], [0], [1], [0, 0, 1, 1], [], []>} : vector<32x16xf32>, vector<16x64xf32>, vector<32x64xf32> -> vector<32x64xf32>
    %64 = arith.addf %57, %63 : vector<32x64xf32>
    %c0_65 = arith.constant 0 : index
    %c0_66 = arith.constant 0 : index
    %65 = vector.load %arg4[%c0_65, %c0_66] : memref<1x64xf32, #tpu.memory_space<vmem>>, vector<1x64xf32>
    %66 = vector.broadcast %65 : vector<1x64xf32> to vector<32x64xf32>
    %67 = arith.addf %64, %66 : vector<32x64xf32>
    %cst_67 = arith.constant 0.000000e+00 : f32
    %68 = vector.broadcast %cst_67 : f32 to vector<32x64xf32>
    %69 = arith.maximumf %67, %68 : vector<32x64xf32>
    %cst_68 = arith.constant 0.000000e+00 : f32
    %70 = vector.broadcast %cst_68 : f32 to vector<32x128xf32>
    %c0_69 = arith.constant 0 : index
    %c0_70 = arith.constant 0 : index
    %c0_71 = arith.constant 0 : index
    %71 = vector.load %arg2[%c0_69, %c0_70, %c0_71] : memref<9x32x32xf32, #tpu.memory_space<vmem>>, vector<1x32x32xf32>
    %72 = vector.shape_cast %71 : vector<1x32x32xf32> to vector<32x32xf32>
    %cst_72 = arith.constant dense<0.000000e+00> : vector<32x64xf32>
    %73 = tpu.matmul %72, %69, %cst_72 {dimension_numbers = #tpu.dot_dimension_numbers<[1], [0], [0], [1], [0, 0, 1, 1], [], []>} : vector<32x32xf32>, vector<32x64xf32>, vector<32x64xf32> -> vector<32x64xf32>
    %c0_73 = arith.constant 0 : index
    %c0_74 = arith.constant 0 : index
    %c0_75 = arith.constant 0 : index
    %74 = vector.load %arg5[%c0_73, %c0_74, %c0_75] : memref<9x64x128xf32, #tpu.memory_space<vmem>>, vector<1x64x128xf32>
    %75 = vector.shape_cast %74 : vector<1x64x128xf32> to vector<64x128xf32>
    %cst_76 = arith.constant dense<0.000000e+00> : vector<32x128xf32>
    %76 = tpu.matmul %73, %75, %cst_76 {dimension_numbers = #tpu.dot_dimension_numbers<[1], [0], [0], [1], [0, 0, 1, 1], [], []>} : vector<32x64xf32>, vector<64x128xf32>, vector<32x128xf32> -> vector<32x128xf32>
    %77 = arith.addf %70, %76 : vector<32x128xf32>
    %c1_77 = arith.constant 1 : index
    %c0_78 = arith.constant 0 : index
    %c0_79 = arith.constant 0 : index
    %78 = vector.load %arg2[%c1_77, %c0_78, %c0_79] : memref<9x32x32xf32, #tpu.memory_space<vmem>>, vector<1x32x32xf32>
    %79 = vector.shape_cast %78 : vector<1x32x32xf32> to vector<32x32xf32>
    %cst_80 = arith.constant dense<0.000000e+00> : vector<32x64xf32>
    %80 = tpu.matmul %79, %69, %cst_80 {dimension_numbers = #tpu.dot_dimension_numbers<[1], [0], [0], [1], [0, 0, 1, 1], [], []>} : vector<32x32xf32>, vector<32x64xf32>, vector<32x64xf32> -> vector<32x64xf32>
    %c1_81 = arith.constant 1 : index
    %c0_82 = arith.constant 0 : index
    %c0_83 = arith.constant 0 : index
    %81 = vector.load %arg5[%c1_81, %c0_82, %c0_83] : memref<9x64x128xf32, #tpu.memory_space<vmem>>, vector<1x64x128xf32>
    %82 = vector.shape_cast %81 : vector<1x64x128xf32> to vector<64x128xf32>
    %cst_84 = arith.constant dense<0.000000e+00> : vector<32x128xf32>
    %83 = tpu.matmul %80, %82, %cst_84 {dimension_numbers = #tpu.dot_dimension_numbers<[1], [0], [0], [1], [0, 0, 1, 1], [], []>} : vector<32x64xf32>, vector<64x128xf32>, vector<32x128xf32> -> vector<32x128xf32>
    %84 = arith.addf %77, %83 : vector<32x128xf32>
    %c2_85 = arith.constant 2 : index
    %c0_86 = arith.constant 0 : index
    %c0_87 = arith.constant 0 : index
    %85 = vector.load %arg2[%c2_85, %c0_86, %c0_87] : memref<9x32x32xf32, #tpu.memory_space<vmem>>, vector<1x32x32xf32>
    %86 = vector.shape_cast %85 : vector<1x32x32xf32> to vector<32x32xf32>
    %cst_88 = arith.constant dense<0.000000e+00> : vector<32x64xf32>
    %87 = tpu.matmul %86, %69, %cst_88 {dimension_numbers = #tpu.dot_dimension_numbers<[1], [0], [0], [1], [0, 0, 1, 1], [], []>} : vector<32x32xf32>, vector<32x64xf32>, vector<32x64xf32> -> vector<32x64xf32>
    %c2_89 = arith.constant 2 : index
    %c0_90 = arith.constant 0 : index
    %c0_91 = arith.constant 0 : index
    %88 = vector.load %arg5[%c2_89, %c0_90, %c0_91] : memref<9x64x128xf32, #tpu.memory_space<vmem>>, vector<1x64x128xf32>
    %89 = vector.shape_cast %88 : vector<1x64x128xf32> to vector<64x128xf32>
    %cst_92 = arith.constant dense<0.000000e+00> : vector<32x128xf32>
    %90 = tpu.matmul %87, %89, %cst_92 {dimension_numbers = #tpu.dot_dimension_numbers<[1], [0], [0], [1], [0, 0, 1, 1], [], []>} : vector<32x64xf32>, vector<64x128xf32>, vector<32x128xf32> -> vector<32x128xf32>
    %91 = arith.addf %84, %90 : vector<32x128xf32>
    %c3_93 = arith.constant 3 : index
    %c0_94 = arith.constant 0 : index
    %c0_95 = arith.constant 0 : index
    %92 = vector.load %arg2[%c3_93, %c0_94, %c0_95] : memref<9x32x32xf32, #tpu.memory_space<vmem>>, vector<1x32x32xf32>
    %93 = vector.shape_cast %92 : vector<1x32x32xf32> to vector<32x32xf32>
    %cst_96 = arith.constant dense<0.000000e+00> : vector<32x64xf32>
    %94 = tpu.matmul %93, %69, %cst_96 {dimension_numbers = #tpu.dot_dimension_numbers<[1], [0], [0], [1], [0, 0, 1, 1], [], []>} : vector<32x32xf32>, vector<32x64xf32>, vector<32x64xf32> -> vector<32x64xf32>
    %c3_97 = arith.constant 3 : index
    %c0_98 = arith.constant 0 : index
    %c0_99 = arith.constant 0 : index
    %95 = vector.load %arg5[%c3_97, %c0_98, %c0_99] : memref<9x64x128xf32, #tpu.memory_space<vmem>>, vector<1x64x128xf32>
    %96 = vector.shape_cast %95 : vector<1x64x128xf32> to vector<64x128xf32>
    %cst_100 = arith.constant dense<0.000000e+00> : vector<32x128xf32>
    %97 = tpu.matmul %94, %96, %cst_100 {dimension_numbers = #tpu.dot_dimension_numbers<[1], [0], [0], [1], [0, 0, 1, 1], [], []>} : vector<32x64xf32>, vector<64x128xf32>, vector<32x128xf32> -> vector<32x128xf32>
    %98 = arith.addf %91, %97 : vector<32x128xf32>
    %c4_101 = arith.constant 4 : index
    %c0_102 = arith.constant 0 : index
    %c0_103 = arith.constant 0 : index
    %99 = vector.load %arg2[%c4_101, %c0_102, %c0_103] : memref<9x32x32xf32, #tpu.memory_space<vmem>>, vector<1x32x32xf32>
    %100 = vector.shape_cast %99 : vector<1x32x32xf32> to vector<32x32xf32>
    %cst_104 = arith.constant dense<0.000000e+00> : vector<32x64xf32>
    %101 = tpu.matmul %100, %69, %cst_104 {dimension_numbers = #tpu.dot_dimension_numbers<[1], [0], [0], [1], [0, 0, 1, 1], [], []>} : vector<32x32xf32>, vector<32x64xf32>, vector<32x64xf32> -> vector<32x64xf32>
    %c4_105 = arith.constant 4 : index
    %c0_106 = arith.constant 0 : index
    %c0_107 = arith.constant 0 : index
    %102 = vector.load %arg5[%c4_105, %c0_106, %c0_107] : memref<9x64x128xf32, #tpu.memory_space<vmem>>, vector<1x64x128xf32>
    %103 = vector.shape_cast %102 : vector<1x64x128xf32> to vector<64x128xf32>
    %cst_108 = arith.constant dense<0.000000e+00> : vector<32x128xf32>
    %104 = tpu.matmul %101, %103, %cst_108 {dimension_numbers = #tpu.dot_dimension_numbers<[1], [0], [0], [1], [0, 0, 1, 1], [], []>} : vector<32x64xf32>, vector<64x128xf32>, vector<32x128xf32> -> vector<32x128xf32>
    %105 = arith.addf %98, %104 : vector<32x128xf32>
    %c5_109 = arith.constant 5 : index
    %c0_110 = arith.constant 0 : index
    %c0_111 = arith.constant 0 : index
    %106 = vector.load %arg2[%c5_109, %c0_110, %c0_111] : memref<9x32x32xf32, #tpu.memory_space<vmem>>, vector<1x32x32xf32>
    %107 = vector.shape_cast %106 : vector<1x32x32xf32> to vector<32x32xf32>
    %cst_112 = arith.constant dense<0.000000e+00> : vector<32x64xf32>
    %108 = tpu.matmul %107, %69, %cst_112 {dimension_numbers = #tpu.dot_dimension_numbers<[1], [0], [0], [1], [0, 0, 1, 1], [], []>} : vector<32x32xf32>, vector<32x64xf32>, vector<32x64xf32> -> vector<32x64xf32>
    %c5_113 = arith.constant 5 : index
    %c0_114 = arith.constant 0 : index
    %c0_115 = arith.constant 0 : index
    %109 = vector.load %arg5[%c5_113, %c0_114, %c0_115] : memref<9x64x128xf32, #tpu.memory_space<vmem>>, vector<1x64x128xf32>
    %110 = vector.shape_cast %109 : vector<1x64x128xf32> to vector<64x128xf32>
    %cst_116 = arith.constant dense<0.000000e+00> : vector<32x128xf32>
    %111 = tpu.matmul %108, %110, %cst_116 {dimension_numbers = #tpu.dot_dimension_numbers<[1], [0], [0], [1], [0, 0, 1, 1], [], []>} : vector<32x64xf32>, vector<64x128xf32>, vector<32x128xf32> -> vector<32x128xf32>
    %112 = arith.addf %105, %111 : vector<32x128xf32>
    %c6_117 = arith.constant 6 : index
    %c0_118 = arith.constant 0 : index
    %c0_119 = arith.constant 0 : index
    %113 = vector.load %arg2[%c6_117, %c0_118, %c0_119] : memref<9x32x32xf32, #tpu.memory_space<vmem>>, vector<1x32x32xf32>
    %114 = vector.shape_cast %113 : vector<1x32x32xf32> to vector<32x32xf32>
    %cst_120 = arith.constant dense<0.000000e+00> : vector<32x64xf32>
    %115 = tpu.matmul %114, %69, %cst_120 {dimension_numbers = #tpu.dot_dimension_numbers<[1], [0], [0], [1], [0, 0, 1, 1], [], []>} : vector<32x32xf32>, vector<32x64xf32>, vector<32x64xf32> -> vector<32x64xf32>
    %c6_121 = arith.constant 6 : index
    %c0_122 = arith.constant 0 : index
    %c0_123 = arith.constant 0 : index
    %116 = vector.load %arg5[%c6_121, %c0_122, %c0_123] : memref<9x64x128xf32, #tpu.memory_space<vmem>>, vector<1x64x128xf32>
    %117 = vector.shape_cast %116 : vector<1x64x128xf32> to vector<64x128xf32>
    %cst_124 = arith.constant dense<0.000000e+00> : vector<32x128xf32>
    %118 = tpu.matmul %115, %117, %cst_124 {dimension_numbers = #tpu.dot_dimension_numbers<[1], [0], [0], [1], [0, 0, 1, 1], [], []>} : vector<32x64xf32>, vector<64x128xf32>, vector<32x128xf32> -> vector<32x128xf32>
    %119 = arith.addf %112, %118 : vector<32x128xf32>
    %c7_125 = arith.constant 7 : index
    %c0_126 = arith.constant 0 : index
    %c0_127 = arith.constant 0 : index
    %120 = vector.load %arg2[%c7_125, %c0_126, %c0_127] : memref<9x32x32xf32, #tpu.memory_space<vmem>>, vector<1x32x32xf32>
    %121 = vector.shape_cast %120 : vector<1x32x32xf32> to vector<32x32xf32>
    %cst_128 = arith.constant dense<0.000000e+00> : vector<32x64xf32>
    %122 = tpu.matmul %121, %69, %cst_128 {dimension_numbers = #tpu.dot_dimension_numbers<[1], [0], [0], [1], [0, 0, 1, 1], [], []>} : vector<32x32xf32>, vector<32x64xf32>, vector<32x64xf32> -> vector<32x64xf32>
    %c7_129 = arith.constant 7 : index
    %c0_130 = arith.constant 0 : index
    %c0_131 = arith.constant 0 : index
    %123 = vector.load %arg5[%c7_129, %c0_130, %c0_131] : memref<9x64x128xf32, #tpu.memory_space<vmem>>, vector<1x64x128xf32>
    %124 = vector.shape_cast %123 : vector<1x64x128xf32> to vector<64x128xf32>
    %cst_132 = arith.constant dense<0.000000e+00> : vector<32x128xf32>
    %125 = tpu.matmul %122, %124, %cst_132 {dimension_numbers = #tpu.dot_dimension_numbers<[1], [0], [0], [1], [0, 0, 1, 1], [], []>} : vector<32x64xf32>, vector<64x128xf32>, vector<32x128xf32> -> vector<32x128xf32>
    %126 = arith.addf %119, %125 : vector<32x128xf32>
    %c8_133 = arith.constant 8 : index
    %c0_134 = arith.constant 0 : index
    %c0_135 = arith.constant 0 : index
    %127 = vector.load %arg2[%c8_133, %c0_134, %c0_135] : memref<9x32x32xf32, #tpu.memory_space<vmem>>, vector<1x32x32xf32>
    %128 = vector.shape_cast %127 : vector<1x32x32xf32> to vector<32x32xf32>
    %cst_136 = arith.constant dense<0.000000e+00> : vector<32x64xf32>
    %129 = tpu.matmul %128, %69, %cst_136 {dimension_numbers = #tpu.dot_dimension_numbers<[1], [0], [0], [1], [0, 0, 1, 1], [], []>} : vector<32x32xf32>, vector<32x64xf32>, vector<32x64xf32> -> vector<32x64xf32>
    %c8_137 = arith.constant 8 : index
    %c0_138 = arith.constant 0 : index
    %c0_139 = arith.constant 0 : index
    %130 = vector.load %arg5[%c8_137, %c0_138, %c0_139] : memref<9x64x128xf32, #tpu.memory_space<vmem>>, vector<1x64x128xf32>
    %131 = vector.shape_cast %130 : vector<1x64x128xf32> to vector<64x128xf32>
    %cst_140 = arith.constant dense<0.000000e+00> : vector<32x128xf32>
    %132 = tpu.matmul %129, %131, %cst_140 {dimension_numbers = #tpu.dot_dimension_numbers<[1], [0], [0], [1], [0, 0, 1, 1], [], []>} : vector<32x64xf32>, vector<64x128xf32>, vector<32x128xf32> -> vector<32x128xf32>
    %133 = arith.addf %126, %132 : vector<32x128xf32>
    %c0_141 = arith.constant 0 : index
    %c0_142 = arith.constant 0 : index
    %134 = vector.load %arg6[%c0_141, %c0_142] : memref<1x128xf32, #tpu.memory_space<vmem>>, vector<1x128xf32>
    %135 = vector.broadcast %134 : vector<1x128xf32> to vector<32x128xf32>
    %136 = arith.addf %133, %135 : vector<32x128xf32>
    %cst_143 = arith.constant 0.000000e+00 : f32
    %137 = vector.broadcast %cst_143 : f32 to vector<32x128xf32>
    %138 = arith.maximumf %136, %137 : vector<32x128xf32>
    %cst_144 = arith.constant 0.000000e+00 : f32
    %139 = vector.broadcast %cst_144 : f32 to vector<2x4xf32>
    %c0_145 = arith.constant 0 : index
    %c0_146 = arith.constant 0 : index
    %c0_147 = arith.constant 0 : index
    %140 = vector.load %arg9[%c0_145, %c0_146, %c0_147] : memref<16x2x32xf32, #tpu.memory_space<vmem>>, vector<1x2x32xf32>
    %141 = vector.shape_cast %140 : vector<1x2x32xf32> to vector<2x32xf32>
    %cst_148 = arith.constant dense<0.000000e+00> : vector<2x128xf32>
    %142 = tpu.matmul %141, %138, %cst_148 {dimension_numbers = #tpu.dot_dimension_numbers<[1], [0], [0], [1], [0, 0, 1, 1], [], []>} : vector<2x32xf32>, vector<32x128xf32>, vector<2x128xf32> -> vector<2x128xf32>
    %c0_149 = arith.constant 0 : index
    %c0_150 = arith.constant 0 : index
    %c0_151 = arith.constant 0 : index
    %143 = vector.load %arg7[%c0_149, %c0_150, %c0_151] : memref<16x128x4xf32, #tpu.memory_space<vmem>>, vector<1x128x4xf32>
    %144 = vector.shape_cast %143 : vector<1x128x4xf32> to vector<128x4xf32>
    %cst_152 = arith.constant dense<0.000000e+00> : vector<2x4xf32>
    %145 = tpu.matmul %142, %144, %cst_152 {dimension_numbers = #tpu.dot_dimension_numbers<[1], [0], [0], [1], [0, 0, 1, 1], [], []>} : vector<2x128xf32>, vector<128x4xf32>, vector<2x4xf32> -> vector<2x4xf32>
    %146 = arith.addf %139, %145 : vector<2x4xf32>
    %c1_153 = arith.constant 1 : index
    %c0_154 = arith.constant 0 : index
    %c0_155 = arith.constant 0 : index
    %147 = vector.load %arg9[%c1_153, %c0_154, %c0_155] : memref<16x2x32xf32, #tpu.memory_space<vmem>>, vector<1x2x32xf32>
    %148 = vector.shape_cast %147 : vector<1x2x32xf32> to vector<2x32xf32>
    %cst_156 = arith.constant dense<0.000000e+00> : vector<2x128xf32>
    %149 = tpu.matmul %148, %138, %cst_156 {dimension_numbers = #tpu.dot_dimension_numbers<[1], [0], [0], [1], [0, 0, 1, 1], [], []>} : vector<2x32xf32>, vector<32x128xf32>, vector<2x128xf32> -> vector<2x128xf32>
    %c1_157 = arith.constant 1 : index
    %c0_158 = arith.constant 0 : index
    %c0_159 = arith.constant 0 : index
    %150 = vector.load %arg7[%c1_157, %c0_158, %c0_159] : memref<16x128x4xf32, #tpu.memory_space<vmem>>, vector<1x128x4xf32>
    %151 = vector.shape_cast %150 : vector<1x128x4xf32> to vector<128x4xf32>
    %cst_160 = arith.constant dense<0.000000e+00> : vector<2x4xf32>
    %152 = tpu.matmul %149, %151, %cst_160 {dimension_numbers = #tpu.dot_dimension_numbers<[1], [0], [0], [1], [0, 0, 1, 1], [], []>} : vector<2x128xf32>, vector<128x4xf32>, vector<2x4xf32> -> vector<2x4xf32>
    %153 = arith.addf %146, %152 : vector<2x4xf32>
    %c2_161 = arith.constant 2 : index
    %c0_162 = arith.constant 0 : index
    %c0_163 = arith.constant 0 : index
    %154 = vector.load %arg9[%c2_161, %c0_162, %c0_163] : memref<16x2x32xf32, #tpu.memory_space<vmem>>, vector<1x2x32xf32>
    %155 = vector.shape_cast %154 : vector<1x2x32xf32> to vector<2x32xf32>
    %cst_164 = arith.constant dense<0.000000e+00> : vector<2x128xf32>
    %156 = tpu.matmul %155, %138, %cst_164 {dimension_numbers = #tpu.dot_dimension_numbers<[1], [0], [0], [1], [0, 0, 1, 1], [], []>} : vector<2x32xf32>, vector<32x128xf32>, vector<2x128xf32> -> vector<2x128xf32>
    %c2_165 = arith.constant 2 : index
    %c0_166 = arith.constant 0 : index
    %c0_167 = arith.constant 0 : index
    %157 = vector.load %arg7[%c2_165, %c0_166, %c0_167] : memref<16x128x4xf32, #tpu.memory_space<vmem>>, vector<1x128x4xf32>
    %158 = vector.shape_cast %157 : vector<1x128x4xf32> to vector<128x4xf32>
    %cst_168 = arith.constant dense<0.000000e+00> : vector<2x4xf32>
    %159 = tpu.matmul %156, %158, %cst_168 {dimension_numbers = #tpu.dot_dimension_numbers<[1], [0], [0], [1], [0, 0, 1, 1], [], []>} : vector<2x128xf32>, vector<128x4xf32>, vector<2x4xf32> -> vector<2x4xf32>
    %160 = arith.addf %153, %159 : vector<2x4xf32>
    %c3_169 = arith.constant 3 : index
    %c0_170 = arith.constant 0 : index
    %c0_171 = arith.constant 0 : index
    %161 = vector.load %arg9[%c3_169, %c0_170, %c0_171] : memref<16x2x32xf32, #tpu.memory_space<vmem>>, vector<1x2x32xf32>
    %162 = vector.shape_cast %161 : vector<1x2x32xf32> to vector<2x32xf32>
    %cst_172 = arith.constant dense<0.000000e+00> : vector<2x128xf32>
    %163 = tpu.matmul %162, %138, %cst_172 {dimension_numbers = #tpu.dot_dimension_numbers<[1], [0], [0], [1], [0, 0, 1, 1], [], []>} : vector<2x32xf32>, vector<32x128xf32>, vector<2x128xf32> -> vector<2x128xf32>
    %c3_173 = arith.constant 3 : index
    %c0_174 = arith.constant 0 : index
    %c0_175 = arith.constant 0 : index
    %164 = vector.load %arg7[%c3_173, %c0_174, %c0_175] : memref<16x128x4xf32, #tpu.memory_space<vmem>>, vector<1x128x4xf32>
    %165 = vector.shape_cast %164 : vector<1x128x4xf32> to vector<128x4xf32>
    %cst_176 = arith.constant dense<0.000000e+00> : vector<2x4xf32>
    %166 = tpu.matmul %163, %165, %cst_176 {dimension_numbers = #tpu.dot_dimension_numbers<[1], [0], [0], [1], [0, 0, 1, 1], [], []>} : vector<2x128xf32>, vector<128x4xf32>, vector<2x4xf32> -> vector<2x4xf32>
    %167 = arith.addf %160, %166 : vector<2x4xf32>
    %c4_177 = arith.constant 4 : index
    %c0_178 = arith.constant 0 : index
    %c0_179 = arith.constant 0 : index
    %168 = vector.load %arg9[%c4_177, %c0_178, %c0_179] : memref<16x2x32xf32, #tpu.memory_space<vmem>>, vector<1x2x32xf32>
    %169 = vector.shape_cast %168 : vector<1x2x32xf32> to vector<2x32xf32>
    %cst_180 = arith.constant dense<0.000000e+00> : vector<2x128xf32>
    %170 = tpu.matmul %169, %138, %cst_180 {dimension_numbers = #tpu.dot_dimension_numbers<[1], [0], [0], [1], [0, 0, 1, 1], [], []>} : vector<2x32xf32>, vector<32x128xf32>, vector<2x128xf32> -> vector<2x128xf32>
    %c4_181 = arith.constant 4 : index
    %c0_182 = arith.constant 0 : index
    %c0_183 = arith.constant 0 : index
    %171 = vector.load %arg7[%c4_181, %c0_182, %c0_183] : memref<16x128x4xf32, #tpu.memory_space<vmem>>, vector<1x128x4xf32>
    %172 = vector.shape_cast %171 : vector<1x128x4xf32> to vector<128x4xf32>
    %cst_184 = arith.constant dense<0.000000e+00> : vector<2x4xf32>
    %173 = tpu.matmul %170, %172, %cst_184 {dimension_numbers = #tpu.dot_dimension_numbers<[1], [0], [0], [1], [0, 0, 1, 1], [], []>} : vector<2x128xf32>, vector<128x4xf32>, vector<2x4xf32> -> vector<2x4xf32>
    %174 = arith.addf %167, %173 : vector<2x4xf32>
    %c5_185 = arith.constant 5 : index
    %c0_186 = arith.constant 0 : index
    %c0_187 = arith.constant 0 : index
    %175 = vector.load %arg9[%c5_185, %c0_186, %c0_187] : memref<16x2x32xf32, #tpu.memory_space<vmem>>, vector<1x2x32xf32>
    %176 = vector.shape_cast %175 : vector<1x2x32xf32> to vector<2x32xf32>
    %cst_188 = arith.constant dense<0.000000e+00> : vector<2x128xf32>
    %177 = tpu.matmul %176, %138, %cst_188 {dimension_numbers = #tpu.dot_dimension_numbers<[1], [0], [0], [1], [0, 0, 1, 1], [], []>} : vector<2x32xf32>, vector<32x128xf32>, vector<2x128xf32> -> vector<2x128xf32>
    %c5_189 = arith.constant 5 : index
    %c0_190 = arith.constant 0 : index
    %c0_191 = arith.constant 0 : index
    %178 = vector.load %arg7[%c5_189, %c0_190, %c0_191] : memref<16x128x4xf32, #tpu.memory_space<vmem>>, vector<1x128x4xf32>
    %179 = vector.shape_cast %178 : vector<1x128x4xf32> to vector<128x4xf32>
    %cst_192 = arith.constant dense<0.000000e+00> : vector<2x4xf32>
    %180 = tpu.matmul %177, %179, %cst_192 {dimension_numbers = #tpu.dot_dimension_numbers<[1], [0], [0], [1], [0, 0, 1, 1], [], []>} : vector<2x128xf32>, vector<128x4xf32>, vector<2x4xf32> -> vector<2x4xf32>
    %181 = arith.addf %174, %180 : vector<2x4xf32>
    %c6_193 = arith.constant 6 : index
    %c0_194 = arith.constant 0 : index
    %c0_195 = arith.constant 0 : index
    %182 = vector.load %arg9[%c6_193, %c0_194, %c0_195] : memref<16x2x32xf32, #tpu.memory_space<vmem>>, vector<1x2x32xf32>
    %183 = vector.shape_cast %182 : vector<1x2x32xf32> to vector<2x32xf32>
    %cst_196 = arith.constant dense<0.000000e+00> : vector<2x128xf32>
    %184 = tpu.matmul %183, %138, %cst_196 {dimension_numbers = #tpu.dot_dimension_numbers<[1], [0], [0], [1], [0, 0, 1, 1], [], []>} : vector<2x32xf32>, vector<32x128xf32>, vector<2x128xf32> -> vector<2x128xf32>
    %c6_197 = arith.constant 6 : index
    %c0_198 = arith.constant 0 : index
    %c0_199 = arith.constant 0 : index
    %185 = vector.load %arg7[%c6_197, %c0_198, %c0_199] : memref<16x128x4xf32, #tpu.memory_space<vmem>>, vector<1x128x4xf32>
    %186 = vector.shape_cast %185 : vector<1x128x4xf32> to vector<128x4xf32>
    %cst_200 = arith.constant dense<0.000000e+00> : vector<2x4xf32>
    %187 = tpu.matmul %184, %186, %cst_200 {dimension_numbers = #tpu.dot_dimension_numbers<[1], [0], [0], [1], [0, 0, 1, 1], [], []>} : vector<2x128xf32>, vector<128x4xf32>, vector<2x4xf32> -> vector<2x4xf32>
    %188 = arith.addf %181, %187 : vector<2x4xf32>
    %c7_201 = arith.constant 7 : index
    %c0_202 = arith.constant 0 : index
    %c0_203 = arith.constant 0 : index
    %189 = vector.load %arg9[%c7_201, %c0_202, %c0_203] : memref<16x2x32xf32, #tpu.memory_space<vmem>>, vector<1x2x32xf32>
    %190 = vector.shape_cast %189 : vector<1x2x32xf32> to vector<2x32xf32>
    %cst_204 = arith.constant dense<0.000000e+00> : vector<2x128xf32>
    %191 = tpu.matmul %190, %138, %cst_204 {dimension_numbers = #tpu.dot_dimension_numbers<[1], [0], [0], [1], [0, 0, 1, 1], [], []>} : vector<2x32xf32>, vector<32x128xf32>, vector<2x128xf32> -> vector<2x128xf32>
    %c7_205 = arith.constant 7 : index
    %c0_206 = arith.constant 0 : index
    %c0_207 = arith.constant 0 : index
    %192 = vector.load %arg7[%c7_205, %c0_206, %c0_207] : memref<16x128x4xf32, #tpu.memory_space<vmem>>, vector<1x128x4xf32>
    %193 = vector.shape_cast %192 : vector<1x128x4xf32> to vector<128x4xf32>
    %cst_208 = arith.constant dense<0.000000e+00> : vector<2x4xf32>
    %194 = tpu.matmul %191, %193, %cst_208 {dimension_numbers = #tpu.dot_dimension_numbers<[1], [0], [0], [1], [0, 0, 1, 1], [], []>} : vector<2x128xf32>, vector<128x4xf32>, vector<2x4xf32> -> vector<2x4xf32>
    %195 = arith.addf %188, %194 : vector<2x4xf32>
    %c8_209 = arith.constant 8 : index
    %c0_210 = arith.constant 0 : index
    %c0_211 = arith.constant 0 : index
    %196 = vector.load %arg9[%c8_209, %c0_210, %c0_211] : memref<16x2x32xf32, #tpu.memory_space<vmem>>, vector<1x2x32xf32>
    %197 = vector.shape_cast %196 : vector<1x2x32xf32> to vector<2x32xf32>
    %cst_212 = arith.constant dense<0.000000e+00> : vector<2x128xf32>
    %198 = tpu.matmul %197, %138, %cst_212 {dimension_numbers = #tpu.dot_dimension_numbers<[1], [0], [0], [1], [0, 0, 1, 1], [], []>} : vector<2x32xf32>, vector<32x128xf32>, vector<2x128xf32> -> vector<2x128xf32>
    %c8_213 = arith.constant 8 : index
    %c0_214 = arith.constant 0 : index
    %c0_215 = arith.constant 0 : index
    %199 = vector.load %arg7[%c8_213, %c0_214, %c0_215] : memref<16x128x4xf32, #tpu.memory_space<vmem>>, vector<1x128x4xf32>
    %200 = vector.shape_cast %199 : vector<1x128x4xf32> to vector<128x4xf32>
    %cst_216 = arith.constant dense<0.000000e+00> : vector<2x4xf32>
    %201 = tpu.matmul %198, %200, %cst_216 {dimension_numbers = #tpu.dot_dimension_numbers<[1], [0], [0], [1], [0, 0, 1, 1], [], []>} : vector<2x128xf32>, vector<128x4xf32>, vector<2x4xf32> -> vector<2x4xf32>
    %202 = arith.addf %195, %201 : vector<2x4xf32>
    %c9 = arith.constant 9 : index
    %c0_217 = arith.constant 0 : index
    %c0_218 = arith.constant 0 : index
    %203 = vector.load %arg9[%c9, %c0_217, %c0_218] : memref<16x2x32xf32, #tpu.memory_space<vmem>>, vector<1x2x32xf32>
    %204 = vector.shape_cast %203 : vector<1x2x32xf32> to vector<2x32xf32>
    %cst_219 = arith.constant dense<0.000000e+00> : vector<2x128xf32>
    %205 = tpu.matmul %204, %138, %cst_219 {dimension_numbers = #tpu.dot_dimension_numbers<[1], [0], [0], [1], [0, 0, 1, 1], [], []>} : vector<2x32xf32>, vector<32x128xf32>, vector<2x128xf32> -> vector<2x128xf32>
    %c9_220 = arith.constant 9 : index
    %c0_221 = arith.constant 0 : index
    %c0_222 = arith.constant 0 : index
    %206 = vector.load %arg7[%c9_220, %c0_221, %c0_222] : memref<16x128x4xf32, #tpu.memory_space<vmem>>, vector<1x128x4xf32>
    %207 = vector.shape_cast %206 : vector<1x128x4xf32> to vector<128x4xf32>
    %cst_223 = arith.constant dense<0.000000e+00> : vector<2x4xf32>
    %208 = tpu.matmul %205, %207, %cst_223 {dimension_numbers = #tpu.dot_dimension_numbers<[1], [0], [0], [1], [0, 0, 1, 1], [], []>} : vector<2x128xf32>, vector<128x4xf32>, vector<2x4xf32> -> vector<2x4xf32>
    %209 = arith.addf %202, %208 : vector<2x4xf32>
    %c10 = arith.constant 10 : index
    %c0_224 = arith.constant 0 : index
    %c0_225 = arith.constant 0 : index
    %210 = vector.load %arg9[%c10, %c0_224, %c0_225] : memref<16x2x32xf32, #tpu.memory_space<vmem>>, vector<1x2x32xf32>
    %211 = vector.shape_cast %210 : vector<1x2x32xf32> to vector<2x32xf32>
    %cst_226 = arith.constant dense<0.000000e+00> : vector<2x128xf32>
    %212 = tpu.matmul %211, %138, %cst_226 {dimension_numbers = #tpu.dot_dimension_numbers<[1], [0], [0], [1], [0, 0, 1, 1], [], []>} : vector<2x32xf32>, vector<32x128xf32>, vector<2x128xf32> -> vector<2x128xf32>
    %c10_227 = arith.constant 10 : index
    %c0_228 = arith.constant 0 : index
    %c0_229 = arith.constant 0 : index
    %213 = vector.load %arg7[%c10_227, %c0_228, %c0_229] : memref<16x128x4xf32, #tpu.memory_space<vmem>>, vector<1x128x4xf32>
    %214 = vector.shape_cast %213 : vector<1x128x4xf32> to vector<128x4xf32>
    %cst_230 = arith.constant dense<0.000000e+00> : vector<2x4xf32>
    %215 = tpu.matmul %212, %214, %cst_230 {dimension_numbers = #tpu.dot_dimension_numbers<[1], [0], [0], [1], [0, 0, 1, 1], [], []>} : vector<2x128xf32>, vector<128x4xf32>, vector<2x4xf32> -> vector<2x4xf32>
    %216 = arith.addf %209, %215 : vector<2x4xf32>
    %c11 = arith.constant 11 : index
    %c0_231 = arith.constant 0 : index
    %c0_232 = arith.constant 0 : index
    %217 = vector.load %arg9[%c11, %c0_231, %c0_232] : memref<16x2x32xf32, #tpu.memory_space<vmem>>, vector<1x2x32xf32>
    %218 = vector.shape_cast %217 : vector<1x2x32xf32> to vector<2x32xf32>
    %cst_233 = arith.constant dense<0.000000e+00> : vector<2x128xf32>
    %219 = tpu.matmul %218, %138, %cst_233 {dimension_numbers = #tpu.dot_dimension_numbers<[1], [0], [0], [1], [0, 0, 1, 1], [], []>} : vector<2x32xf32>, vector<32x128xf32>, vector<2x128xf32> -> vector<2x128xf32>
    %c11_234 = arith.constant 11 : index
    %c0_235 = arith.constant 0 : index
    %c0_236 = arith.constant 0 : index
    %220 = vector.load %arg7[%c11_234, %c0_235, %c0_236] : memref<16x128x4xf32, #tpu.memory_space<vmem>>, vector<1x128x4xf32>
    %221 = vector.shape_cast %220 : vector<1x128x4xf32> to vector<128x4xf32>
    %cst_237 = arith.constant dense<0.000000e+00> : vector<2x4xf32>
    %222 = tpu.matmul %219, %221, %cst_237 {dimension_numbers = #tpu.dot_dimension_numbers<[1], [0], [0], [1], [0, 0, 1, 1], [], []>} : vector<2x128xf32>, vector<128x4xf32>, vector<2x4xf32> -> vector<2x4xf32>
    %223 = arith.addf %216, %222 : vector<2x4xf32>
    %c12 = arith.constant 12 : index
    %c0_238 = arith.constant 0 : index
    %c0_239 = arith.constant 0 : index
    %224 = vector.load %arg9[%c12, %c0_238, %c0_239] : memref<16x2x32xf32, #tpu.memory_space<vmem>>, vector<1x2x32xf32>
    %225 = vector.shape_cast %224 : vector<1x2x32xf32> to vector<2x32xf32>
    %cst_240 = arith.constant dense<0.000000e+00> : vector<2x128xf32>
    %226 = tpu.matmul %225, %138, %cst_240 {dimension_numbers = #tpu.dot_dimension_numbers<[1], [0], [0], [1], [0, 0, 1, 1], [], []>} : vector<2x32xf32>, vector<32x128xf32>, vector<2x128xf32> -> vector<2x128xf32>
    %c12_241 = arith.constant 12 : index
    %c0_242 = arith.constant 0 : index
    %c0_243 = arith.constant 0 : index
    %227 = vector.load %arg7[%c12_241, %c0_242, %c0_243] : memref<16x128x4xf32, #tpu.memory_space<vmem>>, vector<1x128x4xf32>
    %228 = vector.shape_cast %227 : vector<1x128x4xf32> to vector<128x4xf32>
    %cst_244 = arith.constant dense<0.000000e+00> : vector<2x4xf32>
    %229 = tpu.matmul %226, %228, %cst_244 {dimension_numbers = #tpu.dot_dimension_numbers<[1], [0], [0], [1], [0, 0, 1, 1], [], []>} : vector<2x128xf32>, vector<128x4xf32>, vector<2x4xf32> -> vector<2x4xf32>
    %230 = arith.addf %223, %229 : vector<2x4xf32>
    %c13 = arith.constant 13 : index
    %c0_245 = arith.constant 0 : index
    %c0_246 = arith.constant 0 : index
    %231 = vector.load %arg9[%c13, %c0_245, %c0_246] : memref<16x2x32xf32, #tpu.memory_space<vmem>>, vector<1x2x32xf32>
    %232 = vector.shape_cast %231 : vector<1x2x32xf32> to vector<2x32xf32>
    %cst_247 = arith.constant dense<0.000000e+00> : vector<2x128xf32>
    %233 = tpu.matmul %232, %138, %cst_247 {dimension_numbers = #tpu.dot_dimension_numbers<[1], [0], [0], [1], [0, 0, 1, 1], [], []>} : vector<2x32xf32>, vector<32x128xf32>, vector<2x128xf32> -> vector<2x128xf32>
    %c13_248 = arith.constant 13 : index
    %c0_249 = arith.constant 0 : index
    %c0_250 = arith.constant 0 : index
    %234 = vector.load %arg7[%c13_248, %c0_249, %c0_250] : memref<16x128x4xf32, #tpu.memory_space<vmem>>, vector<1x128x4xf32>
    %235 = vector.shape_cast %234 : vector<1x128x4xf32> to vector<128x4xf32>
    %cst_251 = arith.constant dense<0.000000e+00> : vector<2x4xf32>
    %236 = tpu.matmul %233, %235, %cst_251 {dimension_numbers = #tpu.dot_dimension_numbers<[1], [0], [0], [1], [0, 0, 1, 1], [], []>} : vector<2x128xf32>, vector<128x4xf32>, vector<2x4xf32> -> vector<2x4xf32>
    %237 = arith.addf %230, %236 : vector<2x4xf32>
    %c14 = arith.constant 14 : index
    %c0_252 = arith.constant 0 : index
    %c0_253 = arith.constant 0 : index
    %238 = vector.load %arg9[%c14, %c0_252, %c0_253] : memref<16x2x32xf32, #tpu.memory_space<vmem>>, vector<1x2x32xf32>
    %239 = vector.shape_cast %238 : vector<1x2x32xf32> to vector<2x32xf32>
    %cst_254 = arith.constant dense<0.000000e+00> : vector<2x128xf32>
    %240 = tpu.matmul %239, %138, %cst_254 {dimension_numbers = #tpu.dot_dimension_numbers<[1], [0], [0], [1], [0, 0, 1, 1], [], []>} : vector<2x32xf32>, vector<32x128xf32>, vector<2x128xf32> -> vector<2x128xf32>
    %c14_255 = arith.constant 14 : index
    %c0_256 = arith.constant 0 : index
    %c0_257 = arith.constant 0 : index
    %241 = vector.load %arg7[%c14_255, %c0_256, %c0_257] : memref<16x128x4xf32, #tpu.memory_space<vmem>>, vector<1x128x4xf32>
    %242 = vector.shape_cast %241 : vector<1x128x4xf32> to vector<128x4xf32>
    %cst_258 = arith.constant dense<0.000000e+00> : vector<2x4xf32>
    %243 = tpu.matmul %240, %242, %cst_258 {dimension_numbers = #tpu.dot_dimension_numbers<[1], [0], [0], [1], [0, 0, 1, 1], [], []>} : vector<2x128xf32>, vector<128x4xf32>, vector<2x4xf32> -> vector<2x4xf32>
    %244 = arith.addf %237, %243 : vector<2x4xf32>
    %c15 = arith.constant 15 : index
    %c0_259 = arith.constant 0 : index
    %c0_260 = arith.constant 0 : index
    %245 = vector.load %arg9[%c15, %c0_259, %c0_260] : memref<16x2x32xf32, #tpu.memory_space<vmem>>, vector<1x2x32xf32>
    %246 = vector.shape_cast %245 : vector<1x2x32xf32> to vector<2x32xf32>
    %cst_261 = arith.constant dense<0.000000e+00> : vector<2x128xf32>
    %247 = tpu.matmul %246, %138, %cst_261 {dimension_numbers = #tpu.dot_dimension_numbers<[1], [0], [0], [1], [0, 0, 1, 1], [], []>} : vector<2x32xf32>, vector<32x128xf32>, vector<2x128xf32> -> vector<2x128xf32>
    %c15_262 = arith.constant 15 : index
    %c0_263 = arith.constant 0 : index
    %c0_264 = arith.constant 0 : index
    %248 = vector.load %arg7[%c15_262, %c0_263, %c0_264] : memref<16x128x4xf32, #tpu.memory_space<vmem>>, vector<1x128x4xf32>
    %249 = vector.shape_cast %248 : vector<1x128x4xf32> to vector<128x4xf32>
    %cst_265 = arith.constant dense<0.000000e+00> : vector<2x4xf32>
    %250 = tpu.matmul %247, %249, %cst_265 {dimension_numbers = #tpu.dot_dimension_numbers<[1], [0], [0], [1], [0, 0, 1, 1], [], []>} : vector<2x128xf32>, vector<128x4xf32>, vector<2x4xf32> -> vector<2x4xf32>
    %251 = arith.addf %244, %250 : vector<2x4xf32>
    %c0_266 = arith.constant 0 : index
    %c0_267 = arith.constant 0 : index
    %252 = vector.load %arg8[%c0_266, %c0_267] : memref<1x4xf32, #tpu.memory_space<vmem>>, vector<1x4xf32>
    %253 = vector.broadcast %252 : vector<1x4xf32> to vector<2x4xf32>
    %254 = arith.addf %251, %253 : vector<2x4xf32>
    %c0_268 = arith.constant 0 : index
    %c0_269 = arith.constant 0 : index
    %255 = vector.load %arg10[%c0_268, %c0_269] : memref<2x4xf32, #tpu.memory_space<vmem>>, vector<2x4xf32>
    tpu.vector_store %arg10[%c0_268, %c0_269], %254 {strides = array<i32>} : memref<2x4xf32, #tpu.memory_space<vmem>>, vector<2x4xf32>,
    return
  }
  func.func @transform_0(%arg0: i32) -> (i32, i32) {
    %c0_i32 = arith.constant 0 : i32
    %c0_i32_0 = arith.constant 0 : i32
    return %arg0, %c0_i32 : i32, i32
  }
  func.func @transform_1(%arg0: i32) -> (i32, i32, i32) {
    %c0_i32 = arith.constant 0 : i32
    %c0_i32_0 = arith.constant 0 : i32
    %c0_i32_1 = arith.constant 0 : i32
    %c0_i32_2 = arith.constant 0 : i32
    return %c0_i32, %c0_i32_0, %c0_i32_1 : i32, i32, i32
  }
  func.func @transform_2(%arg0: i32) -> (i32, i32, i32) {
    %c0_i32 = arith.constant 0 : i32
    %c0_i32_0 = arith.constant 0 : i32
    %c0_i32_1 = arith.constant 0 : i32
    %c0_i32_2 = arith.constant 0 : i32
    return %c0_i32, %c0_i32_0, %c0_i32_1 : i32, i32, i32
  }
  func.func @transform_3(%arg0: i32) -> (i32, i32) {
    %c0_i32 = arith.constant 0 : i32
    %c0_i32_0 = arith.constant 0 : i32
    %c0_i32_1 = arith.constant 0 : i32
    return %c0_i32, %c0_i32_0 : i32, i32
  }
  func.func @transform_4(%arg0: i32) -> (i32, i32, i32) {
    %c0_i32 = arith.constant 0 : i32
    %c0_i32_0 = arith.constant 0 : i32
    %c0_i32_1 = arith.constant 0 : i32
    %c0_i32_2 = arith.constant 0 : i32
    return %c0_i32, %c0_i32_0, %c0_i32_1 : i32, i32, i32
  }
  func.func @transform_5(%arg0: i32) -> (i32, i32) {
    %c0_i32 = arith.constant 0 : i32
    %c0_i32_0 = arith.constant 0 : i32
    %c0_i32_1 = arith.constant 0 : i32
    return %c0_i32, %c0_i32_0 : i32, i32
  }
  func.func @transform_6(%arg0: i32) -> (i32, i32, i32) {
    %c0_i32 = arith.constant 0 : i32
    %c0_i32_0 = arith.constant 0 : i32
    %c0_i32_1 = arith.constant 0 : i32
    %c0_i32_2 = arith.constant 0 : i32
    return %c0_i32, %c0_i32_0, %c0_i32_1 : i32, i32, i32
  }
  func.func @transform_7(%arg0: i32) -> (i32, i32) {
    %c0_i32 = arith.constant 0 : i32
    %c0_i32_0 = arith.constant 0 : i32
    %c0_i32_1 = arith.constant 0 : i32
    return %c0_i32, %c0_i32_0 : i32, i32
  }
  func.func @transform_8(%arg0: i32) -> (i32, i32, i32) {
    %c0_i32 = arith.constant 0 : i32
    %c0_i32_0 = arith.constant 0 : i32
    %c0_i32_1 = arith.constant 0 : i32
    %c0_i32_2 = arith.constant 0 : i32
    return %c0_i32, %c0_i32_0, %c0_i32_1 : i32, i32, i32
  }
  func.func @transform_9(%arg0: i32) -> (i32, i32) {
    %c0_i32 = arith.constant 0 : i32
    %c0_i32_0 = arith.constant 0 : i32
    return %arg0, %c0_i32 : i32, i32
  }
}

</mosaic_0001>

<llo_original>
// kernel: my_agent_forward.1
$region0: #{my_agent_forward.1}
  #allocation0 [shape = 'u32[]', space=smem, size = 0x4, offset = 0x4, fixed_abs, tag = 'smem constant byte address 0x4 - core index']
  #allocation1 [shape = 'u32[144,128]{1,0:T(1,128)}', space=vmem, size = 0x12000, scoped, tag = 'internal scratch']
  %s0 = inlined_call_operand.vmem [shape: f32[32,16], index: 0, kind: input, shape index: {}]
  %s1 = inlined_call_operand.vmem [shape: f32[9,32,32], index: 1, kind: input, shape index: {}]
  %s2 = inlined_call_operand.vmem [shape: f32[9,16,64], index: 2, kind: input, shape index: {}]
  %s3 = inlined_call_operand.vmem [shape: f32[1,64], index: 3, kind: input, shape index: {}]
  %s4 = inlined_call_operand.vmem [shape: f32[9,64,128], index: 4, kind: input, shape index: {}]
  %s5 = inlined_call_operand.vmem [shape: f32[1,128], index: 5, kind: input, shape index: {}]
  %s6 = inlined_call_operand.vmem [shape: f32[16,128,4], index: 6, kind: input, shape index: {}]
  %s7 = inlined_call_operand.vmem [shape: f32[1,4], index: 7, kind: input, shape index: {}]
  %s8 = inlined_call_operand.vmem [shape: f32[16,2,32], index: 8, kind: input, shape index: {}]
  %s9 = inlined_call_operand.hbm [shape: f32[2,4], index: 9, kind: output, shape index: {}]
  %s10 = sld [smem:[#allocation0]]
  $region46: #{my_agent_forward.1} parent=0
    _
  %s12 = ssub.s32 1, %s10
  %s13 = scalar_select 0, %s12, %s10
  $region1: #{my_agent_forward.1} parent=0
    #allocation2 [shape = 'u8[1024]{0}', space=vmem, size = 0x400, scoped, tag = 'output window, operand 0, single buffered']
    #allocation3 [shape = 's32[1]{0}', space=sflag, size = 0x4, scoped, tag = 'scoped memory for my_agent_forward.1']
    %14 = vsyncpa [#allocation3], 0
    // Predicated region
    $region2: #{my_agent_forward.1} parent=1 // pred_check
      _
    $region3: #{my_agent_forward.1} parent=1 // pred_check_branch
      %16 = sbr.rel (0) target = $region5
    $region4: #{my_agent_forward.1} parent=1 // pred_region
      _
    $region5: #{my_agent_forward.1} parent=1 // pred_fallthru
      _
    // Predicated region
    $region6: #{my_agent_forward.1} parent=1 // pred_check
      _
    $region7: #{my_agent_forward.1} parent=1 // pred_check_branch
      %18 = sbr.rel (0) target = $region9
    $region8: #{my_agent_forward.1} parent=1 // pred_region
      _
    $region9: #{my_agent_forward.1} parent=1 // pred_fallthru
      _
    // Predicated region
    $region10: #{my_agent_forward.1} parent=1 // pred_check
      _
    $region11: #{my_agent_forward.1} parent=1 // pred_check_branch
      %20 = sbr.rel (0) target = $region13
    $region12: #{my_agent_forward.1} parent=1 // pred_region
      _
    $region13: #{my_agent_forward.1} parent=1 // pred_fallthru
      _
    // Predicated region
    $region14: #{my_agent_forward.1} parent=1 // pred_check
      _
    $region15: #{my_agent_forward.1} parent=1 // pred_check_branch
      %22 = sbr.rel (0) target = $region17
    $region16: #{my_agent_forward.1} parent=1 // pred_region
      _
    $region17: #{my_agent_forward.1} parent=1 // pred_fallthru
      _
    // Predicated region
    $region18: #{my_agent_forward.1} parent=1 // pred_check
      _
    $region19: #{my_agent_forward.1} parent=1 // pred_check_branch
      %24 = sbr.rel (0) target = $region21
    $region20: #{my_agent_forward.1} parent=1 // pred_region
      _
    $region21: #{my_agent_forward.1} parent=1 // pred_fallthru
      _
    // Predicated region
    $region22: #{my_agent_forward.1} parent=1 // pred_check
      _
    $region23: #{my_agent_forward.1} parent=1 // pred_check_branch
      %26 = sbr.rel (0) target = $region25
    $region24: #{my_agent_forward.1} parent=1 // pred_region
      _
    $region25: #{my_agent_forward.1} parent=1 // pred_fallthru
      _
    // Predicated region
    $region26: #{my_agent_forward.1} parent=1 // pred_check
      _
    $region27: #{my_agent_forward.1} parent=1 // pred_check_branch
      %28 = sbr.rel (0) target = $region29
    $region28: #{my_agent_forward.1} parent=1 // pred_region
      _
    $region29: #{my_agent_forward.1} parent=1 // pred_fallthru
      _
    // Predicated region
    $region30: #{my_agent_forward.1} parent=1 // pred_check
      _
    $region31: #{my_agent_forward.1} parent=1 // pred_check_branch
      %30 = sbr.rel (0) target = $region33
    $region32: #{my_agent_forward.1} parent=1 // pred_region
      _
    $region33: #{my_agent_forward.1} parent=1 // pred_fallthru
      _
    // Predicated region
    $region34: #{my_agent_forward.1} parent=1 // pred_check
      _
    $region35: #{my_agent_forward.1} parent=1 // pred_check_branch
      %32 = sbr.rel (0) target = $region37
    $region36: #{my_agent_forward.1} parent=1 // pred_region
      _
    $region37: #{my_agent_forward.1} parent=1 // pred_fallthru
      _
    %v33 = vld [vmem:[%s0] sm:$0xff]
    %v34 = vld [vmem:[%s0 + $0x8] sm:$0xff]
    %v35 = vld [vmem:[%s0 + $0x10] sm:$0xff]
    %v36 = vld [vmem:[%s0 + $0x18] sm:$0xff]
    %v37 = vld [vmem:[%s1] sm:$0xff]
    %v38 = vld [vmem:[%s1 + $0x8] sm:$0xff]
    %v39 = vld [vmem:[%s1 + $0x10] sm:$0xff]
    %v40 = vld [vmem:[%s1 + $0x18] sm:$0xff]
    %vm41 = vcmask 261120
    %v43 = vsel %vm41, %v37, 0
    %v46 = vsel %vm41, %v38, 0
    %v49 = vsel %vm41, %v39, 0
    %v52 = vsel %vm41, %v40, 0
    %54 = vmatprep.subr.mxu0 0.0
    %55 = vmatpush1.msra.mxu0 %v33
    %56 = vmatprep.subr.mxu0 0.0
    %57 = vmatpush1.msra.mxu0 %v34
    %58 = vmatprep.subr.mxu0 0.0
    %59 = vmatpush1.msra.mxu0 %v35
    %60 = vmatprep.subr.mxu0 0.0
    %61 = vmatpush1.msra.mxu0 %v36
    %62 = vmatprep.subr.mxu0 0.0
    %63 = vmatpush1.msra.mxu0 0.0
    %64 = vmatprep.subr.mxu0 0.0
    %65 = vmatpush1.msra.mxu0 0.0
    %66 = vmatprep.subr.mxu0 0.0
    %67 = vmatpush1.msra.mxu0 0.0
    %68 = vmatprep.subr.mxu0 0.0
    %69 = vmatpush1.msra.mxu0 0.0
    %70 = vmatprep.subr.mxu0 0.0
    %71 = vmatpush1.msra.mxu0 0.0
    %72 = vmatprep.subr.mxu0 0.0
    %73 = vmatpush1.msra.mxu0 0.0
    %74 = vmatprep.subr.mxu0 0.0
    %75 = vmatpush1.msra.mxu0 0.0
    %76 = vmatprep.subr.mxu0 0.0
    %77 = vmatpush1.msra.mxu0 0.0
    %78 = vmatprep.subr.mxu0 0.0
    %79 = vmatpush1.msra.mxu0 0.0
    %80 = vmatprep.subr.mxu0 0.0
    %81 = vmatpush1.msra.mxu0 0.0
    %82 = vmatprep.subr.mxu0 0.0
    %83 = vmatpush1.msra.mxu0 0.0
    %84 = vmatprep.subr.mxu0 0.0
    %85 = vmatpush1.msra.mxu0 0.0
    %86 = vmatprep.subr.mxu0 0.0
    %87 = vmatpush1.msra.mxu0 0.0
    %88 = vmatprep.subr.mxu0 0.0
    %89 = vmatpush1.msra.mxu0 0.0
    %90 = vmatprep.subr.mxu0 0.0
    %91 = vmatpush1.msra.mxu0 0.0
    %92 = vmatprep.subr.mxu0 0.0
    %93 = vmatpush1.msra.mxu0 0.0
    %94 = vmatprep.subr.mxu0 0.0
    %95 = vmatpush1.msra.mxu0 0.0
    %96 = vmatprep.subr.mxu0 0.0
    %97 = vmatpush1.msra.mxu0 0.0
    %98 = vmatprep.subr.mxu0 0.0
    %99 = vmatpush1.msra.mxu0 0.0
    %100 = vmatprep.subr.mxu0 0.0
    %101 = vmatpush1.msra.mxu0 0.0
    %102 = vmatprep.subr.mxu0 0.0
    %103 = vmatpush1.msra.mxu0 0.0
    %104 = vmatprep.subr.mxu0 0.0
    %105 = vmatpush1.msra.mxu0 0.0
    %106 = vmatprep.subr.mxu0 0.0
    %107 = vmatpush1.msra.mxu0 0.0
    %108 = vmatprep.subr.mxu0 0.0
    %109 = vmatpush1.msra.mxu0 0.0
    %110 = vmatprep.subr.mxu0 0.0
    %111 = vmatpush1.msra.mxu0 0.0
    %112 = vmatprep.subr.mxu0 0.0
    %113 = vmatpush1.msra.mxu0 0.0
    %114 = vmatprep.subr.mxu0 0.0
    %115 = vmatpush1.msra.mxu0 0.0
    %116 = vmatprep.subr.mxu0 0.0
    %117 = vmatpush1.msra.mxu0 0.0
    %118 = vmatprep.mubr.f32.mxu0 0.0
    %119 = vmatmul.mubr.f32.gmra.mrb[0].mxu0 %v43
    %v120 = vpop.f32.mrb[0].mxu0
    %v121 = vadd.f32 0.0, %v120
    %v122 = vpop.f32.mrb[0].mxu0
    %123 = vmatprep.mubr.f32.mxu0 0.0
    %124 = vmatmul.mubr.f32.gmra.mrb[0].mxu0 %v46
    %v125 = vpop.f32.mrb[0].mxu0
    %v126 = vadd.f32 0.0, %v125
    %v127 = vpop.f32.mrb[0].mxu0
    %128 = vmatprep.mubr.f32.mxu0 0.0
    %129 = vmatmul.mubr.f32.gmra.mrb[0].mxu0 %v49
    %v130 = vpop.f32.mrb[0].mxu0
    %v131 = vadd.f32 0.0, %v130
    %v132 = vpop.f32.mrb[0].mxu0
    %133 = vmatprep.mubr.f32.mxu0 0.0
    %134 = vmatmul.mubr.f32.gmra.mrb[0].mxu0 %v52
    %v135 = vpop.f32.mrb[0].mxu0
    %v136 = vadd.f32 0.0, %v135
    %v137 = vpop.f32.mrb[0].mxu0
    %138 = vdwg.mxu0
    %v139 = vld [vmem:[%s2] sm:$0xff]
    %v140 = vld [vmem:[%s2 + $0x8] sm:$0xff]
    %s141 = scalar_lea.vmem %s1, 32
    %v142 = vld [vmem:[%s141] sm:$0xff]
    %v143 = vld [vmem:[%s141 + $0x8] sm:$0xff]
    %v144 = vld [vmem:[%s141 + $0x10] sm:$0xff]
    %v145 = vld [vmem:[%s141 + $0x18] sm:$0xff]
    %v147 = vsel %vm41, %v142, 0
    %v150 = vsel %vm41, %v143, 0
    %v153 = vsel %vm41, %v144, 0
    %v156 = vsel %vm41, %v145, 0
    %158 = vmatprep.subr.mxu0 0.0
    %159 = vmatpush1.msra.mxu0 %v33
    %160 = vmatprep.subr.mxu0 0.0
    %161 = vmatpush1.msra.mxu0 %v34
    %162 = vmatprep.subr.mxu0 0.0
    %163 = vmatpush1.msra.mxu0 %v35
    %164 = vmatprep.subr.mxu0 0.0
    %165 = vmatpush1.msra.mxu0 %v36
    %166 = vmatprep.subr.mxu0 0.0
    %167 = vmatpush1.msra.mxu0 0.0
    %168 = vmatprep.subr.mxu0 0.0
    %169 = vmatpush1.msra.mxu0 0.0
    %170 = vmatprep.subr.mxu0 0.0
    %171 = vmatpush1.msra.mxu0 0.0
    %172 = vmatprep.subr.mxu0 0.0
    %173 = vmatpush1.msra.mxu0 0.0
    %174 = vmatprep.subr.mxu0 0.0
    %175 = vmatpush1.msra.mxu0 0.0
    %176 = vmatprep.subr.mxu0 0.0
    %177 = vmatpush1.msra.mxu0 0.0
    %178 = vmatprep.subr.mxu0 0.0
    %179 = vmatpush1.msra.mxu0 0.0
    %180 = vmatprep.subr.mxu0 0.0
    %181 = vmatpush1.msra.mxu0 0.0
    %182 = vmatprep.subr.mxu0 0.0
    %183 = vmatpush1.msra.mxu0 0.0
    %184 = vmatprep.subr.mxu0 0.0
    %185 = vmatpush1.msra.mxu0 0.0
    %186 = vmatprep.subr.mxu0 0.0
    %187 = vmatpush1.msra.mxu0 0.0
    %188 = vmatprep.subr.mxu0 0.0
    %189 = vmatpush1.msra.mxu0 0.0
    %190 = vmatprep.subr.mxu0 0.0
    %191 = vmatpush1.msra.mxu0 0.0
    %192 = vmatprep.subr.mxu0 0.0
    %193 = vmatpush1.msra.mxu0 0.0
    %194 = vmatprep.subr.mxu0 0.0
    %195 = vmatpush1.msra.mxu0 0.0
    %196 = vmatprep.subr.mxu0 0.0
    %197 = vmatpush1.msra.mxu0 0.0
    %198 = vmatprep.subr.mxu0 0.0
    %199 = vmatpush1.msra.mxu0 0.0
    %200 = vmatprep.subr.mxu0 0.0
    %201 = vmatpush1.msra.mxu0 0.0
    %202 = vmatprep.subr.mxu0 0.0
    %203 = vmatpush1.msra.mxu0 0.0
    %204 = vmatprep.subr.mxu0 0.0
    %205 = vmatpush1.msra.mxu0 0.0
    %206 = vmatprep.subr.mxu0 0.0
    %207 = vmatpush1.msra.mxu0 0.0
    %208 = vmatprep.subr.mxu0 0.0
    %209 = vmatpush1.msra.mxu0 0.0
    %210 = vmatprep.subr.mxu0 0.0
    %211 = vmatpush1.msra.mxu0 0.0
    %212 = vmatprep.subr.mxu0 0.0
    %213 = vmatpush1.msra.mxu0 0.0
    %214 = vmatprep.subr.mxu0 0.0
    %215 = vmatpush1.msra.mxu0 0.0
    %216 = vmatprep.subr.mxu0 0.0
    %217 = vmatpush1.msra.mxu0 0.0
    %218 = vmatprep.subr.mxu0 0.0
    %219 = vmatpush1.msra.mxu0 0.0
    %220 = vmatprep.subr.mxu0 0.0
    %221 = vmatpush1.msra.mxu0 0.0
    %222 = vmatprep.mubr.f32.mxu0 0.0
    %223 = vmatmul.mubr.f32.gmra.mrb[0].mxu0 %v147
    %v224 = vpop.f32.mrb[0].mxu0
    %v225 = vadd.f32 0.0, %v224
    %v226 = vpop.f32.mrb[0].mxu0
    %227 = vmatprep.mubr.f32.mxu0 0.0
    %228 = vmatmul.mubr.f32.gmra.mrb[0].mxu0 %v150
    %v229 = vpop.f32.mrb[0].mxu0
    %v230 = vadd.f32 0.0, %v229
    %v231 = vpop.f32.mrb[0].mxu0
    %232 = vmatprep.mubr.f32.mxu0 0.0
    %233 = vmatmul.mubr.f32.gmra.mrb[0].mxu0 %v153
    %v234 = vpop.f32.mrb[0].mxu0
    %v235 = vadd.f32 0.0, %v234
    %v236 = vpop.f32.mrb[0].mxu0
    %237 = vmatprep.mubr.f32.mxu0 0.0
    %238 = vmatmul.mubr.f32.gmra.mrb[0].mxu0 %v156
    %v239 = vpop.f32.mrb[0].mxu0
    %v240 = vadd.f32 0.0, %v239
    %v241 = vpop.f32.mrb[0].mxu0
    %242 = vdwg.mxu0
    %s243 = scalar_lea.vmem %s2, 16
    %v244 = vld [vmem:[%s243] sm:$0xff]
    %v245 = vld [vmem:[%s243 + $0x8] sm:$0xff]
    %vm246 = vcmask 130048
    %v248 = vsel %vm246, %v225, 0
    %v251 = vsel %vm246, %v230, 0
    %v254 = vsel %vm246, %v235, 0
    %v257 = vsel %vm246, %v240, 0
    %259 = vmatprep.subr.mxu0 0.0
    %260 = vmatpush1.msra.mxu0 %v244
    %261 = vmatprep.subr.mxu0 0.0
    %262 = vmatpush1.msra.mxu0 %v245
    %263 = vmatprep.subr.mxu0 0.0
    %264 = vmatpush1.msra.mxu0 0.0
    %265 = vmatprep.subr.mxu0 0.0
    %266 = vmatpush1.msra.mxu0 0.0
    %267 = vmatprep.subr.mxu0 0.0
    %268 = vmatpush1.msra.mxu0 0.0
    %269 = vmatprep.subr.mxu0 0.0
    %270 = vmatpush1.msra.mxu0 0.0
    %271 = vmatprep.subr.mxu0 0.0
    %272 = vmatpush1.msra.mxu0 0.0
    %273 = vmatprep.subr.mxu0 0.0
    %274 = vmatpush1.msra.mxu0 0.0
    %275 = vmatprep.subr.mxu0 0.0
    %276 = vmatpush1.msra.mxu0 0.0
    %277 = vmatprep.subr.mxu0 0.0
    %278 = vmatpush1.msra.mxu0 0.0
    %279 = vmatprep.subr.mxu0 0.0
    %280 = vmatpush1.msra.mxu0 0.0
    %281 = vmatprep.subr.mxu0 0.0
    %282 = vmatpush1.msra.mxu0 0.0
    %283 = vmatprep.subr.mxu0 0.0
    %284 = vmatpush1.msra.mxu0 0.0
    %285 = vmatprep.subr.mxu0 0.0
    %286 = vmatpush1.msra.mxu0 0.0
    %287 = vmatprep.subr.mxu0 0.0
    %288 = vmatpush1.msra.mxu0 0.0
    %289 = vmatprep.subr.mxu0 0.0
    %290 = vmatpush1.msra.mxu0 0.0
    %291 = vmatprep.subr.mxu0 0.0
    %292 = vmatpush1.msra.mxu0 0.0
    %293 = vmatprep.subr.mxu0 0.0
    %294 = vmatpush1.msra.mxu0 0.0
    %295 = vmatprep.subr.mxu0 0.0
    %296 = vmatpush1.msra.mxu0 0.0
    %297 = vmatprep.subr.mxu0 0.0
    %298 = vmatpush1.msra.mxu0 0.0
    %299 = vmatprep.subr.mxu0 0.0
    %300 = vmatpush1.msra.mxu0 0.0
    %301 = vmatprep.subr.mxu0 0.0
    %302 = vmatpush1.msra.mxu0 0.0
    %303 = vmatprep.subr.mxu0 0.0
    %304 = vmatpush1.msra.mxu0 0.0
    %305 = vmatprep.subr.mxu0 0.0
    %306 = vmatpush1.msra.mxu0 0.0
    %307 = vmatprep.subr.mxu0 0.0
    %308 = vmatpush1.msra.mxu0 0.0
    %309 = vmatprep.subr.mxu0 0.0
    %310 = vmatpush1.msra.mxu0 0.0
    %311 = vmatprep.subr.mxu0 0.0
    %312 = vmatpush1.msra.mxu0 0.0
    %313 = vmatprep.subr.mxu0 0.0
    %314 = vmatpush1.msra.mxu0 0.0
    %315 = vmatprep.subr.mxu0 0.0
    %316 = vmatpush1.msra.mxu0 0.0
    %317 = vmatprep.subr.mxu0 0.0
    %318 = vmatpush1.msra.mxu0 0.0
    %319 = vmatprep.subr.mxu0 0.0
    %320 = vmatpush1.msra.mxu0 0.0
    %321 = vmatprep.subr.mxu0 0.0
    %322 = vmatpush1.msra.mxu0 0.0
    %323 = vmatprep.mubr.f32.mxu0 0.0
    %324 = vmatmul.mubr.f32.gmra.mrb[0].mxu0 %v248
    %v325 = vpop.f32.mrb[0].mxu0
    %v326 = vadd.f32 0.0, %v325
    %v327 = vpop.f32.mrb[0].mxu0
    %328 = vmatprep.mubr.f32.mxu0 0.0
    %329 = vmatmul.mubr.f32.gmra.mrb[0].mxu0 %v251
    %v330 = vpop.f32.mrb[0].mxu0
    %v331 = vadd.f32 0.0, %v330
    %v332 = vpop.f32.mrb[0].mxu0
    %333 = vmatprep.mubr.f32.mxu0 0.0
    %334 = vmatmul.mubr.f32.gmra.mrb[0].mxu0 %v254
    %v335 = vpop.f32.mrb[0].mxu0
    %v336 = vadd.f32 0.0, %v335
    %v337 = vpop.f32.mrb[0].mxu0
    %338 = vmatprep.mubr.f32.mxu0 0.0
    %339 = vmatmul.mubr.f32.gmra.mrb[0].mxu0 %v257
    %v340 = vpop.f32.mrb[0].mxu0
    %v341 = vadd.f32 0.0, %v340
    %v342 = vpop.f32.mrb[0].mxu0
    %343 = vdwg.mxu0
    %v345 = vsel %vm246, %v121, 0
    %v348 = vsel %vm246, %v126, 0
    %v351 = vsel %vm246, %v131, 0
    %v354 = vsel %vm246, %v136, 0
    %356 = vmatprep.subr.mxu0 0.0
    %357 = vmatpush1.msra.mxu0 %v139
    %358 = vmatprep.subr.mxu0 0.0
    %359 = vmatpush1.msra.mxu0 %v140
    %360 = vmatprep.subr.mxu0 0.0
    %361 = vmatpush1.msra.mxu0 0.0
    %362 = vmatprep.subr.mxu0 0.0
    %363 = vmatpush1.msra.mxu0 0.0
    %364 = vmatprep.subr.mxu0 0.0
    %365 = vmatpush1.msra.mxu0 0.0
    %366 = vmatprep.subr.mxu0 0.0
    %367 = vmatpush1.msra.mxu0 0.0
    %368 = vmatprep.subr.mxu0 0.0
    %369 = vmatpush1.msra.mxu0 0.0
    %370 = vmatprep.subr.mxu0 0.0
    %371 = vmatpush1.msra.mxu0 0.0
    %372 = vmatprep.subr.mxu0 0.0
    %373 = vmatpush1.msra.mxu0 0.0
    %374 = vmatprep.subr.mxu0 0.0
    %375 = vmatpush1.msra.mxu0 0.0
    %376 = vmatprep.subr.mxu0 0.0
    %377 = vmatpush1.msra.mxu0 0.0
    %378 = vmatprep.subr.mxu0 0.0
    %379 = vmatpush1.msra.mxu0 0.0
    %380 = vmatprep.subr.mxu0 0.0
    %381 = vmatpush1.msra.mxu0 0.0
    %382 = vmatprep.subr.mxu0 0.0
    %383 = vmatpush1.msra.mxu0 0.0
    %384 = vmatprep.subr.mxu0 0.0
    %385 = vmatpush1.msra.mxu0 0.0
    %386 = vmatprep.subr.mxu0 0.0
    %387 = vmatpush1.msra.mxu0 0.0
    %388 = vmatprep.subr.mxu0 0.0
    %389 = vmatpush1.msra.mxu0 0.0
    %390 = vmatprep.subr.mxu0 0.0
    %391 = vmatpush1.msra.mxu0 0.0
    %392 = vmatprep.subr.mxu0 0.0
    %393 = vmatpush1.msra.mxu0 0.0
    %394 = vmatprep.subr.mxu0 0.0
    %395 = vmatpush1.msra.mxu0 0.0
    %396 = vmatprep.subr.mxu0 0.0
    %397 = vmatpush1.msra.mxu0 0.0
    %398 = vmatprep.subr.mxu0 0.0
    %399 = vmatpush1.msra.mxu0 0.0
    %400 = vmatprep.subr.mxu0 0.0
    %401 = vmatpush1.msra.mxu0 0.0
    %402 = vmatprep.subr.mxu0 0.0
    %403 = vmatpush1.msra.mxu0 0.0
    %404 = vmatprep.subr.mxu0 0.0
    %405 = vmatpush1.msra.mxu0 0.0
    %406 = vmatprep.subr.mxu0 0.0
    %407 = vmatpush1.msra.mxu0 0.0
    %408 = vmatprep.subr.mxu0 0.0
    %409 = vmatpush1.msra.mxu0 0.0
    %410 = vmatprep.subr.mxu0 0.0
    %411 = vmatpush1.msra.mxu0 0.0
    %412 = vmatprep.subr.mxu0 0.0
    %413 = vmatpush1.msra.mxu0 0.0
    %414 = vmatprep.subr.mxu0 0.0
    %415 = vmatpush1.msra.mxu0 0.0
    %416 = vmatprep.subr.mxu0 0.0
    %417 = vmatpush1.msra.mxu0 0.0
    %418 = vmatprep.subr.mxu0 0.0
    %419 = vmatpush1.msra.mxu0 0.0
    %420 = vmatprep.mubr.f32.mxu0 0.0
    %421 = vmatmul.mubr.f32.gmra.mrb[0].mxu0 %v345
    %v422 = vpop.f32.mrb[0].mxu0
    %v423 = vadd.f32 %v326, %v422
    %v424 = vpop.f32.mrb[0].mxu0
    %425 = vmatprep.mubr.f32.mxu0 0.0
    %426 = vmatmul.mubr.f32.gmra.mrb[0].mxu0 %v348
    %v427 = vpop.f32.mrb[0].mxu0
    %v428 = vadd.f32 %v331, %v427
    %v429 = vpop.f32.mrb[0].mxu0
    %430 = vmatprep.mubr.f32.mxu0 0.0
    %431 = vmatmul.mubr.f32.gmra.mrb[0].mxu0 %v351
    %v432 = vpop.f32.mrb[0].mxu0
    %v433 = vadd.f32 %v336, %v432
    %v434 = vpop.f32.mrb[0].mxu0
    %435 = vmatprep.mubr.f32.mxu0 0.0
    %436 = vmatmul.mubr.f32.gmra.mrb[0].mxu0 %v354
    %v437 = vpop.f32.mrb[0].mxu0
    %v438 = vadd.f32 %v341, %v437
    %v439 = vpop.f32.mrb[0].mxu0
    %440 = vdwg.mxu0
    %s441 = scalar_lea.vmem %s1, 64
    %v442 = vld [vmem:[%s441] sm:$0xff]
    %v443 = vld [vmem:[%s441 + $0x8] sm:$0xff]
    %v444 = vld [vmem:[%s441 + $0x10] sm:$0xff]
    %v445 = vld [vmem:[%s441 + $0x18] sm:$0xff]
    %v447 = vsel %vm41, %v442, 0
    %v450 = vsel %vm41, %v443, 0
    %v453 = vsel %vm41, %v444, 0
    %v456 = vsel %vm41, %v445, 0
    %458 = vmatprep.subr.mxu0 0.0
    %459 = vmatpush1.msra.mxu0 %v33
    %460 = vmatprep.subr.mxu0 0.0
    %461 = vmatpush1.msra.mxu0 %v34
    %462 = vmatprep.subr.mxu0 0.0
    %463 = vmatpush1.msra.mxu0 %v35
    %464 = vmatprep.subr.mxu0 0.0
    %465 = vmatpush1.msra.mxu0 %v36
    %466 = vmatprep.subr.mxu0 0.0
    %467 = vmatpush1.msra.mxu0 0.0
    %468 = vmatprep.subr.mxu0 0.0
    %469 = vmatpush1.msra.mxu0 0.0
    %470 = vmatprep.subr.mxu0 0.0
    %471 = vmatpush1.msra.mxu0 0.0
    %472 = vmatprep.subr.mxu0 0.0
    %473 = vmatpush1.msra.mxu0 0.0
    %474 = vmatprep.subr.mxu0 0.0
    %475 = vmatpush1.msra.mxu0 0.0
    %476 = vmatprep.subr.mxu0 0.0
    %477 = vmatpush1.msra.mxu0 0.0
    %478 = vmatprep.subr.mxu0 0.0
    %479 = vmatpush1.msra.mxu0 0.0
    %480 = vmatprep.subr.mxu0 0.0
    %481 = vmatpush1.msra.mxu0 0.0
    %482 = vmatprep.subr.mxu0 0.0
    %483 = vmatpush1.msra.mxu0 0.0
    %484 = vmatprep.subr.mxu0 0.0
    %485 = vmatpush1.msra.mxu0 0.0
    %486 = vmatprep.subr.mxu0 0.0
    %487 = vmatpush1.msra.mxu0 0.0
    %488 = vmatprep.subr.mxu0 0.0
    %489 = vmatpush1.msra.mxu0 0.0
    %490 = vmatprep.subr.mxu0 0.0
    %491 = vmatpush1.msra.mxu0 0.0
    %492 = vmatprep.subr.mxu0 0.0
    %493 = vmatpush1.msra.mxu0 0.0
    %494 = vmatprep.subr.mxu0 0.0
    %495 = vmatpush1.msra.mxu0 0.0
    %496 = vmatprep.subr.mxu0 0.0
    %497 = vmatpush1.msra.mxu0 0.0
    %498 = vmatprep.subr.mxu0 0.0
    %499 = vmatpush1.msra.mxu0 0.0
    %500 = vmatprep.subr.mxu0 0.0
    %501 = vmatpush1.msra.mxu0 0.0
    %502 = vmatprep.subr.mxu0 0.0
    %503 = vmatpush1.msra.mxu0 0.0
    %504 = vmatprep.subr.mxu0 0.0
    %505 = vmatpush1.msra.mxu0 0.0
    %506 = vmatprep.subr.mxu0 0.0
    %507 = vmatpush1.msra.mxu0 0.0
    %508 = vmatprep.subr.mxu0 0.0
    %509 = vmatpush1.msra.mxu0 0.0
    %510 = vmatprep.subr.mxu0 0.0
    %511 = vmatpush1.msra.mxu0 0.0
    %512 = vmatprep.subr.mxu0 0.0
    %513 = vmatpush1.msra.mxu0 0.0
    %514 = vmatprep.subr.mxu0 0.0
    %515 = vmatpush1.msra.mxu0 0.0
    %516 = vmatprep.subr.mxu0 0.0
    %517 = vmatpush1.msra.mxu0 0.0
    %518 = vmatprep.subr.mxu0 0.0
    %519 = vmatpush1.msra.mxu0 0.0
    %520 = vmatprep.subr.mxu0 0.0
    %521 = vmatpush1.msra.mxu0 0.0
    %522 = vmatprep.mubr.f32.mxu0 0.0
    %523 = vmatmul.mubr.f32.gmra.mrb[0].mxu0 %v447
    %v524 = vpop.f32.mrb[0].mxu0
    %v525 = vadd.f32 0.0, %v524
    %v526 = vpop.f32.mrb[0].mxu0
    %527 = vmatprep.mubr.f32.mxu0 0.0
    %528 = vmatmul.mubr.f32.gmra.mrb[0].mxu0 %v450
    %v529 = vpop.f32.mrb[0].mxu0
    %v530 = vadd.f32 0.0, %v529
    %v531 = vpop.f32.mrb[0].mxu0
    %532 = vmatprep.mubr.f32.mxu0 0.0
    %533 = vmatmul.mubr.f32.gmra.mrb[0].mxu0 %v453
    %v534 = vpop.f32.mrb[0].mxu0
    %v535 = vadd.f32 0.0, %v534
    %v536 = vpop.f32.mrb[0].mxu0
    %537 = vmatprep.mubr.f32.mxu0 0.0
    %538 = vmatmul.mubr.f32.gmra.mrb[0].mxu0 %v456
    %v539 = vpop.f32.mrb[0].mxu0
    %v540 = vadd.f32 0.0, %v539
    %v541 = vpop.f32.mrb[0].mxu0
    %542 = vdwg.mxu0
    %s543 = scalar_lea.vmem %s2, 32
    %v544 = vld [vmem:[%s543] sm:$0xff]
    %v545 = vld [vmem:[%s543 + $0x8] sm:$0xff]
    %v547 = vsel %vm246, %v525, 0
    %v550 = vsel %vm246, %v530, 0
    %v553 = vsel %vm246, %v535, 0
    %v556 = vsel %vm246, %v540, 0
    %558 = vmatprep.subr.mxu0 0.0
    %559 = vmatpush1.msra.mxu0 %v544
    %560 = vmatprep.subr.mxu0 0.0
    %561 = vmatpush1.msra.mxu0 %v545
    %562 = vmatprep.subr.mxu0 0.0
    %563 = vmatpush1.msra.mxu0 0.0
    %564 = vmatprep.subr.mxu0 0.0
    %565 = vmatpush1.msra.mxu0 0.0
    %566 = vmatprep.subr.mxu0 0.0
    %567 = vmatpush1.msra.mxu0 0.0
    %568 = vmatprep.subr.mxu0 0.0
    %569 = vmatpush1.msra.mxu0 0.0
    %570 = vmatprep.subr.mxu0 0.0
    %571 = vmatpush1.msra.mxu0 0.0
    %572 = vmatprep.subr.mxu0 0.0
    %573 = vmatpush1.msra.mxu0 0.0
    %574 = vmatprep.subr.mxu0 0.0
    %575 = vmatpush1.msra.mxu0 0.0
    %576 = vmatprep.subr.mxu0 0.0
    %577 = vmatpush1.msra.mxu0 0.0
    %578 = vmatprep.subr.mxu0 0.0
    %579 = vmatpush1.msra.mxu0 0.0
    %580 = vmatprep.subr.mxu0 0.0
    %581 = vmatpush1.msra.mxu0 0.0
    %582 = vmatprep.subr.mxu0 0.0
    %583 = vmatpush1.msra.mxu0 0.0
    %584 = vmatprep.subr.mxu0 0.0
    %585 = vmatpush1.msra.mxu0 0.0
    %586 = vmatprep.subr.mxu0 0.0
    %587 = vmatpush1.msra.mxu0 0.0
    %588 = vmatprep.subr.mxu0 0.0
    %589 = vmatpush1.msra.mxu0 0.0
    %590 = vmatprep.subr.mxu0 0.0
    %591 = vmatpush1.msra.mxu0 0.0
    %592 = vmatprep.subr.mxu0 0.0
    %593 = vmatpush1.msra.mxu0 0.0
    %594 = vmatprep.subr.mxu0 0.0
    %595 = vmatpush1.msra.mxu0 0.0
    %596 = vmatprep.subr.mxu0 0.0
    %597 = vmatpush1.msra.mxu0 0.0
    %598 = vmatprep.subr.mxu0 0.0
    %599 = vmatpush1.msra.mxu0 0.0
    %600 = vmatprep.subr.mxu0 0.0
    %601 = vmatpush1.msra.mxu0 0.0
    %602 = vmatprep.subr.mxu0 0.0
    %603 = vmatpush1.msra.mxu0 0.0
    %604 = vmatprep.subr.mxu0 0.0
    %605 = vmatpush1.msra.mxu0 0.0
    %606 = vmatprep.subr.mxu0 0.0
    %607 = vmatpush1.msra.mxu0 0.0
    %608 = vmatprep.subr.mxu0 0.0
    %609 = vmatpush1.msra.mxu0 0.0
    %610 = vmatprep.subr.mxu0 0.0
    %611 = vmatpush1.msra.mxu0 0.0
    %612 = vmatprep.subr.mxu0 0.0
    %613 = vmatpush1.msra.mxu0 0.0
    %614 = vmatprep.subr.mxu0 0.0
    %615 = vmatpush1.msra.mxu0 0.0
    %616 = vmatprep.subr.mxu0 0.0
    %617 = vmatpush1.msra.mxu0 0.0
    %618 = vmatprep.subr.mxu0 0.0
    %619 = vmatpush1.msra.mxu0 0.0
    %620 = vmatprep.subr.mxu0 0.0
    %621 = vmatpush1.msra.mxu0 0.0
    %622 = vmatprep.mubr.f32.mxu0 0.0
    %623 = vmatmul.mubr.f32.gmra.mrb[0].mxu0 %v547
    %v624 = vpop.f32.mrb[0].mxu0
    %v625 = vadd.f32 0.0, %v624
    %v626 = vpop.f32.mrb[0].mxu0
    %627 = vmatprep.mubr.f32.mxu0 0.0
    %628 = vmatmul.mubr.f32.gmra.mrb[0].mxu0 %v550
    %v629 = vpop.f32.mrb[0].mxu0
    %v630 = vadd.f32 0.0, %v629
    %v631 = vpop.f32.mrb[0].mxu0
    %632 = vmatprep.mubr.f32.mxu0 0.0
    %633 = vmatmul.mubr.f32.gmra.mrb[0].mxu0 %v553
    %v634 = vpop.f32.mrb[0].mxu0
    %v635 = vadd.f32 0.0, %v634
    %v636 = vpop.f32.mrb[0].mxu0
    %637 = vmatprep.mubr.f32.mxu0 0.0
    %638 = vmatmul.mubr.f32.gmra.mrb[0].mxu0 %v556
    %v639 = vpop.f32.mrb[0].mxu0
    %v640 = vadd.f32 0.0, %v639
    %v641 = vpop.f32.mrb[0].mxu0
    %642 = vdwg.mxu0
    %v643 = vadd.f32 %v423, %v625
    %v644 = vadd.f32 %v428, %v630
    %v645 = vadd.f32 %v433, %v635
    %v646 = vadd.f32 %v438, %v640
    %s647 = scalar_lea.vmem %s1, 96
    %v648 = vld [vmem:[%s647] sm:$0xff]
    %v649 = vld [vmem:[%s647 + $0x8] sm:$0xff]
    %v650 = vld [vmem:[%s647 + $0x10] sm:$0xff]
    %v651 = vld [vmem:[%s647 + $0x18] sm:$0xff]
    %v653 = vsel %vm41, %v648, 0
    %v656 = vsel %vm41, %v649, 0
    %v659 = vsel %vm41, %v650, 0
    %v662 = vsel %vm41, %v651, 0
    %664 = vmatprep.subr.mxu0 0.0
    %665 = vmatpush1.msra.mxu0 %v33
    %666 = vmatprep.subr.mxu0 0.0
    %667 = vmatpush1.msra.mxu0 %v34
    %668 = vmatprep.subr.mxu0 0.0
    %669 = vmatpush1.msra.mxu0 %v35
    %670 = vmatprep.subr.mxu0 0.0
    %671 = vmatpush1.msra.mxu0 %v36
    %672 = vmatprep.subr.mxu0 0.0
    %673 = vmatpush1.msra.mxu0 0.0
    %674 = vmatprep.subr.mxu0 0.0
    %675 = vmatpush1.msra.mxu0 0.0
    %676 = vmatprep.subr.mxu0 0.0
    %677 = vmatpush1.msra.mxu0 0.0
    %678 = vmatprep.subr.mxu0 0.0
    %679 = vmatpush1.msra.mxu0 0.0
    %680 = vmatprep.subr.mxu0 0.0
    %681 = vmatpush1.msra.mxu0 0.0
    %682 = vmatprep.subr.mxu0 0.0
    %683 = vmatpush1.msra.mxu0 0.0
    %684 = vmatprep.subr.mxu0 0.0
    %685 = vmatpush1.msra.mxu0 0.0
    %686 = vmatprep.subr.mxu0 0.0
    %687 = vmatpush1.msra.mxu0 0.0
    %688 = vmatprep.subr.mxu0 0.0
    %689 = vmatpush1.msra.mxu0 0.0
    %690 = vmatprep.subr.mxu0 0.0
    %691 = vmatpush1.msra.mxu0 0.0
    %692 = vmatprep.subr.mxu0 0.0
    %693 = vmatpush1.msra.mxu0 0.0
    %694 = vmatprep.subr.mxu0 0.0
    %695 = vmatpush1.msra.mxu0 0.0
    %696 = vmatprep.subr.mxu0 0.0
    %697 = vmatpush1.msra.mxu0 0.0
    %698 = vmatprep.subr.mxu0 0.0
    %699 = vmatpush1.msra.mxu0 0.0
    %700 = vmatprep.subr.mxu0 0.0
    %701 = vmatpush1.msra.mxu0 0.0
    %702 = vmatprep.subr.mxu0 0.0
    %703 = vmatpush1.msra.mxu0 0.0
    %704 = vmatprep.subr.mxu0 0.0
    %705 = vmatpush1.msra.mxu0 0.0
    %706 = vmatprep.subr.mxu0 0.0
    %707 = vmatpush1.msra.mxu0 0.0
    %708 = vmatprep.subr.mxu0 0.0
    %709 = vmatpush1.msra.mxu0 0.0
    %710 = vmatprep.subr.mxu0 0.0
    %711 = vmatpush1.msra.mxu0 0.0
    %712 = vmatprep.subr.mxu0 0.0
    %713 = vmatpush1.msra.mxu0 0.0
    %714 = vmatprep.subr.mxu0 0.0
    %715 = vmatpush1.msra.mxu0 0.0
    %716 = vmatprep.subr.mxu0 0.0
    %717 = vmatpush1.msra.mxu0 0.0
    %718 = vmatprep.subr.mxu0 0.0
    %719 = vmatpush1.msra.mxu0 0.0
    %720 = vmatprep.subr.mxu0 0.0
    %721 = vmatpush1.msra.mxu0 0.0
    %722 = vmatprep.subr.mxu0 0.0
    %723 = vmatpush1.msra.mxu0 0.0
    %724 = vmatprep.subr.mxu0 0.0
    %725 = vmatpush1.msra.mxu0 0.0
    %726 = vmatprep.subr.mxu0 0.0
    %727 = vmatpush1.msra.mxu0 0.0
    %728 = vmatprep.mubr.f32.mxu0 0.0
    %729 = vmatmul.mubr.f32.gmra.mrb[0].mxu0 %v653
    %v730 = vpop.f32.mrb[0].mxu0
    %v731 = vadd.f32 0.0, %v730
    %v732 = vpop.f32.mrb[0].mxu0
    %733 = vmatprep.mubr.f32.mxu0 0.0
    %734 = vmatmul.mubr.f32.gmra.mrb[0].mxu0 %v656
    %v735 = vpop.f32.mrb[0].mxu0
    %v736 = vadd.f32 0.0, %v735
    %v737 = vpop.f32.mrb[0].mxu0
    %738 = vmatprep.mubr.f32.mxu0 0.0
    %739 = vmatmul.mubr.f32.gmra.mrb[0].mxu0 %v659
    %v740 = vpop.f32.mrb[0].mxu0
    %v741 = vadd.f32 0.0, %v740
    %v742 = vpop.f32.mrb[0].mxu0
    %743 = vmatprep.mubr.f32.mxu0 0.0
    %744 = vmatmul.mubr.f32.gmra.mrb[0].mxu0 %v662
    %v745 = vpop.f32.mrb[0].mxu0
    %v746 = vadd.f32 0.0, %v745
    %v747 = vpop.f32.mrb[0].mxu0
    %748 = vdwg.mxu0
    %s749 = scalar_lea.vmem %s2, 48
    %v750 = vld [vmem:[%s749] sm:$0xff]
    %v751 = vld [vmem:[%s749 + $0x8] sm:$0xff]
    %v753 = vsel %vm246, %v731, 0
    %v756 = vsel %vm246, %v736, 0
    %v759 = vsel %vm246, %v741, 0
    %v762 = vsel %vm246, %v746, 0
    %764 = vmatprep.subr.mxu0 0.0
    %765 = vmatpush1.msra.mxu0 %v750
    %766 = vmatprep.subr.mxu0 0.0
    %767 = vmatpush1.msra.mxu0 %v751
    %768 = vmatprep.subr.mxu0 0.0
    %769 = vmatpush1.msra.mxu0 0.0
    %770 = vmatprep.subr.mxu0 0.0
    %771 = vmatpush1.msra.mxu0 0.0
    %772 = vmatprep.subr.mxu0 0.0
    %773 = vmatpush1.msra.mxu0 0.0
    %774 = vmatprep.subr.mxu0 0.0
    %775 = vmatpush1.msra.mxu0 0.0
    %776 = vmatprep.subr.mxu0 0.0
    %777 = vmatpush1.msra.mxu0 0.0
    %778 = vmatprep.subr.mxu0 0.0
    %779 = vmatpush1.msra.mxu0 0.0
    %780 = vmatprep.subr.mxu0 0.0
    %781 = vmatpush1.msra.mxu0 0.0
    %782 = vmatprep.subr.mxu0 0.0
    %783 = vmatpush1.msra.mxu0 0.0
    %784 = vmatprep.subr.mxu0 0.0
    %785 = vmatpush1.msra.mxu0 0.0
    %786 = vmatprep.subr.mxu0 0.0
    %787 = vmatpush1.msra.mxu0 0.0
    %788 = vmatprep.subr.mxu0 0.0
    %789 = vmatpush1.msra.mxu0 0.0
    %790 = vmatprep.subr.mxu0 0.0
    %791 = vmatpush1.msra.mxu0 0.0
    %792 = vmatprep.subr.mxu0 0.0
    %793 = vmatpush1.msra.mxu0 0.0
    %794 = vmatprep.subr.mxu0 0.0
    %795 = vmatpush1.msra.mxu0 0.0
    %796 = vmatprep.subr.mxu0 0.0
    %797 = vmatpush1.msra.mxu0 0.0
    %798 = vmatprep.subr.mxu0 0.0
    %799 = vmatpush1.msra.mxu0 0.0
    %800 = vmatprep.subr.mxu0 0.0
    %801 = vmatpush1.msra.mxu0 0.0
    %802 = vmatprep.subr.mxu0 0.0
    %803 = vmatpush1.msra.mxu0 0.0
    %804 = vmatprep.subr.mxu0 0.0
    %805 = vmatpush1.msra.mxu0 0.0
    %806 = vmatprep.subr.mxu0 0.0
    %807 = vmatpush1.msra.mxu0 0.0
    %808 = vmatprep.subr.mxu0 0.0
    %809 = vmatpush1.msra.mxu0 0.0
    %810 = vmatprep.subr.mxu0 0.0
    %811 = vmatpush1.msra.mxu0 0.0
    %812 = vmatprep.subr.mxu0 0.0
    %813 = vmatpush1.msra.mxu0 0.0
    %814 = vmatprep.subr.mxu0 0.0
    %815 = vmatpush1.msra.mxu0 0.0
    %816 = vmatprep.subr.mxu0 0.0
    %817 = vmatpush1.msra.mxu0 0.0
    %818 = vmatprep.subr.mxu0 0.0
    %819 = vmatpush1.msra.mxu0 0.0
    %820 = vmatprep.subr.mxu0 0.0
    %821 = vmatpush1.msra.mxu0 0.0
    %822 = vmatprep.subr.mxu0 0.0
    %823 = vmatpush1.msra.mxu0 0.0
    %824 = vmatprep.subr.mxu0 0.0
    %825 = vmatpush1.msra.mxu0 0.0
    %826 = vmatprep.subr.mxu0 0.0
    %827 = vmatpush1.msra.mxu0 0.0
    %828 = vmatprep.mubr.f32.mxu0 0.0
    %829 = vmatmul.mubr.f32.gmra.mrb[0].mxu0 %v753
    %v830 = vpop.f32.mrb[0].mxu0
    %v831 = vadd.f32 0.0, %v830
    %v832 = vpop.f32.mrb[0].mxu0
    %833 = vmatprep.mubr.f32.mxu0 0.0
    %834 = vmatmul.mubr.f32.gmra.mrb[0].mxu0 %v756
    %v835 = vpop.f32.mrb[0].mxu0
    %v836 = vadd.f32 0.0, %v835
    %v837 = vpop.f32.mrb[0].mxu0
    %838 = vmatprep.mubr.f32.mxu0 0.0
    %839 = vmatmul.mubr.f32.gmra.mrb[0].mxu0 %v759
    %v840 = vpop.f32.mrb[0].mxu0
    %v841 = vadd.f32 0.0, %v840
    %v842 = vpop.f32.mrb[0].mxu0
    %843 = vmatprep.mubr.f32.mxu0 0.0
    %844 = vmatmul.mubr.f32.gmra.mrb[0].mxu0 %v762
    %v845 = vpop.f32.mrb[0].mxu0
    %v846 = vadd.f32 0.0, %v845
    %v847 = vpop.f32.mrb[0].mxu0
    %848 = vdwg.mxu0
    %v849 = vadd.f32 %v643, %v831
    %v850 = vadd.f32 %v644, %v836
    %v851 = vadd.f32 %v645, %v841
    %v852 = vadd.f32 %v646, %v846
    %s853 = scalar_lea.vmem %s1, 128
    %v854 = vld [vmem:[%s853] sm:$0xff]
    %v855 = vld [vmem:[%s853 + $0x8] sm:$0xff]
    %v856 = vld [vmem:[%s853 + $0x10] sm:$0xff]
    %v857 = vld [vmem:[%s853 + $0x18] sm:$0xff]
    %v859 = vsel %vm41, %v854, 0
    %v862 = vsel %vm41, %v855, 0
    %v865 = vsel %vm41, %v856, 0
    %v868 = vsel %vm41, %v857, 0
    %870 = vmatprep.subr.mxu0 0.0
    %871 = vmatpush1.msra.mxu0 %v33
    %872 = vmatprep.subr.mxu0 0.0
    %873 = vmatpush1.msra.mxu0 %v34
    %874 = vmatprep.subr.mxu0 0.0
    %875 = vmatpush1.msra.mxu0 %v35
    %876 = vmatprep.subr.mxu0 0.0
    %877 = vmatpush1.msra.mxu0 %v36
    %878 = vmatprep.subr.mxu0 0.0
    %879 = vmatpush1.msra.mxu0 0.0
    %880 = vmatprep.subr.mxu0 0.0
    %881 = vmatpush1.msra.mxu0 0.0
    %882 = vmatprep.subr.mxu0 0.0
    %883 = vmatpush1.msra.mxu0 0.0
    %884 = vmatprep.subr.mxu0 0.0
    %885 = vmatpush1.msra.mxu0 0.0
    %886 = vmatprep.subr.mxu0 0.0
    %887 = vmatpush1.msra.mxu0 0.0
    %888 = vmatprep.subr.mxu0 0.0
    %889 = vmatpush1.msra.mxu0 0.0
    %890 = vmatprep.subr.mxu0 0.0
    %891 = vmatpush1.msra.mxu0 0.0
    %892 = vmatprep.subr.mxu0 0.0
    %893 = vmatpush1.msra.mxu0 0.0
    %894 = vmatprep.subr.mxu0 0.0
    %895 = vmatpush1.msra.mxu0 0.0
    %896 = vmatprep.subr.mxu0 0.0
    %897 = vmatpush1.msra.mxu0 0.0
    %898 = vmatprep.subr.mxu0 0.0
    %899 = vmatpush1.msra.mxu0 0.0
    %900 = vmatprep.subr.mxu0 0.0
    %901 = vmatpush1.msra.mxu0 0.0
    %902 = vmatprep.subr.mxu0 0.0
    %903 = vmatpush1.msra.mxu0 0.0
    %904 = vmatprep.subr.mxu0 0.0
    %905 = vmatpush1.msra.mxu0 0.0
    %906 = vmatprep.subr.mxu0 0.0
    %907 = vmatpush1.msra.mxu0 0.0
    %908 = vmatprep.subr.mxu0 0.0
    %909 = vmatpush1.msra.mxu0 0.0
    %910 = vmatprep.subr.mxu0 0.0
    %911 = vmatpush1.msra.mxu0 0.0
    %912 = vmatprep.subr.mxu0 0.0
    %913 = vmatpush1.msra.mxu0 0.0
    %914 = vmatprep.subr.mxu0 0.0
    %915 = vmatpush1.msra.mxu0 0.0
    %916 = vmatprep.subr.mxu0 0.0
    %917 = vmatpush1.msra.mxu0 0.0
    %918 = vmatprep.subr.mxu0 0.0
    %919 = vmatpush1.msra.mxu0 0.0
    %920 = vmatprep.subr.mxu0 0.0
    %921 = vmatpush1.msra.mxu0 0.0
    %922 = vmatprep.subr.mxu0 0.0
    %923 = vmatpush1.msra.mxu0 0.0
    %924 = vmatprep.subr.mxu0 0.0
    %925 = vmatpush1.msra.mxu0 0.0
    %926 = vmatprep.subr.mxu0 0.0
    %927 = vmatpush1.msra.mxu0 0.0
    %928 = vmatprep.subr.mxu0 0.0
    %929 = vmatpush1.msra.mxu0 0.0
    %930 = vmatprep.subr.mxu0 0.0
    %931 = vmatpush1.msra.mxu0 0.0
    %932 = vmatprep.subr.mxu0 0.0
    %933 = vmatpush1.msra.mxu0 0.0
    %934 = vmatprep.mubr.f32.mxu0 0.0
    %935 = vmatmul.mubr.f32.gmra.mrb[0].mxu0 %v859
    %v936 = vpop.f32.mrb[0].mxu0
    %v937 = vadd.f32 0.0, %v936
    %v938 = vpop.f32.mrb[0].mxu0
    %939 = vmatprep.mubr.f32.mxu0 0.0
    %940 = vmatmul.mubr.f32.gmra.mrb[0].mxu0 %v862
    %v941 = vpop.f32.mrb[0].mxu0
    %v942 = vadd.f32 0.0, %v941
    %v943 = vpop.f32.mrb[0].mxu0
    %944 = vmatprep.mubr.f32.mxu0 0.0
    %945 = vmatmul.mubr.f32.gmra.mrb[0].mxu0 %v865
    %v946 = vpop.f32.mrb[0].mxu0
    %v947 = vadd.f32 0.0, %v946
    %v948 = vpop.f32.mrb[0].mxu0
    %949 = vmatprep.mubr.f32.mxu0 0.0
    %950 = vmatmul.mubr.f32.gmra.mrb[0].mxu0 %v868
    %v951 = vpop.f32.mrb[0].mxu0
    %v952 = vadd.f32 0.0, %v951
    %v953 = vpop.f32.mrb[0].mxu0
    %954 = vdwg.mxu0
    %s955 = scalar_lea.vmem %s2, 64
    %v956 = vld [vmem:[%s955] sm:$0xff]
    %v957 = vld [vmem:[%s955 + $0x8] sm:$0xff]
    %v959 = vsel %vm246, %v937, 0
    %v962 = vsel %vm246, %v942, 0
    %v965 = vsel %vm246, %v947, 0
    %v968 = vsel %vm246, %v952, 0
    %970 = vmatprep.subr.mxu0 0.0
    %971 = vmatpush1.msra.mxu0 %v956
    %972 = vmatprep.subr.mxu0 0.0
    %973 = vmatpush1.msra.mxu0 %v957
    %974 = vmatprep.subr.mxu0 0.0
    %975 = vmatpush1.msra.mxu0 0.0
    %976 = vmatprep.subr.mxu0 0.0
    %977 = vmatpush1.msra.mxu0 0.0
    %978 = vmatprep.subr.mxu0 0.0
    %979 = vmatpush1.msra.mxu0 0.0
    %980 = vmatprep.subr.mxu0 0.0
    %981 = vmatpush1.msra.mxu0 0.0
    %982 = vmatprep.subr.mxu0 0.0
    %983 = vmatpush1.msra.mxu0 0.0
    %984 = vmatprep.subr.mxu0 0.0
    %985 = vmatpush1.msra.mxu0 0.0
    %986 = vmatprep.subr.mxu0 0.0
    %987 = vmatpush1.msra.mxu0 0.0
    %988 = vmatprep.subr.mxu0 0.0
    %989 = vmatpush1.msra.mxu0 0.0
    %990 = vmatprep.subr.mxu0 0.0
    %991 = vmatpush1.msra.mxu0 0.0
    %992 = vmatprep.subr.mxu0 0.0
    %993 = vmatpush1.msra.mxu0 0.0
    %994 = vmatprep.subr.mxu0 0.0
    %995 = vmatpush1.msra.mxu0 0.0
    %996 = vmatprep.subr.mxu0 0.0
    %997 = vmatpush1.msra.mxu0 0.0
    %998 = vmatprep.subr.mxu0 0.0
    %999 = vmatpush1.msra.mxu0 0.0
    %1000 = vmatprep.subr.mxu0 0.0
    %1001 = vmatpush1.msra.mxu0 0.0
    %1002 = vmatprep.subr.mxu0 0.0
    %1003 = vmatpush1.msra.mxu0 0.0
    %1004 = vmatprep.subr.mxu0 0.0
    %1005 = vmatpush1.msra.mxu0 0.0
    %1006 = vmatprep.subr.mxu0 0.0
    %1007 = vmatpush1.msra.mxu0 0.0
    %1008 = vmatprep.subr.mxu0 0.0
    %1009 = vmatpush1.msra.mxu0 0.0
    %1010 = vmatprep.subr.mxu0 0.0
    %1011 = vmatpush1.msra.mxu0 0.0
    %1012 = vmatprep.subr.mxu0 0.0
    %1013 = vmatpush1.msra.mxu0 0.0
    %1014 = vmatprep.subr.mxu0 0.0
    %1015 = vmatpush1.msra.mxu0 0.0
    %1016 = vmatprep.subr.mxu0 0.0
    %1017 = vmatpush1.msra.mxu0 0.0
    %1018 = vmatprep.subr.mxu0 0.0
    %1019 = vmatpush1.msra.mxu0 0.0
    %1020 = vmatprep.subr.mxu0 0.0
    %1021 = vmatpush1.msra.mxu0 0.0
    %1022 = vmatprep.subr.mxu0 0.0
    %1023 = vmatpush1.msra.mxu0 0.0
    %1024 = vmatprep.subr.mxu0 0.0
    %1025 = vmatpush1.msra.mxu0 0.0
    %1026 = vmatprep.subr.mxu0 0.0
    %1027 = vmatpush1.msra.mxu0 0.0
    %1028 = vmatprep.subr.mxu0 0.0
    %1029 = vmatpush1.msra.mxu0 0.0
    %1030 = vmatprep.subr.mxu0 0.0
    %1031 = vmatpush1.msra.mxu0 0.0
    %1032 = vmatprep.subr.mxu0 0.0
    %1033 = vmatpush1.msra.mxu0 0.0
    %1034 = vmatprep.mubr.f32.mxu0 0.0
    %1035 = vmatmul.mubr.f32.gmra.mrb[0].mxu0 %v959
    %v1036 = vpop.f32.mrb[0].mxu0
    %v1037 = vadd.f32 0.0, %v1036
    %v1038 = vpop.f32.mrb[0].mxu0
    %1039 = vmatprep.mubr.f32.mxu0 0.0
    %1040 = vmatmul.mubr.f32.gmra.mrb[0].mxu0 %v962
    %v1041 = vpop.f32.mrb[0].mxu0
    %v1042 = vadd.f32 0.0, %v1041
    %v1043 = vpop.f32.mrb[0].mxu0
    %1044 = vmatprep.mubr.f32.mxu0 0.0
    %1045 = vmatmul.mubr.f32.gmra.mrb[0].mxu0 %v965
    %v1046 = vpop.f32.mrb[0].mxu0
    %v1047 = vadd.f32 0.0, %v1046
    %v1048 = vpop.f32.mrb[0].mxu0
    %1049 = vmatprep.mubr.f32.mxu0 0.0
    %1050 = vmatmul.mubr.f32.gmra.mrb[0].mxu0 %v968
    %v1051 = vpop.f32.mrb[0].mxu0
    %v1052 = vadd.f32 0.0, %v1051
    %v1053 = vpop.f32.mrb[0].mxu0
    %1054 = vdwg.mxu0
    %v1055 = vadd.f32 %v849, %v1037
    %v1056 = vadd.f32 %v850, %v1042
    %v1057 = vadd.f32 %v851, %v1047
    %v1058 = vadd.f32 %v852, %v1052
    %s1059 = scalar_lea.vmem %s1, 160
    %v1060 = vld [vmem:[%s1059] sm:$0xff]
    %v1061 = vld [vmem:[%s1059 + $0x8] sm:$0xff]
    %v1062 = vld [vmem:[%s1059 + $0x10] sm:$0xff]
    %v1063 = vld [vmem:[%s1059 + $0x18] sm:$0xff]
    %v1065 = vsel %vm41, %v1060, 0
    %v1068 = vsel %vm41, %v1061, 0
    %v1071 = vsel %vm41, %v1062, 0
    %v1074 = vsel %vm41, %v1063, 0
    %1076 = vmatprep.subr.mxu0 0.0
    %1077 = vmatpush1.msra.mxu0 %v33
    %1078 = vmatprep.subr.mxu0 0.0
    %1079 = vmatpush1.msra.mxu0 %v34
    %1080 = vmatprep.subr.mxu0 0.0
    %1081 = vmatpush1.msra.mxu0 %v35
    %1082 = vmatprep.subr.mxu0 0.0
    %1083 = vmatpush1.msra.mxu0 %v36
    %1084 = vmatprep.subr.mxu0 0.0
    %1085 = vmatpush1.msra.mxu0 0.0
    %1086 = vmatprep.subr.mxu0 0.0
    %1087 = vmatpush1.msra.mxu0 0.0
    %1088 = vmatprep.subr.mxu0 0.0
    %1089 = vmatpush1.msra.mxu0 0.0
    %1090 = vmatprep.subr.mxu0 0.0
    %1091 = vmatpush1.msra.mxu0 0.0
    %1092 = vmatprep.subr.mxu0 0.0
    %1093 = vmatpush1.msra.mxu0 0.0
    %1094 = vmatprep.subr.mxu0 0.0
    %1095 = vmatpush1.msra.mxu0 0.0
    %1096 = vmatprep.subr.mxu0 0.0
    %1097 = vmatpush1.msra.mxu0 0.0
    %1098 = vmatprep.subr.mxu0 0.0
    %1099 = vmatpush1.msra.mxu0 0.0
    %1100 = vmatprep.subr.mxu0 0.0
    %1101 = vmatpush1.msra.mxu0 0.0
    %1102 = vmatprep.subr.mxu0 0.0
    %1103 = vmatpush1.msra.mxu0 0.0
    %1104 = vmatprep.subr.mxu0 0.0
    %1105 = vmatpush1.msra.mxu0 0.0
    %1106 = vmatprep.subr.mxu0 0.0
    %1107 = vmatpush1.msra.mxu0 0.0
    %1108 = vmatprep.subr.mxu0 0.0
    %1109 = vmatpush1.msra.mxu0 0.0
    %1110 = vmatprep.subr.mxu0 0.0
    %1111 = vmatpush1.msra.mxu0 0.0
    %1112 = vmatprep.subr.mxu0 0.0
    %1113 = vmatpush1.msra.mxu0 0.0
    %1114 = vmatprep.subr.mxu0 0.0
    %1115 = vmatpush1.msra.mxu0 0.0
    %1116 = vmatprep.subr.mxu0 0.0
    %1117 = vmatpush1.msra.mxu0 0.0
    %1118 = vmatprep.subr.mxu0 0.0
    %1119 = vmatpush1.msra.mxu0 0.0
    %1120 = vmatprep.subr.mxu0 0.0
    %1121 = vmatpush1.msra.mxu0 0.0
    %1122 = vmatprep.subr.mxu0 0.0
    %1123 = vmatpush1.msra.mxu0 0.0
    %1124 = vmatprep.subr.mxu0 0.0
    %1125 = vmatpush1.msra.mxu0 0.0
    %1126 = vmatprep.subr.mxu0 0.0
    %1127 = vmatpush1.msra.mxu0 0.0
    %1128 = vmatprep.subr.mxu0 0.0
    %1129 = vmatpush1.msra.mxu0 0.0
    %1130 = vmatprep.subr.mxu0 0.0
    %1131 = vmatpush1.msra.mxu0 0.0
    %1132 = vmatprep.subr.mxu0 0.0
    %1133 = vmatpush1.msra.mxu0 0.0
    %1134 = vmatprep.subr.mxu0 0.0
    %1135 = vmatpush1.msra.mxu0 0.0
    %1136 = vmatprep.subr.mxu0 0.0
    %1137 = vmatpush1.msra.mxu0 0.0
    %1138 = vmatprep.subr.mxu0 0.0
    %1139 = vmatpush1.msra.mxu0 0.0
    %1140 = vmatprep.mubr.f32.mxu0 0.0
    %1141 = vmatmul.mubr.f32.gmra.mrb[0].mxu0 %v1065
    %v1142 = vpop.f32.mrb[0].mxu0
    %v1143 = vadd.f32 0.0, %v1142
    %v1144 = vpop.f32.mrb[0].mxu0
    %1145 = vmatprep.mubr.f32.mxu0 0.0
    %1146 = vmatmul.mubr.f32.gmra.mrb[0].mxu0 %v1068
    %v1147 = vpop.f32.mrb[0].mxu0
    %v1148 = vadd.f32 0.0, %v1147
    %v1149 = vpop.f32.mrb[0].mxu0
    %1150 = vmatprep.mubr.f32.mxu0 0.0
    %1151 = vmatmul.mubr.f32.gmra.mrb[0].mxu0 %v1071
    %v1152 = vpop.f32.mrb[0].mxu0
    %v1153 = vadd.f32 0.0, %v1152
    %v1154 = vpop.f32.mrb[0].mxu0
    %1155 = vmatprep.mubr.f32.mxu0 0.0
    %1156 = vmatmul.mubr.f32.gmra.mrb[0].mxu0 %v1074
    %v1157 = vpop.f32.mrb[0].mxu0
    %v1158 = vadd.f32 0.0, %v1157
    %v1159 = vpop.f32.mrb[0].mxu0
    %1160 = vdwg.mxu0
    %s1161 = scalar_lea.vmem %s2, 80
    %v1162 = vld [vmem:[%s1161] sm:$0xff]
    %v1163 = vld [vmem:[%s1161 + $0x8] sm:$0xff]
    %v1165 = vsel %vm246, %v1143, 0
    %v1168 = vsel %vm246, %v1148, 0
    %v1171 = vsel %vm246, %v1153, 0
    %v1174 = vsel %vm246, %v1158, 0
    %1176 = vmatprep.subr.mxu0 0.0
    %1177 = vmatpush1.msra.mxu0 %v1162
    %1178 = vmatprep.subr.mxu0 0.0
    %1179 = vmatpush1.msra.mxu0 %v1163
    %1180 = vmatprep.subr.mxu0 0.0
    %1181 = vmatpush1.msra.mxu0 0.0
    %1182 = vmatprep.subr.mxu0 0.0
    %1183 = vmatpush1.msra.mxu0 0.0
    %1184 = vmatprep.subr.mxu0 0.0
    %1185 = vmatpush1.msra.mxu0 0.0
    %1186 = vmatprep.subr.mxu0 0.0
    %1187 = vmatpush1.msra.mxu0 0.0
    %1188 = vmatprep.subr.mxu0 0.0
    %1189 = vmatpush1.msra.mxu0 0.0
    %1190 = vmatprep.subr.mxu0 0.0
    %1191 = vmatpush1.msra.mxu0 0.0
    %1192 = vmatprep.subr.mxu0 0.0
    %1193 = vmatpush1.msra.mxu0 0.0
    %1194 = vmatprep.subr.mxu0 0.0
    %1195 = vmatpush1.msra.mxu0 0.0
    %1196 = vmatprep.subr.mxu0 0.0
    %1197 = vmatpush1.msra.mxu0 0.0
    %1198 = vmatprep.subr.mxu0 0.0
    %1199 = vmatpush1.msra.mxu0 0.0
    %1200 = vmatprep.subr.mxu0 0.0
    %1201 = vmatpush1.msra.mxu0 0.0
    %1202 = vmatprep.subr.mxu0 0.0
    %1203 = vmatpush1.msra.mxu0 0.0
    %1204 = vmatprep.subr.mxu0 0.0
    %1205 = vmatpush1.msra.mxu0 0.0
    %1206 = vmatprep.subr.mxu0 0.0
    %1207 = vmatpush1.msra.mxu0 0.0
    %1208 = vmatprep.subr.mxu0 0.0
    %1209 = vmatpush1.msra.mxu0 0.0
    %1210 = vmatprep.subr.mxu0 0.0
    %1211 = vmatpush1.msra.mxu0 0.0
    %1212 = vmatprep.subr.mxu0 0.0
    %1213 = vmatpush1.msra.mxu0 0.0
    %1214 = vmatprep.subr.mxu0 0.0
    %1215 = vmatpush1.msra.mxu0 0.0
    %1216 = vmatprep.subr.mxu0 0.0
    %1217 = vmatpush1.msra.mxu0 0.0
    %1218 = vmatprep.subr.mxu0 0.0
    %1219 = vmatpush1.msra.mxu0 0.0
    %1220 = vmatprep.subr.mxu0 0.0
    %1221 = vmatpush1.msra.mxu0 0.0
    %1222 = vmatprep.subr.mxu0 0.0
    %1223 = vmatpush1.msra.mxu0 0.0
    %1224 = vmatprep.subr.mxu0 0.0
    %1225 = vmatpush1.msra.mxu0 0.0
    %1226 = vmatprep.subr.mxu0 0.0
    %1227 = vmatpush1.msra.mxu0 0.0
    %1228 = vmatprep.subr.mxu0 0.0
    %1229 = vmatpush1.msra.mxu0 0.0
    %1230 = vmatprep.subr.mxu0 0.0
    %1231 = vmatpush1.msra.mxu0 0.0
    %1232 = vmatprep.subr.mxu0 0.0
    %1233 = vmatpush1.msra.mxu0 0.0
    %1234 = vmatprep.subr.mxu0 0.0
    %1235 = vmatpush1.msra.mxu0 0.0
    %1236 = vmatprep.subr.mxu0 0.0
    %1237 = vmatpush1.msra.mxu0 0.0
    %1238 = vmatprep.subr.mxu0 0.0
    %1239 = vmatpush1.msra.mxu0 0.0
    %1240 = vmatprep.mubr.f32.mxu0 0.0
    %1241 = vmatmul.mubr.f32.gmra.mrb[0].mxu0 %v1165
    %v1242 = vpop.f32.mrb[0].mxu0
    %v1243 = vadd.f32 0.0, %v1242
    %v1244 = vpop.f32.mrb[0].mxu0
    %1245 = vmatprep.mubr.f32.mxu0 0.0
    %1246 = vmatmul.mubr.f32.gmra.mrb[0].mxu0 %v1168
    %v1247 = vpop.f32.mrb[0].mxu0
    %v1248 = vadd.f32 0.0, %v1247
    %v1249 = vpop.f32.mrb[0].mxu0
    %1250 = vmatprep.mubr.f32.mxu0 0.0
    %1251 = vmatmul.mubr.f32.gmra.mrb[0].mxu0 %v1171
    %v1252 = vpop.f32.mrb[0].mxu0
    %v1253 = vadd.f32 0.0, %v1252
    %v1254 = vpop.f32.mrb[0].mxu0
    %1255 = vmatprep.mubr.f32.mxu0 0.0
    %1256 = vmatmul.mubr.f32.gmra.mrb[0].mxu0 %v1174
    %v1257 = vpop.f32.mrb[0].mxu0
    %v1258 = vadd.f32 0.0, %v1257
    %v1259 = vpop.f32.mrb[0].mxu0
    %1260 = vdwg.mxu0
    %v1261 = vadd.f32 %v1055, %v1243
    %v1262 = vadd.f32 %v1056, %v1248
    %v1263 = vadd.f32 %v1057, %v1253
    %v1264 = vadd.f32 %v1058, %v1258
    %s1265 = scalar_lea.vmem %s1, 192
    %v1266 = vld [vmem:[%s1265] sm:$0xff]
    %v1267 = vld [vmem:[%s1265 + $0x8] sm:$0xff]
    %v1268 = vld [vmem:[%s1265 + $0x10] sm:$0xff]
    %v1269 = vld [vmem:[%s1265 + $0x18] sm:$0xff]
    %v1271 = vsel %vm41, %v1266, 0
    %v1274 = vsel %vm41, %v1267, 0
    %v1277 = vsel %vm41, %v1268, 0
    %v1280 = vsel %vm41, %v1269, 0
    %1282 = vmatprep.subr.mxu0 0.0
    %1283 = vmatpush1.msra.mxu0 %v33
    %1284 = vmatprep.subr.mxu0 0.0
    %1285 = vmatpush1.msra.mxu0 %v34
    %1286 = vmatprep.subr.mxu0 0.0
    %1287 = vmatpush1.msra.mxu0 %v35
    %1288 = vmatprep.subr.mxu0 0.0
    %1289 = vmatpush1.msra.mxu0 %v36
    %1290 = vmatprep.subr.mxu0 0.0
    %1291 = vmatpush1.msra.mxu0 0.0
    %1292 = vmatprep.subr.mxu0 0.0
    %1293 = vmatpush1.msra.mxu0 0.0
    %1294 = vmatprep.subr.mxu0 0.0
    %1295 = vmatpush1.msra.mxu0 0.0
    %1296 = vmatprep.subr.mxu0 0.0
    %1297 = vmatpush1.msra.mxu0 0.0
    %1298 = vmatprep.subr.mxu0 0.0
    %1299 = vmatpush1.msra.mxu0 0.0
    %1300 = vmatprep.subr.mxu0 0.0
    %1301 = vmatpush1.msra.mxu0 0.0
    %1302 = vmatprep.subr.mxu0 0.0
    %1303 = vmatpush1.msra.mxu0 0.0
    %1304 = vmatprep.subr.mxu0 0.0
    %1305 = vmatpush1.msra.mxu0 0.0
    %1306 = vmatprep.subr.mxu0 0.0
    %1307 = vmatpush1.msra.mxu0 0.0
    %1308 = vmatprep.subr.mxu0 0.0
    %1309 = vmatpush1.msra.mxu0 0.0
    %1310 = vmatprep.subr.mxu0 0.0
    %1311 = vmatpush1.msra.mxu0 0.0
    %1312 = vmatprep.subr.mxu0 0.0
    %1313 = vmatpush1.msra.mxu0 0.0
    %1314 = vmatprep.subr.mxu0 0.0
    %1315 = vmatpush1.msra.mxu0 0.0
    %1316 = vmatprep.subr.mxu0 0.0
    %1317 = vmatpush1.msra.mxu0 0.0
    %1318 = vmatprep.subr.mxu0 0.0
    %1319 = vmatpush1.msra.mxu0 0.0
    %1320 = vmatprep.subr.mxu0 0.0
    %1321 = vmatpush1.msra.mxu0 0.0
    %1322 = vmatprep.subr.mxu0 0.0
    %1323 = vmatpush1.msra.mxu0 0.0
    %1324 = vmatprep.subr.mxu0 0.0
    %1325 = vmatpush1.msra.mxu0 0.0
    %1326 = vmatprep.subr.mxu0 0.0
    %1327 = vmatpush1.msra.mxu0 0.0
    %1328 = vmatprep.subr.mxu0 0.0
    %1329 = vmatpush1.msra.mxu0 0.0
    %1330 = vmatprep.subr.mxu0 0.0
    %1331 = vmatpush1.msra.mxu0 0.0
    %1332 = vmatprep.subr.mxu0 0.0
    %1333 = vmatpush1.msra.mxu0 0.0
    %1334 = vmatprep.subr.mxu0 0.0
    %1335 = vmatpush1.msra.mxu0 0.0
    %1336 = vmatprep.subr.mxu0 0.0
    %1337 = vmatpush1.msra.mxu0 0.0
    %1338 = vmatprep.subr.mxu0 0.0
    %1339 = vmatpush1.msra.mxu0 0.0
    %1340 = vmatprep.subr.mxu0 0.0
    %1341 = vmatpush1.msra.mxu0 0.0
    %1342 = vmatprep.subr.mxu0 0.0
    %1343 = vmatpush1.msra.mxu0 0.0
    %1344 = vmatprep.subr.mxu0 0.0
    %1345 = vmatpush1.msra.mxu0 0.0
    %1346 = vmatprep.mubr.f32.mxu0 0.0
    %1347 = vmatmul.mubr.f32.gmra.mrb[0].mxu0 %v1271
    %v1348 = vpop.f32.mrb[0].mxu0
    %v1349 = vadd.f32 0.0, %v1348
    %v1350 = vpop.f32.mrb[0].mxu0
    %1351 = vmatprep.mubr.f32.mxu0 0.0
    %1352 = vmatmul.mubr.f32.gmra.mrb[0].mxu0 %v1274
    %v1353 = vpop.f32.mrb[0].mxu0
    %v1354 = vadd.f32 0.0, %v1353
    %v1355 = vpop.f32.mrb[0].mxu0
    %1356 = vmatprep.mubr.f32.mxu0 0.0
    %1357 = vmatmul.mubr.f32.gmra.mrb[0].mxu0 %v1277
    %v1358 = vpop.f32.mrb[0].mxu0
    %v1359 = vadd.f32 0.0, %v1358
    %v1360 = vpop.f32.mrb[0].mxu0
    %1361 = vmatprep.mubr.f32.mxu0 0.0
    %1362 = vmatmul.mubr.f32.gmra.mrb[0].mxu0 %v1280
    %v1363 = vpop.f32.mrb[0].mxu0
    %v1364 = vadd.f32 0.0, %v1363
    %v1365 = vpop.f32.mrb[0].mxu0
    %1366 = vdwg.mxu0
    %s1367 = scalar_lea.vmem %s2, 96
    %v1368 = vld [vmem:[%s1367] sm:$0xff]
    %v1369 = vld [vmem:[%s1367 + $0x8] sm:$0xff]
    %v1371 = vsel %vm246, %v1349, 0
    %v1374 = vsel %vm246, %v1354, 0
    %v1377 = vsel %vm246, %v1359, 0
    %v1380 = vsel %vm246, %v1364, 0
    %1382 = vmatprep.subr.mxu0 0.0
    %1383 = vmatpush1.msra.mxu0 %v1368
    %1384 = vmatprep.subr.mxu0 0.0
    %1385 = vmatpush1.msra.mxu0 %v1369
    %1386 = vmatprep.subr.mxu0 0.0
    %1387 = vmatpush1.msra.mxu0 0.0
    %1388 = vmatprep.subr.mxu0 0.0
    %1389 = vmatpush1.msra.mxu0 0.0
    %1390 = vmatprep.subr.mxu0 0.0
    %1391 = vmatpush1.msra.mxu0 0.0
    %1392 = vmatprep.subr.mxu0 0.0
    %1393 = vmatpush1.msra.mxu0 0.0
    %1394 = vmatprep.subr.mxu0 0.0
    %1395 = vmatpush1.msra.mxu0 0.0
    %1396 = vmatprep.subr.mxu0 0.0
    %1397 = vmatpush1.msra.mxu0 0.0
    %1398 = vmatprep.subr.mxu0 0.0
    %1399 = vmatpush1.msra.mxu0 0.0
    %1400 = vmatprep.subr.mxu0 0.0
    %1401 = vmatpush1.msra.mxu0 0.0
    %1402 = vmatprep.subr.mxu0 0.0
    %1403 = vmatpush1.msra.mxu0 0.0
    %1404 = vmatprep.subr.mxu0 0.0
    %1405 = vmatpush1.msra.mxu0 0.0
    %1406 = vmatprep.subr.mxu0 0.0
    %1407 = vmatpush1.msra.mxu0 0.0
    %1408 = vmatprep.subr.mxu0 0.0
    %1409 = vmatpush1.msra.mxu0 0.0
    %1410 = vmatprep.subr.mxu0 0.0
    %1411 = vmatpush1.msra.mxu0 0.0
    %1412 = vmatprep.subr.mxu0 0.0
    %1413 = vmatpush1.msra.mxu0 0.0
    %1414 = vmatprep.subr.mxu0 0.0
    %1415 = vmatpush1.msra.mxu0 0.0
    %1416 = vmatprep.subr.mxu0 0.0
    %1417 = vmatpush1.msra.mxu0 0.0
    %1418 = vmatprep.subr.mxu0 0.0
    %1419 = vmatpush1.msra.mxu0 0.0
    %1420 = vmatprep.subr.mxu0 0.0
    %1421 = vmatpush1.msra.mxu0 0.0
    %1422 = vmatprep.subr.mxu0 0.0
    %1423 = vmatpush1.msra.mxu0 0.0
    %1424 = vmatprep.subr.mxu0 0.0
    %1425 = vmatpush1.msra.mxu0 0.0
    %1426 = vmatprep.subr.mxu0 0.0
    %1427 = vmatpush1.msra.mxu0 0.0
    %1428 = vmatprep.subr.mxu0 0.0
    %1429 = vmatpush1.msra.mxu0 0.0
    %1430 = vmatprep.subr.mxu0 0.0
    %1431 = vmatpush1.msra.mxu0 0.0
    %1432 = vmatprep.subr.mxu0 0.0
    %1433 = vmatpush1.msra.mxu0 0.0
    %1434 = vmatprep.subr.mxu0 0.0
    %1435 = vmatpush1.msra.mxu0 0.0
    %1436 = vmatprep.subr.mxu0 0.0
    %1437 = vmatpush1.msra.mxu0 0.0
    %1438 = vmatprep.subr.mxu0 0.0
    %1439 = vmatpush1.msra.mxu0 0.0
    %1440 = vmatprep.subr.mxu0 0.0
    %1441 = vmatpush1.msra.mxu0 0.0
    %1442 = vmatprep.subr.mxu0 0.0
    %1443 = vmatpush1.msra.mxu0 0.0
    %1444 = vmatprep.subr.mxu0 0.0
    %1445 = vmatpush1.msra.mxu0 0.0
    %1446 = vmatprep.mubr.f32.mxu0 0.0
    %1447 = vmatmul.mubr.f32.gmra.mrb[0].mxu0 %v1371
    %v1448 = vpop.f32.mrb[0].mxu0
    %v1449 = vadd.f32 0.0, %v1448
    %v1450 = vpop.f32.mrb[0].mxu0
    %1451 = vmatprep.mubr.f32.mxu0 0.0
    %1452 = vmatmul.mubr.f32.gmra.mrb[0].mxu0 %v1374
    %v1453 = vpop.f32.mrb[0].mxu0
    %v1454 = vadd.f32 0.0, %v1453
    %v1455 = vpop.f32.mrb[0].mxu0
    %1456 = vmatprep.mubr.f32.mxu0 0.0
    %1457 = vmatmul.mubr.f32.gmra.mrb[0].mxu0 %v1377
    %v1458 = vpop.f32.mrb[0].mxu0
    %v1459 = vadd.f32 0.0, %v1458
    %v1460 = vpop.f32.mrb[0].mxu0
    %1461 = vmatprep.mubr.f32.mxu0 0.0
    %1462 = vmatmul.mubr.f32.gmra.mrb[0].mxu0 %v1380
    %v1463 = vpop.f32.mrb[0].mxu0
    %v1464 = vadd.f32 0.0, %v1463
    %v1465 = vpop.f32.mrb[0].mxu0
    %1466 = vdwg.mxu0
    %v1467 = vadd.f32 %v1261, %v1449
    %v1468 = vadd.f32 %v1262, %v1454
    %v1469 = vadd.f32 %v1263, %v1459
    %v1470 = vadd.f32 %v1264, %v1464
    %s1471 = scalar_lea.vmem %s1, 224
    %v1472 = vld [vmem:[%s1471] sm:$0xff]
    %v1473 = vld [vmem:[%s1471 + $0x8] sm:$0xff]
    %v1474 = vld [vmem:[%s1471 + $0x10] sm:$0xff]
    %v1475 = vld [vmem:[%s1471 + $0x18] sm:$0xff]
    %v1477 = vsel %vm41, %v1472, 0
    %v1480 = vsel %vm41, %v1473, 0
    %v1483 = vsel %vm41, %v1474, 0
    %v1486 = vsel %vm41, %v1475, 0
    %1488 = vmatprep.subr.mxu0 0.0
    %1489 = vmatpush1.msra.mxu0 %v33
    %1490 = vmatprep.subr.mxu0 0.0
    %1491 = vmatpush1.msra.mxu0 %v34
    %1492 = vmatprep.subr.mxu0 0.0
    %1493 = vmatpush1.msra.mxu0 %v35
    %1494 = vmatprep.subr.mxu0 0.0
    %1495 = vmatpush1.msra.mxu0 %v36
    %1496 = vmatprep.subr.mxu0 0.0
    %1497 = vmatpush1.msra.mxu0 0.0
    %1498 = vmatprep.subr.mxu0 0.0
    %1499 = vmatpush1.msra.mxu0 0.0
    %1500 = vmatprep.subr.mxu0 0.0
    %1501 = vmatpush1.msra.mxu0 0.0
    %1502 = vmatprep.subr.mxu0 0.0
    %1503 = vmatpush1.msra.mxu0 0.0
    %1504 = vmatprep.subr.mxu0 0.0
    %1505 = vmatpush1.msra.mxu0 0.0
    %1506 = vmatprep.subr.mxu0 0.0
    %1507 = vmatpush1.msra.mxu0 0.0
    %1508 = vmatprep.subr.mxu0 0.0
    %1509 = vmatpush1.msra.mxu0 0.0
    %1510 = vmatprep.subr.mxu0 0.0
    %1511 = vmatpush1.msra.mxu0 0.0
    %1512 = vmatprep.subr.mxu0 0.0
    %1513 = vmatpush1.msra.mxu0 0.0
    %1514 = vmatprep.subr.mxu0 0.0
    %1515 = vmatpush1.msra.mxu0 0.0
    %1516 = vmatprep.subr.mxu0 0.0
    %1517 = vmatpush1.msra.mxu0 0.0
    %1518 = vmatprep.subr.mxu0 0.0
    %1519 = vmatpush1.msra.mxu0 0.0
    %1520 = vmatprep.subr.mxu0 0.0
    %1521 = vmatpush1.msra.mxu0 0.0
    %1522 = vmatprep.subr.mxu0 0.0
    %1523 = vmatpush1.msra.mxu0 0.0
    %1524 = vmatprep.subr.mxu0 0.0
    %1525 = vmatpush1.msra.mxu0 0.0
    %1526 = vmatprep.subr.mxu0 0.0
    %1527 = vmatpush1.msra.mxu0 0.0
    %1528 = vmatprep.subr.mxu0 0.0
    %1529 = vmatpush1.msra.mxu0 0.0
    %1530 = vmatprep.subr.mxu0 0.0
    %1531 = vmatpush1.msra.mxu0 0.0
    %1532 = vmatprep.subr.mxu0 0.0
    %1533 = vmatpush1.msra.mxu0 0.0
    %1534 = vmatprep.subr.mxu0 0.0
    %1535 = vmatpush1.msra.mxu0 0.0
    %1536 = vmatprep.subr.mxu0 0.0
    %1537 = vmatpush1.msra.mxu0 0.0
    %1538 = vmatprep.subr.mxu0 0.0
    %1539 = vmatpush1.msra.mxu0 0.0
    %1540 = vmatprep.subr.mxu0 0.0
    %1541 = vmatpush1.msra.mxu0 0.0
    %1542 = vmatprep.subr.mxu0 0.0
    %1543 = vmatpush1.msra.mxu0 0.0
    %1544 = vmatprep.subr.mxu0 0.0
    %1545 = vmatpush1.msra.mxu0 0.0
    %1546 = vmatprep.subr.mxu0 0.0
    %1547 = vmatpush1.msra.mxu0 0.0
    %1548 = vmatprep.subr.mxu0 0.0
    %1549 = vmatpush1.msra.mxu0 0.0
    %1550 = vmatprep.subr.mxu0 0.0
    %1551 = vmatpush1.msra.mxu0 0.0
    %1552 = vmatprep.mubr.f32.mxu0 0.0
    %1553 = vmatmul.mubr.f32.gmra.mrb[0].mxu0 %v1477
    %v1554 = vpop.f32.mrb[0].mxu0
    %v1555 = vadd.f32 0.0, %v1554
    %v1556 = vpop.f32.mrb[0].mxu0
    %1557 = vmatprep.mubr.f32.mxu0 0.0
    %1558 = vmatmul.mubr.f32.gmra.mrb[0].mxu0 %v1480
    %v1559 = vpop.f32.mrb[0].mxu0
    %v1560 = vadd.f32 0.0, %v1559
    %v1561 = vpop.f32.mrb[0].mxu0
    %1562 = vmatprep.mubr.f32.mxu0 0.0
    %1563 = vmatmul.mubr.f32.gmra.mrb[0].mxu0 %v1483
    %v1564 = vpop.f32.mrb[0].mxu0
    %v1565 = vadd.f32 0.0, %v1564
    %v1566 = vpop.f32.mrb[0].mxu0
    %1567 = vmatprep.mubr.f32.mxu0 0.0
    %1568 = vmatmul.mubr.f32.gmra.mrb[0].mxu0 %v1486
    %v1569 = vpop.f32.mrb[0].mxu0
    %v1570 = vadd.f32 0.0, %v1569
    %v1571 = vpop.f32.mrb[0].mxu0
    %1572 = vdwg.mxu0
    %s1573 = scalar_lea.vmem %s2, 112
    %v1574 = vld [vmem:[%s1573] sm:$0xff]
    %v1575 = vld [vmem:[%s1573 + $0x8] sm:$0xff]
    %v1577 = vsel %vm246, %v1555, 0
    %v1580 = vsel %vm246, %v1560, 0
    %v1583 = vsel %vm246, %v1565, 0
    %v1586 = vsel %vm246, %v1570, 0
    %1588 = vmatprep.subr.mxu0 0.0
    %1589 = vmatpush1.msra.mxu0 %v1574
    %1590 = vmatprep.subr.mxu0 0.0
    %1591 = vmatpush1.msra.mxu0 %v1575
    %1592 = vmatprep.subr.mxu0 0.0
    %1593 = vmatpush1.msra.mxu0 0.0
    %1594 = vmatprep.subr.mxu0 0.0
    %1595 = vmatpush1.msra.mxu0 0.0
    %1596 = vmatprep.subr.mxu0 0.0
    %1597 = vmatpush1.msra.mxu0 0.0
    %1598 = vmatprep.subr.mxu0 0.0
    %1599 = vmatpush1.msra.mxu0 0.0
    %1600 = vmatprep.subr.mxu0 0.0
    %1601 = vmatpush1.msra.mxu0 0.0
    %1602 = vmatprep.subr.mxu0 0.0
    %1603 = vmatpush1.msra.mxu0 0.0
    %1604 = vmatprep.subr.mxu0 0.0
    %1605 = vmatpush1.msra.mxu0 0.0
    %1606 = vmatprep.subr.mxu0 0.0
    %1607 = vmatpush1.msra.mxu0 0.0
    %1608 = vmatprep.subr.mxu0 0.0
    %1609 = vmatpush1.msra.mxu0 0.0
    %1610 = vmatprep.subr.mxu0 0.0
    %1611 = vmatpush1.msra.mxu0 0.0
    %1612 = vmatprep.subr.mxu0 0.0
    %1613 = vmatpush1.msra.mxu0 0.0
    %1614 = vmatprep.subr.mxu0 0.0
    %1615 = vmatpush1.msra.mxu0 0.0
    %1616 = vmatprep.subr.mxu0 0.0
    %1617 = vmatpush1.msra.mxu0 0.0
    %1618 = vmatprep.subr.mxu0 0.0
    %1619 = vmatpush1.msra.mxu0 0.0
    %1620 = vmatprep.subr.mxu0 0.0
    %1621 = vmatpush1.msra.mxu0 0.0
    %1622 = vmatprep.subr.mxu0 0.0
    %1623 = vmatpush1.msra.mxu0 0.0
    %1624 = vmatprep.subr.mxu0 0.0
    %1625 = vmatpush1.msra.mxu0 0.0
    %1626 = vmatprep.subr.mxu0 0.0
    %1627 = vmatpush1.msra.mxu0 0.0
    %1628 = vmatprep.subr.mxu0 0.0
    %1629 = vmatpush1.msra.mxu0 0.0
    %1630 = vmatprep.subr.mxu0 0.0
    %1631 = vmatpush1.msra.mxu0 0.0
    %1632 = vmatprep.subr.mxu0 0.0
    %1633 = vmatpush1.msra.mxu0 0.0
    %1634 = vmatprep.subr.mxu0 0.0
    %1635 = vmatpush1.msra.mxu0 0.0
    %1636 = vmatprep.subr.mxu0 0.0
    %1637 = vmatpush1.msra.mxu0 0.0
    %1638 = vmatprep.subr.mxu0 0.0
    %1639 = vmatpush1.msra.mxu0 0.0
    %1640 = vmatprep.subr.mxu0 0.0
    %1641 = vmatpush1.msra.mxu0 0.0
    %1642 = vmatprep.subr.mxu0 0.0
    %1643 = vmatpush1.msra.mxu0 0.0
    %1644 = vmatprep.subr.mxu0 0.0
    %1645 = vmatpush1.msra.mxu0 0.0
    %1646 = vmatprep.subr.mxu0 0.0
    %1647 = vmatpush1.msra.mxu0 0.0
    %1648 = vmatprep.subr.mxu0 0.0
    %1649 = vmatpush1.msra.mxu0 0.0
    %1650 = vmatprep.subr.mxu0 0.0
    %1651 = vmatpush1.msra.mxu0 0.0
    %1652 = vmatprep.mubr.f32.mxu0 0.0
    %1653 = vmatmul.mubr.f32.gmra.mrb[0].mxu0 %v1577
    %v1654 = vpop.f32.mrb[0].mxu0
    %v1655 = vadd.f32 0.0, %v1654
    %v1656 = vpop.f32.mrb[0].mxu0
    %1657 = vmatprep.mubr.f32.mxu0 0.0
    %1658 = vmatmul.mubr.f32.gmra.mrb[0].mxu0 %v1580
    %v1659 = vpop.f32.mrb[0].mxu0
    %v1660 = vadd.f32 0.0, %v1659
    %v1661 = vpop.f32.mrb[0].mxu0
    %1662 = vmatprep.mubr.f32.mxu0 0.0
    %1663 = vmatmul.mubr.f32.gmra.mrb[0].mxu0 %v1583
    %v1664 = vpop.f32.mrb[0].mxu0
    %v1665 = vadd.f32 0.0, %v1664
    %v1666 = vpop.f32.mrb[0].mxu0
    %1667 = vmatprep.mubr.f32.mxu0 0.0
    %1668 = vmatmul.mubr.f32.gmra.mrb[0].mxu0 %v1586
    %v1669 = vpop.f32.mrb[0].mxu0
    %v1670 = vadd.f32 0.0, %v1669
    %v1671 = vpop.f32.mrb[0].mxu0
    %1672 = vdwg.mxu0
    %v1673 = vadd.f32 %v1467, %v1655
    %v1674 = vadd.f32 %v1468, %v1660
    %v1675 = vadd.f32 %v1469, %v1665
    %v1676 = vadd.f32 %v1470, %v1670
    %s1677 = scalar_lea.vmem %s1, 256
    %v1678 = vld [vmem:[%s1677] sm:$0xff]
    %v1679 = vld [vmem:[%s1677 + $0x8] sm:$0xff]
    %v1680 = vld [vmem:[%s1677 + $0x10] sm:$0xff]
    %v1681 = vld [vmem:[%s1677 + $0x18] sm:$0xff]
    %v1683 = vsel %vm41, %v1678, 0
    %v1686 = vsel %vm41, %v1679, 0
    %v1689 = vsel %vm41, %v1680, 0
    %v1692 = vsel %vm41, %v1681, 0
    %1694 = vmatprep.subr.mxu0 0.0
    %1695 = vmatpush1.msra.mxu0 %v33
    %1696 = vmatprep.subr.mxu0 0.0
    %1697 = vmatpush1.msra.mxu0 %v34
    %1698 = vmatprep.subr.mxu0 0.0
    %1699 = vmatpush1.msra.mxu0 %v35
    %1700 = vmatprep.subr.mxu0 0.0
    %1701 = vmatpush1.msra.mxu0 %v36
    %1702 = vmatprep.subr.mxu0 0.0
    %1703 = vmatpush1.msra.mxu0 0.0
    %1704 = vmatprep.subr.mxu0 0.0
    %1705 = vmatpush1.msra.mxu0 0.0
    %1706 = vmatprep.subr.mxu0 0.0
    %1707 = vmatpush1.msra.mxu0 0.0
    %1708 = vmatprep.subr.mxu0 0.0
    %1709 = vmatpush1.msra.mxu0 0.0
    %1710 = vmatprep.subr.mxu0 0.0
    %1711 = vmatpush1.msra.mxu0 0.0
    %1712 = vmatprep.subr.mxu0 0.0
    %1713 = vmatpush1.msra.mxu0 0.0
    %1714 = vmatprep.subr.mxu0 0.0
    %1715 = vmatpush1.msra.mxu0 0.0
    %1716 = vmatprep.subr.mxu0 0.0
    %1717 = vmatpush1.msra.mxu0 0.0
    %1718 = vmatprep.subr.mxu0 0.0
    %1719 = vmatpush1.msra.mxu0 0.0
    %1720 = vmatprep.subr.mxu0 0.0
    %1721 = vmatpush1.msra.mxu0 0.0
    %1722 = vmatprep.subr.mxu0 0.0
    %1723 = vmatpush1.msra.mxu0 0.0
    %1724 = vmatprep.subr.mxu0 0.0
    %1725 = vmatpush1.msra.mxu0 0.0
    %1726 = vmatprep.subr.mxu0 0.0
    %1727 = vmatpush1.msra.mxu0 0.0
    %1728 = vmatprep.subr.mxu0 0.0
    %1729 = vmatpush1.msra.mxu0 0.0
    %1730 = vmatprep.subr.mxu0 0.0
    %1731 = vmatpush1.msra.mxu0 0.0
    %1732 = vmatprep.subr.mxu0 0.0
    %1733 = vmatpush1.msra.mxu0 0.0
    %1734 = vmatprep.subr.mxu0 0.0
    %1735 = vmatpush1.msra.mxu0 0.0
    %1736 = vmatprep.subr.mxu0 0.0
    %1737 = vmatpush1.msra.mxu0 0.0
    %1738 = vmatprep.subr.mxu0 0.0
    %1739 = vmatpush1.msra.mxu0 0.0
    %1740 = vmatprep.subr.mxu0 0.0
    %1741 = vmatpush1.msra.mxu0 0.0
    %1742 = vmatprep.subr.mxu0 0.0
    %1743 = vmatpush1.msra.mxu0 0.0
    %1744 = vmatprep.subr.mxu0 0.0
    %1745 = vmatpush1.msra.mxu0 0.0
    %1746 = vmatprep.subr.mxu0 0.0
    %1747 = vmatpush1.msra.mxu0 0.0
    %1748 = vmatprep.subr.mxu0 0.0
    %1749 = vmatpush1.msra.mxu0 0.0
    %1750 = vmatprep.subr.mxu0 0.0
    %1751 = vmatpush1.msra.mxu0 0.0
    %1752 = vmatprep.subr.mxu0 0.0
    %1753 = vmatpush1.msra.mxu0 0.0
    %1754 = vmatprep.subr.mxu0 0.0
    %1755 = vmatpush1.msra.mxu0 0.0
    %1756 = vmatprep.subr.mxu0 0.0
    %1757 = vmatpush1.msra.mxu0 0.0
    %1758 = vmatprep.mubr.f32.mxu0 0.0
    %1759 = vmatmul.mubr.f32.gmra.mrb[0].mxu0 %v1683
    %v1760 = vpop.f32.mrb[0].mxu0
    %v1761 = vadd.f32 0.0, %v1760
    %v1762 = vpop.f32.mrb[0].mxu0
    %1763 = vmatprep.mubr.f32.mxu0 0.0
    %1764 = vmatmul.mubr.f32.gmra.mrb[0].mxu0 %v1686
    %v1765 = vpop.f32.mrb[0].mxu0
    %v1766 = vadd.f32 0.0, %v1765
    %v1767 = vpop.f32.mrb[0].mxu0
    %1768 = vmatprep.mubr.f32.mxu0 0.0
    %1769 = vmatmul.mubr.f32.gmra.mrb[0].mxu0 %v1689
    %v1770 = vpop.f32.mrb[0].mxu0
    %v1771 = vadd.f32 0.0, %v1770
    %v1772 = vpop.f32.mrb[0].mxu0
    %1773 = vmatprep.mubr.f32.mxu0 0.0
    %1774 = vmatmul.mubr.f32.gmra.mrb[0].mxu0 %v1692
    %v1775 = vpop.f32.mrb[0].mxu0
    %v1776 = vadd.f32 0.0, %v1775
    %v1777 = vpop.f32.mrb[0].mxu0
    %1778 = vdwg.mxu0
    %s1779 = scalar_lea.vmem %s2, 128
    %v1780 = vld [vmem:[%s1779] sm:$0xff]
    %v1781 = vld [vmem:[%s1779 + $0x8] sm:$0xff]
    %v1783 = vsel %vm246, %v1761, 0
    %v1786 = vsel %vm246, %v1766, 0
    %v1789 = vsel %vm246, %v1771, 0
    %v1792 = vsel %vm246, %v1776, 0
    %1794 = vmatprep.subr.mxu0 0.0
    %1795 = vmatpush1.msra.mxu0 %v1780
    %1796 = vmatprep.subr.mxu0 0.0
    %1797 = vmatpush1.msra.mxu0 %v1781
    %1798 = vmatprep.subr.mxu0 0.0
    %1799 = vmatpush1.msra.mxu0 0.0
    %1800 = vmatprep.subr.mxu0 0.0
    %1801 = vmatpush1.msra.mxu0 0.0
    %1802 = vmatprep.subr.mxu0 0.0
    %1803 = vmatpush1.msra.mxu0 0.0
    %1804 = vmatprep.subr.mxu0 0.0
    %1805 = vmatpush1.msra.mxu0 0.0
    %1806 = vmatprep.subr.mxu0 0.0
    %1807 = vmatpush1.msra.mxu0 0.0
    %1808 = vmatprep.subr.mxu0 0.0
    %1809 = vmatpush1.msra.mxu0 0.0
    %1810 = vmatprep.subr.mxu0 0.0
    %1811 = vmatpush1.msra.mxu0 0.0
    %1812 = vmatprep.subr.mxu0 0.0
    %1813 = vmatpush1.msra.mxu0 0.0
    %1814 = vmatprep.subr.mxu0 0.0
    %1815 = vmatpush1.msra.mxu0 0.0
    %1816 = vmatprep.subr.mxu0 0.0
    %1817 = vmatpush1.msra.mxu0 0.0
    %1818 = vmatprep.subr.mxu0 0.0
    %1819 = vmatpush1.msra.mxu0 0.0
    %1820 = vmatprep.subr.mxu0 0.0
    %1821 = vmatpush1.msra.mxu0 0.0
    %1822 = vmatprep.subr.mxu0 0.0
    %1823 = vmatpush1.msra.mxu0 0.0
    %1824 = vmatprep.subr.mxu0 0.0
    %1825 = vmatpush1.msra.mxu0 0.0
    %1826 = vmatprep.subr.mxu0 0.0
    %1827 = vmatpush1.msra.mxu0 0.0
    %1828 = vmatprep.subr.mxu0 0.0
    %1829 = vmatpush1.msra.mxu0 0.0
    %1830 = vmatprep.subr.mxu0 0.0
    %1831 = vmatpush1.msra.mxu0 0.0
    %1832 = vmatprep.subr.mxu0 0.0
    %1833 = vmatpush1.msra.mxu0 0.0
    %1834 = vmatprep.subr.mxu0 0.0
    %1835 = vmatpush1.msra.mxu0 0.0
    %1836 = vmatprep.subr.mxu0 0.0
    %1837 = vmatpush1.msra.mxu0 0.0
    %1838 = vmatprep.subr.mxu0 0.0
    %1839 = vmatpush1.msra.mxu0 0.0
    %1840 = vmatprep.subr.mxu0 0.0
    %1841 = vmatpush1.msra.mxu0 0.0
    %1842 = vmatprep.subr.mxu0 0.0
    %1843 = vmatpush1.msra.mxu0 0.0
    %1844 = vmatprep.subr.mxu0 0.0
    %1845 = vmatpush1.msra.mxu0 0.0
    %1846 = vmatprep.subr.mxu0 0.0
    %1847 = vmatpush1.msra.mxu0 0.0
    %1848 = vmatprep.subr.mxu0 0.0
    %1849 = vmatpush1.msra.mxu0 0.0
    %1850 = vmatprep.subr.mxu0 0.0
    %1851 = vmatpush1.msra.mxu0 0.0
    %1852 = vmatprep.subr.mxu0 0.0
    %1853 = vmatpush1.msra.mxu0 0.0
    %1854 = vmatprep.subr.mxu0 0.0
    %1855 = vmatpush1.msra.mxu0 0.0
    %1856 = vmatprep.subr.mxu0 0.0
    %1857 = vmatpush1.msra.mxu0 0.0
    %1858 = vmatprep.mubr.f32.mxu0 0.0
    %1859 = vmatmul.mubr.f32.gmra.mrb[0].mxu0 %v1783
    %v1860 = vpop.f32.mrb[0].mxu0
    %v1861 = vadd.f32 0.0, %v1860
    %v1862 = vpop.f32.mrb[0].mxu0
    %1863 = vmatprep.mubr.f32.mxu0 0.0
    %1864 = vmatmul.mubr.f32.gmra.mrb[0].mxu0 %v1786
    %v1865 = vpop.f32.mrb[0].mxu0
    %v1866 = vadd.f32 0.0, %v1865
    %v1867 = vpop.f32.mrb[0].mxu0
    %1868 = vmatprep.mubr.f32.mxu0 0.0
    %1869 = vmatmul.mubr.f32.gmra.mrb[0].mxu0 %v1789
    %v1870 = vpop.f32.mrb[0].mxu0
    %v1871 = vadd.f32 0.0, %v1870
    %v1872 = vpop.f32.mrb[0].mxu0
    %1873 = vmatprep.mubr.f32.mxu0 0.0
    %1874 = vmatmul.mubr.f32.gmra.mrb[0].mxu0 %v1792
    %v1875 = vpop.f32.mrb[0].mxu0
    %v1876 = vadd.f32 0.0, %v1875
    %v1877 = vpop.f32.mrb[0].mxu0
    %1878 = vdwg.mxu0
    %v1879 = vadd.f32 %v1673, %v1861
    %v1880 = vadd.f32 %v1674, %v1866
    %v1881 = vadd.f32 %v1675, %v1871
    %v1882 = vadd.f32 %v1676, %v1876
    %v1883 = vld [vmem:[%s3] sm:$0x1]
    %v1885 = vlaneseq
    %v1886 = vshrl.u32 %v1885, 7
    %v1887 = vsub.s32 0, %v1886
    %v1888 = vrot.slane %v1883, %v1887
    %v1890 = vadd.f32 %v1879, %v1888
    %v1891 = vadd.f32 %v1880, %v1888
    %v1892 = vadd.f32 %v1881, %v1888
    %v1893 = vadd.f32 %v1882, %v1888
    %v1894 = vmax.f32 %v1890, 0.0
    %v1895 = vmax.f32 %v1891, 0.0
    %v1896 = vmax.f32 %v1892, 0.0
    %v1897 = vmax.f32 %v1893, 0.0
    %1898 = vmatprep.subr.mxu0 0.0
    %1899 = vmatpush1.msra.mxu0 %v1894
    %1900 = vmatprep.subr.mxu0 0.0
    %1901 = vmatpush1.msra.mxu0 %v1895
    %1902 = vmatprep.subr.mxu0 0.0
    %1903 = vmatpush1.msra.mxu0 %v1896
    %1904 = vmatprep.subr.mxu0 0.0
    %1905 = vmatpush1.msra.mxu0 %v1897
    %1906 = vmatprep.subr.mxu0 0.0
    %1907 = vmatpush1.msra.mxu0 0.0
    %1908 = vmatprep.subr.mxu0 0.0
    %1909 = vmatpush1.msra.mxu0 0.0
    %1910 = vmatprep.subr.mxu0 0.0
    %1911 = vmatpush1.msra.mxu0 0.0
    %1912 = vmatprep.subr.mxu0 0.0
    %1913 = vmatpush1.msra.mxu0 0.0
    %1914 = vmatprep.subr.mxu0 0.0
    %1915 = vmatpush1.msra.mxu0 0.0
    %1916 = vmatprep.subr.mxu0 0.0
    %1917 = vmatpush1.msra.mxu0 0.0
    %1918 = vmatprep.subr.mxu0 0.0
    %1919 = vmatpush1.msra.mxu0 0.0
    %1920 = vmatprep.subr.mxu0 0.0
    %1921 = vmatpush1.msra.mxu0 0.0
    %1922 = vmatprep.subr.mxu0 0.0
    %1923 = vmatpush1.msra.mxu0 0.0
    %1924 = vmatprep.subr.mxu0 0.0
    %1925 = vmatpush1.msra.mxu0 0.0
    %1926 = vmatprep.subr.mxu0 0.0
    %1927 = vmatpush1.msra.mxu0 0.0
    %1928 = vmatprep.subr.mxu0 0.0
    %1929 = vmatpush1.msra.mxu0 0.0
    %1930 = vmatprep.subr.mxu0 0.0
    %1931 = vmatpush1.msra.mxu0 0.0
    %1932 = vmatprep.subr.mxu0 0.0
    %1933 = vmatpush1.msra.mxu0 0.0
    %1934 = vmatprep.subr.mxu0 0.0
    %1935 = vmatpush1.msra.mxu0 0.0
    %1936 = vmatprep.subr.mxu0 0.0
    %1937 = vmatpush1.msra.mxu0 0.0
    %1938 = vmatprep.subr.mxu0 0.0
    %1939 = vmatpush1.msra.mxu0 0.0
    %1940 = vmatprep.subr.mxu0 0.0
    %1941 = vmatpush1.msra.mxu0 0.0
    %1942 = vmatprep.subr.mxu0 0.0
    %1943 = vmatpush1.msra.mxu0 0.0
    %1944 = vmatprep.subr.mxu0 0.0
    %1945 = vmatpush1.msra.mxu0 0.0
    %1946 = vmatprep.subr.mxu0 0.0
    %1947 = vmatpush1.msra.mxu0 0.0
    %1948 = vmatprep.subr.mxu0 0.0
    %1949 = vmatpush1.msra.mxu0 0.0
    %1950 = vmatprep.subr.mxu0 0.0
    %1951 = vmatpush1.msra.mxu0 0.0
    %1952 = vmatprep.subr.mxu0 0.0
    %1953 = vmatpush1.msra.mxu0 0.0
    %1954 = vmatprep.subr.mxu0 0.0
    %1955 = vmatpush1.msra.mxu0 0.0
    %1956 = vmatprep.subr.mxu0 0.0
    %1957 = vmatpush1.msra.mxu0 0.0
    %1958 = vmatprep.subr.mxu0 0.0
    %1959 = vmatpush1.msra.mxu0 0.0
    %1960 = vmatprep.subr.mxu0 0.0
    %1961 = vmatpush1.msra.mxu0 0.0
    %1962 = vmatprep.mubr.f32.mxu0 0.0
    %1963 = vmatmul.mubr.f32.gmra.mrb[0].mxu0 %v43
    %v1964 = vpop.f32.mrb[0].mxu0
    %v1965 = vadd.f32 0.0, %v1964
    %v1966 = vpop.f32.mrb[0].mxu0
    %1967 = vmatprep.mubr.f32.mxu0 0.0
    %1968 = vmatmul.mubr.f32.gmra.mrb[0].mxu0 %v46
    %v1969 = vpop.f32.mrb[0].mxu0
    %v1970 = vadd.f32 0.0, %v1969
    %v1971 = vpop.f32.mrb[0].mxu0
    %1972 = vmatprep.mubr.f32.mxu0 0.0
    %1973 = vmatmul.mubr.f32.gmra.mrb[0].mxu0 %v49
    %v1974 = vpop.f32.mrb[0].mxu0
    %v1975 = vadd.f32 0.0, %v1974
    %v1976 = vpop.f32.mrb[0].mxu0
    %1977 = vmatprep.mubr.f32.mxu0 0.0
    %1978 = vmatmul.mubr.f32.gmra.mrb[0].mxu0 %v52
    %v1979 = vpop.f32.mrb[0].mxu0
    %v1980 = vadd.f32 0.0, %v1979
    %v1981 = vpop.f32.mrb[0].mxu0
    %1982 = vdwg.mxu0
    %v1983 = vld [vmem:[%s4] sm:$0xff]
    %v1984 = vld [vmem:[%s4 + $0x8] sm:$0xff]
    %v1985 = vld [vmem:[%s4 + $0x10] sm:$0xff]
    %v1986 = vld [vmem:[%s4 + $0x18] sm:$0xff]
    %v1987 = vld [vmem:[%s4 + $0x20] sm:$0xff]
    %v1988 = vld [vmem:[%s4 + $0x28] sm:$0xff]
    %v1989 = vld [vmem:[%s4 + $0x30] sm:$0xff]
    %v1990 = vld [vmem:[%s4 + $0x38] sm:$0xff]
    %1991 = vmatprep.subr.mxu0 0.0
    %1992 = vmatpush1.msra.mxu0 %v1894
    %1993 = vmatprep.subr.mxu0 0.0
    %1994 = vmatpush1.msra.mxu0 %v1895
    %1995 = vmatprep.subr.mxu0 0.0
    %1996 = vmatpush1.msra.mxu0 %v1896
    %1997 = vmatprep.subr.mxu0 0.0
    %1998 = vmatpush1.msra.mxu0 %v1897
    %1999 = vmatprep.subr.mxu0 0.0
    %2000 = vmatpush1.msra.mxu0 0.0
    %2001 = vmatprep.subr.mxu0 0.0
    %2002 = vmatpush1.msra.mxu0 0.0
    %2003 = vmatprep.subr.mxu0 0.0
    %2004 = vmatpush1.msra.mxu0 0.0
    %2005 = vmatprep.subr.mxu0 0.0
    %2006 = vmatpush1.msra.mxu0 0.0
    %2007 = vmatprep.subr.mxu0 0.0
    %2008 = vmatpush1.msra.mxu0 0.0
    %2009 = vmatprep.subr.mxu0 0.0
    %2010 = vmatpush1.msra.mxu0 0.0
    %2011 = vmatprep.subr.mxu0 0.0
    %2012 = vmatpush1.msra.mxu0 0.0
    %2013 = vmatprep.subr.mxu0 0.0
    %2014 = vmatpush1.msra.mxu0 0.0
    %2015 = vmatprep.subr.mxu0 0.0
    %2016 = vmatpush1.msra.mxu0 0.0
    %2017 = vmatprep.subr.mxu0 0.0
    %2018 = vmatpush1.msra.mxu0 0.0
    %2019 = vmatprep.subr.mxu0 0.0
    %2020 = vmatpush1.msra.mxu0 0.0
    %2021 = vmatprep.subr.mxu0 0.0
    %2022 = vmatpush1.msra.mxu0 0.0
    %2023 = vmatprep.subr.mxu0 0.0
    %2024 = vmatpush1.msra.mxu0 0.0
    %2025 = vmatprep.subr.mxu0 0.0
    %2026 = vmatpush1.msra.mxu0 0.0
    %2027 = vmatprep.subr.mxu0 0.0
    %2028 = vmatpush1.msra.mxu0 0.0
    %2029 = vmatprep.subr.mxu0 0.0
    %2030 = vmatpush1.msra.mxu0 0.0
    %2031 = vmatprep.subr.mxu0 0.0
    %2032 = vmatpush1.msra.mxu0 0.0
    %2033 = vmatprep.subr.mxu0 0.0
    %2034 = vmatpush1.msra.mxu0 0.0
    %2035 = vmatprep.subr.mxu0 0.0
    %2036 = vmatpush1.msra.mxu0 0.0
    %2037 = vmatprep.subr.mxu0 0.0
    %2038 = vmatpush1.msra.mxu0 0.0
    %2039 = vmatprep.subr.mxu0 0.0
    %2040 = vmatpush1.msra.mxu0 0.0
    %2041 = vmatprep.subr.mxu0 0.0
    %2042 = vmatpush1.msra.mxu0 0.0
    %2043 = vmatprep.subr.mxu0 0.0
    %2044 = vmatpush1.msra.mxu0 0.0
    %2045 = vmatprep.subr.mxu0 0.0
    %2046 = vmatpush1.msra.mxu0 0.0
    %2047 = vmatprep.subr.mxu0 0.0
    %2048 = vmatpush1.msra.mxu0 0.0
    %2049 = vmatprep.subr.mxu0 0.0
    %2050 = vmatpush1.msra.mxu0 0.0
    %2051 = vmatprep.subr.mxu0 0.0
    %2052 = vmatpush1.msra.mxu0 0.0
    %2053 = vmatprep.subr.mxu0 0.0
    %2054 = vmatpush1.msra.mxu0 0.0
    %2055 = vmatprep.mubr.f32.mxu0 0.0
    %2056 = vmatmul.mubr.f32.gmra.mrb[0].mxu0 %v147
    %v2057 = vpop.f32.mrb[0].mxu0
    %v2058 = vadd.f32 0.0, %v2057
    %v2059 = vpop.f32.mrb[0].mxu0
    %2060 = vmatprep.mubr.f32.mxu0 0.0
    %2061 = vmatmul.mubr.f32.gmra.mrb[0].mxu0 %v150
    %v2062 = vpop.f32.mrb[0].mxu0
    %v2063 = vadd.f32 0.0, %v2062
    %v2064 = vpop.f32.mrb[0].mxu0
    %2065 = vmatprep.mubr.f32.mxu0 0.0
    %2066 = vmatmul.mubr.f32.gmra.mrb[0].mxu0 %v153
    %v2067 = vpop.f32.mrb[0].mxu0
    %v2068 = vadd.f32 0.0, %v2067
    %v2069 = vpop.f32.mrb[0].mxu0
    %2070 = vmatprep.mubr.f32.mxu0 0.0
    %2071 = vmatmul.mubr.f32.gmra.mrb[0].mxu0 %v156
    %v2072 = vpop.f32.mrb[0].mxu0
    %v2073 = vadd.f32 0.0, %v2072
    %v2074 = vpop.f32.mrb[0].mxu0
    %2075 = vdwg.mxu0
    %s2076 = scalar_lea.vmem %s4, 64
    %v2077 = vld [vmem:[%s2076] sm:$0xff]
    %v2078 = vld [vmem:[%s2076 + $0x8] sm:$0xff]
    %v2079 = vld [vmem:[%s2076 + $0x10] sm:$0xff]
    %v2080 = vld [vmem:[%s2076 + $0x18] sm:$0xff]
    %v2081 = vld [vmem:[%s2076 + $0x20] sm:$0xff]
    %v2082 = vld [vmem:[%s2076 + $0x28] sm:$0xff]
    %v2083 = vld [vmem:[%s2076 + $0x30] sm:$0xff]
    %v2084 = vld [vmem:[%s2076 + $0x38] sm:$0xff]
    %vm2085 = vcmask 523264
    %v2087 = vsel %vm2085, %v2058, 0
    %v2090 = vsel %vm2085, %v2063, 0
    %v2093 = vsel %vm2085, %v2068, 0
    %v2096 = vsel %vm2085, %v2073, 0
    %2098 = vmatprep.subr.mxu0 0.0
    %2099 = vmatpush1.msra.mxu0 %v2077
    %2100 = vmatprep.subr.mxu0 0.0
    %2101 = vmatpush1.msra.mxu0 %v2078
    %2102 = vmatprep.subr.mxu0 0.0
    %2103 = vmatpush1.msra.mxu0 %v2079
    %2104 = vmatprep.subr.mxu0 0.0
    %2105 = vmatpush1.msra.mxu0 %v2080
    %2106 = vmatprep.subr.mxu0 0.0
    %2107 = vmatpush1.msra.mxu0 %v2081
    %2108 = vmatprep.subr.mxu0 0.0
    %2109 = vmatpush1.msra.mxu0 %v2082
    %2110 = vmatprep.subr.mxu0 0.0
    %2111 = vmatpush1.msra.mxu0 %v2083
    %2112 = vmatprep.subr.mxu0 0.0
    %2113 = vmatpush1.msra.mxu0 %v2084
    %2114 = vmatprep.subr.mxu0 0.0
    %2115 = vmatpush1.msra.mxu0 0.0
    %2116 = vmatprep.subr.mxu0 0.0
    %2117 = vmatpush1.msra.mxu0 0.0
    %2118 = vmatprep.subr.mxu0 0.0
    %2119 = vmatpush1.msra.mxu0 0.0
    %2120 = vmatprep.subr.mxu0 0.0
    %2121 = vmatpush1.msra.mxu0 0.0
    %2122 = vmatprep.subr.mxu0 0.0
    %2123 = vmatpush1.msra.mxu0 0.0
    %2124 = vmatprep.subr.mxu0 0.0
    %2125 = vmatpush1.msra.mxu0 0.0
    %2126 = vmatprep.subr.mxu0 0.0
    %2127 = vmatpush1.msra.mxu0 0.0
    %2128 = vmatprep.subr.mxu0 0.0
    %2129 = vmatpush1.msra.mxu0 0.0
    %2130 = vmatprep.subr.mxu0 0.0
    %2131 = vmatpush1.msra.mxu0 0.0
    %2132 = vmatprep.subr.mxu0 0.0
    %2133 = vmatpush1.msra.mxu0 0.0
    %2134 = vmatprep.subr.mxu0 0.0
    %2135 = vmatpush1.msra.mxu0 0.0
    %2136 = vmatprep.subr.mxu0 0.0
    %2137 = vmatpush1.msra.mxu0 0.0
    %2138 = vmatprep.subr.mxu0 0.0
    %2139 = vmatpush1.msra.mxu0 0.0
    %2140 = vmatprep.subr.mxu0 0.0
    %2141 = vmatpush1.msra.mxu0 0.0
    %2142 = vmatprep.subr.mxu0 0.0
    %2143 = vmatpush1.msra.mxu0 0.0
    %2144 = vmatprep.subr.mxu0 0.0
    %2145 = vmatpush1.msra.mxu0 0.0
    %2146 = vmatprep.subr.mxu0 0.0
    %2147 = vmatpush1.msra.mxu0 0.0
    %2148 = vmatprep.subr.mxu0 0.0
    %2149 = vmatpush1.msra.mxu0 0.0
    %2150 = vmatprep.subr.mxu0 0.0
    %2151 = vmatpush1.msra.mxu0 0.0
    %2152 = vmatprep.subr.mxu0 0.0
    %2153 = vmatpush1.msra.mxu0 0.0
    %2154 = vmatprep.subr.mxu0 0.0
    %2155 = vmatpush1.msra.mxu0 0.0
    %2156 = vmatprep.subr.mxu0 0.0
    %2157 = vmatpush1.msra.mxu0 0.0
    %2158 = vmatprep.subr.mxu0 0.0
    %2159 = vmatpush1.msra.mxu0 0.0
    %2160 = vmatprep.subr.mxu0 0.0
    %2161 = vmatpush1.msra.mxu0 0.0
    %2162 = vmatprep.mubr.f32.mxu0 0.0
    %2163 = vmatmul.mubr.f32.gmra.mrb[0].mxu0 %v2087
    %v2164 = vpop.f32.mrb[0].mxu0
    %v2165 = vadd.f32 0.0, %v2164
    %v2166 = vpop.f32.mrb[0].mxu0
    %2167 = vmatprep.mubr.f32.mxu0 0.0
    %2168 = vmatmul.mubr.f32.gmra.mrb[0].mxu0 %v2090
    %v2169 = vpop.f32.mrb[0].mxu0
    %v2170 = vadd.f32 0.0, %v2169
    %v2171 = vpop.f32.mrb[0].mxu0
    %2172 = vmatprep.mubr.f32.mxu0 0.0
    %2173 = vmatmul.mubr.f32.gmra.mrb[0].mxu0 %v2093
    %v2174 = vpop.f32.mrb[0].mxu0
    %v2175 = vadd.f32 0.0, %v2174
    %v2176 = vpop.f32.mrb[0].mxu0
    %2177 = vmatprep.mubr.f32.mxu0 0.0
    %2178 = vmatmul.mubr.f32.gmra.mrb[0].mxu0 %v2096
    %v2179 = vpop.f32.mrb[0].mxu0
    %v2180 = vadd.f32 0.0, %v2179
    %v2181 = vpop.f32.mrb[0].mxu0
    %2182 = vdwg.mxu0
    %v2184 = vsel %vm2085, %v1965, 0
    %v2187 = vsel %vm2085, %v1970, 0
    %v2190 = vsel %vm2085, %v1975, 0
    %v2193 = vsel %vm2085, %v1980, 0
    %2195 = vmatprep.subr.mxu0 0.0
    %2196 = vmatpush1.msra.mxu0 %v1983
    %2197 = vmatprep.subr.mxu0 0.0
    %2198 = vmatpush1.msra.mxu0 %v1984
    %2199 = vmatprep.subr.mxu0 0.0
    %2200 = vmatpush1.msra.mxu0 %v1985
    %2201 = vmatprep.subr.mxu0 0.0
    %2202 = vmatpush1.msra.mxu0 %v1986
    %2203 = vmatprep.subr.mxu0 0.0
    %2204 = vmatpush1.msra.mxu0 %v1987
    %2205 = vmatprep.subr.mxu0 0.0
    %2206 = vmatpush1.msra.mxu0 %v1988
    %2207 = vmatprep.subr.mxu0 0.0
    %2208 = vmatpush1.msra.mxu0 %v1989
    %2209 = vmatprep.subr.mxu0 0.0
    %2210 = vmatpush1.msra.mxu0 %v1990
    %2211 = vmatprep.subr.mxu0 0.0
    %2212 = vmatpush1.msra.mxu0 0.0
    %2213 = vmatprep.subr.mxu0 0.0
    %2214 = vmatpush1.msra.mxu0 0.0
    %2215 = vmatprep.subr.mxu0 0.0
    %2216 = vmatpush1.msra.mxu0 0.0
    %2217 = vmatprep.subr.mxu0 0.0
    %2218 = vmatpush1.msra.mxu0 0.0
    %2219 = vmatprep.subr.mxu0 0.0
    %2220 = vmatpush1.msra.mxu0 0.0
    %2221 = vmatprep.subr.mxu0 0.0
    %2222 = vmatpush1.msra.mxu0 0.0
    %2223 = vmatprep.subr.mxu0 0.0
    %2224 = vmatpush1.msra.mxu0 0.0
    %2225 = vmatprep.subr.mxu0 0.0
    %2226 = vmatpush1.msra.mxu0 0.0
    %2227 = vmatprep.subr.mxu0 0.0
    %2228 = vmatpush1.msra.mxu0 0.0
    %2229 = vmatprep.subr.mxu0 0.0
    %2230 = vmatpush1.msra.mxu0 0.0
    %2231 = vmatprep.subr.mxu0 0.0
    %2232 = vmatpush1.msra.mxu0 0.0
    %2233 = vmatprep.subr.mxu0 0.0
    %2234 = vmatpush1.msra.mxu0 0.0
    %2235 = vmatprep.subr.mxu0 0.0
    %2236 = vmatpush1.msra.mxu0 0.0
    %2237 = vmatprep.subr.mxu0 0.0
    %2238 = vmatpush1.msra.mxu0 0.0
    %2239 = vmatprep.subr.mxu0 0.0
    %2240 = vmatpush1.msra.mxu0 0.0
    %2241 = vmatprep.subr.mxu0 0.0
    %2242 = vmatpush1.msra.mxu0 0.0
    %2243 = vmatprep.subr.mxu0 0.0
    %2244 = vmatpush1.msra.mxu0 0.0
    %2245 = vmatprep.subr.mxu0 0.0
    %2246 = vmatpush1.msra.mxu0 0.0
    %2247 = vmatprep.subr.mxu0 0.0
    %2248 = vmatpush1.msra.mxu0 0.0
    %2249 = vmatprep.subr.mxu0 0.0
    %2250 = vmatpush1.msra.mxu0 0.0
    %2251 = vmatprep.subr.mxu0 0.0
    %2252 = vmatpush1.msra.mxu0 0.0
    %2253 = vmatprep.subr.mxu0 0.0
    %2254 = vmatpush1.msra.mxu0 0.0
    %2255 = vmatprep.subr.mxu0 0.0
    %2256 = vmatpush1.msra.mxu0 0.0
    %2257 = vmatprep.subr.mxu0 0.0
    %2258 = vmatpush1.msra.mxu0 0.0
    %2259 = vmatprep.mubr.f32.mxu0 0.0
    %2260 = vmatmul.mubr.f32.gmra.mrb[0].mxu0 %v2184
    %v2261 = vpop.f32.mrb[0].mxu0
    %v2262 = vadd.f32 %v2165, %v2261
    %v2263 = vpop.f32.mrb[0].mxu0
    %2264 = vmatprep.mubr.f32.mxu0 0.0
    %2265 = vmatmul.mubr.f32.gmra.mrb[0].mxu0 %v2187
    %v2266 = vpop.f32.mrb[0].mxu0
    %v2267 = vadd.f32 %v2170, %v2266
    %v2268 = vpop.f32.mrb[0].mxu0
    %2269 = vmatprep.mubr.f32.mxu0 0.0
    %2270 = vmatmul.mubr.f32.gmra.mrb[0].mxu0 %v2190
    %v2271 = vpop.f32.mrb[0].mxu0
    %v2272 = vadd.f32 %v2175, %v2271
    %v2273 = vpop.f32.mrb[0].mxu0
    %2274 = vmatprep.mubr.f32.mxu0 0.0
    %2275 = vmatmul.mubr.f32.gmra.mrb[0].mxu0 %v2193
    %v2276 = vpop.f32.mrb[0].mxu0
    %v2277 = vadd.f32 %v2180, %v2276
    %v2278 = vpop.f32.mrb[0].mxu0
    %2279 = vdwg.mxu0
    %2280 = vmatprep.subr.mxu0 0.0
    %2281 = vmatpush1.msra.mxu0 %v1894
    %2282 = vmatprep.subr.mxu0 0.0
    %2283 = vmatpush1.msra.mxu0 %v1895
    %2284 = vmatprep.subr.mxu0 0.0
    %2285 = vmatpush1.msra.mxu0 %v1896
    %2286 = vmatprep.subr.mxu0 0.0
    %2287 = vmatpush1.msra.mxu0 %v1897
    %2288 = vmatprep.subr.mxu0 0.0
    %2289 = vmatpush1.msra.mxu0 0.0
    %2290 = vmatprep.subr.mxu0 0.0
    %2291 = vmatpush1.msra.mxu0 0.0
    %2292 = vmatprep.subr.mxu0 0.0
    %2293 = vmatpush1.msra.mxu0 0.0
    %2294 = vmatprep.subr.mxu0 0.0
    %2295 = vmatpush1.msra.mxu0 0.0
    %2296 = vmatprep.subr.mxu0 0.0
    %2297 = vmatpush1.msra.mxu0 0.0
    %2298 = vmatprep.subr.mxu0 0.0
    %2299 = vmatpush1.msra.mxu0 0.0
    %2300 = vmatprep.subr.mxu0 0.0
    %2301 = vmatpush1.msra.mxu0 0.0
    %2302 = vmatprep.subr.mxu0 0.0
    %2303 = vmatpush1.msra.mxu0 0.0
    %2304 = vmatprep.subr.mxu0 0.0
    %2305 = vmatpush1.msra.mxu0 0.0
    %2306 = vmatprep.subr.mxu0 0.0
    %2307 = vmatpush1.msra.mxu0 0.0
    %2308 = vmatprep.subr.mxu0 0.0
    %2309 = vmatpush1.msra.mxu0 0.0
    %2310 = vmatprep.subr.mxu0 0.0
    %2311 = vmatpush1.msra.mxu0 0.0
    %2312 = vmatprep.subr.mxu0 0.0
    %2313 = vmatpush1.msra.mxu0 0.0
    %2314 = vmatprep.subr.mxu0 0.0
    %2315 = vmatpush1.msra.mxu0 0.0
    %2316 = vmatprep.subr.mxu0 0.0
    %2317 = vmatpush1.msra.mxu0 0.0
    %2318 = vmatprep.subr.mxu0 0.0
    %2319 = vmatpush1.msra.mxu0 0.0
    %2320 = vmatprep.subr.mxu0 0.0
    %2321 = vmatpush1.msra.mxu0 0.0
    %2322 = vmatprep.subr.mxu0 0.0
    %2323 = vmatpush1.msra.mxu0 0.0
    %2324 = vmatprep.subr.mxu0 0.0
    %2325 = vmatpush1.msra.mxu0 0.0
    %2326 = vmatprep.subr.mxu0 0.0
    %2327 = vmatpush1.msra.mxu0 0.0
    %2328 = vmatprep.subr.mxu0 0.0
    %2329 = vmatpush1.msra.mxu0 0.0
    %2330 = vmatprep.subr.mxu0 0.0
    %2331 = vmatpush1.msra.mxu0 0.0
    %2332 = vmatprep.subr.mxu0 0.0
    %2333 = vmatpush1.msra.mxu0 0.0
    %2334 = vmatprep.subr.mxu0 0.0
    %2335 = vmatpush1.msra.mxu0 0.0
    %2336 = vmatprep.subr.mxu0 0.0
    %2337 = vmatpush1.msra.mxu0 0.0
    %2338 = vmatprep.subr.mxu0 0.0
    %2339 = vmatpush1.msra.mxu0 0.0
    %2340 = vmatprep.subr.mxu0 0.0
    %2341 = vmatpush1.msra.mxu0 0.0
    %2342 = vmatprep.subr.mxu0 0.0
    %2343 = vmatpush1.msra.mxu0 0.0
    %2344 = vmatprep.mubr.f32.mxu0 0.0
    %2345 = vmatmul.mubr.f32.gmra.mrb[0].mxu0 %v447
    %v2346 = vpop.f32.mrb[0].mxu0
    %v2347 = vadd.f32 0.0, %v2346
    %v2348 = vpop.f32.mrb[0].mxu0
    %2349 = vmatprep.mubr.f32.mxu0 0.0
    %2350 = vmatmul.mubr.f32.gmra.mrb[0].mxu0 %v450
    %v2351 = vpop.f32.mrb[0].mxu0
    %v2352 = vadd.f32 0.0, %v2351
    %v2353 = vpop.f32.mrb[0].mxu0
    %2354 = vmatprep.mubr.f32.mxu0 0.0
    %2355 = vmatmul.mubr.f32.gmra.mrb[0].mxu0 %v453
    %v2356 = vpop.f32.mrb[0].mxu0
    %v2357 = vadd.f32 0.0, %v2356
    %v2358 = vpop.f32.mrb[0].mxu0
    %2359 = vmatprep.mubr.f32.mxu0 0.0
    %2360 = vmatmul.mubr.f32.gmra.mrb[0].mxu0 %v456
    %v2361 = vpop.f32.mrb[0].mxu0
    %v2362 = vadd.f32 0.0, %v2361
    %v2363 = vpop.f32.mrb[0].mxu0
    %2364 = vdwg.mxu0
    %s2365 = scalar_lea.vmem %s4, 128
    %v2366 = vld [vmem:[%s2365] sm:$0xff]
    %v2367 = vld [vmem:[%s2365 + $0x8] sm:$0xff]
    %v2368 = vld [vmem:[%s2365 + $0x10] sm:$0xff]
    %v2369 = vld [vmem:[%s2365 + $0x18] sm:$0xff]
    %v2370 = vld [vmem:[%s2365 + $0x20] sm:$0xff]
    %v2371 = vld [vmem:[%s2365 + $0x28] sm:$0xff]
    %v2372 = vld [vmem:[%s2365 + $0x30] sm:$0xff]
    %v2373 = vld [vmem:[%s2365 + $0x38] sm:$0xff]
    %v2375 = vsel %vm2085, %v2347, 0
    %v2378 = vsel %vm2085, %v2352, 0
    %v2381 = vsel %vm2085, %v2357, 0
    %v2384 = vsel %vm2085, %v2362, 0
    %2386 = vmatprep.subr.mxu0 0.0
    %2387 = vmatpush1.msra.mxu0 %v2366
    %2388 = vmatprep.subr.mxu0 0.0
    %2389 = vmatpush1.msra.mxu0 %v2367
    %2390 = vmatprep.subr.mxu0 0.0
    %2391 = vmatpush1.msra.mxu0 %v2368
    %2392 = vmatprep.subr.mxu0 0.0
    %2393 = vmatpush1.msra.mxu0 %v2369
    %2394 = vmatprep.subr.mxu0 0.0
    %2395 = vmatpush1.msra.mxu0 %v2370
    %2396 = vmatprep.subr.mxu0 0.0
    %2397 = vmatpush1.msra.mxu0 %v2371
    %2398 = vmatprep.subr.mxu0 0.0
    %2399 = vmatpush1.msra.mxu0 %v2372
    %2400 = vmatprep.subr.mxu0 0.0
    %2401 = vmatpush1.msra.mxu0 %v2373
    %2402 = vmatprep.subr.mxu0 0.0
    %2403 = vmatpush1.msra.mxu0 0.0
    %2404 = vmatprep.subr.mxu0 0.0
    %2405 = vmatpush1.msra.mxu0 0.0
    %2406 = vmatprep.subr.mxu0 0.0
    %2407 = vmatpush1.msra.mxu0 0.0
    %2408 = vmatprep.subr.mxu0 0.0
    %2409 = vmatpush1.msra.mxu0 0.0
    %2410 = vmatprep.subr.mxu0 0.0
    %2411 = vmatpush1.msra.mxu0 0.0
    %2412 = vmatprep.subr.mxu0 0.0
    %2413 = vmatpush1.msra.mxu0 0.0
    %2414 = vmatprep.subr.mxu0 0.0
    %2415 = vmatpush1.msra.mxu0 0.0
    %2416 = vmatprep.subr.mxu0 0.0
    %2417 = vmatpush1.msra.mxu0 0.0
    %2418 = vmatprep.subr.mxu0 0.0
    %2419 = vmatpush1.msra.mxu0 0.0
    %2420 = vmatprep.subr.mxu0 0.0
    %2421 = vmatpush1.msra.mxu0 0.0
    %2422 = vmatprep.subr.mxu0 0.0
    %2423 = vmatpush1.msra.mxu0 0.0
    %2424 = vmatprep.subr.mxu0 0.0
    %2425 = vmatpush1.msra.mxu0 0.0
    %2426 = vmatprep.subr.mxu0 0.0
    %2427 = vmatpush1.msra.mxu0 0.0
    %2428 = vmatprep.subr.mxu0 0.0
    %2429 = vmatpush1.msra.mxu0 0.0
    %2430 = vmatprep.subr.mxu0 0.0
    %2431 = vmatpush1.msra.mxu0 0.0
    %2432 = vmatprep.subr.mxu0 0.0
    %2433 = vmatpush1.msra.mxu0 0.0
    %2434 = vmatprep.subr.mxu0 0.0
    %2435 = vmatpush1.msra.mxu0 0.0
    %2436 = vmatprep.subr.mxu0 0.0
    %2437 = vmatpush1.msra.mxu0 0.0
    %2438 = vmatprep.subr.mxu0 0.0
    %2439 = vmatpush1.msra.mxu0 0.0
    %2440 = vmatprep.subr.mxu0 0.0
    %2441 = vmatpush1.msra.mxu0 0.0
    %2442 = vmatprep.subr.mxu0 0.0
    %2443 = vmatpush1.msra.mxu0 0.0
    %2444 = vmatprep.subr.mxu0 0.0
    %2445 = vmatpush1.msra.mxu0 0.0
    %2446 = vmatprep.subr.mxu0 0.0
    %2447 = vmatpush1.msra.mxu0 0.0
    %2448 = vmatprep.subr.mxu0 0.0
    %2449 = vmatpush1.msra.mxu0 0.0
    %2450 = vmatprep.mubr.f32.mxu0 0.0
    %2451 = vmatmul.mubr.f32.gmra.mrb[0].mxu0 %v2375
    %v2452 = vpop.f32.mrb[0].mxu0
    %v2453 = vadd.f32 0.0, %v2452
    %v2454 = vpop.f32.mrb[0].mxu0
    %2455 = vmatprep.mubr.f32.mxu0 0.0
    %2456 = vmatmul.mubr.f32.gmra.mrb[0].mxu0 %v2378
    %v2457 = vpop.f32.mrb[0].mxu0
    %v2458 = vadd.f32 0.0, %v2457
    %v2459 = vpop.f32.mrb[0].mxu0
    %2460 = vmatprep.mubr.f32.mxu0 0.0
    %2461 = vmatmul.mubr.f32.gmra.mrb[0].mxu0 %v2381
    %v2462 = vpop.f32.mrb[0].mxu0
    %v2463 = vadd.f32 0.0, %v2462
    %v2464 = vpop.f32.mrb[0].mxu0
    %2465 = vmatprep.mubr.f32.mxu0 0.0
    %2466 = vmatmul.mubr.f32.gmra.mrb[0].mxu0 %v2384
    %v2467 = vpop.f32.mrb[0].mxu0
    %v2468 = vadd.f32 0.0, %v2467
    %v2469 = vpop.f32.mrb[0].mxu0
    %2470 = vdwg.mxu0
    %v2471 = vadd.f32 %v2262, %v2453
    %v2472 = vadd.f32 %v2267, %v2458
    %v2473 = vadd.f32 %v2272, %v2463
    %v2474 = vadd.f32 %v2277, %v2468
    %2475 = vmatprep.subr.mxu0 0.0
    %2476 = vmatpush1.msra.mxu0 %v1894
    %2477 = vmatprep.subr.mxu0 0.0
    %2478 = vmatpush1.msra.mxu0 %v1895
    %2479 = vmatprep.subr.mxu0 0.0
    %2480 = vmatpush1.msra.mxu0 %v1896
    %2481 = vmatprep.subr.mxu0 0.0
    %2482 = vmatpush1.msra.mxu0 %v1897
    %2483 = vmatprep.subr.mxu0 0.0
    %2484 = vmatpush1.msra.mxu0 0.0
    %2485 = vmatprep.subr.mxu0 0.0
    %2486 = vmatpush1.msra.mxu0 0.0
    %2487 = vmatprep.subr.mxu0 0.0
    %2488 = vmatpush1.msra.mxu0 0.0
    %2489 = vmatprep.subr.mxu0 0.0
    %2490 = vmatpush1.msra.mxu0 0.0
    %2491 = vmatprep.subr.mxu0 0.0
    %2492 = vmatpush1.msra.mxu0 0.0
    %2493 = vmatprep.subr.mxu0 0.0
    %2494 = vmatpush1.msra.mxu0 0.0
    %2495 = vmatprep.subr.mxu0 0.0
    %2496 = vmatpush1.msra.mxu0 0.0
    %2497 = vmatprep.subr.mxu0 0.0
    %2498 = vmatpush1.msra.mxu0 0.0
    %2499 = vmatprep.subr.mxu0 0.0
    %2500 = vmatpush1.msra.mxu0 0.0
    %2501 = vmatprep.subr.mxu0 0.0
    %2502 = vmatpush1.msra.mxu0 0.0
    %2503 = vmatprep.subr.mxu0 0.0
    %2504 = vmatpush1.msra.mxu0 0.0
    %2505 = vmatprep.subr.mxu0 0.0
    %2506 = vmatpush1.msra.mxu0 0.0
    %2507 = vmatprep.subr.mxu0 0.0
    %2508 = vmatpush1.msra.mxu0 0.0
    %2509 = vmatprep.subr.mxu0 0.0
    %2510 = vmatpush1.msra.mxu0 0.0
    %2511 = vmatprep.subr.mxu0 0.0
    %2512 = vmatpush1.msra.mxu0 0.0
    %2513 = vmatprep.subr.mxu0 0.0
    %2514 = vmatpush1.msra.mxu0 0.0
    %2515 = vmatprep.subr.mxu0 0.0
    %2516 = vmatpush1.msra.mxu0 0.0
    %2517 = vmatprep.subr.mxu0 0.0
    %2518 = vmatpush1.msra.mxu0 0.0
    %2519 = vmatprep.subr.mxu0 0.0
    %2520 = vmatpush1.msra.mxu0 0.0
    %2521 = vmatprep.subr.mxu0 0.0
    %2522 = vmatpush1.msra.mxu0 0.0
    %2523 = vmatprep.subr.mxu0 0.0
    %2524 = vmatpush1.msra.mxu0 0.0
    %2525 = vmatprep.subr.mxu0 0.0
    %2526 = vmatpush1.msra.mxu0 0.0
    %2527 = vmatprep.subr.mxu0 0.0
    %2528 = vmatpush1.msra.mxu0 0.0
    %2529 = vmatprep.subr.mxu0 0.0
    %2530 = vmatpush1.msra.mxu0 0.0
    %2531 = vmatprep.subr.mxu0 0.0
    %2532 = vmatpush1.msra.mxu0 0.0
    %2533 = vmatprep.subr.mxu0 0.0
    %2534 = vmatpush1.msra.mxu0 0.0
    %2535 = vmatprep.subr.mxu0 0.0
    %2536 = vmatpush1.msra.mxu0 0.0
    %2537 = vmatprep.subr.mxu0 0.0
    %2538 = vmatpush1.msra.mxu0 0.0
    %2539 = vmatprep.mubr.f32.mxu0 0.0
    %2540 = vmatmul.mubr.f32.gmra.mrb[0].mxu0 %v653
    %v2541 = vpop.f32.mrb[0].mxu0
    %v2542 = vadd.f32 0.0, %v2541
    %v2543 = vpop.f32.mrb[0].mxu0
    %2544 = vmatprep.mubr.f32.mxu0 0.0
    %2545 = vmatmul.mubr.f32.gmra.mrb[0].mxu0 %v656
    %v2546 = vpop.f32.mrb[0].mxu0
    %v2547 = vadd.f32 0.0, %v2546
    %v2548 = vpop.f32.mrb[0].mxu0
    %2549 = vmatprep.mubr.f32.mxu0 0.0
    %2550 = vmatmul.mubr.f32.gmra.mrb[0].mxu0 %v659
    %v2551 = vpop.f32.mrb[0].mxu0
    %v2552 = vadd.f32 0.0, %v2551
    %v2553 = vpop.f32.mrb[0].mxu0
    %2554 = vmatprep.mubr.f32.mxu0 0.0
    %2555 = vmatmul.mubr.f32.gmra.mrb[0].mxu0 %v662
    %v2556 = vpop.f32.mrb[0].mxu0
    %v2557 = vadd.f32 0.0, %v2556
    %v2558 = vpop.f32.mrb[0].mxu0
    %2559 = vdwg.mxu0
    %s2560 = scalar_lea.vmem %s4, 192
    %v2561 = vld [vmem:[%s2560] sm:$0xff]
    %v2562 = vld [vmem:[%s2560 + $0x8] sm:$0xff]
    %v2563 = vld [vmem:[%s2560 + $0x10] sm:$0xff]
    %v2564 = vld [vmem:[%s2560 + $0x18] sm:$0xff]
    %v2565 = vld [vmem:[%s2560 + $0x20] sm:$0xff]
    %v2566 = vld [vmem:[%s2560 + $0x28] sm:$0xff]
    %v2567 = vld [vmem:[%s2560 + $0x30] sm:$0xff]
    %v2568 = vld [vmem:[%s2560 + $0x38] sm:$0xff]
    %v2570 = vsel %vm2085, %v2542, 0
    %v2573 = vsel %vm2085, %v2547, 0
    %v2576 = vsel %vm2085, %v2552, 0
    %v2579 = vsel %vm2085, %v2557, 0
    %2581 = vmatprep.subr.mxu0 0.0
    %2582 = vmatpush1.msra.mxu0 %v2561
    %2583 = vmatprep.subr.mxu0 0.0
    %2584 = vmatpush1.msra.mxu0 %v2562
    %2585 = vmatprep.subr.mxu0 0.0
    %2586 = vmatpush1.msra.mxu0 %v2563
    %2587 = vmatprep.subr.mxu0 0.0
    %2588 = vmatpush1.msra.mxu0 %v2564
    %2589 = vmatprep.subr.mxu0 0.0
    %2590 = vmatpush1.msra.mxu0 %v2565
    %2591 = vmatprep.subr.mxu0 0.0
    %2592 = vmatpush1.msra.mxu0 %v2566
    %2593 = vmatprep.subr.mxu0 0.0
    %2594 = vmatpush1.msra.mxu0 %v2567
    %2595 = vmatprep.subr.mxu0 0.0
    %2596 = vmatpush1.msra.mxu0 %v2568
    %2597 = vmatprep.subr.mxu0 0.0
    %2598 = vmatpush1.msra.mxu0 0.0
    %2599 = vmatprep.subr.mxu0 0.0
    %2600 = vmatpush1.msra.mxu0 0.0
    %2601 = vmatprep.subr.mxu0 0.0
    %2602 = vmatpush1.msra.mxu0 0.0
    %2603 = vmatprep.subr.mxu0 0.0
    %2604 = vmatpush1.msra.mxu0 0.0
    %2605 = vmatprep.subr.mxu0 0.0
    %2606 = vmatpush1.msra.mxu0 0.0
    %2607 = vmatprep.subr.mxu0 0.0
    %2608 = vmatpush1.msra.mxu0 0.0
    %2609 = vmatprep.subr.mxu0 0.0
    %2610 = vmatpush1.msra.mxu0 0.0
    %2611 = vmatprep.subr.mxu0 0.0
    %2612 = vmatpush1.msra.mxu0 0.0
    %2613 = vmatprep.subr.mxu0 0.0
    %2614 = vmatpush1.msra.mxu0 0.0
    %2615 = vmatprep.subr.mxu0 0.0
    %2616 = vmatpush1.msra.mxu0 0.0
    %2617 = vmatprep.subr.mxu0 0.0
    %2618 = vmatpush1.msra.mxu0 0.0
    %2619 = vmatprep.subr.mxu0 0.0
    %2620 = vmatpush1.msra.mxu0 0.0
    %2621 = vmatprep.subr.mxu0 0.0
    %2622 = vmatpush1.msra.mxu0 0.0
    %2623 = vmatprep.subr.mxu0 0.0
    %2624 = vmatpush1.msra.mxu0 0.0
    %2625 = vmatprep.subr.mxu0 0.0
    %2626 = vmatpush1.msra.mxu0 0.0
    %2627 = vmatprep.subr.mxu0 0.0
    %2628 = vmatpush1.msra.mxu0 0.0
    %2629 = vmatprep.subr.mxu0 0.0
    %2630 = vmatpush1.msra.mxu0 0.0
    %2631 = vmatprep.subr.mxu0 0.0
    %2632 = vmatpush1.msra.mxu0 0.0
    %2633 = vmatprep.subr.mxu0 0.0
    %2634 = vmatpush1.msra.mxu0 0.0
    %2635 = vmatprep.subr.mxu0 0.0
    %2636 = vmatpush1.msra.mxu0 0.0
    %2637 = vmatprep.subr.mxu0 0.0
    %2638 = vmatpush1.msra.mxu0 0.0
    %2639 = vmatprep.subr.mxu0 0.0
    %2640 = vmatpush1.msra.mxu0 0.0
    %2641 = vmatprep.subr.mxu0 0.0
    %2642 = vmatpush1.msra.mxu0 0.0
    %2643 = vmatprep.subr.mxu0 0.0
    %2644 = vmatpush1.msra.mxu0 0.0
    %2645 = vmatprep.mubr.f32.mxu0 0.0
    %2646 = vmatmul.mubr.f32.gmra.mrb[0].mxu0 %v2570
    %v2647 = vpop.f32.mrb[0].mxu0
    %v2648 = vadd.f32 0.0, %v2647
    %v2649 = vpop.f32.mrb[0].mxu0
    %2650 = vmatprep.mubr.f32.mxu0 0.0
    %2651 = vmatmul.mubr.f32.gmra.mrb[0].mxu0 %v2573
    %v2652 = vpop.f32.mrb[0].mxu0
    %v2653 = vadd.f32 0.0, %v2652
    %v2654 = vpop.f32.mrb[0].mxu0
    %2655 = vmatprep.mubr.f32.mxu0 0.0
    %2656 = vmatmul.mubr.f32.gmra.mrb[0].mxu0 %v2576
    %v2657 = vpop.f32.mrb[0].mxu0
    %v2658 = vadd.f32 0.0, %v2657
    %v2659 = vpop.f32.mrb[0].mxu0
    %2660 = vmatprep.mubr.f32.mxu0 0.0
    %2661 = vmatmul.mubr.f32.gmra.mrb[0].mxu0 %v2579
    %v2662 = vpop.f32.mrb[0].mxu0
    %v2663 = vadd.f32 0.0, %v2662
    %v2664 = vpop.f32.mrb[0].mxu0
    %2665 = vdwg.mxu0
    %v2666 = vadd.f32 %v2471, %v2648
    %v2667 = vadd.f32 %v2472, %v2653
    %v2668 = vadd.f32 %v2473, %v2658
    %v2669 = vadd.f32 %v2474, %v2663
    %2670 = vmatprep.subr.mxu0 0.0
    %2671 = vmatpush1.msra.mxu0 %v1894
    %2672 = vmatprep.subr.mxu0 0.0
    %2673 = vmatpush1.msra.mxu0 %v1895
    %2674 = vmatprep.subr.mxu0 0.0
    %2675 = vmatpush1.msra.mxu0 %v1896
    %2676 = vmatprep.subr.mxu0 0.0
    %2677 = vmatpush1.msra.mxu0 %v1897
    %2678 = vmatprep.subr.mxu0 0.0
    %2679 = vmatpush1.msra.mxu0 0.0
    %2680 = vmatprep.subr.mxu0 0.0
    %2681 = vmatpush1.msra.mxu0 0.0
    %2682 = vmatprep.subr.mxu0 0.0
    %2683 = vmatpush1.msra.mxu0 0.0
    %2684 = vmatprep.subr.mxu0 0.0
    %2685 = vmatpush1.msra.mxu0 0.0
    %2686 = vmatprep.subr.mxu0 0.0
    %2687 = vmatpush1.msra.mxu0 0.0
    %2688 = vmatprep.subr.mxu0 0.0
    %2689 = vmatpush1.msra.mxu0 0.0
    %2690 = vmatprep.subr.mxu0 0.0
    %2691 = vmatpush1.msra.mxu0 0.0
    %2692 = vmatprep.subr.mxu0 0.0
    %2693 = vmatpush1.msra.mxu0 0.0
    %2694 = vmatprep.subr.mxu0 0.0
    %2695 = vmatpush1.msra.mxu0 0.0
    %2696 = vmatprep.subr.mxu0 0.0
    %2697 = vmatpush1.msra.mxu0 0.0
    %2698 = vmatprep.subr.mxu0 0.0
    %2699 = vmatpush1.msra.mxu0 0.0
    %2700 = vmatprep.subr.mxu0 0.0
    %2701 = vmatpush1.msra.mxu0 0.0
    %2702 = vmatprep.subr.mxu0 0.0
    %2703 = vmatpush1.msra.mxu0 0.0
    %2704 = vmatprep.subr.mxu0 0.0
    %2705 = vmatpush1.msra.mxu0 0.0
    %2706 = vmatprep.subr.mxu0 0.0
    %2707 = vmatpush1.msra.mxu0 0.0
    %2708 = vmatprep.subr.mxu0 0.0
    %2709 = vmatpush1.msra.mxu0 0.0
    %2710 = vmatprep.subr.mxu0 0.0
    %2711 = vmatpush1.msra.mxu0 0.0
    %2712 = vmatprep.subr.mxu0 0.0
    %2713 = vmatpush1.msra.mxu0 0.0
    %2714 = vmatprep.subr.mxu0 0.0
    %2715 = vmatpush1.msra.mxu0 0.0
    %2716 = vmatprep.subr.mxu0 0.0
    %2717 = vmatpush1.msra.mxu0 0.0
    %2718 = vmatprep.subr.mxu0 0.0
    %2719 = vmatpush1.msra.mxu0 0.0
    %2720 = vmatprep.subr.mxu0 0.0
    %2721 = vmatpush1.msra.mxu0 0.0
    %2722 = vmatprep.subr.mxu0 0.0
    %2723 = vmatpush1.msra.mxu0 0.0
    %2724 = vmatprep.subr.mxu0 0.0
    %2725 = vmatpush1.msra.mxu0 0.0
    %2726 = vmatprep.subr.mxu0 0.0
    %2727 = vmatpush1.msra.mxu0 0.0
    %2728 = vmatprep.subr.mxu0 0.0
    %2729 = vmatpush1.msra.mxu0 0.0
    %2730 = vmatprep.subr.mxu0 0.0
    %2731 = vmatpush1.msra.mxu0 0.0
    %2732 = vmatprep.subr.mxu0 0.0
    %2733 = vmatpush1.msra.mxu0 0.0
    %2734 = vmatprep.mubr.f32.mxu0 0.0
    %2735 = vmatmul.mubr.f32.gmra.mrb[0].mxu0 %v859
    %v2736 = vpop.f32.mrb[0].mxu0
    %v2737 = vadd.f32 0.0, %v2736
    %v2738 = vpop.f32.mrb[0].mxu0
    %2739 = vmatprep.mubr.f32.mxu0 0.0
    %2740 = vmatmul.mubr.f32.gmra.mrb[0].mxu0 %v862
    %v2741 = vpop.f32.mrb[0].mxu0
    %v2742 = vadd.f32 0.0, %v2741
    %v2743 = vpop.f32.mrb[0].mxu0
    %2744 = vmatprep.mubr.f32.mxu0 0.0
    %2745 = vmatmul.mubr.f32.gmra.mrb[0].mxu0 %v865
    %v2746 = vpop.f32.mrb[0].mxu0
    %v2747 = vadd.f32 0.0, %v2746
    %v2748 = vpop.f32.mrb[0].mxu0
    %2749 = vmatprep.mubr.f32.mxu0 0.0
    %2750 = vmatmul.mubr.f32.gmra.mrb[0].mxu0 %v868
    %v2751 = vpop.f32.mrb[0].mxu0
    %v2752 = vadd.f32 0.0, %v2751
    %v2753 = vpop.f32.mrb[0].mxu0
    %2754 = vdwg.mxu0
    %s2755 = scalar_lea.vmem %s4, 256
    %v2756 = vld [vmem:[%s2755] sm:$0xff]
    %v2757 = vld [vmem:[%s2755 + $0x8] sm:$0xff]
    %v2758 = vld [vmem:[%s2755 + $0x10] sm:$0xff]
    %v2759 = vld [vmem:[%s2755 + $0x18] sm:$0xff]
    %v2760 = vld [vmem:[%s2755 + $0x20] sm:$0xff]
    %v2761 = vld [vmem:[%s2755 + $0x28] sm:$0xff]
    %v2762 = vld [vmem:[%s2755 + $0x30] sm:$0xff]
    %v2763 = vld [vmem:[%s2755 + $0x38] sm:$0xff]
    %v2765 = vsel %vm2085, %v2737, 0
    %v2768 = vsel %vm2085, %v2742, 0
    %v2771 = vsel %vm2085, %v2747, 0
    %v2774 = vsel %vm2085, %v2752, 0
    %2776 = vmatprep.subr.mxu0 0.0
    %2777 = vmatpush1.msra.mxu0 %v2756
    %2778 = vmatprep.subr.mxu0 0.0
    %2779 = vmatpush1.msra.mxu0 %v2757
    %2780 = vmatprep.subr.mxu0 0.0
    %2781 = vmatpush1.msra.mxu0 %v2758
    %2782 = vmatprep.subr.mxu0 0.0
    %2783 = vmatpush1.msra.mxu0 %v2759
    %2784 = vmatprep.subr.mxu0 0.0
    %2785 = vmatpush1.msra.mxu0 %v2760
    %2786 = vmatprep.subr.mxu0 0.0
    %2787 = vmatpush1.msra.mxu0 %v2761
    %2788 = vmatprep.subr.mxu0 0.0
    %2789 = vmatpush1.msra.mxu0 %v2762
    %2790 = vmatprep.subr.mxu0 0.0
    %2791 = vmatpush1.msra.mxu0 %v2763
    %2792 = vmatprep.subr.mxu0 0.0
    %2793 = vmatpush1.msra.mxu0 0.0
    %2794 = vmatprep.subr.mxu0 0.0
    %2795 = vmatpush1.msra.mxu0 0.0
    %2796 = vmatprep.subr.mxu0 0.0
    %2797 = vmatpush1.msra.mxu0 0.0
    %2798 = vmatprep.subr.mxu0 0.0
    %2799 = vmatpush1.msra.mxu0 0.0
    %2800 = vmatprep.subr.mxu0 0.0
    %2801 = vmatpush1.msra.mxu0 0.0
    %2802 = vmatprep.subr.mxu0 0.0
    %2803 = vmatpush1.msra.mxu0 0.0
    %2804 = vmatprep.subr.mxu0 0.0
    %2805 = vmatpush1.msra.mxu0 0.0
    %2806 = vmatprep.subr.mxu0 0.0
    %2807 = vmatpush1.msra.mxu0 0.0
    %2808 = vmatprep.subr.mxu0 0.0
    %2809 = vmatpush1.msra.mxu0 0.0
    %2810 = vmatprep.subr.mxu0 0.0
    %2811 = vmatpush1.msra.mxu0 0.0
    %2812 = vmatprep.subr.mxu0 0.0
    %2813 = vmatpush1.msra.mxu0 0.0
    %2814 = vmatprep.subr.mxu0 0.0
    %2815 = vmatpush1.msra.mxu0 0.0
    %2816 = vmatprep.subr.mxu0 0.0
    %2817 = vmatpush1.msra.mxu0 0.0
    %2818 = vmatprep.subr.mxu0 0.0
    %2819 = vmatpush1.msra.mxu0 0.0
    %2820 = vmatprep.subr.mxu0 0.0
    %2821 = vmatpush1.msra.mxu0 0.0
    %2822 = vmatprep.subr.mxu0 0.0
    %2823 = vmatpush1.msra.mxu0 0.0
    %2824 = vmatprep.subr.mxu0 0.0
    %2825 = vmatpush1.msra.mxu0 0.0
    %2826 = vmatprep.subr.mxu0 0.0
    %2827 = vmatpush1.msra.mxu0 0.0
    %2828 = vmatprep.subr.mxu0 0.0
    %2829 = vmatpush1.msra.mxu0 0.0
    %2830 = vmatprep.subr.mxu0 0.0
    %2831 = vmatpush1.msra.mxu0 0.0
    %2832 = vmatprep.subr.mxu0 0.0
    %2833 = vmatpush1.msra.mxu0 0.0
    %2834 = vmatprep.subr.mxu0 0.0
    %2835 = vmatpush1.msra.mxu0 0.0
    %2836 = vmatprep.subr.mxu0 0.0
    %2837 = vmatpush1.msra.mxu0 0.0
    %2838 = vmatprep.subr.mxu0 0.0
    %2839 = vmatpush1.msra.mxu0 0.0
    %2840 = vmatprep.mubr.f32.mxu0 0.0
    %2841 = vmatmul.mubr.f32.gmra.mrb[0].mxu0 %v2765
    %v2842 = vpop.f32.mrb[0].mxu0
    %v2843 = vadd.f32 0.0, %v2842
    %v2844 = vpop.f32.mrb[0].mxu0
    %2845 = vmatprep.mubr.f32.mxu0 0.0
    %2846 = vmatmul.mubr.f32.gmra.mrb[0].mxu0 %v2768
    %v2847 = vpop.f32.mrb[0].mxu0
    %v2848 = vadd.f32 0.0, %v2847
    %v2849 = vpop.f32.mrb[0].mxu0
    %2850 = vmatprep.mubr.f32.mxu0 0.0
    %2851 = vmatmul.mubr.f32.gmra.mrb[0].mxu0 %v2771
    %v2852 = vpop.f32.mrb[0].mxu0
    %v2853 = vadd.f32 0.0, %v2852
    %v2854 = vpop.f32.mrb[0].mxu0
    %2855 = vmatprep.mubr.f32.mxu0 0.0
    %2856 = vmatmul.mubr.f32.gmra.mrb[0].mxu0 %v2774
    %v2857 = vpop.f32.mrb[0].mxu0
    %v2858 = vadd.f32 0.0, %v2857
    %v2859 = vpop.f32.mrb[0].mxu0
    %2860 = vdwg.mxu0
    %v2861 = vadd.f32 %v2666, %v2843
    %v2862 = vadd.f32 %v2667, %v2848
    %v2863 = vadd.f32 %v2668, %v2853
    %v2864 = vadd.f32 %v2669, %v2858
    %2865 = vmatprep.subr.mxu0 0.0
    %2866 = vmatpush1.msra.mxu0 %v1894
    %2867 = vmatprep.subr.mxu0 0.0
    %2868 = vmatpush1.msra.mxu0 %v1895
    %2869 = vmatprep.subr.mxu0 0.0
    %2870 = vmatpush1.msra.mxu0 %v1896
    %2871 = vmatprep.subr.mxu0 0.0
    %2872 = vmatpush1.msra.mxu0 %v1897
    %2873 = vmatprep.subr.mxu0 0.0
    %2874 = vmatpush1.msra.mxu0 0.0
    %2875 = vmatprep.subr.mxu0 0.0
    %2876 = vmatpush1.msra.mxu0 0.0
    %2877 = vmatprep.subr.mxu0 0.0
    %2878 = vmatpush1.msra.mxu0 0.0
    %2879 = vmatprep.subr.mxu0 0.0
    %2880 = vmatpush1.msra.mxu0 0.0
    %2881 = vmatprep.subr.mxu0 0.0
    %2882 = vmatpush1.msra.mxu0 0.0
    %2883 = vmatprep.subr.mxu0 0.0
    %2884 = vmatpush1.msra.mxu0 0.0
    %2885 = vmatprep.subr.mxu0 0.0
    %2886 = vmatpush1.msra.mxu0 0.0
    %2887 = vmatprep.subr.mxu0 0.0
    %2888 = vmatpush1.msra.mxu0 0.0
    %2889 = vmatprep.subr.mxu0 0.0
    %2890 = vmatpush1.msra.mxu0 0.0
    %2891 = vmatprep.subr.mxu0 0.0
    %2892 = vmatpush1.msra.mxu0 0.0
    %2893 = vmatprep.subr.mxu0 0.0
    %2894 = vmatpush1.msra.mxu0 0.0
    %2895 = vmatprep.subr.mxu0 0.0
    %2896 = vmatpush1.msra.mxu0 0.0
    %2897 = vmatprep.subr.mxu0 0.0
    %2898 = vmatpush1.msra.mxu0 0.0
    %2899 = vmatprep.subr.mxu0 0.0
    %2900 = vmatpush1.msra.mxu0 0.0
    %2901 = vmatprep.subr.mxu0 0.0
    %2902 = vmatpush1.msra.mxu0 0.0
    %2903 = vmatprep.subr.mxu0 0.0
    %2904 = vmatpush1.msra.mxu0 0.0
    %2905 = vmatprep.subr.mxu0 0.0
    %2906 = vmatpush1.msra.mxu0 0.0
    %2907 = vmatprep.subr.mxu0 0.0
    %2908 = vmatpush1.msra.mxu0 0.0
    %2909 = vmatprep.subr.mxu0 0.0
    %2910 = vmatpush1.msra.mxu0 0.0
    %2911 = vmatprep.subr.mxu0 0.0
    %2912 = vmatpush1.msra.mxu0 0.0
    %2913 = vmatprep.subr.mxu0 0.0
    %2914 = vmatpush1.msra.mxu0 0.0
    %2915 = vmatprep.subr.mxu0 0.0
    %2916 = vmatpush1.msra.mxu0 0.0
    %2917 = vmatprep.subr.mxu0 0.0
    %2918 = vmatpush1.msra.mxu0 0.0
    %2919 = vmatprep.subr.mxu0 0.0
    %2920 = vmatpush1.msra.mxu0 0.0
    %2921 = vmatprep.subr.mxu0 0.0
    %2922 = vmatpush1.msra.mxu0 0.0
    %2923 = vmatprep.subr.mxu0 0.0
    %2924 = vmatpush1.msra.mxu0 0.0
    %2925 = vmatprep.subr.mxu0 0.0
    %2926 = vmatpush1.msra.mxu0 0.0
    %2927 = vmatprep.subr.mxu0 0.0
    %2928 = vmatpush1.msra.mxu0 0.0
    %2929 = vmatprep.mubr.f32.mxu0 0.0
    %2930 = vmatmul.mubr.f32.gmra.mrb[0].mxu0 %v1065
    %v2931 = vpop.f32.mrb[0].mxu0
    %v2932 = vadd.f32 0.0, %v2931
    %v2933 = vpop.f32.mrb[0].mxu0
    %2934 = vmatprep.mubr.f32.mxu0 0.0
    %2935 = vmatmul.mubr.f32.gmra.mrb[0].mxu0 %v1068
    %v2936 = vpop.f32.mrb[0].mxu0
    %v2937 = vadd.f32 0.0, %v2936
    %v2938 = vpop.f32.mrb[0].mxu0
    %2939 = vmatprep.mubr.f32.mxu0 0.0
    %2940 = vmatmul.mubr.f32.gmra.mrb[0].mxu0 %v1071
    %v2941 = vpop.f32.mrb[0].mxu0
    %v2942 = vadd.f32 0.0, %v2941
    %v2943 = vpop.f32.mrb[0].mxu0
    %2944 = vmatprep.mubr.f32.mxu0 0.0
    %2945 = vmatmul.mubr.f32.gmra.mrb[0].mxu0 %v1074
    %v2946 = vpop.f32.mrb[0].mxu0
    %v2947 = vadd.f32 0.0, %v2946
    %v2948 = vpop.f32.mrb[0].mxu0
    %2949 = vdwg.mxu0
    %s2950 = scalar_lea.vmem %s4, 320
    %v2951 = vld [vmem:[%s2950] sm:$0xff]
    %v2952 = vld [vmem:[%s2950 + $0x8] sm:$0xff]
    %v2953 = vld [vmem:[%s2950 + $0x10] sm:$0xff]
    %v2954 = vld [vmem:[%s2950 + $0x18] sm:$0xff]
    %v2955 = vld [vmem:[%s2950 + $0x20] sm:$0xff]
    %v2956 = vld [vmem:[%s2950 + $0x28] sm:$0xff]
    %v2957 = vld [vmem:[%s2950 + $0x30] sm:$0xff]
    %v2958 = vld [vmem:[%s2950 + $0x38] sm:$0xff]
    %v2960 = vsel %vm2085, %v2932, 0
    %v2963 = vsel %vm2085, %v2937, 0
    %v2966 = vsel %vm2085, %v2942, 0
    %v2969 = vsel %vm2085, %v2947, 0
    %2971 = vmatprep.subr.mxu0 0.0
    %2972 = vmatpush1.msra.mxu0 %v2951
    %2973 = vmatprep.subr.mxu0 0.0
    %2974 = vmatpush1.msra.mxu0 %v2952
    %2975 = vmatprep.subr.mxu0 0.0
    %2976 = vmatpush1.msra.mxu0 %v2953
    %2977 = vmatprep.subr.mxu0 0.0
    %2978 = vmatpush1.msra.mxu0 %v2954
    %2979 = vmatprep.subr.mxu0 0.0
    %2980 = vmatpush1.msra.mxu0 %v2955
    %2981 = vmatprep.subr.mxu0 0.0
    %2982 = vmatpush1.msra.mxu0 %v2956
    %2983 = vmatprep.subr.mxu0 0.0
    %2984 = vmatpush1.msra.mxu0 %v2957
    %2985 = vmatprep.subr.mxu0 0.0
    %2986 = vmatpush1.msra.mxu0 %v2958
    %2987 = vmatprep.subr.mxu0 0.0
    %2988 = vmatpush1.msra.mxu0 0.0
    %2989 = vmatprep.subr.mxu0 0.0
    %2990 = vmatpush1.msra.mxu0 0.0
    %2991 = vmatprep.subr.mxu0 0.0
    %2992 = vmatpush1.msra.mxu0 0.0
    %2993 = vmatprep.subr.mxu0 0.0
    %2994 = vmatpush1.msra.mxu0 0.0
    %2995 = vmatprep.subr.mxu0 0.0
    %2996 = vmatpush1.msra.mxu0 0.0
    %2997 = vmatprep.subr.mxu0 0.0
    %2998 = vmatpush1.msra.mxu0 0.0
    %2999 = vmatprep.subr.mxu0 0.0
    %3000 = vmatpush1.msra.mxu0 0.0
    %3001 = vmatprep.subr.mxu0 0.0
    %3002 = vmatpush1.msra.mxu0 0.0
    %3003 = vmatprep.subr.mxu0 0.0
    %3004 = vmatpush1.msra.mxu0 0.0
    %3005 = vmatprep.subr.mxu0 0.0
    %3006 = vmatpush1.msra.mxu0 0.0
    %3007 = vmatprep.subr.mxu0 0.0
    %3008 = vmatpush1.msra.mxu0 0.0
    %3009 = vmatprep.subr.mxu0 0.0
    %3010 = vmatpush1.msra.mxu0 0.0
    %3011 = vmatprep.subr.mxu0 0.0
    %3012 = vmatpush1.msra.mxu0 0.0
    %3013 = vmatprep.subr.mxu0 0.0
    %3014 = vmatpush1.msra.mxu0 0.0
    %3015 = vmatprep.subr.mxu0 0.0
    %3016 = vmatpush1.msra.mxu0 0.0
    %3017 = vmatprep.subr.mxu0 0.0
    %3018 = vmatpush1.msra.mxu0 0.0
    %3019 = vmatprep.subr.mxu0 0.0
    %3020 = vmatpush1.msra.mxu0 0.0
    %3021 = vmatprep.subr.mxu0 0.0
    %3022 = vmatpush1.msra.mxu0 0.0
    %3023 = vmatprep.subr.mxu0 0.0
    %3024 = vmatpush1.msra.mxu0 0.0
    %3025 = vmatprep.subr.mxu0 0.0
    %3026 = vmatpush1.msra.mxu0 0.0
    %3027 = vmatprep.subr.mxu0 0.0
    %3028 = vmatpush1.msra.mxu0 0.0
    %3029 = vmatprep.subr.mxu0 0.0
    %3030 = vmatpush1.msra.mxu0 0.0
    %3031 = vmatprep.subr.mxu0 0.0
    %3032 = vmatpush1.msra.mxu0 0.0
    %3033 = vmatprep.subr.mxu0 0.0
    %3034 = vmatpush1.msra.mxu0 0.0
    %3035 = vmatprep.mubr.f32.mxu0 0.0
    %3036 = vmatmul.mubr.f32.gmra.mrb[0].mxu0 %v2960
    %v3037 = vpop.f32.mrb[0].mxu0
    %v3038 = vadd.f32 0.0, %v3037
    %v3039 = vpop.f32.mrb[0].mxu0
    %3040 = vmatprep.mubr.f32.mxu0 0.0
    %3041 = vmatmul.mubr.f32.gmra.mrb[0].mxu0 %v2963
    %v3042 = vpop.f32.mrb[0].mxu0
    %v3043 = vadd.f32 0.0, %v3042
    %v3044 = vpop.f32.mrb[0].mxu0
    %3045 = vmatprep.mubr.f32.mxu0 0.0
    %3046 = vmatmul.mubr.f32.gmra.mrb[0].mxu0 %v2966
    %v3047 = vpop.f32.mrb[0].mxu0
    %v3048 = vadd.f32 0.0, %v3047
    %v3049 = vpop.f32.mrb[0].mxu0
    %3050 = vmatprep.mubr.f32.mxu0 0.0
    %3051 = vmatmul.mubr.f32.gmra.mrb[0].mxu0 %v2969
    %v3052 = vpop.f32.mrb[0].mxu0
    %v3053 = vadd.f32 0.0, %v3052
    %v3054 = vpop.f32.mrb[0].mxu0
    %3055 = vdwg.mxu0
    %v3056 = vadd.f32 %v2861, %v3038
    %v3057 = vadd.f32 %v2862, %v3043
    %v3058 = vadd.f32 %v2863, %v3048
    %v3059 = vadd.f32 %v2864, %v3053
    %3060 = vmatprep.subr.mxu0 0.0
    %3061 = vmatpush1.msra.mxu0 %v1894
    %3062 = vmatprep.subr.mxu0 0.0
    %3063 = vmatpush1.msra.mxu0 %v1895
    %3064 = vmatprep.subr.mxu0 0.0
    %3065 = vmatpush1.msra.mxu0 %v1896
    %3066 = vmatprep.subr.mxu0 0.0
    %3067 = vmatpush1.msra.mxu0 %v1897
    %3068 = vmatprep.subr.mxu0 0.0
    %3069 = vmatpush1.msra.mxu0 0.0
    %3070 = vmatprep.subr.mxu0 0.0
    %3071 = vmatpush1.msra.mxu0 0.0
    %3072 = vmatprep.subr.mxu0 0.0
    %3073 = vmatpush1.msra.mxu0 0.0
    %3074 = vmatprep.subr.mxu0 0.0
    %3075 = vmatpush1.msra.mxu0 0.0
    %3076 = vmatprep.subr.mxu0 0.0
    %3077 = vmatpush1.msra.mxu0 0.0
    %3078 = vmatprep.subr.mxu0 0.0
    %3079 = vmatpush1.msra.mxu0 0.0
    %3080 = vmatprep.subr.mxu0 0.0
    %3081 = vmatpush1.msra.mxu0 0.0
    %3082 = vmatprep.subr.mxu0 0.0
    %3083 = vmatpush1.msra.mxu0 0.0
    %3084 = vmatprep.subr.mxu0 0.0
    %3085 = vmatpush1.msra.mxu0 0.0
    %3086 = vmatprep.subr.mxu0 0.0
    %3087 = vmatpush1.msra.mxu0 0.0
    %3088 = vmatprep.subr.mxu0 0.0
    %3089 = vmatpush1.msra.mxu0 0.0
    %3090 = vmatprep.subr.mxu0 0.0
    %3091 = vmatpush1.msra.mxu0 0.0
    %3092 = vmatprep.subr.mxu0 0.0
    %3093 = vmatpush1.msra.mxu0 0.0
    %3094 = vmatprep.subr.mxu0 0.0
    %3095 = vmatpush1.msra.mxu0 0.0
    %3096 = vmatprep.subr.mxu0 0.0
    %3097 = vmatpush1.msra.mxu0 0.0
    %3098 = vmatprep.subr.mxu0 0.0
    %3099 = vmatpush1.msra.mxu0 0.0
    %3100 = vmatprep.subr.mxu0 0.0
    %3101 = vmatpush1.msra.mxu0 0.0
    %3102 = vmatprep.subr.mxu0 0.0
    %3103 = vmatpush1.msra.mxu0 0.0
    %3104 = vmatprep.subr.mxu0 0.0
    %3105 = vmatpush1.msra.mxu0 0.0
    %3106 = vmatprep.subr.mxu0 0.0
    %3107 = vmatpush1.msra.mxu0 0.0
    %3108 = vmatprep.subr.mxu0 0.0
    %3109 = vmatpush1.msra.mxu0 0.0
    %3110 = vmatprep.subr.mxu0 0.0
    %3111 = vmatpush1.msra.mxu0 0.0
    %3112 = vmatprep.subr.mxu0 0.0
    %3113 = vmatpush1.msra.mxu0 0.0
    %3114 = vmatprep.subr.mxu0 0.0
    %3115 = vmatpush1.msra.mxu0 0.0
    %3116 = vmatprep.subr.mxu0 0.0
    %3117 = vmatpush1.msra.mxu0 0.0
    %3118 = vmatprep.subr.mxu0 0.0
    %3119 = vmatpush1.msra.mxu0 0.0
    %3120 = vmatprep.subr.mxu0 0.0
    %3121 = vmatpush1.msra.mxu0 0.0
    %3122 = vmatprep.subr.mxu0 0.0
    %3123 = vmatpush1.msra.mxu0 0.0
    %3124 = vmatprep.mubr.f32.mxu0 0.0
    %3125 = vmatmul.mubr.f32.gmra.mrb[0].mxu0 %v1271
    %v3126 = vpop.f32.mrb[0].mxu0
    %v3127 = vadd.f32 0.0, %v3126
    %v3128 = vpop.f32.mrb[0].mxu0
    %3129 = vmatprep.mubr.f32.mxu0 0.0
    %3130 = vmatmul.mubr.f32.gmra.mrb[0].mxu0 %v1274
    %v3131 = vpop.f32.mrb[0].mxu0
    %v3132 = vadd.f32 0.0, %v3131
    %v3133 = vpop.f32.mrb[0].mxu0
    %3134 = vmatprep.mubr.f32.mxu0 0.0
    %3135 = vmatmul.mubr.f32.gmra.mrb[0].mxu0 %v1277
    %v3136 = vpop.f32.mrb[0].mxu0
    %v3137 = vadd.f32 0.0, %v3136
    %v3138 = vpop.f32.mrb[0].mxu0
    %3139 = vmatprep.mubr.f32.mxu0 0.0
    %3140 = vmatmul.mubr.f32.gmra.mrb[0].mxu0 %v1280
    %v3141 = vpop.f32.mrb[0].mxu0
    %v3142 = vadd.f32 0.0, %v3141
    %v3143 = vpop.f32.mrb[0].mxu0
    %3144 = vdwg.mxu0
    %s3145 = scalar_lea.vmem %s4, 384
    %v3146 = vld [vmem:[%s3145] sm:$0xff]
    %v3147 = vld [vmem:[%s3145 + $0x8] sm:$0xff]
    %v3148 = vld [vmem:[%s3145 + $0x10] sm:$0xff]
    %v3149 = vld [vmem:[%s3145 + $0x18] sm:$0xff]
    %v3150 = vld [vmem:[%s3145 + $0x20] sm:$0xff]
    %v3151 = vld [vmem:[%s3145 + $0x28] sm:$0xff]
    %v3152 = vld [vmem:[%s3145 + $0x30] sm:$0xff]
    %v3153 = vld [vmem:[%s3145 + $0x38] sm:$0xff]
    %v3155 = vsel %vm2085, %v3127, 0
    %v3158 = vsel %vm2085, %v3132, 0
    %v3161 = vsel %vm2085, %v3137, 0
    %v3164 = vsel %vm2085, %v3142, 0
    %3166 = vmatprep.subr.mxu0 0.0
    %3167 = vmatpush1.msra.mxu0 %v3146
    %3168 = vmatprep.subr.mxu0 0.0
    %3169 = vmatpush1.msra.mxu0 %v3147
    %3170 = vmatprep.subr.mxu0 0.0
    %3171 = vmatpush1.msra.mxu0 %v3148
    %3172 = vmatprep.subr.mxu0 0.0
    %3173 = vmatpush1.msra.mxu0 %v3149
    %3174 = vmatprep.subr.mxu0 0.0
    %3175 = vmatpush1.msra.mxu0 %v3150
    %3176 = vmatprep.subr.mxu0 0.0
    %3177 = vmatpush1.msra.mxu0 %v3151
    %3178 = vmatprep.subr.mxu0 0.0
    %3179 = vmatpush1.msra.mxu0 %v3152
    %3180 = vmatprep.subr.mxu0 0.0
    %3181 = vmatpush1.msra.mxu0 %v3153
    %3182 = vmatprep.subr.mxu0 0.0
    %3183 = vmatpush1.msra.mxu0 0.0
    %3184 = vmatprep.subr.mxu0 0.0
    %3185 = vmatpush1.msra.mxu0 0.0
    %3186 = vmatprep.subr.mxu0 0.0
    %3187 = vmatpush1.msra.mxu0 0.0
    %3188 = vmatprep.subr.mxu0 0.0
    %3189 = vmatpush1.msra.mxu0 0.0
    %3190 = vmatprep.subr.mxu0 0.0
    %3191 = vmatpush1.msra.mxu0 0.0
    %3192 = vmatprep.subr.mxu0 0.0
    %3193 = vmatpush1.msra.mxu0 0.0
    %3194 = vmatprep.subr.mxu0 0.0
    %3195 = vmatpush1.msra.mxu0 0.0
    %3196 = vmatprep.subr.mxu0 0.0
    %3197 = vmatpush1.msra.mxu0 0.0
    %3198 = vmatprep.subr.mxu0 0.0
    %3199 = vmatpush1.msra.mxu0 0.0
    %3200 = vmatprep.subr.mxu0 0.0
    %3201 = vmatpush1.msra.mxu0 0.0
    %3202 = vmatprep.subr.mxu0 0.0
    %3203 = vmatpush1.msra.mxu0 0.0
    %3204 = vmatprep.subr.mxu0 0.0
    %3205 = vmatpush1.msra.mxu0 0.0
    %3206 = vmatprep.subr.mxu0 0.0
    %3207 = vmatpush1.msra.mxu0 0.0
    %3208 = vmatprep.subr.mxu0 0.0
    %3209 = vmatpush1.msra.mxu0 0.0
    %3210 = vmatprep.subr.mxu0 0.0
    %3211 = vmatpush1.msra.mxu0 0.0
    %3212 = vmatprep.subr.mxu0 0.0
    %3213 = vmatpush1.msra.mxu0 0.0
    %3214 = vmatprep.subr.mxu0 0.0
    %3215 = vmatpush1.msra.mxu0 0.0
    %3216 = vmatprep.subr.mxu0 0.0
    %3217 = vmatpush1.msra.mxu0 0.0
    %3218 = vmatprep.subr.mxu0 0.0
    %3219 = vmatpush1.msra.mxu0 0.0
    %3220 = vmatprep.subr.mxu0 0.0
    %3221 = vmatpush1.msra.mxu0 0.0
    %3222 = vmatprep.subr.mxu0 0.0
    %3223 = vmatpush1.msra.mxu0 0.0
    %3224 = vmatprep.subr.mxu0 0.0
    %3225 = vmatpush1.msra.mxu0 0.0
    %3226 = vmatprep.subr.mxu0 0.0
    %3227 = vmatpush1.msra.mxu0 0.0
    %3228 = vmatprep.subr.mxu0 0.0
    %3229 = vmatpush1.msra.mxu0 0.0
    %3230 = vmatprep.mubr.f32.mxu0 0.0
    %3231 = vmatmul.mubr.f32.gmra.mrb[0].mxu0 %v3155
    %v3232 = vpop.f32.mrb[0].mxu0
    %v3233 = vadd.f32 0.0, %v3232
    %v3234 = vpop.f32.mrb[0].mxu0
    %3235 = vmatprep.mubr.f32.mxu0 0.0
    %3236 = vmatmul.mubr.f32.gmra.mrb[0].mxu0 %v3158
    %v3237 = vpop.f32.mrb[0].mxu0
    %v3238 = vadd.f32 0.0, %v3237
    %v3239 = vpop.f32.mrb[0].mxu0
    %3240 = vmatprep.mubr.f32.mxu0 0.0
    %3241 = vmatmul.mubr.f32.gmra.mrb[0].mxu0 %v3161
    %v3242 = vpop.f32.mrb[0].mxu0
    %v3243 = vadd.f32 0.0, %v3242
    %v3244 = vpop.f32.mrb[0].mxu0
    %3245 = vmatprep.mubr.f32.mxu0 0.0
    %3246 = vmatmul.mubr.f32.gmra.mrb[0].mxu0 %v3164
    %v3247 = vpop.f32.mrb[0].mxu0
    %v3248 = vadd.f32 0.0, %v3247
    %v3249 = vpop.f32.mrb[0].mxu0
    %3250 = vdwg.mxu0
    %v3251 = vadd.f32 %v3056, %v3233
    %v3252 = vadd.f32 %v3057, %v3238
    %v3253 = vadd.f32 %v3058, %v3243
    %v3254 = vadd.f32 %v3059, %v3248
    %3255 = vmatprep.subr.mxu0 0.0
    %3256 = vmatpush1.msra.mxu0 %v1894
    %3257 = vmatprep.subr.mxu0 0.0
    %3258 = vmatpush1.msra.mxu0 %v1895
    %3259 = vmatprep.subr.mxu0 0.0
    %3260 = vmatpush1.msra.mxu0 %v1896
    %3261 = vmatprep.subr.mxu0 0.0
    %3262 = vmatpush1.msra.mxu0 %v1897
    %3263 = vmatprep.subr.mxu0 0.0
    %3264 = vmatpush1.msra.mxu0 0.0
    %3265 = vmatprep.subr.mxu0 0.0
    %3266 = vmatpush1.msra.mxu0 0.0
    %3267 = vmatprep.subr.mxu0 0.0
    %3268 = vmatpush1.msra.mxu0 0.0
    %3269 = vmatprep.subr.mxu0 0.0
    %3270 = vmatpush1.msra.mxu0 0.0
    %3271 = vmatprep.subr.mxu0 0.0
    %3272 = vmatpush1.msra.mxu0 0.0
    %3273 = vmatprep.subr.mxu0 0.0
    %3274 = vmatpush1.msra.mxu0 0.0
    %3275 = vmatprep.subr.mxu0 0.0
    %3276 = vmatpush1.msra.mxu0 0.0
    %3277 = vmatprep.subr.mxu0 0.0
    %3278 = vmatpush1.msra.mxu0 0.0
    %3279 = vmatprep.subr.mxu0 0.0
    %3280 = vmatpush1.msra.mxu0 0.0
    %3281 = vmatprep.subr.mxu0 0.0
    %3282 = vmatpush1.msra.mxu0 0.0
    %3283 = vmatprep.subr.mxu0 0.0
    %3284 = vmatpush1.msra.mxu0 0.0
    %3285 = vmatprep.subr.mxu0 0.0
    %3286 = vmatpush1.msra.mxu0 0.0
    %3287 = vmatprep.subr.mxu0 0.0
    %3288 = vmatpush1.msra.mxu0 0.0
    %3289 = vmatprep.subr.mxu0 0.0
    %3290 = vmatpush1.msra.mxu0 0.0
    %3291 = vmatprep.subr.mxu0 0.0
    %3292 = vmatpush1.msra.mxu0 0.0
    %3293 = vmatprep.subr.mxu0 0.0
    %3294 = vmatpush1.msra.mxu0 0.0
    %3295 = vmatprep.subr.mxu0 0.0
    %3296 = vmatpush1.msra.mxu0 0.0
    %3297 = vmatprep.subr.mxu0 0.0
    %3298 = vmatpush1.msra.mxu0 0.0
    %3299 = vmatprep.subr.mxu0 0.0
    %3300 = vmatpush1.msra.mxu0 0.0
    %3301 = vmatprep.subr.mxu0 0.0
    %3302 = vmatpush1.msra.mxu0 0.0
    %3303 = vmatprep.subr.mxu0 0.0
    %3304 = vmatpush1.msra.mxu0 0.0
    %3305 = vmatprep.subr.mxu0 0.0
    %3306 = vmatpush1.msra.mxu0 0.0
    %3307 = vmatprep.subr.mxu0 0.0
    %3308 = vmatpush1.msra.mxu0 0.0
    %3309 = vmatprep.subr.mxu0 0.0
    %3310 = vmatpush1.msra.mxu0 0.0
    %3311 = vmatprep.subr.mxu0 0.0
    %3312 = vmatpush1.msra.mxu0 0.0
    %3313 = vmatprep.subr.mxu0 0.0
    %3314 = vmatpush1.msra.mxu0 0.0
    %3315 = vmatprep.subr.mxu0 0.0
    %3316 = vmatpush1.msra.mxu0 0.0
    %3317 = vmatprep.subr.mxu0 0.0
    %3318 = vmatpush1.msra.mxu0 0.0
    %3319 = vmatprep.mubr.f32.mxu0 0.0
    %3320 = vmatmul.mubr.f32.gmra.mrb[0].mxu0 %v1477
    %v3321 = vpop.f32.mrb[0].mxu0
    %v3322 = vadd.f32 0.0, %v3321
    %v3323 = vpop.f32.mrb[0].mxu0
    %3324 = vmatprep.mubr.f32.mxu0 0.0
    %3325 = vmatmul.mubr.f32.gmra.mrb[0].mxu0 %v1480
    %v3326 = vpop.f32.mrb[0].mxu0
    %v3327 = vadd.f32 0.0, %v3326
    %v3328 = vpop.f32.mrb[0].mxu0
    %3329 = vmatprep.mubr.f32.mxu0 0.0
    %3330 = vmatmul.mubr.f32.gmra.mrb[0].mxu0 %v1483
    %v3331 = vpop.f32.mrb[0].mxu0
    %v3332 = vadd.f32 0.0, %v3331
    %v3333 = vpop.f32.mrb[0].mxu0
    %3334 = vmatprep.mubr.f32.mxu0 0.0
    %3335 = vmatmul.mubr.f32.gmra.mrb[0].mxu0 %v1486
    %v3336 = vpop.f32.mrb[0].mxu0
    %v3337 = vadd.f32 0.0, %v3336
    %v3338 = vpop.f32.mrb[0].mxu0
    %3339 = vdwg.mxu0
    %s3340 = scalar_lea.vmem %s4, 448
    %v3341 = vld [vmem:[%s3340] sm:$0xff]
    %v3342 = vld [vmem:[%s3340 + $0x8] sm:$0xff]
    %v3343 = vld [vmem:[%s3340 + $0x10] sm:$0xff]
    %v3344 = vld [vmem:[%s3340 + $0x18] sm:$0xff]
    %v3345 = vld [vmem:[%s3340 + $0x20] sm:$0xff]
    %v3346 = vld [vmem:[%s3340 + $0x28] sm:$0xff]
    %v3347 = vld [vmem:[%s3340 + $0x30] sm:$0xff]
    %v3348 = vld [vmem:[%s3340 + $0x38] sm:$0xff]
    %v3350 = vsel %vm2085, %v3322, 0
    %v3353 = vsel %vm2085, %v3327, 0
    %v3356 = vsel %vm2085, %v3332, 0
    %v3359 = vsel %vm2085, %v3337, 0
    %3361 = vmatprep.subr.mxu0 0.0
    %3362 = vmatpush1.msra.mxu0 %v3341
    %3363 = vmatprep.subr.mxu0 0.0
    %3364 = vmatpush1.msra.mxu0 %v3342
    %3365 = vmatprep.subr.mxu0 0.0
    %3366 = vmatpush1.msra.mxu0 %v3343
    %3367 = vmatprep.subr.mxu0 0.0
    %3368 = vmatpush1.msra.mxu0 %v3344
    %3369 = vmatprep.subr.mxu0 0.0
    %3370 = vmatpush1.msra.mxu0 %v3345
    %3371 = vmatprep.subr.mxu0 0.0
    %3372 = vmatpush1.msra.mxu0 %v3346
    %3373 = vmatprep.subr.mxu0 0.0
    %3374 = vmatpush1.msra.mxu0 %v3347
    %3375 = vmatprep.subr.mxu0 0.0
    %3376 = vmatpush1.msra.mxu0 %v3348
    %3377 = vmatprep.subr.mxu0 0.0
    %3378 = vmatpush1.msra.mxu0 0.0
    %3379 = vmatprep.subr.mxu0 0.0
    %3380 = vmatpush1.msra.mxu0 0.0
    %3381 = vmatprep.subr.mxu0 0.0
    %3382 = vmatpush1.msra.mxu0 0.0
    %3383 = vmatprep.subr.mxu0 0.0
    %3384 = vmatpush1.msra.mxu0 0.0
    %3385 = vmatprep.subr.mxu0 0.0
    %3386 = vmatpush1.msra.mxu0 0.0
    %3387 = vmatprep.subr.mxu0 0.0
    %3388 = vmatpush1.msra.mxu0 0.0
    %3389 = vmatprep.subr.mxu0 0.0
    %3390 = vmatpush1.msra.mxu0 0.0
    %3391 = vmatprep.subr.mxu0 0.0
    %3392 = vmatpush1.msra.mxu0 0.0
    %3393 = vmatprep.subr.mxu0 0.0
    %3394 = vmatpush1.msra.mxu0 0.0
    %3395 = vmatprep.subr.mxu0 0.0
    %3396 = vmatpush1.msra.mxu0 0.0
    %3397 = vmatprep.subr.mxu0 0.0
    %3398 = vmatpush1.msra.mxu0 0.0
    %3399 = vmatprep.subr.mxu0 0.0
    %3400 = vmatpush1.msra.mxu0 0.0
    %3401 = vmatprep.subr.mxu0 0.0
    %3402 = vmatpush1.msra.mxu0 0.0
    %3403 = vmatprep.subr.mxu0 0.0
    %3404 = vmatpush1.msra.mxu0 0.0
    %3405 = vmatprep.subr.mxu0 0.0
    %3406 = vmatpush1.msra.mxu0 0.0
    %3407 = vmatprep.subr.mxu0 0.0
    %3408 = vmatpush1.msra.mxu0 0.0
    %3409 = vmatprep.subr.mxu0 0.0
    %3410 = vmatpush1.msra.mxu0 0.0
    %3411 = vmatprep.subr.mxu0 0.0
    %3412 = vmatpush1.msra.mxu0 0.0
    %3413 = vmatprep.subr.mxu0 0.0
    %3414 = vmatpush1.msra.mxu0 0.0
    %3415 = vmatprep.subr.mxu0 0.0
    %3416 = vmatpush1.msra.mxu0 0.0
    %3417 = vmatprep.subr.mxu0 0.0
    %3418 = vmatpush1.msra.mxu0 0.0
    %3419 = vmatprep.subr.mxu0 0.0
    %3420 = vmatpush1.msra.mxu0 0.0
    %3421 = vmatprep.subr.mxu0 0.0
    %3422 = vmatpush1.msra.mxu0 0.0
    %3423 = vmatprep.subr.mxu0 0.0
    %3424 = vmatpush1.msra.mxu0 0.0
    %3425 = vmatprep.mubr.f32.mxu0 0.0
    %3426 = vmatmul.mubr.f32.gmra.mrb[0].mxu0 %v3350
    %v3427 = vpop.f32.mrb[0].mxu0
    %v3428 = vadd.f32 0.0, %v3427
    %v3429 = vpop.f32.mrb[0].mxu0
    %3430 = vmatprep.mubr.f32.mxu0 0.0
    %3431 = vmatmul.mubr.f32.gmra.mrb[0].mxu0 %v3353
    %v3432 = vpop.f32.mrb[0].mxu0
    %v3433 = vadd.f32 0.0, %v3432
    %v3434 = vpop.f32.mrb[0].mxu0
    %3435 = vmatprep.mubr.f32.mxu0 0.0
    %3436 = vmatmul.mubr.f32.gmra.mrb[0].mxu0 %v3356
    %v3437 = vpop.f32.mrb[0].mxu0
    %v3438 = vadd.f32 0.0, %v3437
    %v3439 = vpop.f32.mrb[0].mxu0
    %3440 = vmatprep.mubr.f32.mxu0 0.0
    %3441 = vmatmul.mubr.f32.gmra.mrb[0].mxu0 %v3359
    %v3442 = vpop.f32.mrb[0].mxu0
    %v3443 = vadd.f32 0.0, %v3442
    %v3444 = vpop.f32.mrb[0].mxu0
    %3445 = vdwg.mxu0
    %v3446 = vadd.f32 %v3251, %v3428
    %v3447 = vadd.f32 %v3252, %v3433
    %v3448 = vadd.f32 %v3253, %v3438
    %v3449 = vadd.f32 %v3254, %v3443
    %3450 = vmatprep.subr.mxu0 0.0
    %3451 = vmatpush1.msra.mxu0 %v1894
    %3452 = vmatprep.subr.mxu0 0.0
    %3453 = vmatpush1.msra.mxu0 %v1895
    %3454 = vmatprep.subr.mxu0 0.0
    %3455 = vmatpush1.msra.mxu0 %v1896
    %3456 = vmatprep.subr.mxu0 0.0
    %3457 = vmatpush1.msra.mxu0 %v1897
    %3458 = vmatprep.subr.mxu0 0.0
    %3459 = vmatpush1.msra.mxu0 0.0
    %3460 = vmatprep.subr.mxu0 0.0
    %3461 = vmatpush1.msra.mxu0 0.0
    %3462 = vmatprep.subr.mxu0 0.0
    %3463 = vmatpush1.msra.mxu0 0.0
    %3464 = vmatprep.subr.mxu0 0.0
    %3465 = vmatpush1.msra.mxu0 0.0
    %3466 = vmatprep.subr.mxu0 0.0
    %3467 = vmatpush1.msra.mxu0 0.0
    %3468 = vmatprep.subr.mxu0 0.0
    %3469 = vmatpush1.msra.mxu0 0.0
    %3470 = vmatprep.subr.mxu0 0.0
    %3471 = vmatpush1.msra.mxu0 0.0
    %3472 = vmatprep.subr.mxu0 0.0
    %3473 = vmatpush1.msra.mxu0 0.0
    %3474 = vmatprep.subr.mxu0 0.0
    %3475 = vmatpush1.msra.mxu0 0.0
    %3476 = vmatprep.subr.mxu0 0.0
    %3477 = vmatpush1.msra.mxu0 0.0
    %3478 = vmatprep.subr.mxu0 0.0
    %3479 = vmatpush1.msra.mxu0 0.0
    %3480 = vmatprep.subr.mxu0 0.0
    %3481 = vmatpush1.msra.mxu0 0.0
    %3482 = vmatprep.subr.mxu0 0.0
    %3483 = vmatpush1.msra.mxu0 0.0
    %3484 = vmatprep.subr.mxu0 0.0
    %3485 = vmatpush1.msra.mxu0 0.0
    %3486 = vmatprep.subr.mxu0 0.0
    %3487 = vmatpush1.msra.mxu0 0.0
    %3488 = vmatprep.subr.mxu0 0.0
    %3489 = vmatpush1.msra.mxu0 0.0
    %3490 = vmatprep.subr.mxu0 0.0
    %3491 = vmatpush1.msra.mxu0 0.0
    %3492 = vmatprep.subr.mxu0 0.0
    %3493 = vmatpush1.msra.mxu0 0.0
    %3494 = vmatprep.subr.mxu0 0.0
    %3495 = vmatpush1.msra.mxu0 0.0
    %3496 = vmatprep.subr.mxu0 0.0
    %3497 = vmatpush1.msra.mxu0 0.0
    %3498 = vmatprep.subr.mxu0 0.0
    %3499 = vmatpush1.msra.mxu0 0.0
    %3500 = vmatprep.subr.mxu0 0.0
    %3501 = vmatpush1.msra.mxu0 0.0
    %3502 = vmatprep.subr.mxu0 0.0
    %3503 = vmatpush1.msra.mxu0 0.0
    %3504 = vmatprep.subr.mxu0 0.0
    %3505 = vmatpush1.msra.mxu0 0.0
    %3506 = vmatprep.subr.mxu0 0.0
    %3507 = vmatpush1.msra.mxu0 0.0
    %3508 = vmatprep.subr.mxu0 0.0
    %3509 = vmatpush1.msra.mxu0 0.0
    %3510 = vmatprep.subr.mxu0 0.0
    %3511 = vmatpush1.msra.mxu0 0.0
    %3512 = vmatprep.subr.mxu0 0.0
    %3513 = vmatpush1.msra.mxu0 0.0
    %3514 = vmatprep.mubr.f32.mxu0 0.0
    %3515 = vmatmul.mubr.f32.gmra.mrb[0].mxu0 %v1683
    %v3516 = vpop.f32.mrb[0].mxu0
    %v3517 = vadd.f32 0.0, %v3516
    %v3518 = vpop.f32.mrb[0].mxu0
    %3519 = vmatprep.mubr.f32.mxu0 0.0
    %3520 = vmatmul.mubr.f32.gmra.mrb[0].mxu0 %v1686
    %v3521 = vpop.f32.mrb[0].mxu0
    %v3522 = vadd.f32 0.0, %v3521
    %v3523 = vpop.f32.mrb[0].mxu0
    %3524 = vmatprep.mubr.f32.mxu0 0.0
    %3525 = vmatmul.mubr.f32.gmra.mrb[0].mxu0 %v1689
    %v3526 = vpop.f32.mrb[0].mxu0
    %v3527 = vadd.f32 0.0, %v3526
    %v3528 = vpop.f32.mrb[0].mxu0
    %3529 = vmatprep.mubr.f32.mxu0 0.0
    %3530 = vmatmul.mubr.f32.gmra.mrb[0].mxu0 %v1692
    %v3531 = vpop.f32.mrb[0].mxu0
    %v3532 = vadd.f32 0.0, %v3531
    %v3533 = vpop.f32.mrb[0].mxu0
    %3534 = vdwg.mxu0
    %s3535 = scalar_lea.vmem %s4, 512
    %v3536 = vld [vmem:[%s3535] sm:$0xff]
    %v3537 = vld [vmem:[%s3535 + $0x8] sm:$0xff]
    %v3538 = vld [vmem:[%s3535 + $0x10] sm:$0xff]
    %v3539 = vld [vmem:[%s3535 + $0x18] sm:$0xff]
    %v3540 = vld [vmem:[%s3535 + $0x20] sm:$0xff]
    %v3541 = vld [vmem:[%s3535 + $0x28] sm:$0xff]
    %v3542 = vld [vmem:[%s3535 + $0x30] sm:$0xff]
    %v3543 = vld [vmem:[%s3535 + $0x38] sm:$0xff]
    %v3545 = vsel %vm2085, %v3517, 0
    %v3548 = vsel %vm2085, %v3522, 0
    %v3551 = vsel %vm2085, %v3527, 0
    %v3554 = vsel %vm2085, %v3532, 0
    %3556 = vmatprep.subr.mxu0 0.0
    %3557 = vmatpush1.msra.mxu0 %v3536
    %3558 = vmatprep.subr.mxu0 0.0
    %3559 = vmatpush1.msra.mxu0 %v3537
    %3560 = vmatprep.subr.mxu0 0.0
    %3561 = vmatpush1.msra.mxu0 %v3538
    %3562 = vmatprep.subr.mxu0 0.0
    %3563 = vmatpush1.msra.mxu0 %v3539
    %3564 = vmatprep.subr.mxu0 0.0
    %3565 = vmatpush1.msra.mxu0 %v3540
    %3566 = vmatprep.subr.mxu0 0.0
    %3567 = vmatpush1.msra.mxu0 %v3541
    %3568 = vmatprep.subr.mxu0 0.0
    %3569 = vmatpush1.msra.mxu0 %v3542
    %3570 = vmatprep.subr.mxu0 0.0
    %3571 = vmatpush1.msra.mxu0 %v3543
    %3572 = vmatprep.subr.mxu0 0.0
    %3573 = vmatpush1.msra.mxu0 0.0
    %3574 = vmatprep.subr.mxu0 0.0
    %3575 = vmatpush1.msra.mxu0 0.0
    %3576 = vmatprep.subr.mxu0 0.0
    %3577 = vmatpush1.msra.mxu0 0.0
    %3578 = vmatprep.subr.mxu0 0.0
    %3579 = vmatpush1.msra.mxu0 0.0
    %3580 = vmatprep.subr.mxu0 0.0
    %3581 = vmatpush1.msra.mxu0 0.0
    %3582 = vmatprep.subr.mxu0 0.0
    %3583 = vmatpush1.msra.mxu0 0.0
    %3584 = vmatprep.subr.mxu0 0.0
    %3585 = vmatpush1.msra.mxu0 0.0
    %3586 = vmatprep.subr.mxu0 0.0
    %3587 = vmatpush1.msra.mxu0 0.0
    %3588 = vmatprep.subr.mxu0 0.0
    %3589 = vmatpush1.msra.mxu0 0.0
    %3590 = vmatprep.subr.mxu0 0.0
    %3591 = vmatpush1.msra.mxu0 0.0
    %3592 = vmatprep.subr.mxu0 0.0
    %3593 = vmatpush1.msra.mxu0 0.0
    %3594 = vmatprep.subr.mxu0 0.0
    %3595 = vmatpush1.msra.mxu0 0.0
    %3596 = vmatprep.subr.mxu0 0.0
    %3597 = vmatpush1.msra.mxu0 0.0
    %3598 = vmatprep.subr.mxu0 0.0
    %3599 = vmatpush1.msra.mxu0 0.0
    %3600 = vmatprep.subr.mxu0 0.0
    %3601 = vmatpush1.msra.mxu0 0.0
    %3602 = vmatprep.subr.mxu0 0.0
    %3603 = vmatpush1.msra.mxu0 0.0
    %3604 = vmatprep.subr.mxu0 0.0
    %3605 = vmatpush1.msra.mxu0 0.0
    %3606 = vmatprep.subr.mxu0 0.0
    %3607 = vmatpush1.msra.mxu0 0.0
    %3608 = vmatprep.subr.mxu0 0.0
    %3609 = vmatpush1.msra.mxu0 0.0
    %3610 = vmatprep.subr.mxu0 0.0
    %3611 = vmatpush1.msra.mxu0 0.0
    %3612 = vmatprep.subr.mxu0 0.0
    %3613 = vmatpush1.msra.mxu0 0.0
    %3614 = vmatprep.subr.mxu0 0.0
    %3615 = vmatpush1.msra.mxu0 0.0
    %3616 = vmatprep.subr.mxu0 0.0
    %3617 = vmatpush1.msra.mxu0 0.0
    %3618 = vmatprep.subr.mxu0 0.0
    %3619 = vmatpush1.msra.mxu0 0.0
    %3620 = vmatprep.mubr.f32.mxu0 0.0
    %3621 = vmatmul.mubr.f32.gmra.mrb[0].mxu0 %v3545
    %v3622 = vpop.f32.mrb[0].mxu0
    %v3623 = vadd.f32 0.0, %v3622
    %v3624 = vpop.f32.mrb[0].mxu0
    %3625 = vmatprep.mubr.f32.mxu0 0.0
    %3626 = vmatmul.mubr.f32.gmra.mrb[0].mxu0 %v3548
    %v3627 = vpop.f32.mrb[0].mxu0
    %v3628 = vadd.f32 0.0, %v3627
    %v3629 = vpop.f32.mrb[0].mxu0
    %3630 = vmatprep.mubr.f32.mxu0 0.0
    %3631 = vmatmul.mubr.f32.gmra.mrb[0].mxu0 %v3551
    %v3632 = vpop.f32.mrb[0].mxu0
    %v3633 = vadd.f32 0.0, %v3632
    %v3634 = vpop.f32.mrb[0].mxu0
    %3635 = vmatprep.mubr.f32.mxu0 0.0
    %3636 = vmatmul.mubr.f32.gmra.mrb[0].mxu0 %v3554
    %v3637 = vpop.f32.mrb[0].mxu0
    %v3638 = vadd.f32 0.0, %v3637
    %v3639 = vpop.f32.mrb[0].mxu0
    %3640 = vdwg.mxu0
    %v3641 = vadd.f32 %v3446, %v3623
    %v3642 = vadd.f32 %v3447, %v3628
    %v3643 = vadd.f32 %v3448, %v3633
    %v3644 = vadd.f32 %v3449, %v3638
    %v3645 = vld [vmem:[%s5] sm:$0x1]
    %v3647 = vlaneseq
    %v3648 = vshrl.u32 %v3647, 7
    %v3649 = vsub.s32 0, %v3648
    %v3650 = vrot.slane %v3645, %v3649
    %v3652 = vadd.f32 %v3641, %v3650
    %v3653 = vadd.f32 %v3642, %v3650
    %v3654 = vadd.f32 %v3643, %v3650
    %v3655 = vadd.f32 %v3644, %v3650
    %v3656 = vmax.f32 %v3652, 0.0
    %v3657 = vmax.f32 %v3653, 0.0
    %v3658 = vmax.f32 %v3654, 0.0
    %v3659 = vmax.f32 %v3655, 0.0
    %v3660 = vld [vmem:[%s8] sm:$0x3]
    %v3662 = vsel %vm41, %v3660, 0
    %3664 = vmatprep.subr.mxu0 0.0
    %3665 = vmatpush1.msra.mxu0 %v3656
    %3666 = vmatprep.subr.mxu0 0.0
    %3667 = vmatpush1.msra.mxu0 %v3657
    %3668 = vmatprep.subr.mxu0 0.0
    %3669 = vmatpush1.msra.mxu0 %v3658
    %3670 = vmatprep.subr.mxu0 0.0
    %3671 = vmatpush1.msra.mxu0 %v3659
    %3672 = vmatprep.subr.mxu0 0.0
    %3673 = vmatpush1.msra.mxu0 0.0
    %3674 = vmatprep.subr.mxu0 0.0
    %3675 = vmatpush1.msra.mxu0 0.0
    %3676 = vmatprep.subr.mxu0 0.0
    %3677 = vmatpush1.msra.mxu0 0.0
    %3678 = vmatprep.subr.mxu0 0.0
    %3679 = vmatpush1.msra.mxu0 0.0
    %3680 = vmatprep.subr.mxu0 0.0
    %3681 = vmatpush1.msra.mxu0 0.0
    %3682 = vmatprep.subr.mxu0 0.0
    %3683 = vmatpush1.msra.mxu0 0.0
    %3684 = vmatprep.subr.mxu0 0.0
    %3685 = vmatpush1.msra.mxu0 0.0
    %3686 = vmatprep.subr.mxu0 0.0
    %3687 = vmatpush1.msra.mxu0 0.0
    %3688 = vmatprep.subr.mxu0 0.0
    %3689 = vmatpush1.msra.mxu0 0.0
    %3690 = vmatprep.subr.mxu0 0.0
    %3691 = vmatpush1.msra.mxu0 0.0
    %3692 = vmatprep.subr.mxu0 0.0
    %3693 = vmatpush1.msra.mxu0 0.0
    %3694 = vmatprep.subr.mxu0 0.0
    %3695 = vmatpush1.msra.mxu0 0.0
    %3696 = vmatprep.subr.mxu0 0.0
    %3697 = vmatpush1.msra.mxu0 0.0
    %3698 = vmatprep.subr.mxu0 0.0
    %3699 = vmatpush1.msra.mxu0 0.0
    %3700 = vmatprep.subr.mxu0 0.0
    %3701 = vmatpush1.msra.mxu0 0.0
    %3702 = vmatprep.subr.mxu0 0.0
    %3703 = vmatpush1.msra.mxu0 0.0
    %3704 = vmatprep.subr.mxu0 0.0
    %3705 = vmatpush1.msra.mxu0 0.0
    %3706 = vmatprep.subr.mxu0 0.0
    %3707 = vmatpush1.msra.mxu0 0.0
    %3708 = vmatprep.subr.mxu0 0.0
    %3709 = vmatpush1.msra.mxu0 0.0
    %3710 = vmatprep.subr.mxu0 0.0
    %3711 = vmatpush1.msra.mxu0 0.0
    %3712 = vmatprep.subr.mxu0 0.0
    %3713 = vmatpush1.msra.mxu0 0.0
    %3714 = vmatprep.subr.mxu0 0.0
    %3715 = vmatpush1.msra.mxu0 0.0
    %3716 = vmatprep.subr.mxu0 0.0
    %3717 = vmatpush1.msra.mxu0 0.0
    %3718 = vmatprep.subr.mxu0 0.0
    %3719 = vmatpush1.msra.mxu0 0.0
    %3720 = vmatprep.subr.mxu0 0.0
    %3721 = vmatpush1.msra.mxu0 0.0
    %3722 = vmatprep.subr.mxu0 0.0
    %3723 = vmatpush1.msra.mxu0 0.0
    %3724 = vmatprep.subr.mxu0 0.0
    %3725 = vmatpush1.msra.mxu0 0.0
    %3726 = vmatprep.subr.mxu0 0.0
    %3727 = vmatpush1.msra.mxu0 0.0
    %3728 = vmatprep.mubr.f32.mxu0 0.0
    %3729 = vmatmul.mubr.f32.gmra.mrb[0].mxu0 %v3662
    %v3730 = vpop.f32.mrb[0].mxu0
    %v3731 = vadd.f32 0.0, %v3730
    %v3732 = vpop.f32.mrb[0].mxu0
    %3733 = vdwg.mxu0
    %v3734 = vld [vmem:[%s6] sm:$0xff]
    %v3735 = vld [vmem:[%s6 + $0x8] sm:$0xff]
    %v3736 = vld [vmem:[%s6 + $0x10] sm:$0xff]
    %v3737 = vld [vmem:[%s6 + $0x18] sm:$0xff]
    %v3738 = vld [vmem:[%s6 + $0x20] sm:$0xff]
    %v3739 = vld [vmem:[%s6 + $0x28] sm:$0xff]
    %v3740 = vld [vmem:[%s6 + $0x30] sm:$0xff]
    %v3741 = vld [vmem:[%s6 + $0x38] sm:$0xff]
    %v3742 = vld [vmem:[%s6 + $0x40] sm:$0xff]
    %v3743 = vld [vmem:[%s6 + $0x48] sm:$0xff]
    %v3744 = vld [vmem:[%s6 + $0x50] sm:$0xff]
    %v3745 = vld [vmem:[%s6 + $0x58] sm:$0xff]
    %v3746 = vld [vmem:[%s6 + $0x60] sm:$0xff]
    %v3747 = vld [vmem:[%s6 + $0x68] sm:$0xff]
    %v3748 = vld [vmem:[%s6 + $0x70] sm:$0xff]
    %v3749 = vld [vmem:[%s6 + $0x78] sm:$0xff]
    %s3750 = scalar_lea.vmem %s8, 2
    %v3751 = vld [vmem:[%s3750] sm:$0x3]
    %v3753 = vsel %vm41, %v3751, 0
    %3755 = vmatprep.subr.mxu0 0.0
    %3756 = vmatpush1.msra.mxu0 %v3656
    %3757 = vmatprep.subr.mxu0 0.0
    %3758 = vmatpush1.msra.mxu0 %v3657
    %3759 = vmatprep.subr.mxu0 0.0
    %3760 = vmatpush1.msra.mxu0 %v3658
    %3761 = vmatprep.subr.mxu0 0.0
    %3762 = vmatpush1.msra.mxu0 %v3659
    %3763 = vmatprep.subr.mxu0 0.0
    %3764 = vmatpush1.msra.mxu0 0.0
    %3765 = vmatprep.subr.mxu0 0.0
    %3766 = vmatpush1.msra.mxu0 0.0
    %3767 = vmatprep.subr.mxu0 0.0
    %3768 = vmatpush1.msra.mxu0 0.0
    %3769 = vmatprep.subr.mxu0 0.0
    %3770 = vmatpush1.msra.mxu0 0.0
    %3771 = vmatprep.subr.mxu0 0.0
    %3772 = vmatpush1.msra.mxu0 0.0
    %3773 = vmatprep.subr.mxu0 0.0
    %3774 = vmatpush1.msra.mxu0 0.0
    %3775 = vmatprep.subr.mxu0 0.0
    %3776 = vmatpush1.msra.mxu0 0.0
    %3777 = vmatprep.subr.mxu0 0.0
    %3778 = vmatpush1.msra.mxu0 0.0
    %3779 = vmatprep.subr.mxu0 0.0
    %3780 = vmatpush1.msra.mxu0 0.0
    %3781 = vmatprep.subr.mxu0 0.0
    %3782 = vmatpush1.msra.mxu0 0.0
    %3783 = vmatprep.subr.mxu0 0.0
    %3784 = vmatpush1.msra.mxu0 0.0
    %3785 = vmatprep.subr.mxu0 0.0
    %3786 = vmatpush1.msra.mxu0 0.0
    %3787 = vmatprep.subr.mxu0 0.0
    %3788 = vmatpush1.msra.mxu0 0.0
    %3789 = vmatprep.subr.mxu0 0.0
    %3790 = vmatpush1.msra.mxu0 0.0
    %3791 = vmatprep.subr.mxu0 0.0
    %3792 = vmatpush1.msra.mxu0 0.0
    %3793 = vmatprep.subr.mxu0 0.0
    %3794 = vmatpush1.msra.mxu0 0.0
    %3795 = vmatprep.subr.mxu0 0.0
    %3796 = vmatpush1.msra.mxu0 0.0
    %3797 = vmatprep.subr.mxu0 0.0
    %3798 = vmatpush1.msra.mxu0 0.0
    %3799 = vmatprep.subr.mxu0 0.0
    %3800 = vmatpush1.msra.mxu0 0.0
    %3801 = vmatprep.subr.mxu0 0.0
    %3802 = vmatpush1.msra.mxu0 0.0
    %3803 = vmatprep.subr.mxu0 0.0
    %3804 = vmatpush1.msra.mxu0 0.0
    %3805 = vmatprep.subr.mxu0 0.0
    %3806 = vmatpush1.msra.mxu0 0.0
    %3807 = vmatprep.subr.mxu0 0.0
    %3808 = vmatpush1.msra.mxu0 0.0
    %3809 = vmatprep.subr.mxu0 0.0
    %3810 = vmatpush1.msra.mxu0 0.0
    %3811 = vmatprep.subr.mxu0 0.0
    %3812 = vmatpush1.msra.mxu0 0.0
    %3813 = vmatprep.subr.mxu0 0.0
    %3814 = vmatpush1.msra.mxu0 0.0
    %3815 = vmatprep.subr.mxu0 0.0
    %3816 = vmatpush1.msra.mxu0 0.0
    %3817 = vmatprep.subr.mxu0 0.0
    %3818 = vmatpush1.msra.mxu0 0.0
    %3819 = vmatprep.mubr.f32.mxu0 0.0
    %3820 = vmatmul.mubr.f32.gmra.mrb[0].mxu0 %v3753
    %v3821 = vpop.f32.mrb[0].mxu0
    %v3822 = vadd.f32 0.0, %v3821
    %v3823 = vpop.f32.mrb[0].mxu0
    %3824 = vdwg.mxu0
    %s3825 = scalar_lea.vmem %s6, 128
    %v3826 = vld [vmem:[%s3825] sm:$0xff]
    %v3827 = vld [vmem:[%s3825 + $0x8] sm:$0xff]
    %v3828 = vld [vmem:[%s3825 + $0x10] sm:$0xff]
    %v3829 = vld [vmem:[%s3825 + $0x18] sm:$0xff]
    %v3830 = vld [vmem:[%s3825 + $0x20] sm:$0xff]
    %v3831 = vld [vmem:[%s3825 + $0x28] sm:$0xff]
    %v3832 = vld [vmem:[%s3825 + $0x30] sm:$0xff]
    %v3833 = vld [vmem:[%s3825 + $0x38] sm:$0xff]
    %v3834 = vld [vmem:[%s3825 + $0x40] sm:$0xff]
    %v3835 = vld [vmem:[%s3825 + $0x48] sm:$0xff]
    %v3836 = vld [vmem:[%s3825 + $0x50] sm:$0xff]
    %v3837 = vld [vmem:[%s3825 + $0x58] sm:$0xff]
    %v3838 = vld [vmem:[%s3825 + $0x60] sm:$0xff]
    %v3839 = vld [vmem:[%s3825 + $0x68] sm:$0xff]
    %v3840 = vld [vmem:[%s3825 + $0x70] sm:$0xff]
    %v3841 = vld [vmem:[%s3825 + $0x78] sm:$0xff]
    %3842 = vmatprep.subr.mxu0 0.0
    %3843 = vmatpush1.msra.mxu0 %v3826
    %3844 = vmatprep.subr.mxu0 0.0
    %3845 = vmatpush1.msra.mxu0 %v3827
    %3846 = vmatprep.subr.mxu0 0.0
    %3847 = vmatpush1.msra.mxu0 %v3828
    %3848 = vmatprep.subr.mxu0 0.0
    %3849 = vmatpush1.msra.mxu0 %v3829
    %3850 = vmatprep.subr.mxu0 0.0
    %3851 = vmatpush1.msra.mxu0 %v3830
    %3852 = vmatprep.subr.mxu0 0.0
    %3853 = vmatpush1.msra.mxu0 %v3831
    %3854 = vmatprep.subr.mxu0 0.0
    %3855 = vmatpush1.msra.mxu0 %v3832
    %3856 = vmatprep.subr.mxu0 0.0
    %3857 = vmatpush1.msra.mxu0 %v3833
    %3858 = vmatprep.subr.mxu0 0.0
    %3859 = vmatpush1.msra.mxu0 %v3834
    %3860 = vmatprep.subr.mxu0 0.0
    %3861 = vmatpush1.msra.mxu0 %v3835
    %3862 = vmatprep.subr.mxu0 0.0
    %3863 = vmatpush1.msra.mxu0 %v3836
    %3864 = vmatprep.subr.mxu0 0.0
    %3865 = vmatpush1.msra.mxu0 %v3837
    %3866 = vmatprep.subr.mxu0 0.0
    %3867 = vmatpush1.msra.mxu0 %v3838
    %3868 = vmatprep.subr.mxu0 0.0
    %3869 = vmatpush1.msra.mxu0 %v3839
    %3870 = vmatprep.subr.mxu0 0.0
    %3871 = vmatpush1.msra.mxu0 %v3840
    %3872 = vmatprep.subr.mxu0 0.0
    %3873 = vmatpush1.msra.mxu0 %v3841
    %3874 = vmatprep.subr.mxu0 0.0
    %3875 = vmatpush1.msra.mxu0 0.0
    %3876 = vmatprep.subr.mxu0 0.0
    %3877 = vmatpush1.msra.mxu0 0.0
    %3878 = vmatprep.subr.mxu0 0.0
    %3879 = vmatpush1.msra.mxu0 0.0
    %3880 = vmatprep.subr.mxu0 0.0
    %3881 = vmatpush1.msra.mxu0 0.0
    %3882 = vmatprep.subr.mxu0 0.0
    %3883 = vmatpush1.msra.mxu0 0.0
    %3884 = vmatprep.subr.mxu0 0.0
    %3885 = vmatpush1.msra.mxu0 0.0
    %3886 = vmatprep.subr.mxu0 0.0
    %3887 = vmatpush1.msra.mxu0 0.0
    %3888 = vmatprep.subr.mxu0 0.0
    %3889 = vmatpush1.msra.mxu0 0.0
    %3890 = vmatprep.subr.mxu0 0.0
    %3891 = vmatpush1.msra.mxu0 0.0
    %3892 = vmatprep.subr.mxu0 0.0
    %3893 = vmatpush1.msra.mxu0 0.0
    %3894 = vmatprep.subr.mxu0 0.0
    %3895 = vmatpush1.msra.mxu0 0.0
    %3896 = vmatprep.subr.mxu0 0.0
    %3897 = vmatpush1.msra.mxu0 0.0
    %3898 = vmatprep.subr.mxu0 0.0
    %3899 = vmatpush1.msra.mxu0 0.0
    %3900 = vmatprep.subr.mxu0 0.0
    %3901 = vmatpush1.msra.mxu0 0.0
    %3902 = vmatprep.subr.mxu0 0.0
    %3903 = vmatpush1.msra.mxu0 0.0
    %3904 = vmatprep.subr.mxu0 0.0
    %3905 = vmatpush1.msra.mxu0 0.0
    %3906 = vmatprep.mubr.f32.mxu0 0.0
    %3907 = vmatmul.mubr.f32.gmra.mrb[0].mxu0 %v3822
    %v3908 = vpop.f32.mrb[0].mxu0
    %v3909 = vadd.f32 0.0, %v3908
    %v3910 = vpop.f32.mrb[0].mxu0
    %3911 = vdwg.mxu0
    %3912 = vmatprep.subr.mxu0 0.0
    %3913 = vmatpush1.msra.mxu0 %v3734
    %3914 = vmatprep.subr.mxu0 0.0
    %3915 = vmatpush1.msra.mxu0 %v3735
    %3916 = vmatprep.subr.mxu0 0.0
    %3917 = vmatpush1.msra.mxu0 %v3736
    %3918 = vmatprep.subr.mxu0 0.0
    %3919 = vmatpush1.msra.mxu0 %v3737
    %3920 = vmatprep.subr.mxu0 0.0
    %3921 = vmatpush1.msra.mxu0 %v3738
    %3922 = vmatprep.subr.mxu0 0.0
    %3923 = vmatpush1.msra.mxu0 %v3739
    %3924 = vmatprep.subr.mxu0 0.0
    %3925 = vmatpush1.msra.mxu0 %v3740
    %3926 = vmatprep.subr.mxu0 0.0
    %3927 = vmatpush1.msra.mxu0 %v3741
    %3928 = vmatprep.subr.mxu0 0.0
    %3929 = vmatpush1.msra.mxu0 %v3742
    %3930 = vmatprep.subr.mxu0 0.0
    %3931 = vmatpush1.msra.mxu0 %v3743
    %3932 = vmatprep.subr.mxu0 0.0
    %3933 = vmatpush1.msra.mxu0 %v3744
    %3934 = vmatprep.subr.mxu0 0.0
    %3935 = vmatpush1.msra.mxu0 %v3745
    %3936 = vmatprep.subr.mxu0 0.0
    %3937 = vmatpush1.msra.mxu0 %v3746
    %3938 = vmatprep.subr.mxu0 0.0
    %3939 = vmatpush1.msra.mxu0 %v3747
    %3940 = vmatprep.subr.mxu0 0.0
    %3941 = vmatpush1.msra.mxu0 %v3748
    %3942 = vmatprep.subr.mxu0 0.0
    %3943 = vmatpush1.msra.mxu0 %v3749
    %3944 = vmatprep.subr.mxu0 0.0
    %3945 = vmatpush1.msra.mxu0 0.0
    %3946 = vmatprep.subr.mxu0 0.0
    %3947 = vmatpush1.msra.mxu0 0.0
    %3948 = vmatprep.subr.mxu0 0.0
    %3949 = vmatpush1.msra.mxu0 0.0
    %3950 = vmatprep.subr.mxu0 0.0
    %3951 = vmatpush1.msra.mxu0 0.0
    %3952 = vmatprep.subr.mxu0 0.0
    %3953 = vmatpush1.msra.mxu0 0.0
    %3954 = vmatprep.subr.mxu0 0.0
    %3955 = vmatpush1.msra.mxu0 0.0
    %3956 = vmatprep.subr.mxu0 0.0
    %3957 = vmatpush1.msra.mxu0 0.0
    %3958 = vmatprep.subr.mxu0 0.0
    %3959 = vmatpush1.msra.mxu0 0.0
    %3960 = vmatprep.subr.mxu0 0.0
    %3961 = vmatpush1.msra.mxu0 0.0
    %3962 = vmatprep.subr.mxu0 0.0
    %3963 = vmatpush1.msra.mxu0 0.0
    %3964 = vmatprep.subr.mxu0 0.0
    %3965 = vmatpush1.msra.mxu0 0.0
    %3966 = vmatprep.subr.mxu0 0.0
    %3967 = vmatpush1.msra.mxu0 0.0
    %3968 = vmatprep.subr.mxu0 0.0
    %3969 = vmatpush1.msra.mxu0 0.0
    %3970 = vmatprep.subr.mxu0 0.0
    %3971 = vmatpush1.msra.mxu0 0.0
    %3972 = vmatprep.subr.mxu0 0.0
    %3973 = vmatpush1.msra.mxu0 0.0
    %3974 = vmatprep.subr.mxu0 0.0
    %3975 = vmatpush1.msra.mxu0 0.0
    %3976 = vmatprep.mubr.f32.mxu0 0.0
    %3977 = vmatmul.mubr.f32.gmra.mrb[0].mxu0 %v3731
    %v3978 = vpop.f32.mrb[0].mxu0
    %v3979 = vadd.f32 %v3909, %v3978
    %v3980 = vpop.f32.mrb[0].mxu0
    %3981 = vdwg.mxu0
    %s3982 = scalar_lea.vmem %s8, 4
    %v3983 = vld [vmem:[%s3982] sm:$0x3]
    %v3985 = vsel %vm41, %v3983, 0
    %3987 = vmatprep.subr.mxu0 0.0
    %3988 = vmatpush1.msra.mxu0 %v3656
    %3989 = vmatprep.subr.mxu0 0.0
    %3990 = vmatpush1.msra.mxu0 %v3657
    %3991 = vmatprep.subr.mxu0 0.0
    %3992 = vmatpush1.msra.mxu0 %v3658
    %3993 = vmatprep.subr.mxu0 0.0
    %3994 = vmatpush1.msra.mxu0 %v3659
    %3995 = vmatprep.subr.mxu0 0.0
    %3996 = vmatpush1.msra.mxu0 0.0
    %3997 = vmatprep.subr.mxu0 0.0
    %3998 = vmatpush1.msra.mxu0 0.0
    %3999 = vmatprep.subr.mxu0 0.0
    %4000 = vmatpush1.msra.mxu0 0.0
    %4001 = vmatprep.subr.mxu0 0.0
    %4002 = vmatpush1.msra.mxu0 0.0
    %4003 = vmatprep.subr.mxu0 0.0
    %4004 = vmatpush1.msra.mxu0 0.0
    %4005 = vmatprep.subr.mxu0 0.0
    %4006 = vmatpush1.msra.mxu0 0.0
    %4007 = vmatprep.subr.mxu0 0.0
    %4008 = vmatpush1.msra.mxu0 0.0
    %4009 = vmatprep.subr.mxu0 0.0
    %4010 = vmatpush1.msra.mxu0 0.0
    %4011 = vmatprep.subr.mxu0 0.0
    %4012 = vmatpush1.msra.mxu0 0.0
    %4013 = vmatprep.subr.mxu0 0.0
    %4014 = vmatpush1.msra.mxu0 0.0
    %4015 = vmatprep.subr.mxu0 0.0
    %4016 = vmatpush1.msra.mxu0 0.0
    %4017 = vmatprep.subr.mxu0 0.0
    %4018 = vmatpush1.msra.mxu0 0.0
    %4019 = vmatprep.subr.mxu0 0.0
    %4020 = vmatpush1.msra.mxu0 0.0
    %4021 = vmatprep.subr.mxu0 0.0
    %4022 = vmatpush1.msra.mxu0 0.0
    %4023 = vmatprep.subr.mxu0 0.0
    %4024 = vmatpush1.msra.mxu0 0.0
    %4025 = vmatprep.subr.mxu0 0.0
    %4026 = vmatpush1.msra.mxu0 0.0
    %4027 = vmatprep.subr.mxu0 0.0
    %4028 = vmatpush1.msra.mxu0 0.0
    %4029 = vmatprep.subr.mxu0 0.0
    %4030 = vmatpush1.msra.mxu0 0.0
    %4031 = vmatprep.subr.mxu0 0.0
    %4032 = vmatpush1.msra.mxu0 0.0
    %4033 = vmatprep.subr.mxu0 0.0
    %4034 = vmatpush1.msra.mxu0 0.0
    %4035 = vmatprep.subr.mxu0 0.0
    %4036 = vmatpush1.msra.mxu0 0.0
    %4037 = vmatprep.subr.mxu0 0.0
    %4038 = vmatpush1.msra.mxu0 0.0
    %4039 = vmatprep.subr.mxu0 0.0
    %4040 = vmatpush1.msra.mxu0 0.0
    %4041 = vmatprep.subr.mxu0 0.0
    %4042 = vmatpush1.msra.mxu0 0.0
    %4043 = vmatprep.subr.mxu0 0.0
    %4044 = vmatpush1.msra.mxu0 0.0
    %4045 = vmatprep.subr.mxu0 0.0
    %4046 = vmatpush1.msra.mxu0 0.0
    %4047 = vmatprep.subr.mxu0 0.0
    %4048 = vmatpush1.msra.mxu0 0.0
    %4049 = vmatprep.subr.mxu0 0.0
    %4050 = vmatpush1.msra.mxu0 0.0
    %4051 = vmatprep.mubr.f32.mxu0 0.0
    %4052 = vmatmul.mubr.f32.gmra.mrb[0].mxu0 %v3985
    %v4053 = vpop.f32.mrb[0].mxu0
    %v4054 = vadd.f32 0.0, %v4053
    %v4055 = vpop.f32.mrb[0].mxu0
    %4056 = vdwg.mxu0
    %s4057 = scalar_lea.vmem %s6, 256
    %v4058 = vld [vmem:[%s4057] sm:$0xff]
    %v4059 = vld [vmem:[%s4057 + $0x8] sm:$0xff]
    %v4060 = vld [vmem:[%s4057 + $0x10] sm:$0xff]
    %v4061 = vld [vmem:[%s4057 + $0x18] sm:$0xff]
    %v4062 = vld [vmem:[%s4057 + $0x20] sm:$0xff]
    %v4063 = vld [vmem:[%s4057 + $0x28] sm:$0xff]
    %v4064 = vld [vmem:[%s4057 + $0x30] sm:$0xff]
    %v4065 = vld [vmem:[%s4057 + $0x38] sm:$0xff]
    %v4066 = vld [vmem:[%s4057 + $0x40] sm:$0xff]
    %v4067 = vld [vmem:[%s4057 + $0x48] sm:$0xff]
    %v4068 = vld [vmem:[%s4057 + $0x50] sm:$0xff]
    %v4069 = vld [vmem:[%s4057 + $0x58] sm:$0xff]
    %v4070 = vld [vmem:[%s4057 + $0x60] sm:$0xff]
    %v4071 = vld [vmem:[%s4057 + $0x68] sm:$0xff]
    %v4072 = vld [vmem:[%s4057 + $0x70] sm:$0xff]
    %v4073 = vld [vmem:[%s4057 + $0x78] sm:$0xff]
    %4074 = vmatprep.subr.mxu0 0.0
    %4075 = vmatpush1.msra.mxu0 %v4058
    %4076 = vmatprep.subr.mxu0 0.0
    %4077 = vmatpush1.msra.mxu0 %v4059
    %4078 = vmatprep.subr.mxu0 0.0
    %4079 = vmatpush1.msra.mxu0 %v4060
    %4080 = vmatprep.subr.mxu0 0.0
    %4081 = vmatpush1.msra.mxu0 %v4061
    %4082 = vmatprep.subr.mxu0 0.0
    %4083 = vmatpush1.msra.mxu0 %v4062
    %4084 = vmatprep.subr.mxu0 0.0
    %4085 = vmatpush1.msra.mxu0 %v4063
    %4086 = vmatprep.subr.mxu0 0.0
    %4087 = vmatpush1.msra.mxu0 %v4064
    %4088 = vmatprep.subr.mxu0 0.0
    %4089 = vmatpush1.msra.mxu0 %v4065
    %4090 = vmatprep.subr.mxu0 0.0
    %4091 = vmatpush1.msra.mxu0 %v4066
    %4092 = vmatprep.subr.mxu0 0.0
    %4093 = vmatpush1.msra.mxu0 %v4067
    %4094 = vmatprep.subr.mxu0 0.0
    %4095 = vmatpush1.msra.mxu0 %v4068
    %4096 = vmatprep.subr.mxu0 0.0
    %4097 = vmatpush1.msra.mxu0 %v4069
    %4098 = vmatprep.subr.mxu0 0.0
    %4099 = vmatpush1.msra.mxu0 %v4070
    %4100 = vmatprep.subr.mxu0 0.0
    %4101 = vmatpush1.msra.mxu0 %v4071
    %4102 = vmatprep.subr.mxu0 0.0
    %4103 = vmatpush1.msra.mxu0 %v4072
    %4104 = vmatprep.subr.mxu0 0.0
    %4105 = vmatpush1.msra.mxu0 %v4073
    %4106 = vmatprep.subr.mxu0 0.0
    %4107 = vmatpush1.msra.mxu0 0.0
    %4108 = vmatprep.subr.mxu0 0.0
    %4109 = vmatpush1.msra.mxu0 0.0
    %4110 = vmatprep.subr.mxu0 0.0
    %4111 = vmatpush1.msra.mxu0 0.0
    %4112 = vmatprep.subr.mxu0 0.0
    %4113 = vmatpush1.msra.mxu0 0.0
    %4114 = vmatprep.subr.mxu0 0.0
    %4115 = vmatpush1.msra.mxu0 0.0
    %4116 = vmatprep.subr.mxu0 0.0
    %4117 = vmatpush1.msra.mxu0 0.0
    %4118 = vmatprep.subr.mxu0 0.0
    %4119 = vmatpush1.msra.mxu0 0.0
    %4120 = vmatprep.subr.mxu0 0.0
    %4121 = vmatpush1.msra.mxu0 0.0
    %4122 = vmatprep.subr.mxu0 0.0
    %4123 = vmatpush1.msra.mxu0 0.0
    %4124 = vmatprep.subr.mxu0 0.0
    %4125 = vmatpush1.msra.mxu0 0.0
    %4126 = vmatprep.subr.mxu0 0.0
    %4127 = vmatpush1.msra.mxu0 0.0
    %4128 = vmatprep.subr.mxu0 0.0
    %4129 = vmatpush1.msra.mxu0 0.0
    %4130 = vmatprep.subr.mxu0 0.0
    %4131 = vmatpush1.msra.mxu0 0.0
    %4132 = vmatprep.subr.mxu0 0.0
    %4133 = vmatpush1.msra.mxu0 0.0
    %4134 = vmatprep.subr.mxu0 0.0
    %4135 = vmatpush1.msra.mxu0 0.0
    %4136 = vmatprep.subr.mxu0 0.0
    %4137 = vmatpush1.msra.mxu0 0.0
    %4138 = vmatprep.mubr.f32.mxu0 0.0
    %4139 = vmatmul.mubr.f32.gmra.mrb[0].mxu0 %v4054
    %v4140 = vpop.f32.mrb[0].mxu0
    %v4141 = vadd.f32 0.0, %v4140
    %v4142 = vpop.f32.mrb[0].mxu0
    %4143 = vdwg.mxu0
    %v4144 = vadd.f32 %v3979, %v4141
    %s4145 = scalar_lea.vmem %s8, 6
    %v4146 = vld [vmem:[%s4145] sm:$0x3]
    %v4148 = vsel %vm41, %v4146, 0
    %4150 = vmatprep.subr.mxu0 0.0
    %4151 = vmatpush1.msra.mxu0 %v3656
    %4152 = vmatprep.subr.mxu0 0.0
    %4153 = vmatpush1.msra.mxu0 %v3657
    %4154 = vmatprep.subr.mxu0 0.0
    %4155 = vmatpush1.msra.mxu0 %v3658
    %4156 = vmatprep.subr.mxu0 0.0
    %4157 = vmatpush1.msra.mxu0 %v3659
    %4158 = vmatprep.subr.mxu0 0.0
    %4159 = vmatpush1.msra.mxu0 0.0
    %4160 = vmatprep.subr.mxu0 0.0
    %4161 = vmatpush1.msra.mxu0 0.0
    %4162 = vmatprep.subr.mxu0 0.0
    %4163 = vmatpush1.msra.mxu0 0.0
    %4164 = vmatprep.subr.mxu0 0.0
    %4165 = vmatpush1.msra.mxu0 0.0
    %4166 = vmatprep.subr.mxu0 0.0
    %4167 = vmatpush1.msra.mxu0 0.0
    %4168 = vmatprep.subr.mxu0 0.0
    %4169 = vmatpush1.msra.mxu0 0.0
    %4170 = vmatprep.subr.mxu0 0.0
    %4171 = vmatpush1.msra.mxu0 0.0
    %4172 = vmatprep.subr.mxu0 0.0
    %4173 = vmatpush1.msra.mxu0 0.0
    %4174 = vmatprep.subr.mxu0 0.0
    %4175 = vmatpush1.msra.mxu0 0.0
    %4176 = vmatprep.subr.mxu0 0.0
    %4177 = vmatpush1.msra.mxu0 0.0
    %4178 = vmatprep.subr.mxu0 0.0
    %4179 = vmatpush1.msra.mxu0 0.0
    %4180 = vmatprep.subr.mxu0 0.0
    %4181 = vmatpush1.msra.mxu0 0.0
    %4182 = vmatprep.subr.mxu0 0.0
    %4183 = vmatpush1.msra.mxu0 0.0
    %4184 = vmatprep.subr.mxu0 0.0
    %4185 = vmatpush1.msra.mxu0 0.0
    %4186 = vmatprep.subr.mxu0 0.0
    %4187 = vmatpush1.msra.mxu0 0.0
    %4188 = vmatprep.subr.mxu0 0.0
    %4189 = vmatpush1.msra.mxu0 0.0
    %4190 = vmatprep.subr.mxu0 0.0
    %4191 = vmatpush1.msra.mxu0 0.0
    %4192 = vmatprep.subr.mxu0 0.0
    %4193 = vmatpush1.msra.mxu0 0.0
    %4194 = vmatprep.subr.mxu0 0.0
    %4195 = vmatpush1.msra.mxu0 0.0
    %4196 = vmatprep.subr.mxu0 0.0
    %4197 = vmatpush1.msra.mxu0 0.0
    %4198 = vmatprep.subr.mxu0 0.0
    %4199 = vmatpush1.msra.mxu0 0.0
    %4200 = vmatprep.subr.mxu0 0.0
    %4201 = vmatpush1.msra.mxu0 0.0
    %4202 = vmatprep.subr.mxu0 0.0
    %4203 = vmatpush1.msra.mxu0 0.0
    %4204 = vmatprep.subr.mxu0 0.0
    %4205 = vmatpush1.msra.mxu0 0.0
    %4206 = vmatprep.subr.mxu0 0.0
    %4207 = vmatpush1.msra.mxu0 0.0
    %4208 = vmatprep.subr.mxu0 0.0
    %4209 = vmatpush1.msra.mxu0 0.0
    %4210 = vmatprep.subr.mxu0 0.0
    %4211 = vmatpush1.msra.mxu0 0.0
    %4212 = vmatprep.subr.mxu0 0.0
    %4213 = vmatpush1.msra.mxu0 0.0
    %4214 = vmatprep.mubr.f32.mxu0 0.0
    %4215 = vmatmul.mubr.f32.gmra.mrb[0].mxu0 %v4148
    %v4216 = vpop.f32.mrb[0].mxu0
    %v4217 = vadd.f32 0.0, %v4216
    %v4218 = vpop.f32.mrb[0].mxu0
    %4219 = vdwg.mxu0
    %s4220 = scalar_lea.vmem %s6, 384
    %v4221 = vld [vmem:[%s4220] sm:$0xff]
    %v4222 = vld [vmem:[%s4220 + $0x8] sm:$0xff]
    %v4223 = vld [vmem:[%s4220 + $0x10] sm:$0xff]
    %v4224 = vld [vmem:[%s4220 + $0x18] sm:$0xff]
    %v4225 = vld [vmem:[%s4220 + $0x20] sm:$0xff]
    %v4226 = vld [vmem:[%s4220 + $0x28] sm:$0xff]
    %v4227 = vld [vmem:[%s4220 + $0x30] sm:$0xff]
    %v4228 = vld [vmem:[%s4220 + $0x38] sm:$0xff]
    %v4229 = vld [vmem:[%s4220 + $0x40] sm:$0xff]
    %v4230 = vld [vmem:[%s4220 + $0x48] sm:$0xff]
    %v4231 = vld [vmem:[%s4220 + $0x50] sm:$0xff]
    %v4232 = vld [vmem:[%s4220 + $0x58] sm:$0xff]
    %v4233 = vld [vmem:[%s4220 + $0x60] sm:$0xff]
    %v4234 = vld [vmem:[%s4220 + $0x68] sm:$0xff]
    %v4235 = vld [vmem:[%s4220 + $0x70] sm:$0xff]
    %v4236 = vld [vmem:[%s4220 + $0x78] sm:$0xff]
    %4237 = vmatprep.subr.mxu0 0.0
    %4238 = vmatpush1.msra.mxu0 %v4221
    %4239 = vmatprep.subr.mxu0 0.0
    %4240 = vmatpush1.msra.mxu0 %v4222
    %4241 = vmatprep.subr.mxu0 0.0
    %4242 = vmatpush1.msra.mxu0 %v4223
    %4243 = vmatprep.subr.mxu0 0.0
    %4244 = vmatpush1.msra.mxu0 %v4224
    %4245 = vmatprep.subr.mxu0 0.0
    %4246 = vmatpush1.msra.mxu0 %v4225
    %4247 = vmatprep.subr.mxu0 0.0
    %4248 = vmatpush1.msra.mxu0 %v4226
    %4249 = vmatprep.subr.mxu0 0.0
    %4250 = vmatpush1.msra.mxu0 %v4227
    %4251 = vmatprep.subr.mxu0 0.0
    %4252 = vmatpush1.msra.mxu0 %v4228
    %4253 = vmatprep.subr.mxu0 0.0
    %4254 = vmatpush1.msra.mxu0 %v4229
    %4255 = vmatprep.subr.mxu0 0.0
    %4256 = vmatpush1.msra.mxu0 %v4230
    %4257 = vmatprep.subr.mxu0 0.0
    %4258 = vmatpush1.msra.mxu0 %v4231
    %4259 = vmatprep.subr.mxu0 0.0
    %4260 = vmatpush1.msra.mxu0 %v4232
    %4261 = vmatprep.subr.mxu0 0.0
    %4262 = vmatpush1.msra.mxu0 %v4233
    %4263 = vmatprep.subr.mxu0 0.0
    %4264 = vmatpush1.msra.mxu0 %v4234
    %4265 = vmatprep.subr.mxu0 0.0
    %4266 = vmatpush1.msra.mxu0 %v4235
    %4267 = vmatprep.subr.mxu0 0.0
    %4268 = vmatpush1.msra.mxu0 %v4236
    %4269 = vmatprep.subr.mxu0 0.0
    %4270 = vmatpush1.msra.mxu0 0.0
    %4271 = vmatprep.subr.mxu0 0.0
    %4272 = vmatpush1.msra.mxu0 0.0
    %4273 = vmatprep.subr.mxu0 0.0
    %4274 = vmatpush1.msra.mxu0 0.0
    %4275 = vmatprep.subr.mxu0 0.0
    %4276 = vmatpush1.msra.mxu0 0.0
    %4277 = vmatprep.subr.mxu0 0.0
    %4278 = vmatpush1.msra.mxu0 0.0
    %4279 = vmatprep.subr.mxu0 0.0
    %4280 = vmatpush1.msra.mxu0 0.0
    %4281 = vmatprep.subr.mxu0 0.0
    %4282 = vmatpush1.msra.mxu0 0.0
    %4283 = vmatprep.subr.mxu0 0.0
    %4284 = vmatpush1.msra.mxu0 0.0
    %4285 = vmatprep.subr.mxu0 0.0
    %4286 = vmatpush1.msra.mxu0 0.0
    %4287 = vmatprep.subr.mxu0 0.0
    %4288 = vmatpush1.msra.mxu0 0.0
    %4289 = vmatprep.subr.mxu0 0.0
    %4290 = vmatpush1.msra.mxu0 0.0
    %4291 = vmatprep.subr.mxu0 0.0
    %4292 = vmatpush1.msra.mxu0 0.0
    %4293 = vmatprep.subr.mxu0 0.0
    %4294 = vmatpush1.msra.mxu0 0.0
    %4295 = vmatprep.subr.mxu0 0.0
    %4296 = vmatpush1.msra.mxu0 0.0
    %4297 = vmatprep.subr.mxu0 0.0
    %4298 = vmatpush1.msra.mxu0 0.0
    %4299 = vmatprep.subr.mxu0 0.0
    %4300 = vmatpush1.msra.mxu0 0.0
    %4301 = vmatprep.mubr.f32.mxu0 0.0
    %4302 = vmatmul.mubr.f32.gmra.mrb[0].mxu0 %v4217
    %v4303 = vpop.f32.mrb[0].mxu0
    %v4304 = vadd.f32 0.0, %v4303
    %v4305 = vpop.f32.mrb[0].mxu0
    %4306 = vdwg.mxu0
    %v4307 = vadd.f32 %v4144, %v4304
    %s4308 = scalar_lea.vmem %s8, 8
    %v4309 = vld [vmem:[%s4308] sm:$0x3]
    %v4311 = vsel %vm41, %v4309, 0
    %4313 = vmatprep.subr.mxu0 0.0
    %4314 = vmatpush1.msra.mxu0 %v3656
    %4315 = vmatprep.subr.mxu0 0.0
    %4316 = vmatpush1.msra.mxu0 %v3657
    %4317 = vmatprep.subr.mxu0 0.0
    %4318 = vmatpush1.msra.mxu0 %v3658
    %4319 = vmatprep.subr.mxu0 0.0
    %4320 = vmatpush1.msra.mxu0 %v3659
    %4321 = vmatprep.subr.mxu0 0.0
    %4322 = vmatpush1.msra.mxu0 0.0
    %4323 = vmatprep.subr.mxu0 0.0
    %4324 = vmatpush1.msra.mxu0 0.0
    %4325 = vmatprep.subr.mxu0 0.0
    %4326 = vmatpush1.msra.mxu0 0.0
    %4327 = vmatprep.subr.mxu0 0.0
    %4328 = vmatpush1.msra.mxu0 0.0
    %4329 = vmatprep.subr.mxu0 0.0
    %4330 = vmatpush1.msra.mxu0 0.0
    %4331 = vmatprep.subr.mxu0 0.0
    %4332 = vmatpush1.msra.mxu0 0.0
    %4333 = vmatprep.subr.mxu0 0.0
    %4334 = vmatpush1.msra.mxu0 0.0
    %4335 = vmatprep.subr.mxu0 0.0
    %4336 = vmatpush1.msra.mxu0 0.0
    %4337 = vmatprep.subr.mxu0 0.0
    %4338 = vmatpush1.msra.mxu0 0.0
    %4339 = vmatprep.subr.mxu0 0.0
    %4340 = vmatpush1.msra.mxu0 0.0
    %4341 = vmatprep.subr.mxu0 0.0
    %4342 = vmatpush1.msra.mxu0 0.0
    %4343 = vmatprep.subr.mxu0 0.0
    %4344 = vmatpush1.msra.mxu0 0.0
    %4345 = vmatprep.subr.mxu0 0.0
    %4346 = vmatpush1.msra.mxu0 0.0
    %4347 = vmatprep.subr.mxu0 0.0
    %4348 = vmatpush1.msra.mxu0 0.0
    %4349 = vmatprep.subr.mxu0 0.0
    %4350 = vmatpush1.msra.mxu0 0.0
    %4351 = vmatprep.subr.mxu0 0.0
    %4352 = vmatpush1.msra.mxu0 0.0
    %4353 = vmatprep.subr.mxu0 0.0
    %4354 = vmatpush1.msra.mxu0 0.0
    %4355 = vmatprep.subr.mxu0 0.0
    %4356 = vmatpush1.msra.mxu0 0.0
    %4357 = vmatprep.subr.mxu0 0.0
    %4358 = vmatpush1.msra.mxu0 0.0
    %4359 = vmatprep.subr.mxu0 0.0
    %4360 = vmatpush1.msra.mxu0 0.0
    %4361 = vmatprep.subr.mxu0 0.0
    %4362 = vmatpush1.msra.mxu0 0.0
    %4363 = vmatprep.subr.mxu0 0.0
    %4364 = vmatpush1.msra.mxu0 0.0
    %4365 = vmatprep.subr.mxu0 0.0
    %4366 = vmatpush1.msra.mxu0 0.0
    %4367 = vmatprep.subr.mxu0 0.0
    %4368 = vmatpush1.msra.mxu0 0.0
    %4369 = vmatprep.subr.mxu0 0.0
    %4370 = vmatpush1.msra.mxu0 0.0
    %4371 = vmatprep.subr.mxu0 0.0
    %4372 = vmatpush1.msra.mxu0 0.0
    %4373 = vmatprep.subr.mxu0 0.0
    %4374 = vmatpush1.msra.mxu0 0.0
    %4375 = vmatprep.subr.mxu0 0.0
    %4376 = vmatpush1.msra.mxu0 0.0
    %4377 = vmatprep.mubr.f32.mxu0 0.0
    %4378 = vmatmul.mubr.f32.gmra.mrb[0].mxu0 %v4311
    %v4379 = vpop.f32.mrb[0].mxu0
    %v4380 = vadd.f32 0.0, %v4379
    %v4381 = vpop.f32.mrb[0].mxu0
    %4382 = vdwg.mxu0
    %s4383 = scalar_lea.vmem %s6, 512
    %v4384 = vld [vmem:[%s4383] sm:$0xff]
    %v4385 = vld [vmem:[%s4383 + $0x8] sm:$0xff]
    %v4386 = vld [vmem:[%s4383 + $0x10] sm:$0xff]
    %v4387 = vld [vmem:[%s4383 + $0x18] sm:$0xff]
    %v4388 = vld [vmem:[%s4383 + $0x20] sm:$0xff]
    %v4389 = vld [vmem:[%s4383 + $0x28] sm:$0xff]
    %v4390 = vld [vmem:[%s4383 + $0x30] sm:$0xff]
    %v4391 = vld [vmem:[%s4383 + $0x38] sm:$0xff]
    %v4392 = vld [vmem:[%s4383 + $0x40] sm:$0xff]
    %v4393 = vld [vmem:[%s4383 + $0x48] sm:$0xff]
    %v4394 = vld [vmem:[%s4383 + $0x50] sm:$0xff]
    %v4395 = vld [vmem:[%s4383 + $0x58] sm:$0xff]
    %v4396 = vld [vmem:[%s4383 + $0x60] sm:$0xff]
    %v4397 = vld [vmem:[%s4383 + $0x68] sm:$0xff]
    %v4398 = vld [vmem:[%s4383 + $0x70] sm:$0xff]
    %v4399 = vld [vmem:[%s4383 + $0x78] sm:$0xff]
    %4400 = vmatprep.subr.mxu0 0.0
    %4401 = vmatpush1.msra.mxu0 %v4384
    %4402 = vmatprep.subr.mxu0 0.0
    %4403 = vmatpush1.msra.mxu0 %v4385
    %4404 = vmatprep.subr.mxu0 0.0
    %4405 = vmatpush1.msra.mxu0 %v4386
    %4406 = vmatprep.subr.mxu0 0.0
    %4407 = vmatpush1.msra.mxu0 %v4387
    %4408 = vmatprep.subr.mxu0 0.0
    %4409 = vmatpush1.msra.mxu0 %v4388
    %4410 = vmatprep.subr.mxu0 0.0
    %4411 = vmatpush1.msra.mxu0 %v4389
    %4412 = vmatprep.subr.mxu0 0.0
    %4413 = vmatpush1.msra.mxu0 %v4390
    %4414 = vmatprep.subr.mxu0 0.0
    %4415 = vmatpush1.msra.mxu0 %v4391
    %4416 = vmatprep.subr.mxu0 0.0
    %4417 = vmatpush1.msra.mxu0 %v4392
    %4418 = vmatprep.subr.mxu0 0.0
    %4419 = vmatpush1.msra.mxu0 %v4393
    %4420 = vmatprep.subr.mxu0 0.0
    %4421 = vmatpush1.msra.mxu0 %v4394
    %4422 = vmatprep.subr.mxu0 0.0
    %4423 = vmatpush1.msra.mxu0 %v4395
    %4424 = vmatprep.subr.mxu0 0.0
    %4425 = vmatpush1.msra.mxu0 %v4396
    %4426 = vmatprep.subr.mxu0 0.0
    %4427 = vmatpush1.msra.mxu0 %v4397
    %4428 = vmatprep.subr.mxu0 0.0
    %4429 = vmatpush1.msra.mxu0 %v4398
    %4430 = vmatprep.subr.mxu0 0.0
    %4431 = vmatpush1.msra.mxu0 %v4399
    %4432 = vmatprep.subr.mxu0 0.0
    %4433 = vmatpush1.msra.mxu0 0.0
    %4434 = vmatprep.subr.mxu0 0.0
    %4435 = vmatpush1.msra.mxu0 0.0
    %4436 = vmatprep.subr.mxu0 0.0
    %4437 = vmatpush1.msra.mxu0 0.0
    %4438 = vmatprep.subr.mxu0 0.0
    %4439 = vmatpush1.msra.mxu0 0.0
    %4440 = vmatprep.subr.mxu0 0.0
    %4441 = vmatpush1.msra.mxu0 0.0
    %4442 = vmatprep.subr.mxu0 0.0
    %4443 = vmatpush1.msra.mxu0 0.0
    %4444 = vmatprep.subr.mxu0 0.0
    %4445 = vmatpush1.msra.mxu0 0.0
    %4446 = vmatprep.subr.mxu0 0.0
    %4447 = vmatpush1.msra.mxu0 0.0
    %4448 = vmatprep.subr.mxu0 0.0
    %4449 = vmatpush1.msra.mxu0 0.0
    %4450 = vmatprep.subr.mxu0 0.0
    %4451 = vmatpush1.msra.mxu0 0.0
    %4452 = vmatprep.subr.mxu0 0.0
    %4453 = vmatpush1.msra.mxu0 0.0
    %4454 = vmatprep.subr.mxu0 0.0
    %4455 = vmatpush1.msra.mxu0 0.0
    %4456 = vmatprep.subr.mxu0 0.0
    %4457 = vmatpush1.msra.mxu0 0.0
    %4458 = vmatprep.subr.mxu0 0.0
    %4459 = vmatpush1.msra.mxu0 0.0
    %4460 = vmatprep.subr.mxu0 0.0
    %4461 = vmatpush1.msra.mxu0 0.0
    %4462 = vmatprep.subr.mxu0 0.0
    %4463 = vmatpush1.msra.mxu0 0.0
    %4464 = vmatprep.mubr.f32.mxu0 0.0
    %4465 = vmatmul.mubr.f32.gmra.mrb[0].mxu0 %v4380
    %v4466 = vpop.f32.mrb[0].mxu0
    %v4467 = vadd.f32 0.0, %v4466
    %v4468 = vpop.f32.mrb[0].mxu0
    %4469 = vdwg.mxu0
    %v4470 = vadd.f32 %v4307, %v4467
    %s4471 = scalar_lea.vmem %s8, 10
    %v4472 = vld [vmem:[%s4471] sm:$0x3]
    %v4474 = vsel %vm41, %v4472, 0
    %4476 = vmatprep.subr.mxu0 0.0
    %4477 = vmatpush1.msra.mxu0 %v3656
    %4478 = vmatprep.subr.mxu0 0.0
    %4479 = vmatpush1.msra.mxu0 %v3657
    %4480 = vmatprep.subr.mxu0 0.0
    %4481 = vmatpush1.msra.mxu0 %v3658
    %4482 = vmatprep.subr.mxu0 0.0
    %4483 = vmatpush1.msra.mxu0 %v3659
    %4484 = vmatprep.subr.mxu0 0.0
    %4485 = vmatpush1.msra.mxu0 0.0
    %4486 = vmatprep.subr.mxu0 0.0
    %4487 = vmatpush1.msra.mxu0 0.0
    %4488 = vmatprep.subr.mxu0 0.0
    %4489 = vmatpush1.msra.mxu0 0.0
    %4490 = vmatprep.subr.mxu0 0.0
    %4491 = vmatpush1.msra.mxu0 0.0
    %4492 = vmatprep.subr.mxu0 0.0
    %4493 = vmatpush1.msra.mxu0 0.0
    %4494 = vmatprep.subr.mxu0 0.0
    %4495 = vmatpush1.msra.mxu0 0.0
    %4496 = vmatprep.subr.mxu0 0.0
    %4497 = vmatpush1.msra.mxu0 0.0
    %4498 = vmatprep.subr.mxu0 0.0
    %4499 = vmatpush1.msra.mxu0 0.0
    %4500 = vmatprep.subr.mxu0 0.0
    %4501 = vmatpush1.msra.mxu0 0.0
    %4502 = vmatprep.subr.mxu0 0.0
    %4503 = vmatpush1.msra.mxu0 0.0
    %4504 = vmatprep.subr.mxu0 0.0
    %4505 = vmatpush1.msra.mxu0 0.0
    %4506 = vmatprep.subr.mxu0 0.0
    %4507 = vmatpush1.msra.mxu0 0.0
    %4508 = vmatprep.subr.mxu0 0.0
    %4509 = vmatpush1.msra.mxu0 0.0
    %4510 = vmatprep.subr.mxu0 0.0
    %4511 = vmatpush1.msra.mxu0 0.0
    %4512 = vmatprep.subr.mxu0 0.0
    %4513 = vmatpush1.msra.mxu0 0.0
    %4514 = vmatprep.subr.mxu0 0.0
    %4515 = vmatpush1.msra.mxu0 0.0
    %4516 = vmatprep.subr.mxu0 0.0
    %4517 = vmatpush1.msra.mxu0 0.0
    %4518 = vmatprep.subr.mxu0 0.0
    %4519 = vmatpush1.msra.mxu0 0.0
    %4520 = vmatprep.subr.mxu0 0.0
    %4521 = vmatpush1.msra.mxu0 0.0
    %4522 = vmatprep.subr.mxu0 0.0
    %4523 = vmatpush1.msra.mxu0 0.0
    %4524 = vmatprep.subr.mxu0 0.0
    %4525 = vmatpush1.msra.mxu0 0.0
    %4526 = vmatprep.subr.mxu0 0.0
    %4527 = vmatpush1.msra.mxu0 0.0
    %4528 = vmatprep.subr.mxu0 0.0
    %4529 = vmatpush1.msra.mxu0 0.0
    %4530 = vmatprep.subr.mxu0 0.0
    %4531 = vmatpush1.msra.mxu0 0.0
    %4532 = vmatprep.subr.mxu0 0.0
    %4533 = vmatpush1.msra.mxu0 0.0
    %4534 = vmatprep.subr.mxu0 0.0
    %4535 = vmatpush1.msra.mxu0 0.0
    %4536 = vmatprep.subr.mxu0 0.0
    %4537 = vmatpush1.msra.mxu0 0.0
    %4538 = vmatprep.subr.mxu0 0.0
    %4539 = vmatpush1.msra.mxu0 0.0
    %4540 = vmatprep.mubr.f32.mxu0 0.0
    %4541 = vmatmul.mubr.f32.gmra.mrb[0].mxu0 %v4474
    %v4542 = vpop.f32.mrb[0].mxu0
    %v4543 = vadd.f32 0.0, %v4542
    %v4544 = vpop.f32.mrb[0].mxu0
    %4545 = vdwg.mxu0
    %s4546 = scalar_lea.vmem %s6, 640
    %v4547 = vld [vmem:[%s4546] sm:$0xff]
    %v4548 = vld [vmem:[%s4546 + $0x8] sm:$0xff]
    %v4549 = vld [vmem:[%s4546 + $0x10] sm:$0xff]
    %v4550 = vld [vmem:[%s4546 + $0x18] sm:$0xff]
    %v4551 = vld [vmem:[%s4546 + $0x20] sm:$0xff]
    %v4552 = vld [vmem:[%s4546 + $0x28] sm:$0xff]
    %v4553 = vld [vmem:[%s4546 + $0x30] sm:$0xff]
    %v4554 = vld [vmem:[%s4546 + $0x38] sm:$0xff]
    %v4555 = vld [vmem:[%s4546 + $0x40] sm:$0xff]
    %v4556 = vld [vmem:[%s4546 + $0x48] sm:$0xff]
    %v4557 = vld [vmem:[%s4546 + $0x50] sm:$0xff]
    %v4558 = vld [vmem:[%s4546 + $0x58] sm:$0xff]
    %v4559 = vld [vmem:[%s4546 + $0x60] sm:$0xff]
    %v4560 = vld [vmem:[%s4546 + $0x68] sm:$0xff]
    %v4561 = vld [vmem:[%s4546 + $0x70] sm:$0xff]
    %v4562 = vld [vmem:[%s4546 + $0x78] sm:$0xff]
    %4563 = vmatprep.subr.mxu0 0.0
    %4564 = vmatpush1.msra.mxu0 %v4547
    %4565 = vmatprep.subr.mxu0 0.0
    %4566 = vmatpush1.msra.mxu0 %v4548
    %4567 = vmatprep.subr.mxu0 0.0
    %4568 = vmatpush1.msra.mxu0 %v4549
    %4569 = vmatprep.subr.mxu0 0.0
    %4570 = vmatpush1.msra.mxu0 %v4550
    %4571 = vmatprep.subr.mxu0 0.0
    %4572 = vmatpush1.msra.mxu0 %v4551
    %4573 = vmatprep.subr.mxu0 0.0
    %4574 = vmatpush1.msra.mxu0 %v4552
    %4575 = vmatprep.subr.mxu0 0.0
    %4576 = vmatpush1.msra.mxu0 %v4553
    %4577 = vmatprep.subr.mxu0 0.0
    %4578 = vmatpush1.msra.mxu0 %v4554
    %4579 = vmatprep.subr.mxu0 0.0
    %4580 = vmatpush1.msra.mxu0 %v4555
    %4581 = vmatprep.subr.mxu0 0.0
    %4582 = vmatpush1.msra.mxu0 %v4556
    %4583 = vmatprep.subr.mxu0 0.0
    %4584 = vmatpush1.msra.mxu0 %v4557
    %4585 = vmatprep.subr.mxu0 0.0
    %4586 = vmatpush1.msra.mxu0 %v4558
    %4587 = vmatprep.subr.mxu0 0.0
    %4588 = vmatpush1.msra.mxu0 %v4559
    %4589 = vmatprep.subr.mxu0 0.0
    %4590 = vmatpush1.msra.mxu0 %v4560
    %4591 = vmatprep.subr.mxu0 0.0
    %4592 = vmatpush1.msra.mxu0 %v4561
    %4593 = vmatprep.subr.mxu0 0.0
    %4594 = vmatpush1.msra.mxu0 %v4562
    %4595 = vmatprep.subr.mxu0 0.0
    %4596 = vmatpush1.msra.mxu0 0.0
    %4597 = vmatprep.subr.mxu0 0.0
    %4598 = vmatpush1.msra.mxu0 0.0
    %4599 = vmatprep.subr.mxu0 0.0
    %4600 = vmatpush1.msra.mxu0 0.0
    %4601 = vmatprep.subr.mxu0 0.0
    %4602 = vmatpush1.msra.mxu0 0.0
    %4603 = vmatprep.subr.mxu0 0.0
    %4604 = vmatpush1.msra.mxu0 0.0
    %4605 = vmatprep.subr.mxu0 0.0
    %4606 = vmatpush1.msra.mxu0 0.0
    %4607 = vmatprep.subr.mxu0 0.0
    %4608 = vmatpush1.msra.mxu0 0.0
    %4609 = vmatprep.subr.mxu0 0.0
    %4610 = vmatpush1.msra.mxu0 0.0
    %4611 = vmatprep.subr.mxu0 0.0
    %4612 = vmatpush1.msra.mxu0 0.0
    %4613 = vmatprep.subr.mxu0 0.0
    %4614 = vmatpush1.msra.mxu0 0.0
    %4615 = vmatprep.subr.mxu0 0.0
    %4616 = vmatpush1.msra.mxu0 0.0
    %4617 = vmatprep.subr.mxu0 0.0
    %4618 = vmatpush1.msra.mxu0 0.0
    %4619 = vmatprep.subr.mxu0 0.0
    %4620 = vmatpush1.msra.mxu0 0.0
    %4621 = vmatprep.subr.mxu0 0.0
    %4622 = vmatpush1.msra.mxu0 0.0
    %4623 = vmatprep.subr.mxu0 0.0
    %4624 = vmatpush1.msra.mxu0 0.0
    %4625 = vmatprep.subr.mxu0 0.0
    %4626 = vmatpush1.msra.mxu0 0.0
    %4627 = vmatprep.mubr.f32.mxu0 0.0
    %4628 = vmatmul.mubr.f32.gmra.mrb[0].mxu0 %v4543
    %v4629 = vpop.f32.mrb[0].mxu0
    %v4630 = vadd.f32 0.0, %v4629
    %v4631 = vpop.f32.mrb[0].mxu0
    %4632 = vdwg.mxu0
    %v4633 = vadd.f32 %v4470, %v4630
    %s4634 = scalar_lea.vmem %s8, 12
    %v4635 = vld [vmem:[%s4634] sm:$0x3]
    %v4637 = vsel %vm41, %v4635, 0
    %4639 = vmatprep.subr.mxu0 0.0
    %4640 = vmatpush1.msra.mxu0 %v3656
    %4641 = vmatprep.subr.mxu0 0.0
    %4642 = vmatpush1.msra.mxu0 %v3657
    %4643 = vmatprep.subr.mxu0 0.0
    %4644 = vmatpush1.msra.mxu0 %v3658
    %4645 = vmatprep.subr.mxu0 0.0
    %4646 = vmatpush1.msra.mxu0 %v3659
    %4647 = vmatprep.subr.mxu0 0.0
    %4648 = vmatpush1.msra.mxu0 0.0
    %4649 = vmatprep.subr.mxu0 0.0
    %4650 = vmatpush1.msra.mxu0 0.0
    %4651 = vmatprep.subr.mxu0 0.0
    %4652 = vmatpush1.msra.mxu0 0.0
    %4653 = vmatprep.subr.mxu0 0.0
    %4654 = vmatpush1.msra.mxu0 0.0
    %4655 = vmatprep.subr.mxu0 0.0
    %4656 = vmatpush1.msra.mxu0 0.0
    %4657 = vmatprep.subr.mxu0 0.0
    %4658 = vmatpush1.msra.mxu0 0.0
    %4659 = vmatprep.subr.mxu0 0.0
    %4660 = vmatpush1.msra.mxu0 0.0
    %4661 = vmatprep.subr.mxu0 0.0
    %4662 = vmatpush1.msra.mxu0 0.0
    %4663 = vmatprep.subr.mxu0 0.0
    %4664 = vmatpush1.msra.mxu0 0.0
    %4665 = vmatprep.subr.mxu0 0.0
    %4666 = vmatpush1.msra.mxu0 0.0
    %4667 = vmatprep.subr.mxu0 0.0
    %4668 = vmatpush1.msra.mxu0 0.0
    %4669 = vmatprep.subr.mxu0 0.0
    %4670 = vmatpush1.msra.mxu0 0.0
    %4671 = vmatprep.subr.mxu0 0.0
    %4672 = vmatpush1.msra.mxu0 0.0
    %4673 = vmatprep.subr.mxu0 0.0
    %4674 = vmatpush1.msra.mxu0 0.0
    %4675 = vmatprep.subr.mxu0 0.0
    %4676 = vmatpush1.msra.mxu0 0.0
    %4677 = vmatprep.subr.mxu0 0.0
    %4678 = vmatpush1.msra.mxu0 0.0
    %4679 = vmatprep.subr.mxu0 0.0
    %4680 = vmatpush1.msra.mxu0 0.0
    %4681 = vmatprep.subr.mxu0 0.0
    %4682 = vmatpush1.msra.mxu0 0.0
    %4683 = vmatprep.subr.mxu0 0.0
    %4684 = vmatpush1.msra.mxu0 0.0
    %4685 = vmatprep.subr.mxu0 0.0
    %4686 = vmatpush1.msra.mxu0 0.0
    %4687 = vmatprep.subr.mxu0 0.0
    %4688 = vmatpush1.msra.mxu0 0.0
    %4689 = vmatprep.subr.mxu0 0.0
    %4690 = vmatpush1.msra.mxu0 0.0
    %4691 = vmatprep.subr.mxu0 0.0
    %4692 = vmatpush1.msra.mxu0 0.0
    %4693 = vmatprep.subr.mxu0 0.0
    %4694 = vmatpush1.msra.mxu0 0.0
    %4695 = vmatprep.subr.mxu0 0.0
    %4696 = vmatpush1.msra.mxu0 0.0
    %4697 = vmatprep.subr.mxu0 0.0
    %4698 = vmatpush1.msra.mxu0 0.0
    %4699 = vmatprep.subr.mxu0 0.0
    %4700 = vmatpush1.msra.mxu0 0.0
    %4701 = vmatprep.subr.mxu0 0.0
    %4702 = vmatpush1.msra.mxu0 0.0
    %4703 = vmatprep.mubr.f32.mxu0 0.0
    %4704 = vmatmul.mubr.f32.gmra.mrb[0].mxu0 %v4637
    %v4705 = vpop.f32.mrb[0].mxu0
    %v4706 = vadd.f32 0.0, %v4705
    %v4707 = vpop.f32.mrb[0].mxu0
    %4708 = vdwg.mxu0
    %s4709 = scalar_lea.vmem %s6, 768
    %v4710 = vld [vmem:[%s4709] sm:$0xff]
    %v4711 = vld [vmem:[%s4709 + $0x8] sm:$0xff]
    %v4712 = vld [vmem:[%s4709 + $0x10] sm:$0xff]
    %v4713 = vld [vmem:[%s4709 + $0x18] sm:$0xff]
    %v4714 = vld [vmem:[%s4709 + $0x20] sm:$0xff]
    %v4715 = vld [vmem:[%s4709 + $0x28] sm:$0xff]
    %v4716 = vld [vmem:[%s4709 + $0x30] sm:$0xff]
    %v4717 = vld [vmem:[%s4709 + $0x38] sm:$0xff]
    %v4718 = vld [vmem:[%s4709 + $0x40] sm:$0xff]
    %v4719 = vld [vmem:[%s4709 + $0x48] sm:$0xff]
    %v4720 = vld [vmem:[%s4709 + $0x50] sm:$0xff]
    %v4721 = vld [vmem:[%s4709 + $0x58] sm:$0xff]
    %v4722 = vld [vmem:[%s4709 + $0x60] sm:$0xff]
    %v4723 = vld [vmem:[%s4709 + $0x68] sm:$0xff]
    %v4724 = vld [vmem:[%s4709 + $0x70] sm:$0xff]
    %v4725 = vld [vmem:[%s4709 + $0x78] sm:$0xff]
    %4726 = vmatprep.subr.mxu0 0.0
    %4727 = vmatpush1.msra.mxu0 %v4710
    %4728 = vmatprep.subr.mxu0 0.0
    %4729 = vmatpush1.msra.mxu0 %v4711
    %4730 = vmatprep.subr.mxu0 0.0
    %4731 = vmatpush1.msra.mxu0 %v4712
    %4732 = vmatprep.subr.mxu0 0.0
    %4733 = vmatpush1.msra.mxu0 %v4713
    %4734 = vmatprep.subr.mxu0 0.0
    %4735 = vmatpush1.msra.mxu0 %v4714
    %4736 = vmatprep.subr.mxu0 0.0
    %4737 = vmatpush1.msra.mxu0 %v4715
    %4738 = vmatprep.subr.mxu0 0.0
    %4739 = vmatpush1.msra.mxu0 %v4716
    %4740 = vmatprep.subr.mxu0 0.0
    %4741 = vmatpush1.msra.mxu0 %v4717
    %4742 = vmatprep.subr.mxu0 0.0
    %4743 = vmatpush1.msra.mxu0 %v4718
    %4744 = vmatprep.subr.mxu0 0.0
    %4745 = vmatpush1.msra.mxu0 %v4719
    %4746 = vmatprep.subr.mxu0 0.0
    %4747 = vmatpush1.msra.mxu0 %v4720
    %4748 = vmatprep.subr.mxu0 0.0
    %4749 = vmatpush1.msra.mxu0 %v4721
    %4750 = vmatprep.subr.mxu0 0.0
    %4751 = vmatpush1.msra.mxu0 %v4722
    %4752 = vmatprep.subr.mxu0 0.0
    %4753 = vmatpush1.msra.mxu0 %v4723
    %4754 = vmatprep.subr.mxu0 0.0
    %4755 = vmatpush1.msra.mxu0 %v4724
    %4756 = vmatprep.subr.mxu0 0.0
    %4757 = vmatpush1.msra.mxu0 %v4725
    %4758 = vmatprep.subr.mxu0 0.0
    %4759 = vmatpush1.msra.mxu0 0.0
    %4760 = vmatprep.subr.mxu0 0.0
    %4761 = vmatpush1.msra.mxu0 0.0
    %4762 = vmatprep.subr.mxu0 0.0
    %4763 = vmatpush1.msra.mxu0 0.0
    %4764 = vmatprep.subr.mxu0 0.0
    %4765 = vmatpush1.msra.mxu0 0.0
    %4766 = vmatprep.subr.mxu0 0.0
    %4767 = vmatpush1.msra.mxu0 0.0
    %4768 = vmatprep.subr.mxu0 0.0
    %4769 = vmatpush1.msra.mxu0 0.0
    %4770 = vmatprep.subr.mxu0 0.0
    %4771 = vmatpush1.msra.mxu0 0.0
    %4772 = vmatprep.subr.mxu0 0.0
    %4773 = vmatpush1.msra.mxu0 0.0
    %4774 = vmatprep.subr.mxu0 0.0
    %4775 = vmatpush1.msra.mxu0 0.0
    %4776 = vmatprep.subr.mxu0 0.0
    %4777 = vmatpush1.msra.mxu0 0.0
    %4778 = vmatprep.subr.mxu0 0.0
    %4779 = vmatpush1.msra.mxu0 0.0
    %4780 = vmatprep.subr.mxu0 0.0
    %4781 = vmatpush1.msra.mxu0 0.0
    %4782 = vmatprep.subr.mxu0 0.0
    %4783 = vmatpush1.msra.mxu0 0.0
    %4784 = vmatprep.subr.mxu0 0.0
    %4785 = vmatpush1.msra.mxu0 0.0
    %4786 = vmatprep.subr.mxu0 0.0
    %4787 = vmatpush1.msra.mxu0 0.0
    %4788 = vmatprep.subr.mxu0 0.0
    %4789 = vmatpush1.msra.mxu0 0.0
    %4790 = vmatprep.mubr.f32.mxu0 0.0
    %4791 = vmatmul.mubr.f32.gmra.mrb[0].mxu0 %v4706
    %v4792 = vpop.f32.mrb[0].mxu0
    %v4793 = vadd.f32 0.0, %v4792
    %v4794 = vpop.f32.mrb[0].mxu0
    %4795 = vdwg.mxu0
    %v4796 = vadd.f32 %v4633, %v4793
    %s4797 = scalar_lea.vmem %s8, 14
    %v4798 = vld [vmem:[%s4797] sm:$0x3]
    %v4800 = vsel %vm41, %v4798, 0
    %4802 = vmatprep.subr.mxu0 0.0
    %4803 = vmatpush1.msra.mxu0 %v3656
    %4804 = vmatprep.subr.mxu0 0.0
    %4805 = vmatpush1.msra.mxu0 %v3657
    %4806 = vmatprep.subr.mxu0 0.0
    %4807 = vmatpush1.msra.mxu0 %v3658
    %4808 = vmatprep.subr.mxu0 0.0
    %4809 = vmatpush1.msra.mxu0 %v3659
    %4810 = vmatprep.subr.mxu0 0.0
    %4811 = vmatpush1.msra.mxu0 0.0
    %4812 = vmatprep.subr.mxu0 0.0
    %4813 = vmatpush1.msra.mxu0 0.0
    %4814 = vmatprep.subr.mxu0 0.0
    %4815 = vmatpush1.msra.mxu0 0.0
    %4816 = vmatprep.subr.mxu0 0.0
    %4817 = vmatpush1.msra.mxu0 0.0
    %4818 = vmatprep.subr.mxu0 0.0
    %4819 = vmatpush1.msra.mxu0 0.0
    %4820 = vmatprep.subr.mxu0 0.0
    %4821 = vmatpush1.msra.mxu0 0.0
    %4822 = vmatprep.subr.mxu0 0.0
    %4823 = vmatpush1.msra.mxu0 0.0
    %4824 = vmatprep.subr.mxu0 0.0
    %4825 = vmatpush1.msra.mxu0 0.0
    %4826 = vmatprep.subr.mxu0 0.0
    %4827 = vmatpush1.msra.mxu0 0.0
    %4828 = vmatprep.subr.mxu0 0.0
    %4829 = vmatpush1.msra.mxu0 0.0
    %4830 = vmatprep.subr.mxu0 0.0
    %4831 = vmatpush1.msra.mxu0 0.0
    %4832 = vmatprep.subr.mxu0 0.0
    %4833 = vmatpush1.msra.mxu0 0.0
    %4834 = vmatprep.subr.mxu0 0.0
    %4835 = vmatpush1.msra.mxu0 0.0
    %4836 = vmatprep.subr.mxu0 0.0
    %4837 = vmatpush1.msra.mxu0 0.0
    %4838 = vmatprep.subr.mxu0 0.0
    %4839 = vmatpush1.msra.mxu0 0.0
    %4840 = vmatprep.subr.mxu0 0.0
    %4841 = vmatpush1.msra.mxu0 0.0
    %4842 = vmatprep.subr.mxu0 0.0
    %4843 = vmatpush1.msra.mxu0 0.0
    %4844 = vmatprep.subr.mxu0 0.0
    %4845 = vmatpush1.msra.mxu0 0.0
    %4846 = vmatprep.subr.mxu0 0.0
    %4847 = vmatpush1.msra.mxu0 0.0
    %4848 = vmatprep.subr.mxu0 0.0
    %4849 = vmatpush1.msra.mxu0 0.0
    %4850 = vmatprep.subr.mxu0 0.0
    %4851 = vmatpush1.msra.mxu0 0.0
    %4852 = vmatprep.subr.mxu0 0.0
    %4853 = vmatpush1.msra.mxu0 0.0
    %4854 = vmatprep.subr.mxu0 0.0
    %4855 = vmatpush1.msra.mxu0 0.0
    %4856 = vmatprep.subr.mxu0 0.0
    %4857 = vmatpush1.msra.mxu0 0.0
    %4858 = vmatprep.subr.mxu0 0.0
    %4859 = vmatpush1.msra.mxu0 0.0
    %4860 = vmatprep.subr.mxu0 0.0
    %4861 = vmatpush1.msra.mxu0 0.0
    %4862 = vmatprep.subr.mxu0 0.0
    %4863 = vmatpush1.msra.mxu0 0.0
    %4864 = vmatprep.subr.mxu0 0.0
    %4865 = vmatpush1.msra.mxu0 0.0
    %4866 = vmatprep.mubr.f32.mxu0 0.0
    %4867 = vmatmul.mubr.f32.gmra.mrb[0].mxu0 %v4800
    %v4868 = vpop.f32.mrb[0].mxu0
    %v4869 = vadd.f32 0.0, %v4868
    %v4870 = vpop.f32.mrb[0].mxu0
    %4871 = vdwg.mxu0
    %s4872 = scalar_lea.vmem %s6, 896
    %v4873 = vld [vmem:[%s4872] sm:$0xff]
    %v4874 = vld [vmem:[%s4872 + $0x8] sm:$0xff]
    %v4875 = vld [vmem:[%s4872 + $0x10] sm:$0xff]
    %v4876 = vld [vmem:[%s4872 + $0x18] sm:$0xff]
    %v4877 = vld [vmem:[%s4872 + $0x20] sm:$0xff]
    %v4878 = vld [vmem:[%s4872 + $0x28] sm:$0xff]
    %v4879 = vld [vmem:[%s4872 + $0x30] sm:$0xff]
    %v4880 = vld [vmem:[%s4872 + $0x38] sm:$0xff]
    %v4881 = vld [vmem:[%s4872 + $0x40] sm:$0xff]
    %v4882 = vld [vmem:[%s4872 + $0x48] sm:$0xff]
    %v4883 = vld [vmem:[%s4872 + $0x50] sm:$0xff]
    %v4884 = vld [vmem:[%s4872 + $0x58] sm:$0xff]
    %v4885 = vld [vmem:[%s4872 + $0x60] sm:$0xff]
    %v4886 = vld [vmem:[%s4872 + $0x68] sm:$0xff]
    %v4887 = vld [vmem:[%s4872 + $0x70] sm:$0xff]
    %v4888 = vld [vmem:[%s4872 + $0x78] sm:$0xff]
    %4889 = vmatprep.subr.mxu0 0.0
    %4890 = vmatpush1.msra.mxu0 %v4873
    %4891 = vmatprep.subr.mxu0 0.0
    %4892 = vmatpush1.msra.mxu0 %v4874
    %4893 = vmatprep.subr.mxu0 0.0
    %4894 = vmatpush1.msra.mxu0 %v4875
    %4895 = vmatprep.subr.mxu0 0.0
    %4896 = vmatpush1.msra.mxu0 %v4876
    %4897 = vmatprep.subr.mxu0 0.0
    %4898 = vmatpush1.msra.mxu0 %v4877
    %4899 = vmatprep.subr.mxu0 0.0
    %4900 = vmatpush1.msra.mxu0 %v4878
    %4901 = vmatprep.subr.mxu0 0.0
    %4902 = vmatpush1.msra.mxu0 %v4879
    %4903 = vmatprep.subr.mxu0 0.0
    %4904 = vmatpush1.msra.mxu0 %v4880
    %4905 = vmatprep.subr.mxu0 0.0
    %4906 = vmatpush1.msra.mxu0 %v4881
    %4907 = vmatprep.subr.mxu0 0.0
    %4908 = vmatpush1.msra.mxu0 %v4882
    %4909 = vmatprep.subr.mxu0 0.0
    %4910 = vmatpush1.msra.mxu0 %v4883
    %4911 = vmatprep.subr.mxu0 0.0
    %4912 = vmatpush1.msra.mxu0 %v4884
    %4913 = vmatprep.subr.mxu0 0.0
    %4914 = vmatpush1.msra.mxu0 %v4885
    %4915 = vmatprep.subr.mxu0 0.0
    %4916 = vmatpush1.msra.mxu0 %v4886
    %4917 = vmatprep.subr.mxu0 0.0
    %4918 = vmatpush1.msra.mxu0 %v4887
    %4919 = vmatprep.subr.mxu0 0.0
    %4920 = vmatpush1.msra.mxu0 %v4888
    %4921 = vmatprep.subr.mxu0 0.0
    %4922 = vmatpush1.msra.mxu0 0.0
    %4923 = vmatprep.subr.mxu0 0.0
    %4924 = vmatpush1.msra.mxu0 0.0
    %4925 = vmatprep.subr.mxu0 0.0
    %4926 = vmatpush1.msra.mxu0 0.0
    %4927 = vmatprep.subr.mxu0 0.0
    %4928 = vmatpush1.msra.mxu0 0.0
    %4929 = vmatprep.subr.mxu0 0.0
    %4930 = vmatpush1.msra.mxu0 0.0
    %4931 = vmatprep.subr.mxu0 0.0
    %4932 = vmatpush1.msra.mxu0 0.0
    %4933 = vmatprep.subr.mxu0 0.0
    %4934 = vmatpush1.msra.mxu0 0.0
    %4935 = vmatprep.subr.mxu0 0.0
    %4936 = vmatpush1.msra.mxu0 0.0
    %4937 = vmatprep.subr.mxu0 0.0
    %4938 = vmatpush1.msra.mxu0 0.0
    %4939 = vmatprep.subr.mxu0 0.0
    %4940 = vmatpush1.msra.mxu0 0.0
    %4941 = vmatprep.subr.mxu0 0.0
    %4942 = vmatpush1.msra.mxu0 0.0
    %4943 = vmatprep.subr.mxu0 0.0
    %4944 = vmatpush1.msra.mxu0 0.0
    %4945 = vmatprep.subr.mxu0 0.0
    %4946 = vmatpush1.msra.mxu0 0.0
    %4947 = vmatprep.subr.mxu0 0.0
    %4948 = vmatpush1.msra.mxu0 0.0
    %4949 = vmatprep.subr.mxu0 0.0
    %4950 = vmatpush1.msra.mxu0 0.0
    %4951 = vmatprep.subr.mxu0 0.0
    %4952 = vmatpush1.msra.mxu0 0.0
    %4953 = vmatprep.mubr.f32.mxu0 0.0
    %4954 = vmatmul.mubr.f32.gmra.mrb[0].mxu0 %v4869
    %v4955 = vpop.f32.mrb[0].mxu0
    %v4956 = vadd.f32 0.0, %v4955
    %v4957 = vpop.f32.mrb[0].mxu0
    %4958 = vdwg.mxu0
    %v4959 = vadd.f32 %v4796, %v4956
    %s4960 = scalar_lea.vmem %s8, 16
    %v4961 = vld [vmem:[%s4960] sm:$0x3]
    %v4963 = vsel %vm41, %v4961, 0
    %4965 = vmatprep.subr.mxu0 0.0
    %4966 = vmatpush1.msra.mxu0 %v3656
    %4967 = vmatprep.subr.mxu0 0.0
    %4968 = vmatpush1.msra.mxu0 %v3657
    %4969 = vmatprep.subr.mxu0 0.0
    %4970 = vmatpush1.msra.mxu0 %v3658
    %4971 = vmatprep.subr.mxu0 0.0
    %4972 = vmatpush1.msra.mxu0 %v3659
    %4973 = vmatprep.subr.mxu0 0.0
    %4974 = vmatpush1.msra.mxu0 0.0
    %4975 = vmatprep.subr.mxu0 0.0
    %4976 = vmatpush1.msra.mxu0 0.0
    %4977 = vmatprep.subr.mxu0 0.0
    %4978 = vmatpush1.msra.mxu0 0.0
    %4979 = vmatprep.subr.mxu0 0.0
    %4980 = vmatpush1.msra.mxu0 0.0
    %4981 = vmatprep.subr.mxu0 0.0
    %4982 = vmatpush1.msra.mxu0 0.0
    %4983 = vmatprep.subr.mxu0 0.0
    %4984 = vmatpush1.msra.mxu0 0.0
    %4985 = vmatprep.subr.mxu0 0.0
    %4986 = vmatpush1.msra.mxu0 0.0
    %4987 = vmatprep.subr.mxu0 0.0
    %4988 = vmatpush1.msra.mxu0 0.0
    %4989 = vmatprep.subr.mxu0 0.0
    %4990 = vmatpush1.msra.mxu0 0.0
    %4991 = vmatprep.subr.mxu0 0.0
    %4992 = vmatpush1.msra.mxu0 0.0
    %4993 = vmatprep.subr.mxu0 0.0
    %4994 = vmatpush1.msra.mxu0 0.0
    %4995 = vmatprep.subr.mxu0 0.0
    %4996 = vmatpush1.msra.mxu0 0.0
    %4997 = vmatprep.subr.mxu0 0.0
    %4998 = vmatpush1.msra.mxu0 0.0
    %4999 = vmatprep.subr.mxu0 0.0
    %5000 = vmatpush1.msra.mxu0 0.0
    %5001 = vmatprep.subr.mxu0 0.0
    %5002 = vmatpush1.msra.mxu0 0.0
    %5003 = vmatprep.subr.mxu0 0.0
    %5004 = vmatpush1.msra.mxu0 0.0
    %5005 = vmatprep.subr.mxu0 0.0
    %5006 = vmatpush1.msra.mxu0 0.0
    %5007 = vmatprep.subr.mxu0 0.0
    %5008 = vmatpush1.msra.mxu0 0.0
    %5009 = vmatprep.subr.mxu0 0.0
    %5010 = vmatpush1.msra.mxu0 0.0
    %5011 = vmatprep.subr.mxu0 0.0
    %5012 = vmatpush1.msra.mxu0 0.0
    %5013 = vmatprep.subr.mxu0 0.0
    %5014 = vmatpush1.msra.mxu0 0.0
    %5015 = vmatprep.subr.mxu0 0.0
    %5016 = vmatpush1.msra.mxu0 0.0
    %5017 = vmatprep.subr.mxu0 0.0
    %5018 = vmatpush1.msra.mxu0 0.0
    %5019 = vmatprep.subr.mxu0 0.0
    %5020 = vmatpush1.msra.mxu0 0.0
    %5021 = vmatprep.subr.mxu0 0.0
    %5022 = vmatpush1.msra.mxu0 0.0
    %5023 = vmatprep.subr.mxu0 0.0
    %5024 = vmatpush1.msra.mxu0 0.0
    %5025 = vmatprep.subr.mxu0 0.0
    %5026 = vmatpush1.msra.mxu0 0.0
    %5027 = vmatprep.subr.mxu0 0.0
    %5028 = vmatpush1.msra.mxu0 0.0
    %5029 = vmatprep.mubr.f32.mxu0 0.0
    %5030 = vmatmul.mubr.f32.gmra.mrb[0].mxu0 %v4963
    %v5031 = vpop.f32.mrb[0].mxu0
    %v5032 = vadd.f32 0.0, %v5031
    %v5033 = vpop.f32.mrb[0].mxu0
    %5034 = vdwg.mxu0
    %s5035 = scalar_lea.vmem %s6, 1024
    %v5036 = vld [vmem:[%s5035] sm:$0xff]
    %v5037 = vld [vmem:[%s5035 + $0x8] sm:$0xff]
    %v5038 = vld [vmem:[%s5035 + $0x10] sm:$0xff]
    %v5039 = vld [vmem:[%s5035 + $0x18] sm:$0xff]
    %v5040 = vld [vmem:[%s5035 + $0x20] sm:$0xff]
    %v5041 = vld [vmem:[%s5035 + $0x28] sm:$0xff]
    %v5042 = vld [vmem:[%s5035 + $0x30] sm:$0xff]
    %v5043 = vld [vmem:[%s5035 + $0x38] sm:$0xff]
    %v5044 = vld [vmem:[%s5035 + $0x40] sm:$0xff]
    %v5045 = vld [vmem:[%s5035 + $0x48] sm:$0xff]
    %v5046 = vld [vmem:[%s5035 + $0x50] sm:$0xff]
    %v5047 = vld [vmem:[%s5035 + $0x58] sm:$0xff]
    %v5048 = vld [vmem:[%s5035 + $0x60] sm:$0xff]
    %v5049 = vld [vmem:[%s5035 + $0x68] sm:$0xff]
    %v5050 = vld [vmem:[%s5035 + $0x70] sm:$0xff]
    %v5051 = vld [vmem:[%s5035 + $0x78] sm:$0xff]
    %5052 = vmatprep.subr.mxu0 0.0
    %5053 = vmatpush1.msra.mxu0 %v5036
    %5054 = vmatprep.subr.mxu0 0.0
    %5055 = vmatpush1.msra.mxu0 %v5037
    %5056 = vmatprep.subr.mxu0 0.0
    %5057 = vmatpush1.msra.mxu0 %v5038
    %5058 = vmatprep.subr.mxu0 0.0
    %5059 = vmatpush1.msra.mxu0 %v5039
    %5060 = vmatprep.subr.mxu0 0.0
    %5061 = vmatpush1.msra.mxu0 %v5040
    %5062 = vmatprep.subr.mxu0 0.0
    %5063 = vmatpush1.msra.mxu0 %v5041
    %5064 = vmatprep.subr.mxu0 0.0
    %5065 = vmatpush1.msra.mxu0 %v5042
    %5066 = vmatprep.subr.mxu0 0.0
    %5067 = vmatpush1.msra.mxu0 %v5043
    %5068 = vmatprep.subr.mxu0 0.0
    %5069 = vmatpush1.msra.mxu0 %v5044
    %5070 = vmatprep.subr.mxu0 0.0
    %5071 = vmatpush1.msra.mxu0 %v5045
    %5072 = vmatprep.subr.mxu0 0.0
    %5073 = vmatpush1.msra.mxu0 %v5046
    %5074 = vmatprep.subr.mxu0 0.0
    %5075 = vmatpush1.msra.mxu0 %v5047
    %5076 = vmatprep.subr.mxu0 0.0
    %5077 = vmatpush1.msra.mxu0 %v5048
    %5078 = vmatprep.subr.mxu0 0.0
    %5079 = vmatpush1.msra.mxu0 %v5049
    %5080 = vmatprep.subr.mxu0 0.0
    %5081 = vmatpush1.msra.mxu0 %v5050
    %5082 = vmatprep.subr.mxu0 0.0
    %5083 = vmatpush1.msra.mxu0 %v5051
    %5084 = vmatprep.subr.mxu0 0.0
    %5085 = vmatpush1.msra.mxu0 0.0
    %5086 = vmatprep.subr.mxu0 0.0
    %5087 = vmatpush1.msra.mxu0 0.0
    %5088 = vmatprep.subr.mxu0 0.0
    %5089 = vmatpush1.msra.mxu0 0.0
    %5090 = vmatprep.subr.mxu0 0.0
    %5091 = vmatpush1.msra.mxu0 0.0
    %5092 = vmatprep.subr.mxu0 0.0
    %5093 = vmatpush1.msra.mxu0 0.0
    %5094 = vmatprep.subr.mxu0 0.0
    %5095 = vmatpush1.msra.mxu0 0.0
    %5096 = vmatprep.subr.mxu0 0.0
    %5097 = vmatpush1.msra.mxu0 0.0
    %5098 = vmatprep.subr.mxu0 0.0
    %5099 = vmatpush1.msra.mxu0 0.0
    %5100 = vmatprep.subr.mxu0 0.0
    %5101 = vmatpush1.msra.mxu0 0.0
    %5102 = vmatprep.subr.mxu0 0.0
    %5103 = vmatpush1.msra.mxu0 0.0
    %5104 = vmatprep.subr.mxu0 0.0
    %5105 = vmatpush1.msra.mxu0 0.0
    %5106 = vmatprep.subr.mxu0 0.0
    %5107 = vmatpush1.msra.mxu0 0.0
    %5108 = vmatprep.subr.mxu0 0.0
    %5109 = vmatpush1.msra.mxu0 0.0
    %5110 = vmatprep.subr.mxu0 0.0
    %5111 = vmatpush1.msra.mxu0 0.0
    %5112 = vmatprep.subr.mxu0 0.0
    %5113 = vmatpush1.msra.mxu0 0.0
    %5114 = vmatprep.subr.mxu0 0.0
    %5115 = vmatpush1.msra.mxu0 0.0
    %5116 = vmatprep.mubr.f32.mxu0 0.0
    %5117 = vmatmul.mubr.f32.gmra.mrb[0].mxu0 %v5032
    %v5118 = vpop.f32.mrb[0].mxu0
    %v5119 = vadd.f32 0.0, %v5118
    %v5120 = vpop.f32.mrb[0].mxu0
    %5121 = vdwg.mxu0
    %v5122 = vadd.f32 %v4959, %v5119
    %s5123 = scalar_lea.vmem %s8, 18
    %v5124 = vld [vmem:[%s5123] sm:$0x3]
    %v5126 = vsel %vm41, %v5124, 0
    %5128 = vmatprep.subr.mxu0 0.0
    %5129 = vmatpush1.msra.mxu0 %v3656
    %5130 = vmatprep.subr.mxu0 0.0
    %5131 = vmatpush1.msra.mxu0 %v3657
    %5132 = vmatprep.subr.mxu0 0.0
    %5133 = vmatpush1.msra.mxu0 %v3658
    %5134 = vmatprep.subr.mxu0 0.0
    %5135 = vmatpush1.msra.mxu0 %v3659
    %5136 = vmatprep.subr.mxu0 0.0
    %5137 = vmatpush1.msra.mxu0 0.0
    %5138 = vmatprep.subr.mxu0 0.0
    %5139 = vmatpush1.msra.mxu0 0.0
    %5140 = vmatprep.subr.mxu0 0.0
    %5141 = vmatpush1.msra.mxu0 0.0
    %5142 = vmatprep.subr.mxu0 0.0
    %5143 = vmatpush1.msra.mxu0 0.0
    %5144 = vmatprep.subr.mxu0 0.0
    %5145 = vmatpush1.msra.mxu0 0.0
    %5146 = vmatprep.subr.mxu0 0.0
    %5147 = vmatpush1.msra.mxu0 0.0
    %5148 = vmatprep.subr.mxu0 0.0
    %5149 = vmatpush1.msra.mxu0 0.0
    %5150 = vmatprep.subr.mxu0 0.0
    %5151 = vmatpush1.msra.mxu0 0.0
    %5152 = vmatprep.subr.mxu0 0.0
    %5153 = vmatpush1.msra.mxu0 0.0
    %5154 = vmatprep.subr.mxu0 0.0
    %5155 = vmatpush1.msra.mxu0 0.0
    %5156 = vmatprep.subr.mxu0 0.0
    %5157 = vmatpush1.msra.mxu0 0.0
    %5158 = vmatprep.subr.mxu0 0.0
    %5159 = vmatpush1.msra.mxu0 0.0
    %5160 = vmatprep.subr.mxu0 0.0
    %5161 = vmatpush1.msra.mxu0 0.0
    %5162 = vmatprep.subr.mxu0 0.0
    %5163 = vmatpush1.msra.mxu0 0.0
    %5164 = vmatprep.subr.mxu0 0.0
    %5165 = vmatpush1.msra.mxu0 0.0
    %5166 = vmatprep.subr.mxu0 0.0
    %5167 = vmatpush1.msra.mxu0 0.0
    %5168 = vmatprep.subr.mxu0 0.0
    %5169 = vmatpush1.msra.mxu0 0.0
    %5170 = vmatprep.subr.mxu0 0.0
    %5171 = vmatpush1.msra.mxu0 0.0
    %5172 = vmatprep.subr.mxu0 0.0
    %5173 = vmatpush1.msra.mxu0 0.0
    %5174 = vmatprep.subr.mxu0 0.0
    %5175 = vmatpush1.msra.mxu0 0.0
    %5176 = vmatprep.subr.mxu0 0.0
    %5177 = vmatpush1.msra.mxu0 0.0
    %5178 = vmatprep.subr.mxu0 0.0
    %5179 = vmatpush1.msra.mxu0 0.0
    %5180 = vmatprep.subr.mxu0 0.0
    %5181 = vmatpush1.msra.mxu0 0.0
    %5182 = vmatprep.subr.mxu0 0.0
    %5183 = vmatpush1.msra.mxu0 0.0
    %5184 = vmatprep.subr.mxu0 0.0
    %5185 = vmatpush1.msra.mxu0 0.0
    %5186 = vmatprep.subr.mxu0 0.0
    %5187 = vmatpush1.msra.mxu0 0.0
    %5188 = vmatprep.subr.mxu0 0.0
    %5189 = vmatpush1.msra.mxu0 0.0
    %5190 = vmatprep.subr.mxu0 0.0
    %5191 = vmatpush1.msra.mxu0 0.0
    %5192 = vmatprep.mubr.f32.mxu0 0.0
    %5193 = vmatmul.mubr.f32.gmra.mrb[0].mxu0 %v5126
    %v5194 = vpop.f32.mrb[0].mxu0
    %v5195 = vadd.f32 0.0, %v5194
    %v5196 = vpop.f32.mrb[0].mxu0
    %5197 = vdwg.mxu0
    %s5198 = scalar_lea.vmem %s6, 1152
    %v5199 = vld [vmem:[%s5198] sm:$0xff]
    %v5200 = vld [vmem:[%s5198 + $0x8] sm:$0xff]
    %v5201 = vld [vmem:[%s5198 + $0x10] sm:$0xff]
    %v5202 = vld [vmem:[%s5198 + $0x18] sm:$0xff]
    %v5203 = vld [vmem:[%s5198 + $0x20] sm:$0xff]
    %v5204 = vld [vmem:[%s5198 + $0x28] sm:$0xff]
    %v5205 = vld [vmem:[%s5198 + $0x30] sm:$0xff]
    %v5206 = vld [vmem:[%s5198 + $0x38] sm:$0xff]
    %v5207 = vld [vmem:[%s5198 + $0x40] sm:$0xff]
    %v5208 = vld [vmem:[%s5198 + $0x48] sm:$0xff]
    %v5209 = vld [vmem:[%s5198 + $0x50] sm:$0xff]
    %v5210 = vld [vmem:[%s5198 + $0x58] sm:$0xff]
    %v5211 = vld [vmem:[%s5198 + $0x60] sm:$0xff]
    %v5212 = vld [vmem:[%s5198 + $0x68] sm:$0xff]
    %v5213 = vld [vmem:[%s5198 + $0x70] sm:$0xff]
    %v5214 = vld [vmem:[%s5198 + $0x78] sm:$0xff]
    %5215 = vmatprep.subr.mxu0 0.0
    %5216 = vmatpush1.msra.mxu0 %v5199
    %5217 = vmatprep.subr.mxu0 0.0
    %5218 = vmatpush1.msra.mxu0 %v5200
    %5219 = vmatprep.subr.mxu0 0.0
    %5220 = vmatpush1.msra.mxu0 %v5201
    %5221 = vmatprep.subr.mxu0 0.0
    %5222 = vmatpush1.msra.mxu0 %v5202
    %5223 = vmatprep.subr.mxu0 0.0
    %5224 = vmatpush1.msra.mxu0 %v5203
    %5225 = vmatprep.subr.mxu0 0.0
    %5226 = vmatpush1.msra.mxu0 %v5204
    %5227 = vmatprep.subr.mxu0 0.0
    %5228 = vmatpush1.msra.mxu0 %v5205
    %5229 = vmatprep.subr.mxu0 0.0
    %5230 = vmatpush1.msra.mxu0 %v5206
    %5231 = vmatprep.subr.mxu0 0.0
    %5232 = vmatpush1.msra.mxu0 %v5207
    %5233 = vmatprep.subr.mxu0 0.0
    %5234 = vmatpush1.msra.mxu0 %v5208
    %5235 = vmatprep.subr.mxu0 0.0
    %5236 = vmatpush1.msra.mxu0 %v5209
    %5237 = vmatprep.subr.mxu0 0.0
    %5238 = vmatpush1.msra.mxu0 %v5210
    %5239 = vmatprep.subr.mxu0 0.0
    %5240 = vmatpush1.msra.mxu0 %v5211
    %5241 = vmatprep.subr.mxu0 0.0
    %5242 = vmatpush1.msra.mxu0 %v5212
    %5243 = vmatprep.subr.mxu0 0.0
    %5244 = vmatpush1.msra.mxu0 %v5213
    %5245 = vmatprep.subr.mxu0 0.0
    %5246 = vmatpush1.msra.mxu0 %v5214
    %5247 = vmatprep.subr.mxu0 0.0
    %5248 = vmatpush1.msra.mxu0 0.0
    %5249 = vmatprep.subr.mxu0 0.0
    %5250 = vmatpush1.msra.mxu0 0.0
    %5251 = vmatprep.subr.mxu0 0.0
    %5252 = vmatpush1.msra.mxu0 0.0
    %5253 = vmatprep.subr.mxu0 0.0
    %5254 = vmatpush1.msra.mxu0 0.0
    %5255 = vmatprep.subr.mxu0 0.0
    %5256 = vmatpush1.msra.mxu0 0.0
    %5257 = vmatprep.subr.mxu0 0.0
    %5258 = vmatpush1.msra.mxu0 0.0
    %5259 = vmatprep.subr.mxu0 0.0
    %5260 = vmatpush1.msra.mxu0 0.0
    %5261 = vmatprep.subr.mxu0 0.0
    %5262 = vmatpush1.msra.mxu0 0.0
    %5263 = vmatprep.subr.mxu0 0.0
    %5264 = vmatpush1.msra.mxu0 0.0
    %5265 = vmatprep.subr.mxu0 0.0
    %5266 = vmatpush1.msra.mxu0 0.0
    %5267 = vmatprep.subr.mxu0 0.0
    %5268 = vmatpush1.msra.mxu0 0.0
    %5269 = vmatprep.subr.mxu0 0.0
    %5270 = vmatpush1.msra.mxu0 0.0
    %5271 = vmatprep.subr.mxu0 0.0
    %5272 = vmatpush1.msra.mxu0 0.0
    %5273 = vmatprep.subr.mxu0 0.0
    %5274 = vmatpush1.msra.mxu0 0.0
    %5275 = vmatprep.subr.mxu0 0.0
    %5276 = vmatpush1.msra.mxu0 0.0
    %5277 = vmatprep.subr.mxu0 0.0
    %5278 = vmatpush1.msra.mxu0 0.0
    %5279 = vmatprep.mubr.f32.mxu0 0.0
    %5280 = vmatmul.mubr.f32.gmra.mrb[0].mxu0 %v5195
    %v5281 = vpop.f32.mrb[0].mxu0
    %v5282 = vadd.f32 0.0, %v5281
    %v5283 = vpop.f32.mrb[0].mxu0
    %5284 = vdwg.mxu0
    %v5285 = vadd.f32 %v5122, %v5282
    %s5286 = scalar_lea.vmem %s8, 20
    %v5287 = vld [vmem:[%s5286] sm:$0x3]
    %v5289 = vsel %vm41, %v5287, 0
    %5291 = vmatprep.subr.mxu0 0.0
    %5292 = vmatpush1.msra.mxu0 %v3656
    %5293 = vmatprep.subr.mxu0 0.0
    %5294 = vmatpush1.msra.mxu0 %v3657
    %5295 = vmatprep.subr.mxu0 0.0
    %5296 = vmatpush1.msra.mxu0 %v3658
    %5297 = vmatprep.subr.mxu0 0.0
    %5298 = vmatpush1.msra.mxu0 %v3659
    %5299 = vmatprep.subr.mxu0 0.0
    %5300 = vmatpush1.msra.mxu0 0.0
    %5301 = vmatprep.subr.mxu0 0.0
    %5302 = vmatpush1.msra.mxu0 0.0
    %5303 = vmatprep.subr.mxu0 0.0
    %5304 = vmatpush1.msra.mxu0 0.0
    %5305 = vmatprep.subr.mxu0 0.0
    %5306 = vmatpush1.msra.mxu0 0.0
    %5307 = vmatprep.subr.mxu0 0.0
    %5308 = vmatpush1.msra.mxu0 0.0
    %5309 = vmatprep.subr.mxu0 0.0
    %5310 = vmatpush1.msra.mxu0 0.0
    %5311 = vmatprep.subr.mxu0 0.0
    %5312 = vmatpush1.msra.mxu0 0.0
    %5313 = vmatprep.subr.mxu0 0.0
    %5314 = vmatpush1.msra.mxu0 0.0
    %5315 = vmatprep.subr.mxu0 0.0
    %5316 = vmatpush1.msra.mxu0 0.0
    %5317 = vmatprep.subr.mxu0 0.0
    %5318 = vmatpush1.msra.mxu0 0.0
    %5319 = vmatprep.subr.mxu0 0.0
    %5320 = vmatpush1.msra.mxu0 0.0
    %5321 = vmatprep.subr.mxu0 0.0
    %5322 = vmatpush1.msra.mxu0 0.0
    %5323 = vmatprep.subr.mxu0 0.0
    %5324 = vmatpush1.msra.mxu0 0.0
    %5325 = vmatprep.subr.mxu0 0.0
    %5326 = vmatpush1.msra.mxu0 0.0
    %5327 = vmatprep.subr.mxu0 0.0
    %5328 = vmatpush1.msra.mxu0 0.0
    %5329 = vmatprep.subr.mxu0 0.0
    %5330 = vmatpush1.msra.mxu0 0.0
    %5331 = vmatprep.subr.mxu0 0.0
    %5332 = vmatpush1.msra.mxu0 0.0
    %5333 = vmatprep.subr.mxu0 0.0
    %5334 = vmatpush1.msra.mxu0 0.0
    %5335 = vmatprep.subr.mxu0 0.0
    %5336 = vmatpush1.msra.mxu0 0.0
    %5337 = vmatprep.subr.mxu0 0.0
    %5338 = vmatpush1.msra.mxu0 0.0
    %5339 = vmatprep.subr.mxu0 0.0
    %5340 = vmatpush1.msra.mxu0 0.0
    %5341 = vmatprep.subr.mxu0 0.0
    %5342 = vmatpush1.msra.mxu0 0.0
    %5343 = vmatprep.subr.mxu0 0.0
    %5344 = vmatpush1.msra.mxu0 0.0
    %5345 = vmatprep.subr.mxu0 0.0
    %5346 = vmatpush1.msra.mxu0 0.0
    %5347 = vmatprep.subr.mxu0 0.0
    %5348 = vmatpush1.msra.mxu0 0.0
    %5349 = vmatprep.subr.mxu0 0.0
    %5350 = vmatpush1.msra.mxu0 0.0
    %5351 = vmatprep.subr.mxu0 0.0
    %5352 = vmatpush1.msra.mxu0 0.0
    %5353 = vmatprep.subr.mxu0 0.0
    %5354 = vmatpush1.msra.mxu0 0.0
    %5355 = vmatprep.mubr.f32.mxu0 0.0
    %5356 = vmatmul.mubr.f32.gmra.mrb[0].mxu0 %v5289
    %v5357 = vpop.f32.mrb[0].mxu0
    %v5358 = vadd.f32 0.0, %v5357
    %v5359 = vpop.f32.mrb[0].mxu0
    %5360 = vdwg.mxu0
    %s5361 = scalar_lea.vmem %s6, 1280
    %v5362 = vld [vmem:[%s5361] sm:$0xff]
    %v5363 = vld [vmem:[%s5361 + $0x8] sm:$0xff]
    %v5364 = vld [vmem:[%s5361 + $0x10] sm:$0xff]
    %v5365 = vld [vmem:[%s5361 + $0x18] sm:$0xff]
    %v5366 = vld [vmem:[%s5361 + $0x20] sm:$0xff]
    %v5367 = vld [vmem:[%s5361 + $0x28] sm:$0xff]
    %v5368 = vld [vmem:[%s5361 + $0x30] sm:$0xff]
    %v5369 = vld [vmem:[%s5361 + $0x38] sm:$0xff]
    %v5370 = vld [vmem:[%s5361 + $0x40] sm:$0xff]
    %v5371 = vld [vmem:[%s5361 + $0x48] sm:$0xff]
    %v5372 = vld [vmem:[%s5361 + $0x50] sm:$0xff]
    %v5373 = vld [vmem:[%s5361 + $0x58] sm:$0xff]
    %v5374 = vld [vmem:[%s5361 + $0x60] sm:$0xff]
    %v5375 = vld [vmem:[%s5361 + $0x68] sm:$0xff]
    %v5376 = vld [vmem:[%s5361 + $0x70] sm:$0xff]
    %v5377 = vld [vmem:[%s5361 + $0x78] sm:$0xff]
    %5378 = vmatprep.subr.mxu0 0.0
    %5379 = vmatpush1.msra.mxu0 %v5362
    %5380 = vmatprep.subr.mxu0 0.0
    %5381 = vmatpush1.msra.mxu0 %v5363
    %5382 = vmatprep.subr.mxu0 0.0
    %5383 = vmatpush1.msra.mxu0 %v5364
    %5384 = vmatprep.subr.mxu0 0.0
    %5385 = vmatpush1.msra.mxu0 %v5365
    %5386 = vmatprep.subr.mxu0 0.0
    %5387 = vmatpush1.msra.mxu0 %v5366
    %5388 = vmatprep.subr.mxu0 0.0
    %5389 = vmatpush1.msra.mxu0 %v5367
    %5390 = vmatprep.subr.mxu0 0.0
    %5391 = vmatpush1.msra.mxu0 %v5368
    %5392 = vmatprep.subr.mxu0 0.0
    %5393 = vmatpush1.msra.mxu0 %v5369
    %5394 = vmatprep.subr.mxu0 0.0
    %5395 = vmatpush1.msra.mxu0 %v5370
    %5396 = vmatprep.subr.mxu0 0.0
    %5397 = vmatpush1.msra.mxu0 %v5371
    %5398 = vmatprep.subr.mxu0 0.0
    %5399 = vmatpush1.msra.mxu0 %v5372
    %5400 = vmatprep.subr.mxu0 0.0
    %5401 = vmatpush1.msra.mxu0 %v5373
    %5402 = vmatprep.subr.mxu0 0.0
    %5403 = vmatpush1.msra.mxu0 %v5374
    %5404 = vmatprep.subr.mxu0 0.0
    %5405 = vmatpush1.msra.mxu0 %v5375
    %5406 = vmatprep.subr.mxu0 0.0
    %5407 = vmatpush1.msra.mxu0 %v5376
    %5408 = vmatprep.subr.mxu0 0.0
    %5409 = vmatpush1.msra.mxu0 %v5377
    %5410 = vmatprep.subr.mxu0 0.0
    %5411 = vmatpush1.msra.mxu0 0.0
    %5412 = vmatprep.subr.mxu0 0.0
    %5413 = vmatpush1.msra.mxu0 0.0
    %5414 = vmatprep.subr.mxu0 0.0
    %5415 = vmatpush1.msra.mxu0 0.0
    %5416 = vmatprep.subr.mxu0 0.0
    %5417 = vmatpush1.msra.mxu0 0.0
    %5418 = vmatprep.subr.mxu0 0.0
    %5419 = vmatpush1.msra.mxu0 0.0
    %5420 = vmatprep.subr.mxu0 0.0
    %5421 = vmatpush1.msra.mxu0 0.0
    %5422 = vmatprep.subr.mxu0 0.0
    %5423 = vmatpush1.msra.mxu0 0.0
    %5424 = vmatprep.subr.mxu0 0.0
    %5425 = vmatpush1.msra.mxu0 0.0
    %5426 = vmatprep.subr.mxu0 0.0
    %5427 = vmatpush1.msra.mxu0 0.0
    %5428 = vmatprep.subr.mxu0 0.0
    %5429 = vmatpush1.msra.mxu0 0.0
    %5430 = vmatprep.subr.mxu0 0.0
    %5431 = vmatpush1.msra.mxu0 0.0
    %5432 = vmatprep.subr.mxu0 0.0
    %5433 = vmatpush1.msra.mxu0 0.0
    %5434 = vmatprep.subr.mxu0 0.0
    %5435 = vmatpush1.msra.mxu0 0.0
    %5436 = vmatprep.subr.mxu0 0.0
    %5437 = vmatpush1.msra.mxu0 0.0
    %5438 = vmatprep.subr.mxu0 0.0
    %5439 = vmatpush1.msra.mxu0 0.0
    %5440 = vmatprep.subr.mxu0 0.0
    %5441 = vmatpush1.msra.mxu0 0.0
    %5442 = vmatprep.mubr.f32.mxu0 0.0
    %5443 = vmatmul.mubr.f32.gmra.mrb[0].mxu0 %v5358
    %v5444 = vpop.f32.mrb[0].mxu0
    %v5445 = vadd.f32 0.0, %v5444
    %v5446 = vpop.f32.mrb[0].mxu0
    %5447 = vdwg.mxu0
    %v5448 = vadd.f32 %v5285, %v5445
    %s5449 = scalar_lea.vmem %s8, 22
    %v5450 = vld [vmem:[%s5449] sm:$0x3]
    %v5452 = vsel %vm41, %v5450, 0
    %5454 = vmatprep.subr.mxu0 0.0
    %5455 = vmatpush1.msra.mxu0 %v3656
    %5456 = vmatprep.subr.mxu0 0.0
    %5457 = vmatpush1.msra.mxu0 %v3657
    %5458 = vmatprep.subr.mxu0 0.0
    %5459 = vmatpush1.msra.mxu0 %v3658
    %5460 = vmatprep.subr.mxu0 0.0
    %5461 = vmatpush1.msra.mxu0 %v3659
    %5462 = vmatprep.subr.mxu0 0.0
    %5463 = vmatpush1.msra.mxu0 0.0
    %5464 = vmatprep.subr.mxu0 0.0
    %5465 = vmatpush1.msra.mxu0 0.0
    %5466 = vmatprep.subr.mxu0 0.0
    %5467 = vmatpush1.msra.mxu0 0.0
    %5468 = vmatprep.subr.mxu0 0.0
    %5469 = vmatpush1.msra.mxu0 0.0
    %5470 = vmatprep.subr.mxu0 0.0
    %5471 = vmatpush1.msra.mxu0 0.0
    %5472 = vmatprep.subr.mxu0 0.0
    %5473 = vmatpush1.msra.mxu0 0.0
    %5474 = vmatprep.subr.mxu0 0.0
    %5475 = vmatpush1.msra.mxu0 0.0
    %5476 = vmatprep.subr.mxu0 0.0
    %5477 = vmatpush1.msra.mxu0 0.0
    %5478 = vmatprep.subr.mxu0 0.0
    %5479 = vmatpush1.msra.mxu0 0.0
    %5480 = vmatprep.subr.mxu0 0.0
    %5481 = vmatpush1.msra.mxu0 0.0
    %5482 = vmatprep.subr.mxu0 0.0
    %5483 = vmatpush1.msra.mxu0 0.0
    %5484 = vmatprep.subr.mxu0 0.0
    %5485 = vmatpush1.msra.mxu0 0.0
    %5486 = vmatprep.subr.mxu0 0.0
    %5487 = vmatpush1.msra.mxu0 0.0
    %5488 = vmatprep.subr.mxu0 0.0
    %5489 = vmatpush1.msra.mxu0 0.0
    %5490 = vmatprep.subr.mxu0 0.0
    %5491 = vmatpush1.msra.mxu0 0.0
    %5492 = vmatprep.subr.mxu0 0.0
    %5493 = vmatpush1.msra.mxu0 0.0
    %5494 = vmatprep.subr.mxu0 0.0
    %5495 = vmatpush1.msra.mxu0 0.0
    %5496 = vmatprep.subr.mxu0 0.0
    %5497 = vmatpush1.msra.mxu0 0.0
    %5498 = vmatprep.subr.mxu0 0.0
    %5499 = vmatpush1.msra.mxu0 0.0
    %5500 = vmatprep.subr.mxu0 0.0
    %5501 = vmatpush1.msra.mxu0 0.0
    %5502 = vmatprep.subr.mxu0 0.0
    %5503 = vmatpush1.msra.mxu0 0.0
    %5504 = vmatprep.subr.mxu0 0.0
    %5505 = vmatpush1.msra.mxu0 0.0
    %5506 = vmatprep.subr.mxu0 0.0
    %5507 = vmatpush1.msra.mxu0 0.0
    %5508 = vmatprep.subr.mxu0 0.0
    %5509 = vmatpush1.msra.mxu0 0.0
    %5510 = vmatprep.subr.mxu0 0.0
    %5511 = vmatpush1.msra.mxu0 0.0
    %5512 = vmatprep.subr.mxu0 0.0
    %5513 = vmatpush1.msra.mxu0 0.0
    %5514 = vmatprep.subr.mxu0 0.0
    %5515 = vmatpush1.msra.mxu0 0.0
    %5516 = vmatprep.subr.mxu0 0.0
    %5517 = vmatpush1.msra.mxu0 0.0
    %5518 = vmatprep.mubr.f32.mxu0 0.0
    %5519 = vmatmul.mubr.f32.gmra.mrb[0].mxu0 %v5452
    %v5520 = vpop.f32.mrb[0].mxu0
    %v5521 = vadd.f32 0.0, %v5520
    %v5522 = vpop.f32.mrb[0].mxu0
    %5523 = vdwg.mxu0
    %s5524 = scalar_lea.vmem %s6, 1408
    %v5525 = vld [vmem:[%s5524] sm:$0xff]
    %v5526 = vld [vmem:[%s5524 + $0x8] sm:$0xff]
    %v5527 = vld [vmem:[%s5524 + $0x10] sm:$0xff]
    %v5528 = vld [vmem:[%s5524 + $0x18] sm:$0xff]
    %v5529 = vld [vmem:[%s5524 + $0x20] sm:$0xff]
    %v5530 = vld [vmem:[%s5524 + $0x28] sm:$0xff]
    %v5531 = vld [vmem:[%s5524 + $0x30] sm:$0xff]
    %v5532 = vld [vmem:[%s5524 + $0x38] sm:$0xff]
    %v5533 = vld [vmem:[%s5524 + $0x40] sm:$0xff]
    %v5534 = vld [vmem:[%s5524 + $0x48] sm:$0xff]
    %v5535 = vld [vmem:[%s5524 + $0x50] sm:$0xff]
    %v5536 = vld [vmem:[%s5524 + $0x58] sm:$0xff]
    %v5537 = vld [vmem:[%s5524 + $0x60] sm:$0xff]
    %v5538 = vld [vmem:[%s5524 + $0x68] sm:$0xff]
    %v5539 = vld [vmem:[%s5524 + $0x70] sm:$0xff]
    %v5540 = vld [vmem:[%s5524 + $0x78] sm:$0xff]
    %5541 = vmatprep.subr.mxu0 0.0
    %5542 = vmatpush1.msra.mxu0 %v5525
    %5543 = vmatprep.subr.mxu0 0.0
    %5544 = vmatpush1.msra.mxu0 %v5526
    %5545 = vmatprep.subr.mxu0 0.0
    %5546 = vmatpush1.msra.mxu0 %v5527
    %5547 = vmatprep.subr.mxu0 0.0
    %5548 = vmatpush1.msra.mxu0 %v5528
    %5549 = vmatprep.subr.mxu0 0.0
    %5550 = vmatpush1.msra.mxu0 %v5529
    %5551 = vmatprep.subr.mxu0 0.0
    %5552 = vmatpush1.msra.mxu0 %v5530
    %5553 = vmatprep.subr.mxu0 0.0
    %5554 = vmatpush1.msra.mxu0 %v5531
    %5555 = vmatprep.subr.mxu0 0.0
    %5556 = vmatpush1.msra.mxu0 %v5532
    %5557 = vmatprep.subr.mxu0 0.0
    %5558 = vmatpush1.msra.mxu0 %v5533
    %5559 = vmatprep.subr.mxu0 0.0
    %5560 = vmatpush1.msra.mxu0 %v5534
    %5561 = vmatprep.subr.mxu0 0.0
    %5562 = vmatpush1.msra.mxu0 %v5535
    %5563 = vmatprep.subr.mxu0 0.0
    %5564 = vmatpush1.msra.mxu0 %v5536
    %5565 = vmatprep.subr.mxu0 0.0
    %5566 = vmatpush1.msra.mxu0 %v5537
    %5567 = vmatprep.subr.mxu0 0.0
    %5568 = vmatpush1.msra.mxu0 %v5538
    %5569 = vmatprep.subr.mxu0 0.0
    %5570 = vmatpush1.msra.mxu0 %v5539
    %5571 = vmatprep.subr.mxu0 0.0
    %5572 = vmatpush1.msra.mxu0 %v5540
    %5573 = vmatprep.subr.mxu0 0.0
    %5574 = vmatpush1.msra.mxu0 0.0
    %5575 = vmatprep.subr.mxu0 0.0
    %5576 = vmatpush1.msra.mxu0 0.0
    %5577 = vmatprep.subr.mxu0 0.0
    %5578 = vmatpush1.msra.mxu0 0.0
    %5579 = vmatprep.subr.mxu0 0.0
    %5580 = vmatpush1.msra.mxu0 0.0
    %5581 = vmatprep.subr.mxu0 0.0
    %5582 = vmatpush1.msra.mxu0 0.0
    %5583 = vmatprep.subr.mxu0 0.0
    %5584 = vmatpush1.msra.mxu0 0.0
    %5585 = vmatprep.subr.mxu0 0.0
    %5586 = vmatpush1.msra.mxu0 0.0
    %5587 = vmatprep.subr.mxu0 0.0
    %5588 = vmatpush1.msra.mxu0 0.0
    %5589 = vmatprep.subr.mxu0 0.0
    %5590 = vmatpush1.msra.mxu0 0.0
    %5591 = vmatprep.subr.mxu0 0.0
    %5592 = vmatpush1.msra.mxu0 0.0
    %5593 = vmatprep.subr.mxu0 0.0
    %5594 = vmatpush1.msra.mxu0 0.0
    %5595 = vmatprep.subr.mxu0 0.0
    %5596 = vmatpush1.msra.mxu0 0.0
    %5597 = vmatprep.subr.mxu0 0.0
    %5598 = vmatpush1.msra.mxu0 0.0
    %5599 = vmatprep.subr.mxu0 0.0
    %5600 = vmatpush1.msra.mxu0 0.0
    %5601 = vmatprep.subr.mxu0 0.0
    %5602 = vmatpush1.msra.mxu0 0.0
    %5603 = vmatprep.subr.mxu0 0.0
    %5604 = vmatpush1.msra.mxu0 0.0
    %5605 = vmatprep.mubr.f32.mxu0 0.0
    %5606 = vmatmul.mubr.f32.gmra.mrb[0].mxu0 %v5521
    %v5607 = vpop.f32.mrb[0].mxu0
    %v5608 = vadd.f32 0.0, %v5607
    %v5609 = vpop.f32.mrb[0].mxu0
    %5610 = vdwg.mxu0
    %v5611 = vadd.f32 %v5448, %v5608
    %s5612 = scalar_lea.vmem %s8, 24
    %v5613 = vld [vmem:[%s5612] sm:$0x3]
    %v5615 = vsel %vm41, %v5613, 0
    %5617 = vmatprep.subr.mxu0 0.0
    %5618 = vmatpush1.msra.mxu0 %v3656
    %5619 = vmatprep.subr.mxu0 0.0
    %5620 = vmatpush1.msra.mxu0 %v3657
    %5621 = vmatprep.subr.mxu0 0.0
    %5622 = vmatpush1.msra.mxu0 %v3658
    %5623 = vmatprep.subr.mxu0 0.0
    %5624 = vmatpush1.msra.mxu0 %v3659
    %5625 = vmatprep.subr.mxu0 0.0
    %5626 = vmatpush1.msra.mxu0 0.0
    %5627 = vmatprep.subr.mxu0 0.0
    %5628 = vmatpush1.msra.mxu0 0.0
    %5629 = vmatprep.subr.mxu0 0.0
    %5630 = vmatpush1.msra.mxu0 0.0
    %5631 = vmatprep.subr.mxu0 0.0
    %5632 = vmatpush1.msra.mxu0 0.0
    %5633 = vmatprep.subr.mxu0 0.0
    %5634 = vmatpush1.msra.mxu0 0.0
    %5635 = vmatprep.subr.mxu0 0.0
    %5636 = vmatpush1.msra.mxu0 0.0
    %5637 = vmatprep.subr.mxu0 0.0
    %5638 = vmatpush1.msra.mxu0 0.0
    %5639 = vmatprep.subr.mxu0 0.0
    %5640 = vmatpush1.msra.mxu0 0.0
    %5641 = vmatprep.subr.mxu0 0.0
    %5642 = vmatpush1.msra.mxu0 0.0
    %5643 = vmatprep.subr.mxu0 0.0
    %5644 = vmatpush1.msra.mxu0 0.0
    %5645 = vmatprep.subr.mxu0 0.0
    %5646 = vmatpush1.msra.mxu0 0.0
    %5647 = vmatprep.subr.mxu0 0.0
    %5648 = vmatpush1.msra.mxu0 0.0
    %5649 = vmatprep.subr.mxu0 0.0
    %5650 = vmatpush1.msra.mxu0 0.0
    %5651 = vmatprep.subr.mxu0 0.0
    %5652 = vmatpush1.msra.mxu0 0.0
    %5653 = vmatprep.subr.mxu0 0.0
    %5654 = vmatpush1.msra.mxu0 0.0
    %5655 = vmatprep.subr.mxu0 0.0
    %5656 = vmatpush1.msra.mxu0 0.0
    %5657 = vmatprep.subr.mxu0 0.0
    %5658 = vmatpush1.msra.mxu0 0.0
    %5659 = vmatprep.subr.mxu0 0.0
    %5660 = vmatpush1.msra.mxu0 0.0
    %5661 = vmatprep.subr.mxu0 0.0
    %5662 = vmatpush1.msra.mxu0 0.0
    %5663 = vmatprep.subr.mxu0 0.0
    %5664 = vmatpush1.msra.mxu0 0.0
    %5665 = vmatprep.subr.mxu0 0.0
    %5666 = vmatpush1.msra.mxu0 0.0
    %5667 = vmatprep.subr.mxu0 0.0
    %5668 = vmatpush1.msra.mxu0 0.0
    %5669 = vmatprep.subr.mxu0 0.0
    %5670 = vmatpush1.msra.mxu0 0.0
    %5671 = vmatprep.subr.mxu0 0.0
    %5672 = vmatpush1.msra.mxu0 0.0
    %5673 = vmatprep.subr.mxu0 0.0
    %5674 = vmatpush1.msra.mxu0 0.0
    %5675 = vmatprep.subr.mxu0 0.0
    %5676 = vmatpush1.msra.mxu0 0.0
    %5677 = vmatprep.subr.mxu0 0.0
    %5678 = vmatpush1.msra.mxu0 0.0
    %5679 = vmatprep.subr.mxu0 0.0
    %5680 = vmatpush1.msra.mxu0 0.0
    %5681 = vmatprep.mubr.f32.mxu0 0.0
    %5682 = vmatmul.mubr.f32.gmra.mrb[0].mxu0 %v5615
    %v5683 = vpop.f32.mrb[0].mxu0
    %v5684 = vadd.f32 0.0, %v5683
    %v5685 = vpop.f32.mrb[0].mxu0
    %5686 = vdwg.mxu0
    %s5687 = scalar_lea.vmem %s6, 1536
    %v5688 = vld [vmem:[%s5687] sm:$0xff]
    %v5689 = vld [vmem:[%s5687 + $0x8] sm:$0xff]
    %v5690 = vld [vmem:[%s5687 + $0x10] sm:$0xff]
    %v5691 = vld [vmem:[%s5687 + $0x18] sm:$0xff]
    %v5692 = vld [vmem:[%s5687 + $0x20] sm:$0xff]
    %v5693 = vld [vmem:[%s5687 + $0x28] sm:$0xff]
    %v5694 = vld [vmem:[%s5687 + $0x30] sm:$0xff]
    %v5695 = vld [vmem:[%s5687 + $0x38] sm:$0xff]
    %v5696 = vld [vmem:[%s5687 + $0x40] sm:$0xff]
    %v5697 = vld [vmem:[%s5687 + $0x48] sm:$0xff]
    %v5698 = vld [vmem:[%s5687 + $0x50] sm:$0xff]
    %v5699 = vld [vmem:[%s5687 + $0x58] sm:$0xff]
    %v5700 = vld [vmem:[%s5687 + $0x60] sm:$0xff]
    %v5701 = vld [vmem:[%s5687 + $0x68] sm:$0xff]
    %v5702 = vld [vmem:[%s5687 + $0x70] sm:$0xff]
    %v5703 = vld [vmem:[%s5687 + $0x78] sm:$0xff]
    %5704 = vmatprep.subr.mxu0 0.0
    %5705 = vmatpush1.msra.mxu0 %v5688
    %5706 = vmatprep.subr.mxu0 0.0
    %5707 = vmatpush1.msra.mxu0 %v5689
    %5708 = vmatprep.subr.mxu0 0.0
    %5709 = vmatpush1.msra.mxu0 %v5690
    %5710 = vmatprep.subr.mxu0 0.0
    %5711 = vmatpush1.msra.mxu0 %v5691
    %5712 = vmatprep.subr.mxu0 0.0
    %5713 = vmatpush1.msra.mxu0 %v5692
    %5714 = vmatprep.subr.mxu0 0.0
    %5715 = vmatpush1.msra.mxu0 %v5693
    %5716 = vmatprep.subr.mxu0 0.0
    %5717 = vmatpush1.msra.mxu0 %v5694
    %5718 = vmatprep.subr.mxu0 0.0
    %5719 = vmatpush1.msra.mxu0 %v5695
    %5720 = vmatprep.subr.mxu0 0.0
    %5721 = vmatpush1.msra.mxu0 %v5696
    %5722 = vmatprep.subr.mxu0 0.0
    %5723 = vmatpush1.msra.mxu0 %v5697
    %5724 = vmatprep.subr.mxu0 0.0
    %5725 = vmatpush1.msra.mxu0 %v5698
    %5726 = vmatprep.subr.mxu0 0.0
    %5727 = vmatpush1.msra.mxu0 %v5699
    %5728 = vmatprep.subr.mxu0 0.0
    %5729 = vmatpush1.msra.mxu0 %v5700
    %5730 = vmatprep.subr.mxu0 0.0
    %5731 = vmatpush1.msra.mxu0 %v5701
    %5732 = vmatprep.subr.mxu0 0.0
    %5733 = vmatpush1.msra.mxu0 %v5702
    %5734 = vmatprep.subr.mxu0 0.0
    %5735 = vmatpush1.msra.mxu0 %v5703
    %5736 = vmatprep.subr.mxu0 0.0
    %5737 = vmatpush1.msra.mxu0 0.0
    %5738 = vmatprep.subr.mxu0 0.0
    %5739 = vmatpush1.msra.mxu0 0.0
    %5740 = vmatprep.subr.mxu0 0.0
    %5741 = vmatpush1.msra.mxu0 0.0
    %5742 = vmatprep.subr.mxu0 0.0
    %5743 = vmatpush1.msra.mxu0 0.0
    %5744 = vmatprep.subr.mxu0 0.0
    %5745 = vmatpush1.msra.mxu0 0.0
    %5746 = vmatprep.subr.mxu0 0.0
    %5747 = vmatpush1.msra.mxu0 0.0
    %5748 = vmatprep.subr.mxu0 0.0
    %5749 = vmatpush1.msra.mxu0 0.0
    %5750 = vmatprep.subr.mxu0 0.0
    %5751 = vmatpush1.msra.mxu0 0.0
    %5752 = vmatprep.subr.mxu0 0.0
    %5753 = vmatpush1.msra.mxu0 0.0
    %5754 = vmatprep.subr.mxu0 0.0
    %5755 = vmatpush1.msra.mxu0 0.0
    %5756 = vmatprep.subr.mxu0 0.0
    %5757 = vmatpush1.msra.mxu0 0.0
    %5758 = vmatprep.subr.mxu0 0.0
    %5759 = vmatpush1.msra.mxu0 0.0
    %5760 = vmatprep.subr.mxu0 0.0
    %5761 = vmatpush1.msra.mxu0 0.0
    %5762 = vmatprep.subr.mxu0 0.0
    %5763 = vmatpush1.msra.mxu0 0.0
    %5764 = vmatprep.subr.mxu0 0.0
    %5765 = vmatpush1.msra.mxu0 0.0
    %5766 = vmatprep.subr.mxu0 0.0
    %5767 = vmatpush1.msra.mxu0 0.0
    %5768 = vmatprep.mubr.f32.mxu0 0.0
    %5769 = vmatmul.mubr.f32.gmra.mrb[0].mxu0 %v5684
    %v5770 = vpop.f32.mrb[0].mxu0
    %v5771 = vadd.f32 0.0, %v5770
    %v5772 = vpop.f32.mrb[0].mxu0
    %5773 = vdwg.mxu0
    %v5774 = vadd.f32 %v5611, %v5771
    %s5775 = scalar_lea.vmem %s8, 26
    %v5776 = vld [vmem:[%s5775] sm:$0x3]
    %v5778 = vsel %vm41, %v5776, 0
    %5780 = vmatprep.subr.mxu0 0.0
    %5781 = vmatpush1.msra.mxu0 %v3656
    %5782 = vmatprep.subr.mxu0 0.0
    %5783 = vmatpush1.msra.mxu0 %v3657
    %5784 = vmatprep.subr.mxu0 0.0
    %5785 = vmatpush1.msra.mxu0 %v3658
    %5786 = vmatprep.subr.mxu0 0.0
    %5787 = vmatpush1.msra.mxu0 %v3659
    %5788 = vmatprep.subr.mxu0 0.0
    %5789 = vmatpush1.msra.mxu0 0.0
    %5790 = vmatprep.subr.mxu0 0.0
    %5791 = vmatpush1.msra.mxu0 0.0
    %5792 = vmatprep.subr.mxu0 0.0
    %5793 = vmatpush1.msra.mxu0 0.0
    %5794 = vmatprep.subr.mxu0 0.0
    %5795 = vmatpush1.msra.mxu0 0.0
    %5796 = vmatprep.subr.mxu0 0.0
    %5797 = vmatpush1.msra.mxu0 0.0
    %5798 = vmatprep.subr.mxu0 0.0
    %5799 = vmatpush1.msra.mxu0 0.0
    %5800 = vmatprep.subr.mxu0 0.0
    %5801 = vmatpush1.msra.mxu0 0.0
    %5802 = vmatprep.subr.mxu0 0.0
    %5803 = vmatpush1.msra.mxu0 0.0
    %5804 = vmatprep.subr.mxu0 0.0
    %5805 = vmatpush1.msra.mxu0 0.0
    %5806 = vmatprep.subr.mxu0 0.0
    %5807 = vmatpush1.msra.mxu0 0.0
    %5808 = vmatprep.subr.mxu0 0.0
    %5809 = vmatpush1.msra.mxu0 0.0
    %5810 = vmatprep.subr.mxu0 0.0
    %5811 = vmatpush1.msra.mxu0 0.0
    %5812 = vmatprep.subr.mxu0 0.0
    %5813 = vmatpush1.msra.mxu0 0.0
    %5814 = vmatprep.subr.mxu0 0.0
    %5815 = vmatpush1.msra.mxu0 0.0
    %5816 = vmatprep.subr.mxu0 0.0
    %5817 = vmatpush1.msra.mxu0 0.0
    %5818 = vmatprep.subr.mxu0 0.0
    %5819 = vmatpush1.msra.mxu0 0.0
    %5820 = vmatprep.subr.mxu0 0.0
    %5821 = vmatpush1.msra.mxu0 0.0
    %5822 = vmatprep.subr.mxu0 0.0
    %5823 = vmatpush1.msra.mxu0 0.0
    %5824 = vmatprep.subr.mxu0 0.0
    %5825 = vmatpush1.msra.mxu0 0.0
    %5826 = vmatprep.subr.mxu0 0.0
    %5827 = vmatpush1.msra.mxu0 0.0
    %5828 = vmatprep.subr.mxu0 0.0
    %5829 = vmatpush1.msra.mxu0 0.0
    %5830 = vmatprep.subr.mxu0 0.0
    %5831 = vmatpush1.msra.mxu0 0.0
    %5832 = vmatprep.subr.mxu0 0.0
    %5833 = vmatpush1.msra.mxu0 0.0
    %5834 = vmatprep.subr.mxu0 0.0
    %5835 = vmatpush1.msra.mxu0 0.0
    %5836 = vmatprep.subr.mxu0 0.0
    %5837 = vmatpush1.msra.mxu0 0.0
    %5838 = vmatprep.subr.mxu0 0.0
    %5839 = vmatpush1.msra.mxu0 0.0
    %5840 = vmatprep.subr.mxu0 0.0
    %5841 = vmatpush1.msra.mxu0 0.0
    %5842 = vmatprep.subr.mxu0 0.0
    %5843 = vmatpush1.msra.mxu0 0.0
    %5844 = vmatprep.mubr.f32.mxu0 0.0
    %5845 = vmatmul.mubr.f32.gmra.mrb[0].mxu0 %v5778
    %v5846 = vpop.f32.mrb[0].mxu0
    %v5847 = vadd.f32 0.0, %v5846
    %v5848 = vpop.f32.mrb[0].mxu0
    %5849 = vdwg.mxu0
    %s5850 = scalar_lea.vmem %s6, 1664
    %v5851 = vld [vmem:[%s5850] sm:$0xff]
    %v5852 = vld [vmem:[%s5850 + $0x8] sm:$0xff]
    %v5853 = vld [vmem:[%s5850 + $0x10] sm:$0xff]
    %v5854 = vld [vmem:[%s5850 + $0x18] sm:$0xff]
    %v5855 = vld [vmem:[%s5850 + $0x20] sm:$0xff]
    %v5856 = vld [vmem:[%s5850 + $0x28] sm:$0xff]
    %v5857 = vld [vmem:[%s5850 + $0x30] sm:$0xff]
    %v5858 = vld [vmem:[%s5850 + $0x38] sm:$0xff]
    %v5859 = vld [vmem:[%s5850 + $0x40] sm:$0xff]
    %v5860 = vld [vmem:[%s5850 + $0x48] sm:$0xff]
    %v5861 = vld [vmem:[%s5850 + $0x50] sm:$0xff]
    %v5862 = vld [vmem:[%s5850 + $0x58] sm:$0xff]
    %v5863 = vld [vmem:[%s5850 + $0x60] sm:$0xff]
    %v5864 = vld [vmem:[%s5850 + $0x68] sm:$0xff]
    %v5865 = vld [vmem:[%s5850 + $0x70] sm:$0xff]
    %v5866 = vld [vmem:[%s5850 + $0x78] sm:$0xff]
    %5867 = vmatprep.subr.mxu0 0.0
    %5868 = vmatpush1.msra.mxu0 %v5851
    %5869 = vmatprep.subr.mxu0 0.0
    %5870 = vmatpush1.msra.mxu0 %v5852
    %5871 = vmatprep.subr.mxu0 0.0
    %5872 = vmatpush1.msra.mxu0 %v5853
    %5873 = vmatprep.subr.mxu0 0.0
    %5874 = vmatpush1.msra.mxu0 %v5854
    %5875 = vmatprep.subr.mxu0 0.0
    %5876 = vmatpush1.msra.mxu0 %v5855
    %5877 = vmatprep.subr.mxu0 0.0
    %5878 = vmatpush1.msra.mxu0 %v5856
    %5879 = vmatprep.subr.mxu0 0.0
    %5880 = vmatpush1.msra.mxu0 %v5857
    %5881 = vmatprep.subr.mxu0 0.0
    %5882 = vmatpush1.msra.mxu0 %v5858
    %5883 = vmatprep.subr.mxu0 0.0
    %5884 = vmatpush1.msra.mxu0 %v5859
    %5885 = vmatprep.subr.mxu0 0.0
    %5886 = vmatpush1.msra.mxu0 %v5860
    %5887 = vmatprep.subr.mxu0 0.0
    %5888 = vmatpush1.msra.mxu0 %v5861
    %5889 = vmatprep.subr.mxu0 0.0
    %5890 = vmatpush1.msra.mxu0 %v5862
    %5891 = vmatprep.subr.mxu0 0.0
    %5892 = vmatpush1.msra.mxu0 %v5863
    %5893 = vmatprep.subr.mxu0 0.0
    %5894 = vmatpush1.msra.mxu0 %v5864
    %5895 = vmatprep.subr.mxu0 0.0
    %5896 = vmatpush1.msra.mxu0 %v5865
    %5897 = vmatprep.subr.mxu0 0.0
    %5898 = vmatpush1.msra.mxu0 %v5866
    %5899 = vmatprep.subr.mxu0 0.0
    %5900 = vmatpush1.msra.mxu0 0.0
    %5901 = vmatprep.subr.mxu0 0.0
    %5902 = vmatpush1.msra.mxu0 0.0
    %5903 = vmatprep.subr.mxu0 0.0
    %5904 = vmatpush1.msra.mxu0 0.0
    %5905 = vmatprep.subr.mxu0 0.0
    %5906 = vmatpush1.msra.mxu0 0.0
    %5907 = vmatprep.subr.mxu0 0.0
    %5908 = vmatpush1.msra.mxu0 0.0
    %5909 = vmatprep.subr.mxu0 0.0
    %5910 = vmatpush1.msra.mxu0 0.0
    %5911 = vmatprep.subr.mxu0 0.0
    %5912 = vmatpush1.msra.mxu0 0.0
    %5913 = vmatprep.subr.mxu0 0.0
    %5914 = vmatpush1.msra.mxu0 0.0
    %5915 = vmatprep.subr.mxu0 0.0
    %5916 = vmatpush1.msra.mxu0 0.0
    %5917 = vmatprep.subr.mxu0 0.0
    %5918 = vmatpush1.msra.mxu0 0.0
    %5919 = vmatprep.subr.mxu0 0.0
    %5920 = vmatpush1.msra.mxu0 0.0
    %5921 = vmatprep.subr.mxu0 0.0
    %5922 = vmatpush1.msra.mxu0 0.0
    %5923 = vmatprep.subr.mxu0 0.0
    %5924 = vmatpush1.msra.mxu0 0.0
    %5925 = vmatprep.subr.mxu0 0.0
    %5926 = vmatpush1.msra.mxu0 0.0
    %5927 = vmatprep.subr.mxu0 0.0
    %5928 = vmatpush1.msra.mxu0 0.0
    %5929 = vmatprep.subr.mxu0 0.0
    %5930 = vmatpush1.msra.mxu0 0.0
    %5931 = vmatprep.mubr.f32.mxu0 0.0
    %5932 = vmatmul.mubr.f32.gmra.mrb[0].mxu0 %v5847
    %v5933 = vpop.f32.mrb[0].mxu0
    %v5934 = vadd.f32 0.0, %v5933
    %v5935 = vpop.f32.mrb[0].mxu0
    %5936 = vdwg.mxu0
    %v5937 = vadd.f32 %v5774, %v5934
    %s5938 = scalar_lea.vmem %s8, 28
    %v5939 = vld [vmem:[%s5938] sm:$0x3]
    %v5941 = vsel %vm41, %v5939, 0
    %5943 = vmatprep.subr.mxu0 0.0
    %5944 = vmatpush1.msra.mxu0 %v3656
    %5945 = vmatprep.subr.mxu0 0.0
    %5946 = vmatpush1.msra.mxu0 %v3657
    %5947 = vmatprep.subr.mxu0 0.0
    %5948 = vmatpush1.msra.mxu0 %v3658
    %5949 = vmatprep.subr.mxu0 0.0
    %5950 = vmatpush1.msra.mxu0 %v3659
    %5951 = vmatprep.subr.mxu0 0.0
    %5952 = vmatpush1.msra.mxu0 0.0
    %5953 = vmatprep.subr.mxu0 0.0
    %5954 = vmatpush1.msra.mxu0 0.0
    %5955 = vmatprep.subr.mxu0 0.0
    %5956 = vmatpush1.msra.mxu0 0.0
    %5957 = vmatprep.subr.mxu0 0.0
    %5958 = vmatpush1.msra.mxu0 0.0
    %5959 = vmatprep.subr.mxu0 0.0
    %5960 = vmatpush1.msra.mxu0 0.0
    %5961 = vmatprep.subr.mxu0 0.0
    %5962 = vmatpush1.msra.mxu0 0.0
    %5963 = vmatprep.subr.mxu0 0.0
    %5964 = vmatpush1.msra.mxu0 0.0
    %5965 = vmatprep.subr.mxu0 0.0
    %5966 = vmatpush1.msra.mxu0 0.0
    %5967 = vmatprep.subr.mxu0 0.0
    %5968 = vmatpush1.msra.mxu0 0.0
    %5969 = vmatprep.subr.mxu0 0.0
    %5970 = vmatpush1.msra.mxu0 0.0
    %5971 = vmatprep.subr.mxu0 0.0
    %5972 = vmatpush1.msra.mxu0 0.0
    %5973 = vmatprep.subr.mxu0 0.0
    %5974 = vmatpush1.msra.mxu0 0.0
    %5975 = vmatprep.subr.mxu0 0.0
    %5976 = vmatpush1.msra.mxu0 0.0
    %5977 = vmatprep.subr.mxu0 0.0
    %5978 = vmatpush1.msra.mxu0 0.0
    %5979 = vmatprep.subr.mxu0 0.0
    %5980 = vmatpush1.msra.mxu0 0.0
    %5981 = vmatprep.subr.mxu0 0.0
    %5982 = vmatpush1.msra.mxu0 0.0
    %5983 = vmatprep.subr.mxu0 0.0
    %5984 = vmatpush1.msra.mxu0 0.0
    %5985 = vmatprep.subr.mxu0 0.0
    %5986 = vmatpush1.msra.mxu0 0.0
    %5987 = vmatprep.subr.mxu0 0.0
    %5988 = vmatpush1.msra.mxu0 0.0
    %5989 = vmatprep.subr.mxu0 0.0
    %5990 = vmatpush1.msra.mxu0 0.0
    %5991 = vmatprep.subr.mxu0 0.0
    %5992 = vmatpush1.msra.mxu0 0.0
    %5993 = vmatprep.subr.mxu0 0.0
    %5994 = vmatpush1.msra.mxu0 0.0
    %5995 = vmatprep.subr.mxu0 0.0
    %5996 = vmatpush1.msra.mxu0 0.0
    %5997 = vmatprep.subr.mxu0 0.0
    %5998 = vmatpush1.msra.mxu0 0.0
    %5999 = vmatprep.subr.mxu0 0.0
    %6000 = vmatpush1.msra.mxu0 0.0
    %6001 = vmatprep.subr.mxu0 0.0
    %6002 = vmatpush1.msra.mxu0 0.0
    %6003 = vmatprep.subr.mxu0 0.0
    %6004 = vmatpush1.msra.mxu0 0.0
    %6005 = vmatprep.subr.mxu0 0.0
    %6006 = vmatpush1.msra.mxu0 0.0
    %6007 = vmatprep.mubr.f32.mxu0 0.0
    %6008 = vmatmul.mubr.f32.gmra.mrb[0].mxu0 %v5941
    %v6009 = vpop.f32.mrb[0].mxu0
    %v6010 = vadd.f32 0.0, %v6009
    %v6011 = vpop.f32.mrb[0].mxu0
    %6012 = vdwg.mxu0
    %s6013 = scalar_lea.vmem %s6, 1792
    %v6014 = vld [vmem:[%s6013] sm:$0xff]
    %v6015 = vld [vmem:[%s6013 + $0x8] sm:$0xff]
    %v6016 = vld [vmem:[%s6013 + $0x10] sm:$0xff]
    %v6017 = vld [vmem:[%s6013 + $0x18] sm:$0xff]
    %v6018 = vld [vmem:[%s6013 + $0x20] sm:$0xff]
    %v6019 = vld [vmem:[%s6013 + $0x28] sm:$0xff]
    %v6020 = vld [vmem:[%s6013 + $0x30] sm:$0xff]
    %v6021 = vld [vmem:[%s6013 + $0x38] sm:$0xff]
    %v6022 = vld [vmem:[%s6013 + $0x40] sm:$0xff]
    %v6023 = vld [vmem:[%s6013 + $0x48] sm:$0xff]
    %v6024 = vld [vmem:[%s6013 + $0x50] sm:$0xff]
    %v6025 = vld [vmem:[%s6013 + $0x58] sm:$0xff]
    %v6026 = vld [vmem:[%s6013 + $0x60] sm:$0xff]
    %v6027 = vld [vmem:[%s6013 + $0x68] sm:$0xff]
    %v6028 = vld [vmem:[%s6013 + $0x70] sm:$0xff]
    %v6029 = vld [vmem:[%s6013 + $0x78] sm:$0xff]
    %6030 = vmatprep.subr.mxu0 0.0
    %6031 = vmatpush1.msra.mxu0 %v6014
    %6032 = vmatprep.subr.mxu0 0.0
    %6033 = vmatpush1.msra.mxu0 %v6015
    %6034 = vmatprep.subr.mxu0 0.0
    %6035 = vmatpush1.msra.mxu0 %v6016
    %6036 = vmatprep.subr.mxu0 0.0
    %6037 = vmatpush1.msra.mxu0 %v6017
    %6038 = vmatprep.subr.mxu0 0.0
    %6039 = vmatpush1.msra.mxu0 %v6018
    %6040 = vmatprep.subr.mxu0 0.0
    %6041 = vmatpush1.msra.mxu0 %v6019
    %6042 = vmatprep.subr.mxu0 0.0
    %6043 = vmatpush1.msra.mxu0 %v6020
    %6044 = vmatprep.subr.mxu0 0.0
    %6045 = vmatpush1.msra.mxu0 %v6021
    %6046 = vmatprep.subr.mxu0 0.0
    %6047 = vmatpush1.msra.mxu0 %v6022
    %6048 = vmatprep.subr.mxu0 0.0
    %6049 = vmatpush1.msra.mxu0 %v6023
    %6050 = vmatprep.subr.mxu0 0.0
    %6051 = vmatpush1.msra.mxu0 %v6024
    %6052 = vmatprep.subr.mxu0 0.0
    %6053 = vmatpush1.msra.mxu0 %v6025
    %6054 = vmatprep.subr.mxu0 0.0
    %6055 = vmatpush1.msra.mxu0 %v6026
    %6056 = vmatprep.subr.mxu0 0.0
    %6057 = vmatpush1.msra.mxu0 %v6027
    %6058 = vmatprep.subr.mxu0 0.0
    %6059 = vmatpush1.msra.mxu0 %v6028
    %6060 = vmatprep.subr.mxu0 0.0
    %6061 = vmatpush1.msra.mxu0 %v6029
    %6062 = vmatprep.subr.mxu0 0.0
    %6063 = vmatpush1.msra.mxu0 0.0
    %6064 = vmatprep.subr.mxu0 0.0
    %6065 = vmatpush1.msra.mxu0 0.0
    %6066 = vmatprep.subr.mxu0 0.0
    %6067 = vmatpush1.msra.mxu0 0.0
    %6068 = vmatprep.subr.mxu0 0.0
    %6069 = vmatpush1.msra.mxu0 0.0
    %6070 = vmatprep.subr.mxu0 0.0
    %6071 = vmatpush1.msra.mxu0 0.0
    %6072 = vmatprep.subr.mxu0 0.0
    %6073 = vmatpush1.msra.mxu0 0.0
    %6074 = vmatprep.subr.mxu0 0.0
    %6075 = vmatpush1.msra.mxu0 0.0
    %6076 = vmatprep.subr.mxu0 0.0
    %6077 = vmatpush1.msra.mxu0 0.0
    %6078 = vmatprep.subr.mxu0 0.0
    %6079 = vmatpush1.msra.mxu0 0.0
    %6080 = vmatprep.subr.mxu0 0.0
    %6081 = vmatpush1.msra.mxu0 0.0
    %6082 = vmatprep.subr.mxu0 0.0
    %6083 = vmatpush1.msra.mxu0 0.0
    %6084 = vmatprep.subr.mxu0 0.0
    %6085 = vmatpush1.msra.mxu0 0.0
    %6086 = vmatprep.subr.mxu0 0.0
    %6087 = vmatpush1.msra.mxu0 0.0
    %6088 = vmatprep.subr.mxu0 0.0
    %6089 = vmatpush1.msra.mxu0 0.0
    %6090 = vmatprep.subr.mxu0 0.0
    %6091 = vmatpush1.msra.mxu0 0.0
    %6092 = vmatprep.subr.mxu0 0.0
    %6093 = vmatpush1.msra.mxu0 0.0
    %6094 = vmatprep.mubr.f32.mxu0 0.0
    %6095 = vmatmul.mubr.f32.gmra.mrb[0].mxu0 %v6010
    %v6096 = vpop.f32.mrb[0].mxu0
    %v6097 = vadd.f32 0.0, %v6096
    %v6098 = vpop.f32.mrb[0].mxu0
    %6099 = vdwg.mxu0
    %v6100 = vadd.f32 %v5937, %v6097
    %s6101 = scalar_lea.vmem %s8, 30
    %v6102 = vld [vmem:[%s6101] sm:$0x3]
    %v6104 = vsel %vm41, %v6102, 0
    %6106 = vmatprep.subr.mxu0 0.0
    %6107 = vmatpush1.msra.mxu0 %v3656
    %6108 = vmatprep.subr.mxu0 0.0
    %6109 = vmatpush1.msra.mxu0 %v3657
    %6110 = vmatprep.subr.mxu0 0.0
    %6111 = vmatpush1.msra.mxu0 %v3658
    %6112 = vmatprep.subr.mxu0 0.0
    %6113 = vmatpush1.msra.mxu0 %v3659
    %6114 = vmatprep.subr.mxu0 0.0
    %6115 = vmatpush1.msra.mxu0 0.0
    %6116 = vmatprep.subr.mxu0 0.0
    %6117 = vmatpush1.msra.mxu0 0.0
    %6118 = vmatprep.subr.mxu0 0.0
    %6119 = vmatpush1.msra.mxu0 0.0
    %6120 = vmatprep.subr.mxu0 0.0
    %6121 = vmatpush1.msra.mxu0 0.0
    %6122 = vmatprep.subr.mxu0 0.0
    %6123 = vmatpush1.msra.mxu0 0.0
    %6124 = vmatprep.subr.mxu0 0.0
    %6125 = vmatpush1.msra.mxu0 0.0
    %6126 = vmatprep.subr.mxu0 0.0
    %6127 = vmatpush1.msra.mxu0 0.0
    %6128 = vmatprep.subr.mxu0 0.0
    %6129 = vmatpush1.msra.mxu0 0.0
    %6130 = vmatprep.subr.mxu0 0.0
    %6131 = vmatpush1.msra.mxu0 0.0
    %6132 = vmatprep.subr.mxu0 0.0
    %6133 = vmatpush1.msra.mxu0 0.0
    %6134 = vmatprep.subr.mxu0 0.0
    %6135 = vmatpush1.msra.mxu0 0.0
    %6136 = vmatprep.subr.mxu0 0.0
    %6137 = vmatpush1.msra.mxu0 0.0
    %6138 = vmatprep.subr.mxu0 0.0
    %6139 = vmatpush1.msra.mxu0 0.0
    %6140 = vmatprep.subr.mxu0 0.0
    %6141 = vmatpush1.msra.mxu0 0.0
    %6142 = vmatprep.subr.mxu0 0.0
    %6143 = vmatpush1.msra.mxu0 0.0
    %6144 = vmatprep.subr.mxu0 0.0
    %6145 = vmatpush1.msra.mxu0 0.0
    %6146 = vmatprep.subr.mxu0 0.0
    %6147 = vmatpush1.msra.mxu0 0.0
    %6148 = vmatprep.subr.mxu0 0.0
    %6149 = vmatpush1.msra.mxu0 0.0
    %6150 = vmatprep.subr.mxu0 0.0
    %6151 = vmatpush1.msra.mxu0 0.0
    %6152 = vmatprep.subr.mxu0 0.0
    %6153 = vmatpush1.msra.mxu0 0.0
    %6154 = vmatprep.subr.mxu0 0.0
    %6155 = vmatpush1.msra.mxu0 0.0
    %6156 = vmatprep.subr.mxu0 0.0
    %6157 = vmatpush1.msra.mxu0 0.0
    %6158 = vmatprep.subr.mxu0 0.0
    %6159 = vmatpush1.msra.mxu0 0.0
    %6160 = vmatprep.subr.mxu0 0.0
    %6161 = vmatpush1.msra.mxu0 0.0
    %6162 = vmatprep.subr.mxu0 0.0
    %6163 = vmatpush1.msra.mxu0 0.0
    %6164 = vmatprep.subr.mxu0 0.0
    %6165 = vmatpush1.msra.mxu0 0.0
    %6166 = vmatprep.subr.mxu0 0.0
    %6167 = vmatpush1.msra.mxu0 0.0
    %6168 = vmatprep.subr.mxu0 0.0
    %6169 = vmatpush1.msra.mxu0 0.0
    %6170 = vmatprep.mubr.f32.mxu0 0.0
    %6171 = vmatmul.mubr.f32.gmra.mrb[0].mxu0 %v6104
    %v6172 = vpop.f32.mrb[0].mxu0
    %v6173 = vadd.f32 0.0, %v6172
    %v6174 = vpop.f32.mrb[0].mxu0
    %6175 = vdwg.mxu0
    %s6176 = scalar_lea.vmem %s6, 1920
    %v6177 = vld [vmem:[%s6176] sm:$0xff]
    %v6178 = vld [vmem:[%s6176 + $0x8] sm:$0xff]
    %v6179 = vld [vmem:[%s6176 + $0x10] sm:$0xff]
    %v6180 = vld [vmem:[%s6176 + $0x18] sm:$0xff]
    %v6181 = vld [vmem:[%s6176 + $0x20] sm:$0xff]
    %v6182 = vld [vmem:[%s6176 + $0x28] sm:$0xff]
    %v6183 = vld [vmem:[%s6176 + $0x30] sm:$0xff]
    %v6184 = vld [vmem:[%s6176 + $0x38] sm:$0xff]
    %v6185 = vld [vmem:[%s6176 + $0x40] sm:$0xff]
    %v6186 = vld [vmem:[%s6176 + $0x48] sm:$0xff]
    %v6187 = vld [vmem:[%s6176 + $0x50] sm:$0xff]
    %v6188 = vld [vmem:[%s6176 + $0x58] sm:$0xff]
    %v6189 = vld [vmem:[%s6176 + $0x60] sm:$0xff]
    %v6190 = vld [vmem:[%s6176 + $0x68] sm:$0xff]
    %v6191 = vld [vmem:[%s6176 + $0x70] sm:$0xff]
    %v6192 = vld [vmem:[%s6176 + $0x78] sm:$0xff]
    %6193 = vmatprep.subr.mxu0 0.0
    %6194 = vmatpush1.msra.mxu0 %v6177
    %6195 = vmatprep.subr.mxu0 0.0
    %6196 = vmatpush1.msra.mxu0 %v6178
    %6197 = vmatprep.subr.mxu0 0.0
    %6198 = vmatpush1.msra.mxu0 %v6179
    %6199 = vmatprep.subr.mxu0 0.0
    %6200 = vmatpush1.msra.mxu0 %v6180
    %6201 = vmatprep.subr.mxu0 0.0
    %6202 = vmatpush1.msra.mxu0 %v6181
    %6203 = vmatprep.subr.mxu0 0.0
    %6204 = vmatpush1.msra.mxu0 %v6182
    %6205 = vmatprep.subr.mxu0 0.0
    %6206 = vmatpush1.msra.mxu0 %v6183
    %6207 = vmatprep.subr.mxu0 0.0
    %6208 = vmatpush1.msra.mxu0 %v6184
    %6209 = vmatprep.subr.mxu0 0.0
    %6210 = vmatpush1.msra.mxu0 %v6185
    %6211 = vmatprep.subr.mxu0 0.0
    %6212 = vmatpush1.msra.mxu0 %v6186
    %6213 = vmatprep.subr.mxu0 0.0
    %6214 = vmatpush1.msra.mxu0 %v6187
    %6215 = vmatprep.subr.mxu0 0.0
    %6216 = vmatpush1.msra.mxu0 %v6188
    %6217 = vmatprep.subr.mxu0 0.0
    %6218 = vmatpush1.msra.mxu0 %v6189
    %6219 = vmatprep.subr.mxu0 0.0
    %6220 = vmatpush1.msra.mxu0 %v6190
    %6221 = vmatprep.subr.mxu0 0.0
    %6222 = vmatpush1.msra.mxu0 %v6191
    %6223 = vmatprep.subr.mxu0 0.0
    %6224 = vmatpush1.msra.mxu0 %v6192
    %6225 = vmatprep.subr.mxu0 0.0
    %6226 = vmatpush1.msra.mxu0 0.0
    %6227 = vmatprep.subr.mxu0 0.0
    %6228 = vmatpush1.msra.mxu0 0.0
    %6229 = vmatprep.subr.mxu0 0.0
    %6230 = vmatpush1.msra.mxu0 0.0
    %6231 = vmatprep.subr.mxu0 0.0
    %6232 = vmatpush1.msra.mxu0 0.0
    %6233 = vmatprep.subr.mxu0 0.0
    %6234 = vmatpush1.msra.mxu0 0.0
    %6235 = vmatprep.subr.mxu0 0.0
    %6236 = vmatpush1.msra.mxu0 0.0
    %6237 = vmatprep.subr.mxu0 0.0
    %6238 = vmatpush1.msra.mxu0 0.0
    %6239 = vmatprep.subr.mxu0 0.0
    %6240 = vmatpush1.msra.mxu0 0.0
    %6241 = vmatprep.subr.mxu0 0.0
    %6242 = vmatpush1.msra.mxu0 0.0
    %6243 = vmatprep.subr.mxu0 0.0
    %6244 = vmatpush1.msra.mxu0 0.0
    %6245 = vmatprep.subr.mxu0 0.0
    %6246 = vmatpush1.msra.mxu0 0.0
    %6247 = vmatprep.subr.mxu0 0.0
    %6248 = vmatpush1.msra.mxu0 0.0
    %6249 = vmatprep.subr.mxu0 0.0
    %6250 = vmatpush1.msra.mxu0 0.0
    %6251 = vmatprep.subr.mxu0 0.0
    %6252 = vmatpush1.msra.mxu0 0.0
    %6253 = vmatprep.subr.mxu0 0.0
    %6254 = vmatpush1.msra.mxu0 0.0
    %6255 = vmatprep.subr.mxu0 0.0
    %6256 = vmatpush1.msra.mxu0 0.0
    %6257 = vmatprep.mubr.f32.mxu0 0.0
    %6258 = vmatmul.mubr.f32.gmra.mrb[0].mxu0 %v6173
    %v6259 = vpop.f32.mrb[0].mxu0
    %v6260 = vadd.f32 0.0, %v6259
    %v6261 = vpop.f32.mrb[0].mxu0
    %6262 = vdwg.mxu0
    %v6263 = vadd.f32 %v6100, %v6260
    %v6264 = vld [vmem:[%s7] sm:$0x1]
    %v6266 = vlaneseq
    %v6267 = vshrl.u32 %v6266, 7
    %v6268 = vsub.s32 0, %v6267
    %v6269 = vrot.slane %v6264, %v6268
    %v6271 = vadd.f32 %v6263, %v6269
    %vm6272 = vcmask 25600
    %6273 = vst.msk [vmem:[#allocation2] sm:$0x3] %vm6272, %v6271
    // Predicated region
    $region38: #{my_agent_forward.1} parent=1 // pred_check
      _
    $region39: #{my_agent_forward.1} parent=1 // pred_check_branch
      %6275 = sbr.rel (0) target = $region41
    $region40: #{my_agent_forward.1} parent=1 // pred_region
      %s6277 = ssub.s32 32, 32
      %6278 = vsyncadd [#allocation3], %s6277
      %s6280 = sshll.u32 [#allocation2], 4
      %s6281 = int_to_ptr.vmem [resolvable:$true] %s6280
      %6283 = dma.vmem_to_hbm [thread:$0]  %s6281, 32, %s9, [#allocation3]
    $region41: #{my_agent_forward.1} parent=1 // pred_fallthru
      _
    // Predicated region
    $region42: #{my_agent_forward.1} parent=1 // pred_check
      _
    $region43: #{my_agent_forward.1} parent=1 // pred_check_branch
      %6285 = sbr.rel (0) target = $region45
    $region44: #{my_agent_forward.1} parent=1 // pred_region
      %6286 = dma.done [#allocation3], 32
    $region45: #{my_agent_forward.1} parent=1 // pred_fallthru
      _
    %6287 = vsyncpa [#allocation3], 1

</llo_original>
